<compile_context>
chip_gen: v7x
topology: tpu7x:2x2x1
jax: 0.10.0
libtpu: 0.0.40
codegen_flags: <defaults>
</compile_context>

<pallas_src>
import functools
import math

import jax
import jax.numpy as jnp
from jax.experimental import pallas as pl
from jax.experimental.pallas import tpu as pltpu


# ----------------------------------------------------------------------------
# Pallas kernel 1: fused 3-layer Conv1d(no bias) + BatchNorm(running stats)
# + ReLU stack.  grid = (B, nT); each step computes one (Tt, Cout) tile with
# three folded-K MXU matmuls, keeping the inter-layer activations in VMEM.
# ----------------------------------------------------------------------------
def conv_stack_kernel(x_ref, *refs, n_layers, k_taps, pad, t_tile, t_valid):
    # x_ref : (1, Tp, Cin0) bf16  zero-padded input (halo = n_layers*pad/side)
    # refs  : [w_0, scale_0, shift_0, ..., w_{L-1}, scale_{L-1}, shift_{L-1}, o_ref]
    #   w_l     : (K*Cin_l, Cout) f32  taps folded into the contraction dim
    #   scale_l : (1, Cout)       f32  folded BN scale
    #   shift_l : (1, Cout)       f32  folded BN shift
    #   o_ref   : (1, Tt, Cout)   bf16
    o_ref = refs[-1]
    i = pl.program_id(1)
    halo = n_layers * pad
    start = pl.multiple_of(i * t_tile, t_tile)

    # One aligned dynamic-window load covering all halos of the whole stack.
    cur = x_ref[0, pl.ds(start, t_tile + 2 * halo), :].astype(jnp.float32)

    for l in range(n_layers):
        w_ref = refs[3 * l]
        scale = refs[3 * l + 1][...]
        shift = refs[3 * l + 2][...]
        w_out = t_tile + 2 * pad * (n_layers - 1 - l)
        # im2col: K shifted views concatenated -> one folded-K MXU contraction
        taps = [cur[k:k + w_out, :] for k in range(k_taps)]
        xk = jnp.concatenate(taps, axis=-1)                  # (w_out, K*Cin_l)
        y = jnp.dot(xk, w_ref[...], preferred_element_type=jnp.float32)
        y = jnp.maximum(y * scale + shift, 0.0)              # BN + ReLU (f32)
        if l < n_layers - 1:
            # Rows whose global position is outside [0, T) must be exactly
            # zero so the next layer sees Conv1d's zero padding.
            off = pad * (n_layers - 1 - l)
            t_glob = (start - off
                      + jax.lax.broadcasted_iota(jnp.int32, (w_out, 1), 0))
            y = jnp.where((t_glob >= 0) & (t_glob < t_valid), y, 0.0)
        cur = y

    o_ref[0] = cur.astype(o_ref.dtype)


def conv_stack(x, conv_params, *, k_taps, t_tile=128):
    """x: (B, T, Cin) bf16 -> (B, T, Cout) bf16 through the fused conv stack."""
    B, T, Cin = x.shape
    L = len(conv_params)
    Cout = conv_params[-1]["w"].shape[-1]
    pad = (k_taps - 1) // 2
    halo = L * pad
    # big, 16-aligned time tile (clamped for short sequences)
    t_tile = min(t_tile, max(16, ((T + 15) // 16) * 16))
    nT = pl.cdiv(T, t_tile)
    Tout = nT * t_tile
    # pad ONCE for the whole stack (left halo, right halo + tile round-up)
    x_pad = jnp.pad(x, ((0, 0), (halo, halo + Tout - T), (0, 0)))
    Tp = Tout + 2 * halo

    args = [x_pad]
    specs = [pl.BlockSpec((1, Tp, Cin), lambda b, i: (b, 0, 0))]
    for cp in conv_params:
        args += [cp["w"], cp["scale"], cp["shift"]]
        specs += [
            pl.BlockSpec(cp["w"].shape, lambda b, i: (0, 0)),
            pl.BlockSpec((1, Cout), lambda b, i: (0, 0)),
            pl.BlockSpec((1, Cout), lambda b, i: (0, 0)),
        ]

    kernel = functools.partial(conv_stack_kernel, n_layers=L, k_taps=k_taps,
                               pad=pad, t_tile=t_tile, t_valid=T)
    out = pl.pallas_call(
        kernel,
        out_shape=jax.ShapeDtypeStruct((B, Tout, Cout), jnp.bfloat16),
        grid=(B, nT),
        in_specs=specs,
        out_specs=pl.BlockSpec((1, t_tile, Cout), lambda b, i: (b, i, 0)),
        compiler_params=pltpu.CompilerParams(
            dimension_semantics=("parallel", "parallel")),
    )(*args)
    return out[:, :T, :] if Tout != T else out


# ----------------------------------------------------------------------------
# Pallas kernel 2: fused, lane-packed bidirectional LSTM recurrence.
# Both directions share one (B, 2H) state, one block-diagonal (2H, 8H) W_hh
# matmul, one 6H-wide sigmoid and one 2H-wide tanh per timestep.  The x@W_ih
# projection (+ biases) is precomputed outside; the backward half of gx is
# pre-flipped in time so both directions read the same row per step.
# grid = (nc,) sequential; t_chunk timesteps per grid step (static unroll).
# ----------------------------------------------------------------------------
def blstm_packed_kernel(gx_ref, whh_ref, len_ref, o_ref, h_st, c_st, *,
                        t_chunk, t_total, hsize):
    # gx_ref : (Tc, B, 8H) bf16  packed projection; gate order i,f,o,g and per
    #          gate [fwd H | bwd H]; bwd half already time-reversed.
    # whh_ref: (2H, 8H) f32      block-diagonal packed recurrent weights
    # len_ref: (B, 1) int32      sequence lengths
    # o_ref  : (Tc, B, 2H) f32   packed outputs [fwd@tau | bwd@(t_total-1-tau)]
    # h_st/c_st: (B, 2H) f32     carried packed states (VMEM scratch)
    c = pl.program_id(0)

    @pl.when(c == 0)
    def _():
        h_st[...] = jnp.zeros_like(h_st)
        c_st[...] = jnp.zeros_like(c_st)

    whh = whh_ref[...]                                        # (2H, 8H) f32
    lens = len_ref[...]                                       # (B, 1) int32
    H = hsize
    is_fwd = jax.lax.broadcasted_iota(jnp.int32, (1, 2 * H), 1) < H

    for tl in range(t_chunk):                                 # static unroll
        tau = c * t_chunk + tl                                # forward time
        gates = gx_ref[tl].astype(jnp.float32) + jnp.dot(
            h_st[...], whh, preferred_element_type=jnp.float32)   # (B, 8H)
        sig = jax.nn.sigmoid(gates[:, :6 * H])                # i, f, o at once
        i_g = sig[:, 0 * H:2 * H]
        f_g = sig[:, 2 * H:4 * H]
        o_g = sig[:, 4 * H:6 * H]
        g_g = jnp.tanh(gates[:, 6 * H:8 * H])
        c_new = f_g * c_st[...] + i_g * g_g
        h_new = o_g * jnp.tanh(c_new)
        # per-lane validity: fwd lanes use time tau, bwd lanes t_total-1-tau
        t_lane = jnp.where(is_fwd, tau, t_total - 1 - tau)    # (1, 2H)
        valid = t_lane < lens                                 # (B, 2H)
        h_st[...] = jnp.where(valid, h_new, h_st[...])
        c_st[...] = jnp.where(valid, c_new, c_st[...])
        o_ref[tl] = jnp.where(valid, h_new, 0.0).astype(o_ref.dtype)


def blstm_packed(gx_f, gx_b, w_hh_packed, ilens, *, t_chunk=32):
    """gx_f/gx_b: (T, B, 4H) f32 time-major, gate order i,f,o,g.
    Returns (T, B, 2H) f32 = [forward | backward] hidden states, zero past ilen."""
    T, B, G = gx_f.shape
    H = G // 4
    t_chunk = min(t_chunk, max(8, ((T + 7) // 8) * 8))
    nc = pl.cdiv(T, t_chunk)
    Tpad = nc * t_chunk
    if Tpad != T:
        padw = ((0, Tpad - T), (0, 0), (0, 0))
        gx_f = jnp.pad(gx_f, padw)
        gx_b = jnp.pad(gx_b, padw)
    # backward direction walks reversed time: pre-flip its projection, then
    # interleave per-gate [fwd | bwd] columns into one lane-dense bf16 stream.
    gx_b_rev = gx_b[::-1]
    gx_packed = jnp.concatenate(
        [gx_f.reshape(Tpad, B, 4, H), gx_b_rev.reshape(Tpad, B, 4, H)],
        axis=-1).reshape(Tpad, B, 8 * H).astype(jnp.bfloat16)
    lens_col = ilens.astype(jnp.int32)[:, None]               # (B, 1)

    kernel = functools.partial(blstm_packed_kernel, t_chunk=t_chunk,
                               t_total=Tpad, hsize=H)
    o_packed = pl.pallas_call(
        kernel,
        out_shape=jax.ShapeDtypeStruct((Tpad, B, 2 * H), jnp.float32),
        grid=(nc,),
        in_specs=[
            pl.BlockSpec((t_chunk, B, 8 * H), lambda c: (c, 0, 0)),
            pl.BlockSpec((2 * H, 8 * H), lambda c: (0, 0)),
            pl.BlockSpec((B, 1), lambda c: (0, 0)),
        ],
        out_specs=pl.BlockSpec((t_chunk, B, 2 * H), lambda c: (c, 0, 0)),
        scratch_shapes=[pltpu.VMEM((B, 2 * H), jnp.float32),
                        pltpu.VMEM((B, 2 * H), jnp.float32)],
        compiler_params=pltpu.CompilerParams(
            dimension_semantics=("arbitrary",)),
    )(gx_packed, w_hh_packed, lens_col)

    # unpack: forward half is in natural time, backward half is time-reversed
    enc_f = o_packed[:T, :, :H]
    enc_b = o_packed[::-1, :, H:][:T]
    return jnp.concatenate([enc_f, enc_b], axis=-1)           # (T, B, 2H)


# ----------------------------------------------------------------------------
# Parameter construction (deterministic, matches module shapes)
# ----------------------------------------------------------------------------
def pack_blstm_params(raw, H):
    """Repack per-direction LSTM weights (PyTorch gate order i,f,g,o) into the
    lane-packed layout used by the fused kernel:
      * gates reordered to i, f, o, g (one sigmoid covers the first three),
      * each gate's columns are [forward H | backward H],
      * W_hh is block-diagonal (2H, 8H) so both directions share one matmul."""
    order = jnp.array([0, 1, 3, 2])

    def reorder(w):                          # (..., 4H) -> gate order i,f,o,g
        shp = w.shape[:-1]
        return w.reshape(*shp, 4, H)[..., order, :].reshape(*shp, 4 * H)

    w_ih_f, w_ih_b = reorder(raw["w_ih_f"]), reorder(raw["w_ih_b"])
    b_f, b_b = reorder(raw["b_f"]), reorder(raw["b_b"])

    wf4 = raw["w_hh_f"].reshape(H, 4, H)[:, order, :]
    wb4 = raw["w_hh_b"].reshape(H, 4, H)[:, order, :]
    zeros = jnp.zeros_like(wf4)
    w_hh_packed = jnp.concatenate(
        [jnp.concatenate([wf4, zeros], axis=-1),
         jnp.concatenate([zeros, wb4], axis=-1)],
        axis=0).reshape(2 * H, 8 * H).astype(jnp.float32)

    return dict(w_ih_f=w_ih_f, w_ih_b=w_ih_b, b_f=b_f, b_b=b_b,
                w_hh_packed=w_hh_packed)


def init_params(key, idim, embed_dim, econv_layers, econv_chans, econv_filts,
                eunits):
    H = eunits // 2
    keys = jax.random.split(key, 2 + 5 * econv_layers + 12)
    ki = iter(keys)

    # Embedding (idim, embed_dim), padding_idx=0 row zeroed.
    embed = jax.random.normal(next(ki), (idim, embed_dim), jnp.float32)
    embed = embed.at[0].set(0.0)

    convs = []
    for layer in range(econv_layers):
        cin = embed_dim if layer == 0 else econv_chans
        gain = math.sqrt(2.0)                 # xavier_uniform with relu gain
        fan_in, fan_out = cin * econv_filts, econv_chans * econv_filts
        lim = gain * math.sqrt(6.0 / (fan_in + fan_out))
        # conv weight stored pre-folded as (K*Cin, Cout), row = k*Cin + cin
        w = jax.random.uniform(next(ki), (econv_filts, cin, econv_chans),
                               jnp.float32, -lim, lim)
        gamma = 1.0 + 0.1 * jax.random.normal(next(ki), (econv_chans,))
        beta = 0.1 * jax.random.normal(next(ki), (econv_chans,))
        rmean = 0.05 * jax.random.normal(next(ki), (econv_chans,))
        rvar = jnp.ones((econv_chans,), jnp.float32)
        inv = 1.0 / jnp.sqrt(rvar + 1e-5)
        convs.append(dict(
            w=w.reshape(econv_filts * cin, econv_chans),
            scale=(gamma * inv).reshape(1, econv_chans).astype(jnp.float32),
            shift=(beta - rmean * gamma * inv).reshape(1, econv_chans)))

    # Bidirectional LSTM (1 layer), PyTorch-style per-direction weights stored
    # transposed: W_ih (C, 4H), W_hh (H, 4H), gate order i, f, g, o.
    lstm_in = econv_chans if econv_layers > 0 else embed_dim
    lim = 1.0 / math.sqrt(H)

    def u(k, shape):
        return jax.random.uniform(k, shape, jnp.float32, -lim, lim)

    raw = {}
    for d in ("f", "b"):
        raw[f"w_ih_{d}"] = u(next(ki), (lstm_in, 4 * H))
        raw[f"w_hh_{d}"] = u(next(ki), (H, 4 * H))
        raw[f"b_{d}"] = u(next(ki), (4 * H,)) + u(next(ki), (4 * H,))  # b_ih+b_hh

    return dict(embed=embed, convs=convs, lstm=pack_blstm_params(raw, H))


# ----------------------------------------------------------------------------
# Encoder forward
# ----------------------------------------------------------------------------
def encoder_forward(params, xs_ids, ilens, *, econv_filts=5):
    """xs_ids: (B, Tmax) int32 char ids; ilens: (B,) int32 lengths.
    Returns (B, Tmax, eunits) encoder states and (B,) lengths."""
    # Embedding lookup (plain-JAX gather); bf16 activations stream to the conv.
    h = params["embed"][xs_ids].astype(jnp.bfloat16)            # (B, T, E)

    # Fused conv stack (single Pallas kernel, inter-layer activations in VMEM).
    h = conv_stack(h, params["convs"], k_taps=econv_filts)      # (B, T, C) bf16

    # Hoisted LSTM input projection: one f32 MXU matmul per direction,
    # emitted directly time-major with (b_ih + b_hh) folded in.
    p = params["lstm"]
    hf = h.astype(jnp.float32)
    gx_f = jnp.einsum("btc,cg->tbg", hf, p["w_ih_f"]) + p["b_f"]
    gx_b = jnp.einsum("btc,cg->tbg", hf, p["w_ih_b"]) + p["b_b"]

    # Fused, lane-packed bidirectional recurrence (single Pallas kernel).
    out = blstm_packed(gx_f, gx_b, p["w_hh_packed"], ilens)     # (T, B, 2H)
    return jnp.transpose(out, (1, 0, 2)), ilens                 # (B, T, 2H)


if __name__ == "__main__":
    # Small deterministic config (lane-friendly widths: 128 channels, H=64).
    idim, embed_dim = 10, 128
    econv_layers, econv_chans, econv_filts = 3, 128, 5
    eunits = 128                                     # -> H = 64 per direction
    B, Tmax = 2, 16

    key = jax.random.PRNGKey(0)
    k_par, k_ids = jax.random.split(key)
    params = init_params(k_par, idim, embed_dim, econv_layers, econv_chans,
                         econv_filts, eunits)

    ilens = jnp.array([16, 11], dtype=jnp.int32)
    ids = jax.random.randint(k_ids, (B, Tmax), 1, idim, dtype=jnp.int32)
    pos = jnp.arange(Tmax)[None, :]
    xs_ids = jnp.where(pos < ilens[:, None], ids, 0)   # padding_idx beyond ilen

    out, hlens = jax.jit(encoder_forward)(params, xs_ids, ilens)
    jax.block_until_ready(out)

    assert out.shape == (B, Tmax, eunits), out.shape
    assert hlens.shape == (B,)
    # padded positions (t >= ilen) must be zero (pad_packed_sequence semantics)
    assert float(jnp.abs(out[1, 11:, :]).max()) == 0.0
    # valid positions should be non-trivial
    assert float(jnp.abs(out[0]).max()) > 0.0
    print("KERNEL_OK")
</pallas_src>

<mosaic_0001>
module attributes {stable_mosaic.version = 11 : i64} {
  func.func @conv_stack_kernel(%arg0: i32, %arg1: i32, %arg2: memref<1x28x128xbf16, #tpu.memory_space<vmem>>, %arg3: memref<640x128xf32, #tpu.memory_space<vmem>>, %arg4: memref<1x128xf32, #tpu.memory_space<vmem>>, %arg5: memref<1x128xf32, #tpu.memory_space<vmem>>, %arg6: memref<640x128xf32, #tpu.memory_space<vmem>>, %arg7: memref<1x128xf32, #tpu.memory_space<vmem>>, %arg8: memref<1x128xf32, #tpu.memory_space<vmem>>, %arg9: memref<640x128xf32, #tpu.memory_space<vmem>>, %arg10: memref<1x128xf32, #tpu.memory_space<vmem>>, %arg11: memref<1x128xf32, #tpu.memory_space<vmem>>, %arg12: memref<1x16x128xbf16, #tpu.memory_space<vmem>>) attributes {dimension_semantics = [#tpu.dimension_semantics<parallel>, #tpu.dimension_semantics<parallel>], iteration_bounds = array<i64: 2, 1>, scalar_prefetch = 0 : i64, scratch_operands = 0 : i64, tpu.core_type = #tpu.core_type<tc>, window_params = [{transform_indices = @transform_0, window_bounds = array<i64: 1, 28, 128>}, {pipeline_mode = #tpu.pipeline_mode<synchronous>, transform_indices = @transform_1, window_bounds = array<i64: 640, 128>}, {pipeline_mode = #tpu.pipeline_mode<synchronous>, transform_indices = @transform_2, window_bounds = array<i64: 1, 128>}, {pipeline_mode = #tpu.pipeline_mode<synchronous>, transform_indices = @transform_3, window_bounds = array<i64: 1, 128>}, {pipeline_mode = #tpu.pipeline_mode<synchronous>, transform_indices = @transform_4, window_bounds = array<i64: 640, 128>}, {pipeline_mode = #tpu.pipeline_mode<synchronous>, transform_indices = @transform_5, window_bounds = array<i64: 1, 128>}, {pipeline_mode = #tpu.pipeline_mode<synchronous>, transform_indices = @transform_6, window_bounds = array<i64: 1, 128>}, {pipeline_mode = #tpu.pipeline_mode<synchronous>, transform_indices = @transform_7, window_bounds = array<i64: 640, 128>}, {pipeline_mode = #tpu.pipeline_mode<synchronous>, transform_indices = @transform_8, window_bounds = array<i64: 1, 128>}, {pipeline_mode = #tpu.pipeline_mode<synchronous>, transform_indices = @transform_9, window_bounds = array<i64: 1, 128>}, {transform_indices = @transform_10, window_bounds = array<i64: 1, 16, 128>}]} {
    %c16_i32 = arith.constant 16 : i32
    %0 = arith.muli %arg1, %c16_i32 : i32
    %1 = tpu.assume_multiple %0, 16 : i32
    %c0 = arith.constant 0 : index
    %2 = arith.index_cast %1 : i32 to index
    %c0_0 = arith.constant 0 : index
    %3 = vector.load %arg2[%c0, %2, %c0_0] : memref<1x28x128xbf16, #tpu.memory_space<vmem>>, vector<1x28x128xbf16>
    %4 = vector.shape_cast %3 : vector<1x28x128xbf16> to vector<28x128xbf16>
    %5 = arith.extf %4 : vector<28x128xbf16> to vector<28x128xf32>
    %c0_1 = arith.constant 0 : index
    %c0_2 = arith.constant 0 : index
    %6 = vector.load %arg4[%c0_1, %c0_2] : memref<1x128xf32, #tpu.memory_space<vmem>>, vector<1x128xf32>
    %c0_3 = arith.constant 0 : index
    %c0_4 = arith.constant 0 : index
    %7 = vector.load %arg5[%c0_3, %c0_4] : memref<1x128xf32, #tpu.memory_space<vmem>>, vector<1x128xf32>
    %8 = vector.extract_strided_slice %5 {offsets = [0, 0], sizes = [24, 128], strides = [1, 1]} : vector<28x128xf32> to vector<24x128xf32>
    %9 = vector.extract_strided_slice %5 {offsets = [1, 0], sizes = [24, 128], strides = [1, 1]} : vector<28x128xf32> to vector<24x128xf32>
    %10 = vector.extract_strided_slice %5 {offsets = [2, 0], sizes = [24, 128], strides = [1, 1]} : vector<28x128xf32> to vector<24x128xf32>
    %11 = vector.extract_strided_slice %5 {offsets = [3, 0], sizes = [24, 128], strides = [1, 1]} : vector<28x128xf32> to vector<24x128xf32>
    %12 = vector.extract_strided_slice %5 {offsets = [4, 0], sizes = [24, 128], strides = [1, 1]} : vector<28x128xf32> to vector<24x128xf32>
    %13 = tpu.concatenate %8, %9, %10, %11, %12 in 1 : vector<24x128xf32>, vector<24x128xf32>, vector<24x128xf32>, vector<24x128xf32>, vector<24x128xf32> -> vector<24x640xf32>
    %c0_5 = arith.constant 0 : index
    %c0_6 = arith.constant 0 : index
    %14 = vector.load %arg3[%c0_5, %c0_6] : memref<640x128xf32, #tpu.memory_space<vmem>>, vector<640x128xf32>
    %cst = arith.constant dense<0.000000e+00> : vector<24x128xf32>
    %15 = tpu.matmul %13, %14, %cst {dimension_numbers = #tpu.dot_dimension_numbers<[1], [0], [0], [1], [0, 0, 1, 1], [], []>} : vector<24x640xf32>, vector<640x128xf32>, vector<24x128xf32> -> vector<24x128xf32>
    %16 = vector.broadcast %6 : vector<1x128xf32> to vector<24x128xf32>
    %17 = arith.mulf %15, %16 : vector<24x128xf32>
    %18 = vector.broadcast %7 : vector<1x128xf32> to vector<24x128xf32>
    %19 = arith.addf %17, %18 : vector<24x128xf32>
    %cst_7 = arith.constant 0.000000e+00 : f32
    %20 = vector.broadcast %cst_7 : f32 to vector<24x128xf32>
    %21 = arith.maximumf %19, %20 : vector<24x128xf32>
    %c4_i32 = arith.constant 4 : i32
    %22 = arith.subi %1, %c4_i32 : i32
    %23 = tpu.iota {dimensions = array<i32: 0>} : vector<24x1xi32>
    %24 = vector.broadcast %22 : i32 to vector<24x1xi32>
    %25 = arith.addi %24, %23 : vector<24x1xi32>
    %c0_i32 = arith.constant 0 : i32
    %26 = vector.broadcast %c0_i32 : i32 to vector<24x1xi32>
    %27 = arith.cmpi sge, %25, %26 : vector<24x1xi32>
    %c16_i32_8 = arith.constant 16 : i32
    %28 = vector.broadcast %c16_i32_8 : i32 to vector<24x1xi32>
    %29 = arith.cmpi slt, %25, %28 : vector<24x1xi32>
    %30 = arith.andi %27, %29 : vector<24x1xi1>
    %cst_9 = arith.constant 0.000000e+00 : f32
    %31 = vector.shape_cast %30 : vector<24x1xi1> to vector<24x1xi1>
    %32 = vector.broadcast %31 : vector<24x1xi1> to vector<24x128xi1>
    %33 = vector.broadcast %cst_9 : f32 to vector<24x128xf32>
    %34 = arith.select %32, %21, %33 : vector<24x128xi1>, vector<24x128xf32>
    %c0_10 = arith.constant 0 : index
    %c0_11 = arith.constant 0 : index
    %35 = vector.load %arg7[%c0_10, %c0_11] : memref<1x128xf32, #tpu.memory_space<vmem>>, vector<1x128xf32>
    %c0_12 = arith.constant 0 : index
    %c0_13 = arith.constant 0 : index
    %36 = vector.load %arg8[%c0_12, %c0_13] : memref<1x128xf32, #tpu.memory_space<vmem>>, vector<1x128xf32>
    %37 = vector.extract_strided_slice %34 {offsets = [0, 0], sizes = [20, 128], strides = [1, 1]} : vector<24x128xf32> to vector<20x128xf32>
    %38 = vector.extract_strided_slice %34 {offsets = [1, 0], sizes = [20, 128], strides = [1, 1]} : vector<24x128xf32> to vector<20x128xf32>
    %39 = vector.extract_strided_slice %34 {offsets = [2, 0], sizes = [20, 128], strides = [1, 1]} : vector<24x128xf32> to vector<20x128xf32>
    %40 = vector.extract_strided_slice %34 {offsets = [3, 0], sizes = [20, 128], strides = [1, 1]} : vector<24x128xf32> to vector<20x128xf32>
    %41 = vector.extract_strided_slice %34 {offsets = [4, 0], sizes = [20, 128], strides = [1, 1]} : vector<24x128xf32> to vector<20x128xf32>
    %42 = tpu.concatenate %37, %38, %39, %40, %41 in 1 : vector<20x128xf32>, vector<20x128xf32>, vector<20x128xf32>, vector<20x128xf32>, vector<20x128xf32> -> vector<20x640xf32>
    %c0_14 = arith.constant 0 : index
    %c0_15 = arith.constant 0 : index
    %43 = vector.load %arg6[%c0_14, %c0_15] : memref<640x128xf32, #tpu.memory_space<vmem>>, vector<640x128xf32>
    %cst_16 = arith.constant dense<0.000000e+00> : vector<20x128xf32>
    %44 = tpu.matmul %42, %43, %cst_16 {dimension_numbers = #tpu.dot_dimension_numbers<[1], [0], [0], [1], [0, 0, 1, 1], [], []>} : vector<20x640xf32>, vector<640x128xf32>, vector<20x128xf32> -> vector<20x128xf32>
    %45 = vector.broadcast %35 : vector<1x128xf32> to vector<20x128xf32>
    %46 = arith.mulf %44, %45 : vector<20x128xf32>
    %47 = vector.broadcast %36 : vector<1x128xf32> to vector<20x128xf32>
    %48 = arith.addf %46, %47 : vector<20x128xf32>
    %cst_17 = arith.constant 0.000000e+00 : f32
    %49 = vector.broadcast %cst_17 : f32 to vector<20x128xf32>
    %50 = arith.maximumf %48, %49 : vector<20x128xf32>
    %c2_i32 = arith.constant 2 : i32
    %51 = arith.subi %1, %c2_i32 : i32
    %52 = tpu.iota {dimensions = array<i32: 0>} : vector<20x1xi32>
    %53 = vector.broadcast %51 : i32 to vector<20x1xi32>
    %54 = arith.addi %53, %52 : vector<20x1xi32>
    %c0_i32_18 = arith.constant 0 : i32
    %55 = vector.broadcast %c0_i32_18 : i32 to vector<20x1xi32>
    %56 = arith.cmpi sge, %54, %55 : vector<20x1xi32>
    %c16_i32_19 = arith.constant 16 : i32
    %57 = vector.broadcast %c16_i32_19 : i32 to vector<20x1xi32>
    %58 = arith.cmpi slt, %54, %57 : vector<20x1xi32>
    %59 = arith.andi %56, %58 : vector<20x1xi1>
    %cst_20 = arith.constant 0.000000e+00 : f32
    %60 = vector.shape_cast %59 : vector<20x1xi1> to vector<20x1xi1>
    %61 = vector.broadcast %60 : vector<20x1xi1> to vector<20x128xi1>
    %62 = vector.broadcast %cst_20 : f32 to vector<20x128xf32>
    %63 = arith.select %61, %50, %62 : vector<20x128xi1>, vector<20x128xf32>
    %c0_21 = arith.constant 0 : index
    %c0_22 = arith.constant 0 : index
    %64 = vector.load %arg10[%c0_21, %c0_22] : memref<1x128xf32, #tpu.memory_space<vmem>>, vector<1x128xf32>
    %c0_23 = arith.constant 0 : index
    %c0_24 = arith.constant 0 : index
    %65 = vector.load %arg11[%c0_23, %c0_24] : memref<1x128xf32, #tpu.memory_space<vmem>>, vector<1x128xf32>
    %66 = vector.extract_strided_slice %63 {offsets = [0, 0], sizes = [16, 128], strides = [1, 1]} : vector<20x128xf32> to vector<16x128xf32>
    %67 = vector.extract_strided_slice %63 {offsets = [1, 0], sizes = [16, 128], strides = [1, 1]} : vector<20x128xf32> to vector<16x128xf32>
    %68 = vector.extract_strided_slice %63 {offsets = [2, 0], sizes = [16, 128], strides = [1, 1]} : vector<20x128xf32> to vector<16x128xf32>
    %69 = vector.extract_strided_slice %63 {offsets = [3, 0], sizes = [16, 128], strides = [1, 1]} : vector<20x128xf32> to vector<16x128xf32>
    %70 = vector.extract_strided_slice %63 {offsets = [4, 0], sizes = [16, 128], strides = [1, 1]} : vector<20x128xf32> to vector<16x128xf32>
    %71 = tpu.concatenate %66, %67, %68, %69, %70 in 1 : vector<16x128xf32>, vector<16x128xf32>, vector<16x128xf32>, vector<16x128xf32>, vector<16x128xf32> -> vector<16x640xf32>
    %c0_25 = arith.constant 0 : index
    %c0_26 = arith.constant 0 : index
    %72 = vector.load %arg9[%c0_25, %c0_26] : memref<640x128xf32, #tpu.memory_space<vmem>>, vector<640x128xf32>
    %cst_27 = arith.constant dense<0.000000e+00> : vector<16x128xf32>
    %73 = tpu.matmul %71, %72, %cst_27 {dimension_numbers = #tpu.dot_dimension_numbers<[1], [0], [0], [1], [0, 0, 1, 1], [], []>} : vector<16x640xf32>, vector<640x128xf32>, vector<16x128xf32> -> vector<16x128xf32>
    %74 = vector.broadcast %64 : vector<1x128xf32> to vector<16x128xf32>
    %75 = arith.mulf %73, %74 : vector<16x128xf32>
    %76 = vector.broadcast %65 : vector<1x128xf32> to vector<16x128xf32>
    %77 = arith.addf %75, %76 : vector<16x128xf32>
    %cst_28 = arith.constant 0.000000e+00 : f32
    %78 = vector.broadcast %cst_28 : f32 to vector<16x128xf32>
    %79 = arith.maximumf %77, %78 : vector<16x128xf32>
    %80 = arith.truncf %79 : vector<16x128xf32> to vector<16x128xbf16>
    %c0_29 = arith.constant 0 : index
    %c0_30 = arith.constant 0 : index
    %c0_31 = arith.constant 0 : index
    %81 = vector.load %arg12[%c0_29, %c0_30, %c0_31] : memref<1x16x128xbf16, #tpu.memory_space<vmem>>, vector<1x16x128xbf16>
    %82 = vector.shape_cast %81 : vector<1x16x128xbf16> to vector<16x128xbf16>
    %83 = vector.shape_cast %80 : vector<16x128xbf16> to vector<1x16x128xbf16>
    tpu.vector_store %arg12[%c0_29, %c0_30, %c0_31], %83 {strides = array<i32>} : memref<1x16x128xbf16, #tpu.memory_space<vmem>>, vector<1x16x128xbf16>,
    return
  }
  func.func @transform_0(%arg0: i32, %arg1: i32) -> (i32, i32, i32) {
    %c0_i32 = arith.constant 0 : i32
    %c0_i32_0 = arith.constant 0 : i32
    %c0_i32_1 = arith.constant 0 : i32
    return %arg0, %c0_i32, %c0_i32_0 : i32, i32, i32
  }
  func.func @transform_1(%arg0: i32, %arg1: i32) -> (i32, i32) {
    %c0_i32 = arith.constant 0 : i32
    %c0_i32_0 = arith.constant 0 : i32
    %c0_i32_1 = arith.constant 0 : i32
    return %c0_i32, %c0_i32_0 : i32, i32
  }
  func.func @transform_2(%arg0: i32, %arg1: i32) -> (i32, i32) {
    %c0_i32 = arith.constant 0 : i32
    %c0_i32_0 = arith.constant 0 : i32
    %c0_i32_1 = arith.constant 0 : i32
    return %c0_i32, %c0_i32_0 : i32, i32
  }
  func.func @transform_3(%arg0: i32, %arg1: i32) -> (i32, i32) {
    %c0_i32 = arith.constant 0 : i32
    %c0_i32_0 = arith.constant 0 : i32
    %c0_i32_1 = arith.constant 0 : i32
    return %c0_i32, %c0_i32_0 : i32, i32
  }
  func.func @transform_4(%arg0: i32, %arg1: i32) -> (i32, i32) {
    %c0_i32 = arith.constant 0 : i32
    %c0_i32_0 = arith.constant 0 : i32
    %c0_i32_1 = arith.constant 0 : i32
    return %c0_i32, %c0_i32_0 : i32, i32
  }
  func.func @transform_5(%arg0: i32, %arg1: i32) -> (i32, i32) {
    %c0_i32 = arith.constant 0 : i32
    %c0_i32_0 = arith.constant 0 : i32
    %c0_i32_1 = arith.constant 0 : i32
    return %c0_i32, %c0_i32_0 : i32, i32
  }
  func.func @transform_6(%arg0: i32, %arg1: i32) -> (i32, i32) {
    %c0_i32 = arith.constant 0 : i32
    %c0_i32_0 = arith.constant 0 : i32
    %c0_i32_1 = arith.constant 0 : i32
    return %c0_i32, %c0_i32_0 : i32, i32
  }
  func.func @transform_7(%arg0: i32, %arg1: i32) -> (i32, i32) {
    %c0_i32 = arith.constant 0 : i32
    %c0_i32_0 = arith.constant 0 : i32
    %c0_i32_1 = arith.constant 0 : i32
    return %c0_i32, %c0_i32_0 : i32, i32
  }
  func.func @transform_8(%arg0: i32, %arg1: i32) -> (i32, i32) {
    %c0_i32 = arith.constant 0 : i32
    %c0_i32_0 = arith.constant 0 : i32
    %c0_i32_1 = arith.constant 0 : i32
    return %c0_i32, %c0_i32_0 : i32, i32
  }
  func.func @transform_9(%arg0: i32, %arg1: i32) -> (i32, i32) {
    %c0_i32 = arith.constant 0 : i32
    %c0_i32_0 = arith.constant 0 : i32
    %c0_i32_1 = arith.constant 0 : i32
    return %c0_i32, %c0_i32_0 : i32, i32
  }
  func.func @transform_10(%arg0: i32, %arg1: i32) -> (i32, i32, i32) {
    %c0_i32 = arith.constant 0 : i32
    %c0_i32_0 = arith.constant 0 : i32
    return %arg0, %arg1, %c0_i32 : i32, i32, i32
  }
}

module attributes {stable_mosaic.version = 11 : i64} {
  func.func @blstm_packed_kernel(%arg0: i32, %arg1: memref<16x2x512xbf16, #tpu.memory_space<vmem>>, %arg2: memref<128x512xf32, #tpu.memory_space<vmem>>, %arg3: memref<2x1xi32, #tpu.memory_space<vmem>>, %arg4: memref<16x2x128xf32, #tpu.memory_space<vmem>>, %arg5: memref<2x128xf32, #tpu.memory_space<vmem>>, %arg6: memref<2x128xf32, #tpu.memory_space<vmem>>) attributes {dimension_semantics = [#tpu.dimension_semantics<arbitrary>], iteration_bounds = array<i64: 1>, scalar_prefetch = 0 : i64, scratch_operands = 2 : i64, tpu.core_type = #tpu.core_type<tc>, window_params = [{transform_indices = @transform_0, window_bounds = array<i64: 16, 2, 512>}, {pipeline_mode = #tpu.pipeline_mode<synchronous>, transform_indices = @transform_1, window_bounds = array<i64: 128, 512>}, {pipeline_mode = #tpu.pipeline_mode<synchronous>, transform_indices = @transform_2, window_bounds = array<i64: 2, 1>}, {transform_indices = @transform_3, window_bounds = array<i64: 16, 2, 128>}]} {
    %c0_i32 = arith.constant 0 : i32
    %0 = arith.cmpi eq, %arg0, %c0_i32 : i32
    %1 = arith.extui %0 : i1 to i32
    %c0_i32_0 = arith.constant 0 : i32
    %2 = arith.cmpi ne, %1, %c0_i32_0 : i32
    scf.if %2 {
      %cst_356 = arith.constant 0.000000e+00 : f32
      %696 = vector.broadcast %cst_356 : f32 to vector<2x128xf32>
      %c0_357 = arith.constant 0 : index
      %c0_358 = arith.constant 0 : index
      %697 = vector.load %arg5[%c0_357, %c0_358] : memref<2x128xf32, #tpu.memory_space<vmem>>, vector<2x128xf32>
      tpu.vector_store %arg5[%c0_357, %c0_358], %696 {strides = array<i32>} : memref<2x128xf32, #tpu.memory_space<vmem>>, vector<2x128xf32>,
      %cst_359 = arith.constant 0.000000e+00 : f32
      %698 = vector.broadcast %cst_359 : f32 to vector<2x128xf32>
      %c0_360 = arith.constant 0 : index
      %c0_361 = arith.constant 0 : index
      %699 = vector.load %arg6[%c0_360, %c0_361] : memref<2x128xf32, #tpu.memory_space<vmem>>, vector<2x128xf32>
      tpu.vector_store %arg6[%c0_360, %c0_361], %698 {strides = array<i32>} : memref<2x128xf32, #tpu.memory_space<vmem>>, vector<2x128xf32>,
    } else {
    }
    %c0 = arith.constant 0 : index
    %c0_1 = arith.constant 0 : index
    %3 = vector.load %arg2[%c0, %c0_1] : memref<128x512xf32, #tpu.memory_space<vmem>>, vector<128x512xf32>
    %c0_2 = arith.constant 0 : index
    %c0_3 = arith.constant 0 : index
    %4 = vector.load %arg3[%c0_2, %c0_3] : memref<2x1xi32, #tpu.memory_space<vmem>>, vector<2x1xi32>
    %5 = tpu.iota {dimensions = array<i32: 1>} : vector<1x128xi32>
    %c64_i32 = arith.constant 64 : i32
    %6 = vector.broadcast %c64_i32 : i32 to vector<1x128xi32>
    %7 = arith.cmpi slt, %5, %6 : vector<1x128xi32>
    %c16_i32 = arith.constant 16 : i32
    %8 = arith.muli %arg0, %c16_i32 : i32
    %c0_i32_4 = arith.constant 0 : i32
    %9 = arith.addi %8, %c0_i32_4 : i32
    %c0_5 = arith.constant 0 : index
    %c0_6 = arith.constant 0 : index
    %c0_7 = arith.constant 0 : index
    %10 = vector.load %arg1[%c0_5, %c0_6, %c0_7] : memref<16x2x512xbf16, #tpu.memory_space<vmem>>, vector<1x2x512xbf16>
    %11 = vector.shape_cast %10 : vector<1x2x512xbf16> to vector<2x512xbf16>
    %12 = arith.extf %11 : vector<2x512xbf16> to vector<2x512xf32>
    %c0_8 = arith.constant 0 : index
    %c0_9 = arith.constant 0 : index
    %13 = vector.load %arg5[%c0_8, %c0_9] : memref<2x128xf32, #tpu.memory_space<vmem>>, vector<2x128xf32>
    %cst = arith.constant dense<0.000000e+00> : vector<2x512xf32>
    %14 = tpu.matmul %13, %3, %cst {dimension_numbers = #tpu.dot_dimension_numbers<[1], [0], [0], [1], [0, 0, 1, 1], [], []>} : vector<2x128xf32>, vector<128x512xf32>, vector<2x512xf32> -> vector<2x512xf32>
    %15 = arith.addf %12, %14 : vector<2x512xf32>
    %16 = vector.extract_strided_slice %15 {offsets = [0, 0], sizes = [2, 384], strides = [1, 1]} : vector<2x512xf32> to vector<2x384xf32>
    %17 = arith.negf %16 : vector<2x384xf32>
    %18 = math.exp %17 : vector<2x384xf32>
    %cst_10 = arith.constant 1.000000e+00 : f32
    %19 = vector.broadcast %cst_10 : f32 to vector<2x384xf32>
    %20 = arith.addf %19, %18 : vector<2x384xf32>
    %21 = arith.divf %19, %20 : vector<2x384xf32>
    %22 = vector.extract_strided_slice %21 {offsets = [0, 0], sizes = [2, 128], strides = [1, 1]} : vector<2x384xf32> to vector<2x128xf32>
    %23 = vector.extract_strided_slice %21 {offsets = [0, 128], sizes = [2, 128], strides = [1, 1]} : vector<2x384xf32> to vector<2x128xf32>
    %24 = vector.extract_strided_slice %21 {offsets = [0, 256], sizes = [2, 128], strides = [1, 1]} : vector<2x384xf32> to vector<2x128xf32>
    %25 = vector.extract_strided_slice %15 {offsets = [0, 384], sizes = [2, 128], strides = [1, 1]} : vector<2x512xf32> to vector<2x128xf32>
    %26 = math.tanh %25 : vector<2x128xf32>
    %c0_11 = arith.constant 0 : index
    %c0_12 = arith.constant 0 : index
    %27 = vector.load %arg6[%c0_11, %c0_12] : memref<2x128xf32, #tpu.memory_space<vmem>>, vector<2x128xf32>
    %28 = arith.mulf %23, %27 : vector<2x128xf32>
    %29 = arith.mulf %22, %26 : vector<2x128xf32>
    %30 = arith.addf %28, %29 : vector<2x128xf32>
    %31 = math.tanh %30 : vector<2x128xf32>
    %32 = arith.mulf %24, %31 : vector<2x128xf32>
    %c15_i32 = arith.constant 15 : i32
    %33 = arith.subi %c15_i32, %9 : i32
    %34 = vector.broadcast %9 : i32 to vector<1x128xi32>
    %35 = vector.broadcast %33 : i32 to vector<1x128xi32>
    %36 = arith.select %7, %34, %35 : vector<1x128xi1>, vector<1x128xi32>
    %37 = vector.broadcast %36 : vector<1x128xi32> to vector<2x128xi32>
    %38 = vector.broadcast %4 : vector<2x1xi32> to vector<2x128xi32>
    %39 = arith.cmpi slt, %37, %38 : vector<2x128xi32>
    %c0_13 = arith.constant 0 : index
    %c0_14 = arith.constant 0 : index
    %40 = vector.load %arg5[%c0_13, %c0_14] : memref<2x128xf32, #tpu.memory_space<vmem>>, vector<2x128xf32>
    %41 = arith.select %39, %32, %40 : vector<2x128xi1>, vector<2x128xf32>
    %c0_15 = arith.constant 0 : index
    %c0_16 = arith.constant 0 : index
    %42 = vector.load %arg5[%c0_15, %c0_16] : memref<2x128xf32, #tpu.memory_space<vmem>>, vector<2x128xf32>
    tpu.vector_store %arg5[%c0_15, %c0_16], %41 {strides = array<i32>} : memref<2x128xf32, #tpu.memory_space<vmem>>, vector<2x128xf32>,
    %c0_17 = arith.constant 0 : index
    %c0_18 = arith.constant 0 : index
    %43 = vector.load %arg6[%c0_17, %c0_18] : memref<2x128xf32, #tpu.memory_space<vmem>>, vector<2x128xf32>
    %44 = arith.select %39, %30, %43 : vector<2x128xi1>, vector<2x128xf32>
    %c0_19 = arith.constant 0 : index
    %c0_20 = arith.constant 0 : index
    %45 = vector.load %arg6[%c0_19, %c0_20] : memref<2x128xf32, #tpu.memory_space<vmem>>, vector<2x128xf32>
    tpu.vector_store %arg6[%c0_19, %c0_20], %44 {strides = array<i32>} : memref<2x128xf32, #tpu.memory_space<vmem>>, vector<2x128xf32>,
    %cst_21 = arith.constant 0.000000e+00 : f32
    %46 = vector.broadcast %cst_21 : f32 to vector<2x128xf32>
    %47 = arith.select %39, %32, %46 : vector<2x128xi1>, vector<2x128xf32>
    %c0_22 = arith.constant 0 : index
    %c0_23 = arith.constant 0 : index
    %c0_24 = arith.constant 0 : index
    %48 = vector.load %arg4[%c0_22, %c0_23, %c0_24] : memref<16x2x128xf32, #tpu.memory_space<vmem>>, vector<1x2x128xf32>
    %49 = vector.shape_cast %48 : vector<1x2x128xf32> to vector<2x128xf32>
    %50 = vector.shape_cast %47 : vector<2x128xf32> to vector<1x2x128xf32>
    tpu.vector_store %arg4[%c0_22, %c0_23, %c0_24], %50 {strides = array<i32>} : memref<16x2x128xf32, #tpu.memory_space<vmem>>, vector<1x2x128xf32>,
    %c16_i32_25 = arith.constant 16 : i32
    %51 = arith.muli %arg0, %c16_i32_25 : i32
    %c1_i32 = arith.constant 1 : i32
    %52 = arith.addi %51, %c1_i32 : i32
    %c1 = arith.constant 1 : index
    %c0_26 = arith.constant 0 : index
    %c0_27 = arith.constant 0 : index
    %53 = vector.load %arg1[%c1, %c0_26, %c0_27] : memref<16x2x512xbf16, #tpu.memory_space<vmem>>, vector<1x2x512xbf16>
    %54 = vector.shape_cast %53 : vector<1x2x512xbf16> to vector<2x512xbf16>
    %55 = arith.extf %54 : vector<2x512xbf16> to vector<2x512xf32>
    %c0_28 = arith.constant 0 : index
    %c0_29 = arith.constant 0 : index
    %56 = vector.load %arg5[%c0_28, %c0_29] : memref<2x128xf32, #tpu.memory_space<vmem>>, vector<2x128xf32>
    %cst_30 = arith.constant dense<0.000000e+00> : vector<2x512xf32>
    %57 = tpu.matmul %56, %3, %cst_30 {dimension_numbers = #tpu.dot_dimension_numbers<[1], [0], [0], [1], [0, 0, 1, 1], [], []>} : vector<2x128xf32>, vector<128x512xf32>, vector<2x512xf32> -> vector<2x512xf32>
    %58 = arith.addf %55, %57 : vector<2x512xf32>
    %59 = vector.extract_strided_slice %58 {offsets = [0, 0], sizes = [2, 384], strides = [1, 1]} : vector<2x512xf32> to vector<2x384xf32>
    %60 = arith.negf %59 : vector<2x384xf32>
    %61 = math.exp %60 : vector<2x384xf32>
    %cst_31 = arith.constant 1.000000e+00 : f32
    %62 = vector.broadcast %cst_31 : f32 to vector<2x384xf32>
    %63 = arith.addf %62, %61 : vector<2x384xf32>
    %64 = arith.divf %62, %63 : vector<2x384xf32>
    %65 = vector.extract_strided_slice %64 {offsets = [0, 0], sizes = [2, 128], strides = [1, 1]} : vector<2x384xf32> to vector<2x128xf32>
    %66 = vector.extract_strided_slice %64 {offsets = [0, 128], sizes = [2, 128], strides = [1, 1]} : vector<2x384xf32> to vector<2x128xf32>
    %67 = vector.extract_strided_slice %64 {offsets = [0, 256], sizes = [2, 128], strides = [1, 1]} : vector<2x384xf32> to vector<2x128xf32>
    %68 = vector.extract_strided_slice %58 {offsets = [0, 384], sizes = [2, 128], strides = [1, 1]} : vector<2x512xf32> to vector<2x128xf32>
    %69 = math.tanh %68 : vector<2x128xf32>
    %c0_32 = arith.constant 0 : index
    %c0_33 = arith.constant 0 : index
    %70 = vector.load %arg6[%c0_32, %c0_33] : memref<2x128xf32, #tpu.memory_space<vmem>>, vector<2x128xf32>
    %71 = arith.mulf %66, %70 : vector<2x128xf32>
    %72 = arith.mulf %65, %69 : vector<2x128xf32>
    %73 = arith.addf %71, %72 : vector<2x128xf32>
    %74 = math.tanh %73 : vector<2x128xf32>
    %75 = arith.mulf %67, %74 : vector<2x128xf32>
    %c15_i32_34 = arith.constant 15 : i32
    %76 = arith.subi %c15_i32_34, %52 : i32
    %77 = vector.broadcast %52 : i32 to vector<1x128xi32>
    %78 = vector.broadcast %76 : i32 to vector<1x128xi32>
    %79 = arith.select %7, %77, %78 : vector<1x128xi1>, vector<1x128xi32>
    %80 = vector.broadcast %79 : vector<1x128xi32> to vector<2x128xi32>
    %81 = vector.broadcast %4 : vector<2x1xi32> to vector<2x128xi32>
    %82 = arith.cmpi slt, %80, %81 : vector<2x128xi32>
    %c0_35 = arith.constant 0 : index
    %c0_36 = arith.constant 0 : index
    %83 = vector.load %arg5[%c0_35, %c0_36] : memref<2x128xf32, #tpu.memory_space<vmem>>, vector<2x128xf32>
    %84 = arith.select %82, %75, %83 : vector<2x128xi1>, vector<2x128xf32>
    %c0_37 = arith.constant 0 : index
    %c0_38 = arith.constant 0 : index
    %85 = vector.load %arg5[%c0_37, %c0_38] : memref<2x128xf32, #tpu.memory_space<vmem>>, vector<2x128xf32>
    tpu.vector_store %arg5[%c0_37, %c0_38], %84 {strides = array<i32>} : memref<2x128xf32, #tpu.memory_space<vmem>>, vector<2x128xf32>,
    %c0_39 = arith.constant 0 : index
    %c0_40 = arith.constant 0 : index
    %86 = vector.load %arg6[%c0_39, %c0_40] : memref<2x128xf32, #tpu.memory_space<vmem>>, vector<2x128xf32>
    %87 = arith.select %82, %73, %86 : vector<2x128xi1>, vector<2x128xf32>
    %c0_41 = arith.constant 0 : index
    %c0_42 = arith.constant 0 : index
    %88 = vector.load %arg6[%c0_41, %c0_42] : memref<2x128xf32, #tpu.memory_space<vmem>>, vector<2x128xf32>
    tpu.vector_store %arg6[%c0_41, %c0_42], %87 {strides = array<i32>} : memref<2x128xf32, #tpu.memory_space<vmem>>, vector<2x128xf32>,
    %cst_43 = arith.constant 0.000000e+00 : f32
    %89 = vector.broadcast %cst_43 : f32 to vector<2x128xf32>
    %90 = arith.select %82, %75, %89 : vector<2x128xi1>, vector<2x128xf32>
    %c1_44 = arith.constant 1 : index
    %c0_45 = arith.constant 0 : index
    %c0_46 = arith.constant 0 : index
    %91 = vector.load %arg4[%c1_44, %c0_45, %c0_46] : memref<16x2x128xf32, #tpu.memory_space<vmem>>, vector<1x2x128xf32>
    %92 = vector.shape_cast %91 : vector<1x2x128xf32> to vector<2x128xf32>
    %93 = vector.shape_cast %90 : vector<2x128xf32> to vector<1x2x128xf32>
    tpu.vector_store %arg4[%c1_44, %c0_45, %c0_46], %93 {strides = array<i32>} : memref<16x2x128xf32, #tpu.memory_space<vmem>>, vector<1x2x128xf32>,
    %c16_i32_47 = arith.constant 16 : i32
    %94 = arith.muli %arg0, %c16_i32_47 : i32
    %c2_i32 = arith.constant 2 : i32
    %95 = arith.addi %94, %c2_i32 : i32
    %c2 = arith.constant 2 : index
    %c0_48 = arith.constant 0 : index
    %c0_49 = arith.constant 0 : index
    %96 = vector.load %arg1[%c2, %c0_48, %c0_49] : memref<16x2x512xbf16, #tpu.memory_space<vmem>>, vector<1x2x512xbf16>
    %97 = vector.shape_cast %96 : vector<1x2x512xbf16> to vector<2x512xbf16>
    %98 = arith.extf %97 : vector<2x512xbf16> to vector<2x512xf32>
    %c0_50 = arith.constant 0 : index
    %c0_51 = arith.constant 0 : index
    %99 = vector.load %arg5[%c0_50, %c0_51] : memref<2x128xf32, #tpu.memory_space<vmem>>, vector<2x128xf32>
    %cst_52 = arith.constant dense<0.000000e+00> : vector<2x512xf32>
    %100 = tpu.matmul %99, %3, %cst_52 {dimension_numbers = #tpu.dot_dimension_numbers<[1], [0], [0], [1], [0, 0, 1, 1], [], []>} : vector<2x128xf32>, vector<128x512xf32>, vector<2x512xf32> -> vector<2x512xf32>
    %101 = arith.addf %98, %100 : vector<2x512xf32>
    %102 = vector.extract_strided_slice %101 {offsets = [0, 0], sizes = [2, 384], strides = [1, 1]} : vector<2x512xf32> to vector<2x384xf32>
    %103 = arith.negf %102 : vector<2x384xf32>
    %104 = math.exp %103 : vector<2x384xf32>
    %cst_53 = arith.constant 1.000000e+00 : f32
    %105 = vector.broadcast %cst_53 : f32 to vector<2x384xf32>
    %106 = arith.addf %105, %104 : vector<2x384xf32>
    %107 = arith.divf %105, %106 : vector<2x384xf32>
    %108 = vector.extract_strided_slice %107 {offsets = [0, 0], sizes = [2, 128], strides = [1, 1]} : vector<2x384xf32> to vector<2x128xf32>
    %109 = vector.extract_strided_slice %107 {offsets = [0, 128], sizes = [2, 128], strides = [1, 1]} : vector<2x384xf32> to vector<2x128xf32>
    %110 = vector.extract_strided_slice %107 {offsets = [0, 256], sizes = [2, 128], strides = [1, 1]} : vector<2x384xf32> to vector<2x128xf32>
    %111 = vector.extract_strided_slice %101 {offsets = [0, 384], sizes = [2, 128], strides = [1, 1]} : vector<2x512xf32> to vector<2x128xf32>
    %112 = math.tanh %111 : vector<2x128xf32>
    %c0_54 = arith.constant 0 : index
    %c0_55 = arith.constant 0 : index
    %113 = vector.load %arg6[%c0_54, %c0_55] : memref<2x128xf32, #tpu.memory_space<vmem>>, vector<2x128xf32>
    %114 = arith.mulf %109, %113 : vector<2x128xf32>
    %115 = arith.mulf %108, %112 : vector<2x128xf32>
    %116 = arith.addf %114, %115 : vector<2x128xf32>
    %117 = math.tanh %116 : vector<2x128xf32>
    %118 = arith.mulf %110, %117 : vector<2x128xf32>
    %c15_i32_56 = arith.constant 15 : i32
    %119 = arith.subi %c15_i32_56, %95 : i32
    %120 = vector.broadcast %95 : i32 to vector<1x128xi32>
    %121 = vector.broadcast %119 : i32 to vector<1x128xi32>
    %122 = arith.select %7, %120, %121 : vector<1x128xi1>, vector<1x128xi32>
    %123 = vector.broadcast %122 : vector<1x128xi32> to vector<2x128xi32>
    %124 = vector.broadcast %4 : vector<2x1xi32> to vector<2x128xi32>
    %125 = arith.cmpi slt, %123, %124 : vector<2x128xi32>
    %c0_57 = arith.constant 0 : index
    %c0_58 = arith.constant 0 : index
    %126 = vector.load %arg5[%c0_57, %c0_58] : memref<2x128xf32, #tpu.memory_space<vmem>>, vector<2x128xf32>
    %127 = arith.select %125, %118, %126 : vector<2x128xi1>, vector<2x128xf32>
    %c0_59 = arith.constant 0 : index
    %c0_60 = arith.constant 0 : index
    %128 = vector.load %arg5[%c0_59, %c0_60] : memref<2x128xf32, #tpu.memory_space<vmem>>, vector<2x128xf32>
    tpu.vector_store %arg5[%c0_59, %c0_60], %127 {strides = array<i32>} : memref<2x128xf32, #tpu.memory_space<vmem>>, vector<2x128xf32>,
    %c0_61 = arith.constant 0 : index
    %c0_62 = arith.constant 0 : index
    %129 = vector.load %arg6[%c0_61, %c0_62] : memref<2x128xf32, #tpu.memory_space<vmem>>, vector<2x128xf32>
    %130 = arith.select %125, %116, %129 : vector<2x128xi1>, vector<2x128xf32>
    %c0_63 = arith.constant 0 : index
    %c0_64 = arith.constant 0 : index
    %131 = vector.load %arg6[%c0_63, %c0_64] : memref<2x128xf32, #tpu.memory_space<vmem>>, vector<2x128xf32>
    tpu.vector_store %arg6[%c0_63, %c0_64], %130 {strides = array<i32>} : memref<2x128xf32, #tpu.memory_space<vmem>>, vector<2x128xf32>,
    %cst_65 = arith.constant 0.000000e+00 : f32
    %132 = vector.broadcast %cst_65 : f32 to vector<2x128xf32>
    %133 = arith.select %125, %118, %132 : vector<2x128xi1>, vector<2x128xf32>
    %c2_66 = arith.constant 2 : index
    %c0_67 = arith.constant 0 : index
    %c0_68 = arith.constant 0 : index
    %134 = vector.load %arg4[%c2_66, %c0_67, %c0_68] : memref<16x2x128xf32, #tpu.memory_space<vmem>>, vector<1x2x128xf32>
    %135 = vector.shape_cast %134 : vector<1x2x128xf32> to vector<2x128xf32>
    %136 = vector.shape_cast %133 : vector<2x128xf32> to vector<1x2x128xf32>
    tpu.vector_store %arg4[%c2_66, %c0_67, %c0_68], %136 {strides = array<i32>} : memref<16x2x128xf32, #tpu.memory_space<vmem>>, vector<1x2x128xf32>,
    %c16_i32_69 = arith.constant 16 : i32
    %137 = arith.muli %arg0, %c16_i32_69 : i32
    %c3_i32 = arith.constant 3 : i32
    %138 = arith.addi %137, %c3_i32 : i32
    %c3 = arith.constant 3 : index
    %c0_70 = arith.constant 0 : index
    %c0_71 = arith.constant 0 : index
    %139 = vector.load %arg1[%c3, %c0_70, %c0_71] : memref<16x2x512xbf16, #tpu.memory_space<vmem>>, vector<1x2x512xbf16>
    %140 = vector.shape_cast %139 : vector<1x2x512xbf16> to vector<2x512xbf16>
    %141 = arith.extf %140 : vector<2x512xbf16> to vector<2x512xf32>
    %c0_72 = arith.constant 0 : index
    %c0_73 = arith.constant 0 : index
    %142 = vector.load %arg5[%c0_72, %c0_73] : memref<2x128xf32, #tpu.memory_space<vmem>>, vector<2x128xf32>
    %cst_74 = arith.constant dense<0.000000e+00> : vector<2x512xf32>
    %143 = tpu.matmul %142, %3, %cst_74 {dimension_numbers = #tpu.dot_dimension_numbers<[1], [0], [0], [1], [0, 0, 1, 1], [], []>} : vector<2x128xf32>, vector<128x512xf32>, vector<2x512xf32> -> vector<2x512xf32>
    %144 = arith.addf %141, %143 : vector<2x512xf32>
    %145 = vector.extract_strided_slice %144 {offsets = [0, 0], sizes = [2, 384], strides = [1, 1]} : vector<2x512xf32> to vector<2x384xf32>
    %146 = arith.negf %145 : vector<2x384xf32>
    %147 = math.exp %146 : vector<2x384xf32>
    %cst_75 = arith.constant 1.000000e+00 : f32
    %148 = vector.broadcast %cst_75 : f32 to vector<2x384xf32>
    %149 = arith.addf %148, %147 : vector<2x384xf32>
    %150 = arith.divf %148, %149 : vector<2x384xf32>
    %151 = vector.extract_strided_slice %150 {offsets = [0, 0], sizes = [2, 128], strides = [1, 1]} : vector<2x384xf32> to vector<2x128xf32>
    %152 = vector.extract_strided_slice %150 {offsets = [0, 128], sizes = [2, 128], strides = [1, 1]} : vector<2x384xf32> to vector<2x128xf32>
    %153 = vector.extract_strided_slice %150 {offsets = [0, 256], sizes = [2, 128], strides = [1, 1]} : vector<2x384xf32> to vector<2x128xf32>
    %154 = vector.extract_strided_slice %144 {offsets = [0, 384], sizes = [2, 128], strides = [1, 1]} : vector<2x512xf32> to vector<2x128xf32>
    %155 = math.tanh %154 : vector<2x128xf32>
    %c0_76 = arith.constant 0 : index
    %c0_77 = arith.constant 0 : index
    %156 = vector.load %arg6[%c0_76, %c0_77] : memref<2x128xf32, #tpu.memory_space<vmem>>, vector<2x128xf32>
    %157 = arith.mulf %152, %156 : vector<2x128xf32>
    %158 = arith.mulf %151, %155 : vector<2x128xf32>
    %159 = arith.addf %157, %158 : vector<2x128xf32>
    %160 = math.tanh %159 : vector<2x128xf32>
    %161 = arith.mulf %153, %160 : vector<2x128xf32>
    %c15_i32_78 = arith.constant 15 : i32
    %162 = arith.subi %c15_i32_78, %138 : i32
    %163 = vector.broadcast %138 : i32 to vector<1x128xi32>
    %164 = vector.broadcast %162 : i32 to vector<1x128xi32>
    %165 = arith.select %7, %163, %164 : vector<1x128xi1>, vector<1x128xi32>
    %166 = vector.broadcast %165 : vector<1x128xi32> to vector<2x128xi32>
    %167 = vector.broadcast %4 : vector<2x1xi32> to vector<2x128xi32>
    %168 = arith.cmpi slt, %166, %167 : vector<2x128xi32>
    %c0_79 = arith.constant 0 : index
    %c0_80 = arith.constant 0 : index
    %169 = vector.load %arg5[%c0_79, %c0_80] : memref<2x128xf32, #tpu.memory_space<vmem>>, vector<2x128xf32>
    %170 = arith.select %168, %161, %169 : vector<2x128xi1>, vector<2x128xf32>
    %c0_81 = arith.constant 0 : index
    %c0_82 = arith.constant 0 : index
    %171 = vector.load %arg5[%c0_81, %c0_82] : memref<2x128xf32, #tpu.memory_space<vmem>>, vector<2x128xf32>
    tpu.vector_store %arg5[%c0_81, %c0_82], %170 {strides = array<i32>} : memref<2x128xf32, #tpu.memory_space<vmem>>, vector<2x128xf32>,
    %c0_83 = arith.constant 0 : index
    %c0_84 = arith.constant 0 : index
    %172 = vector.load %arg6[%c0_83, %c0_84] : memref<2x128xf32, #tpu.memory_space<vmem>>, vector<2x128xf32>
    %173 = arith.select %168, %159, %172 : vector<2x128xi1>, vector<2x128xf32>
    %c0_85 = arith.constant 0 : index
    %c0_86 = arith.constant 0 : index
    %174 = vector.load %arg6[%c0_85, %c0_86] : memref<2x128xf32, #tpu.memory_space<vmem>>, vector<2x128xf32>
    tpu.vector_store %arg6[%c0_85, %c0_86], %173 {strides = array<i32>} : memref<2x128xf32, #tpu.memory_space<vmem>>, vector<2x128xf32>,
    %cst_87 = arith.constant 0.000000e+00 : f32
    %175 = vector.broadcast %cst_87 : f32 to vector<2x128xf32>
    %176 = arith.select %168, %161, %175 : vector<2x128xi1>, vector<2x128xf32>
    %c3_88 = arith.constant 3 : index
    %c0_89 = arith.constant 0 : index
    %c0_90 = arith.constant 0 : index
    %177 = vector.load %arg4[%c3_88, %c0_89, %c0_90] : memref<16x2x128xf32, #tpu.memory_space<vmem>>, vector<1x2x128xf32>
    %178 = vector.shape_cast %177 : vector<1x2x128xf32> to vector<2x128xf32>
    %179 = vector.shape_cast %176 : vector<2x128xf32> to vector<1x2x128xf32>
    tpu.vector_store %arg4[%c3_88, %c0_89, %c0_90], %179 {strides = array<i32>} : memref<16x2x128xf32, #tpu.memory_space<vmem>>, vector<1x2x128xf32>,
    %c16_i32_91 = arith.constant 16 : i32
    %180 = arith.muli %arg0, %c16_i32_91 : i32
    %c4_i32 = arith.constant 4 : i32
    %181 = arith.addi %180, %c4_i32 : i32
    %c4 = arith.constant 4 : index
    %c0_92 = arith.constant 0 : index
    %c0_93 = arith.constant 0 : index
    %182 = vector.load %arg1[%c4, %c0_92, %c0_93] : memref<16x2x512xbf16, #tpu.memory_space<vmem>>, vector<1x2x512xbf16>
    %183 = vector.shape_cast %182 : vector<1x2x512xbf16> to vector<2x512xbf16>
    %184 = arith.extf %183 : vector<2x512xbf16> to vector<2x512xf32>
    %c0_94 = arith.constant 0 : index
    %c0_95 = arith.constant 0 : index
    %185 = vector.load %arg5[%c0_94, %c0_95] : memref<2x128xf32, #tpu.memory_space<vmem>>, vector<2x128xf32>
    %cst_96 = arith.constant dense<0.000000e+00> : vector<2x512xf32>
    %186 = tpu.matmul %185, %3, %cst_96 {dimension_numbers = #tpu.dot_dimension_numbers<[1], [0], [0], [1], [0, 0, 1, 1], [], []>} : vector<2x128xf32>, vector<128x512xf32>, vector<2x512xf32> -> vector<2x512xf32>
    %187 = arith.addf %184, %186 : vector<2x512xf32>
    %188 = vector.extract_strided_slice %187 {offsets = [0, 0], sizes = [2, 384], strides = [1, 1]} : vector<2x512xf32> to vector<2x384xf32>
    %189 = arith.negf %188 : vector<2x384xf32>
    %190 = math.exp %189 : vector<2x384xf32>
    %cst_97 = arith.constant 1.000000e+00 : f32
    %191 = vector.broadcast %cst_97 : f32 to vector<2x384xf32>
    %192 = arith.addf %191, %190 : vector<2x384xf32>
    %193 = arith.divf %191, %192 : vector<2x384xf32>
    %194 = vector.extract_strided_slice %193 {offsets = [0, 0], sizes = [2, 128], strides = [1, 1]} : vector<2x384xf32> to vector<2x128xf32>
    %195 = vector.extract_strided_slice %193 {offsets = [0, 128], sizes = [2, 128], strides = [1, 1]} : vector<2x384xf32> to vector<2x128xf32>
    %196 = vector.extract_strided_slice %193 {offsets = [0, 256], sizes = [2, 128], strides = [1, 1]} : vector<2x384xf32> to vector<2x128xf32>
    %197 = vector.extract_strided_slice %187 {offsets = [0, 384], sizes = [2, 128], strides = [1, 1]} : vector<2x512xf32> to vector<2x128xf32>
    %198 = math.tanh %197 : vector<2x128xf32>
    %c0_98 = arith.constant 0 : index
    %c0_99 = arith.constant 0 : index
    %199 = vector.load %arg6[%c0_98, %c0_99] : memref<2x128xf32, #tpu.memory_space<vmem>>, vector<2x128xf32>
    %200 = arith.mulf %195, %199 : vector<2x128xf32>
    %201 = arith.mulf %194, %198 : vector<2x128xf32>
    %202 = arith.addf %200, %201 : vector<2x128xf32>
    %203 = math.tanh %202 : vector<2x128xf32>
    %204 = arith.mulf %196, %203 : vector<2x128xf32>
    %c15_i32_100 = arith.constant 15 : i32
    %205 = arith.subi %c15_i32_100, %181 : i32
    %206 = vector.broadcast %181 : i32 to vector<1x128xi32>
    %207 = vector.broadcast %205 : i32 to vector<1x128xi32>
    %208 = arith.select %7, %206, %207 : vector<1x128xi1>, vector<1x128xi32>
    %209 = vector.broadcast %208 : vector<1x128xi32> to vector<2x128xi32>
    %210 = vector.broadcast %4 : vector<2x1xi32> to vector<2x128xi32>
    %211 = arith.cmpi slt, %209, %210 : vector<2x128xi32>
    %c0_101 = arith.constant 0 : index
    %c0_102 = arith.constant 0 : index
    %212 = vector.load %arg5[%c0_101, %c0_102] : memref<2x128xf32, #tpu.memory_space<vmem>>, vector<2x128xf32>
    %213 = arith.select %211, %204, %212 : vector<2x128xi1>, vector<2x128xf32>
    %c0_103 = arith.constant 0 : index
    %c0_104 = arith.constant 0 : index
    %214 = vector.load %arg5[%c0_103, %c0_104] : memref<2x128xf32, #tpu.memory_space<vmem>>, vector<2x128xf32>
    tpu.vector_store %arg5[%c0_103, %c0_104], %213 {strides = array<i32>} : memref<2x128xf32, #tpu.memory_space<vmem>>, vector<2x128xf32>,
    %c0_105 = arith.constant 0 : index
    %c0_106 = arith.constant 0 : index
    %215 = vector.load %arg6[%c0_105, %c0_106] : memref<2x128xf32, #tpu.memory_space<vmem>>, vector<2x128xf32>
    %216 = arith.select %211, %202, %215 : vector<2x128xi1>, vector<2x128xf32>
    %c0_107 = arith.constant 0 : index
    %c0_108 = arith.constant 0 : index
    %217 = vector.load %arg6[%c0_107, %c0_108] : memref<2x128xf32, #tpu.memory_space<vmem>>, vector<2x128xf32>
    tpu.vector_store %arg6[%c0_107, %c0_108], %216 {strides = array<i32>} : memref<2x128xf32, #tpu.memory_space<vmem>>, vector<2x128xf32>,
    %cst_109 = arith.constant 0.000000e+00 : f32
    %218 = vector.broadcast %cst_109 : f32 to vector<2x128xf32>
    %219 = arith.select %211, %204, %218 : vector<2x128xi1>, vector<2x128xf32>
    %c4_110 = arith.constant 4 : index
    %c0_111 = arith.constant 0 : index
    %c0_112 = arith.constant 0 : index
    %220 = vector.load %arg4[%c4_110, %c0_111, %c0_112] : memref<16x2x128xf32, #tpu.memory_space<vmem>>, vector<1x2x128xf32>
    %221 = vector.shape_cast %220 : vector<1x2x128xf32> to vector<2x128xf32>
    %222 = vector.shape_cast %219 : vector<2x128xf32> to vector<1x2x128xf32>
    tpu.vector_store %arg4[%c4_110, %c0_111, %c0_112], %222 {strides = array<i32>} : memref<16x2x128xf32, #tpu.memory_space<vmem>>, vector<1x2x128xf32>,
    %c16_i32_113 = arith.constant 16 : i32
    %223 = arith.muli %arg0, %c16_i32_113 : i32
    %c5_i32 = arith.constant 5 : i32
    %224 = arith.addi %223, %c5_i32 : i32
    %c5 = arith.constant 5 : index
    %c0_114 = arith.constant 0 : index
    %c0_115 = arith.constant 0 : index
    %225 = vector.load %arg1[%c5, %c0_114, %c0_115] : memref<16x2x512xbf16, #tpu.memory_space<vmem>>, vector<1x2x512xbf16>
    %226 = vector.shape_cast %225 : vector<1x2x512xbf16> to vector<2x512xbf16>
    %227 = arith.extf %226 : vector<2x512xbf16> to vector<2x512xf32>
    %c0_116 = arith.constant 0 : index
    %c0_117 = arith.constant 0 : index
    %228 = vector.load %arg5[%c0_116, %c0_117] : memref<2x128xf32, #tpu.memory_space<vmem>>, vector<2x128xf32>
    %cst_118 = arith.constant dense<0.000000e+00> : vector<2x512xf32>
    %229 = tpu.matmul %228, %3, %cst_118 {dimension_numbers = #tpu.dot_dimension_numbers<[1], [0], [0], [1], [0, 0, 1, 1], [], []>} : vector<2x128xf32>, vector<128x512xf32>, vector<2x512xf32> -> vector<2x512xf32>
    %230 = arith.addf %227, %229 : vector<2x512xf32>
    %231 = vector.extract_strided_slice %230 {offsets = [0, 0], sizes = [2, 384], strides = [1, 1]} : vector<2x512xf32> to vector<2x384xf32>
    %232 = arith.negf %231 : vector<2x384xf32>
    %233 = math.exp %232 : vector<2x384xf32>
    %cst_119 = arith.constant 1.000000e+00 : f32
    %234 = vector.broadcast %cst_119 : f32 to vector<2x384xf32>
    %235 = arith.addf %234, %233 : vector<2x384xf32>
    %236 = arith.divf %234, %235 : vector<2x384xf32>
    %237 = vector.extract_strided_slice %236 {offsets = [0, 0], sizes = [2, 128], strides = [1, 1]} : vector<2x384xf32> to vector<2x128xf32>
    %238 = vector.extract_strided_slice %236 {offsets = [0, 128], sizes = [2, 128], strides = [1, 1]} : vector<2x384xf32> to vector<2x128xf32>
    %239 = vector.extract_strided_slice %236 {offsets = [0, 256], sizes = [2, 128], strides = [1, 1]} : vector<2x384xf32> to vector<2x128xf32>
    %240 = vector.extract_strided_slice %230 {offsets = [0, 384], sizes = [2, 128], strides = [1, 1]} : vector<2x512xf32> to vector<2x128xf32>
    %241 = math.tanh %240 : vector<2x128xf32>
    %c0_120 = arith.constant 0 : index
    %c0_121 = arith.constant 0 : index
    %242 = vector.load %arg6[%c0_120, %c0_121] : memref<2x128xf32, #tpu.memory_space<vmem>>, vector<2x128xf32>
    %243 = arith.mulf %238, %242 : vector<2x128xf32>
    %244 = arith.mulf %237, %241 : vector<2x128xf32>
    %245 = arith.addf %243, %244 : vector<2x128xf32>
    %246 = math.tanh %245 : vector<2x128xf32>
    %247 = arith.mulf %239, %246 : vector<2x128xf32>
    %c15_i32_122 = arith.constant 15 : i32
    %248 = arith.subi %c15_i32_122, %224 : i32
    %249 = vector.broadcast %224 : i32 to vector<1x128xi32>
    %250 = vector.broadcast %248 : i32 to vector<1x128xi32>
    %251 = arith.select %7, %249, %250 : vector<1x128xi1>, vector<1x128xi32>
    %252 = vector.broadcast %251 : vector<1x128xi32> to vector<2x128xi32>
    %253 = vector.broadcast %4 : vector<2x1xi32> to vector<2x128xi32>
    %254 = arith.cmpi slt, %252, %253 : vector<2x128xi32>
    %c0_123 = arith.constant 0 : index
    %c0_124 = arith.constant 0 : index
    %255 = vector.load %arg5[%c0_123, %c0_124] : memref<2x128xf32, #tpu.memory_space<vmem>>, vector<2x128xf32>
    %256 = arith.select %254, %247, %255 : vector<2x128xi1>, vector<2x128xf32>
    %c0_125 = arith.constant 0 : index
    %c0_126 = arith.constant 0 : index
    %257 = vector.load %arg5[%c0_125, %c0_126] : memref<2x128xf32, #tpu.memory_space<vmem>>, vector<2x128xf32>
    tpu.vector_store %arg5[%c0_125, %c0_126], %256 {strides = array<i32>} : memref<2x128xf32, #tpu.memory_space<vmem>>, vector<2x128xf32>,
    %c0_127 = arith.constant 0 : index
    %c0_128 = arith.constant 0 : index
    %258 = vector.load %arg6[%c0_127, %c0_128] : memref<2x128xf32, #tpu.memory_space<vmem>>, vector<2x128xf32>
    %259 = arith.select %254, %245, %258 : vector<2x128xi1>, vector<2x128xf32>
    %c0_129 = arith.constant 0 : index
    %c0_130 = arith.constant 0 : index
    %260 = vector.load %arg6[%c0_129, %c0_130] : memref<2x128xf32, #tpu.memory_space<vmem>>, vector<2x128xf32>
    tpu.vector_store %arg6[%c0_129, %c0_130], %259 {strides = array<i32>} : memref<2x128xf32, #tpu.memory_space<vmem>>, vector<2x128xf32>,
    %cst_131 = arith.constant 0.000000e+00 : f32
    %261 = vector.broadcast %cst_131 : f32 to vector<2x128xf32>
    %262 = arith.select %254, %247, %261 : vector<2x128xi1>, vector<2x128xf32>
    %c5_132 = arith.constant 5 : index
    %c0_133 = arith.constant 0 : index
    %c0_134 = arith.constant 0 : index
    %263 = vector.load %arg4[%c5_132, %c0_133, %c0_134] : memref<16x2x128xf32, #tpu.memory_space<vmem>>, vector<1x2x128xf32>
    %264 = vector.shape_cast %263 : vector<1x2x128xf32> to vector<2x128xf32>
    %265 = vector.shape_cast %262 : vector<2x128xf32> to vector<1x2x128xf32>
    tpu.vector_store %arg4[%c5_132, %c0_133, %c0_134], %265 {strides = array<i32>} : memref<16x2x128xf32, #tpu.memory_space<vmem>>, vector<1x2x128xf32>,
    %c16_i32_135 = arith.constant 16 : i32
    %266 = arith.muli %arg0, %c16_i32_135 : i32
    %c6_i32 = arith.constant 6 : i32
    %267 = arith.addi %266, %c6_i32 : i32
    %c6 = arith.constant 6 : index
    %c0_136 = arith.constant 0 : index
    %c0_137 = arith.constant 0 : index
    %268 = vector.load %arg1[%c6, %c0_136, %c0_137] : memref<16x2x512xbf16, #tpu.memory_space<vmem>>, vector<1x2x512xbf16>
    %269 = vector.shape_cast %268 : vector<1x2x512xbf16> to vector<2x512xbf16>
    %270 = arith.extf %269 : vector<2x512xbf16> to vector<2x512xf32>
    %c0_138 = arith.constant 0 : index
    %c0_139 = arith.constant 0 : index
    %271 = vector.load %arg5[%c0_138, %c0_139] : memref<2x128xf32, #tpu.memory_space<vmem>>, vector<2x128xf32>
    %cst_140 = arith.constant dense<0.000000e+00> : vector<2x512xf32>
    %272 = tpu.matmul %271, %3, %cst_140 {dimension_numbers = #tpu.dot_dimension_numbers<[1], [0], [0], [1], [0, 0, 1, 1], [], []>} : vector<2x128xf32>, vector<128x512xf32>, vector<2x512xf32> -> vector<2x512xf32>
    %273 = arith.addf %270, %272 : vector<2x512xf32>
    %274 = vector.extract_strided_slice %273 {offsets = [0, 0], sizes = [2, 384], strides = [1, 1]} : vector<2x512xf32> to vector<2x384xf32>
    %275 = arith.negf %274 : vector<2x384xf32>
    %276 = math.exp %275 : vector<2x384xf32>
    %cst_141 = arith.constant 1.000000e+00 : f32
    %277 = vector.broadcast %cst_141 : f32 to vector<2x384xf32>
    %278 = arith.addf %277, %276 : vector<2x384xf32>
    %279 = arith.divf %277, %278 : vector<2x384xf32>
    %280 = vector.extract_strided_slice %279 {offsets = [0, 0], sizes = [2, 128], strides = [1, 1]} : vector<2x384xf32> to vector<2x128xf32>
    %281 = vector.extract_strided_slice %279 {offsets = [0, 128], sizes = [2, 128], strides = [1, 1]} : vector<2x384xf32> to vector<2x128xf32>
    %282 = vector.extract_strided_slice %279 {offsets = [0, 256], sizes = [2, 128], strides = [1, 1]} : vector<2x384xf32> to vector<2x128xf32>
    %283 = vector.extract_strided_slice %273 {offsets = [0, 384], sizes = [2, 128], strides = [1, 1]} : vector<2x512xf32> to vector<2x128xf32>
    %284 = math.tanh %283 : vector<2x128xf32>
    %c0_142 = arith.constant 0 : index
    %c0_143 = arith.constant 0 : index
    %285 = vector.load %arg6[%c0_142, %c0_143] : memref<2x128xf32, #tpu.memory_space<vmem>>, vector<2x128xf32>
    %286 = arith.mulf %281, %285 : vector<2x128xf32>
    %287 = arith.mulf %280, %284 : vector<2x128xf32>
    %288 = arith.addf %286, %287 : vector<2x128xf32>
    %289 = math.tanh %288 : vector<2x128xf32>
    %290 = arith.mulf %282, %289 : vector<2x128xf32>
    %c15_i32_144 = arith.constant 15 : i32
    %291 = arith.subi %c15_i32_144, %267 : i32
    %292 = vector.broadcast %267 : i32 to vector<1x128xi32>
    %293 = vector.broadcast %291 : i32 to vector<1x128xi32>
    %294 = arith.select %7, %292, %293 : vector<1x128xi1>, vector<1x128xi32>
    %295 = vector.broadcast %294 : vector<1x128xi32> to vector<2x128xi32>
    %296 = vector.broadcast %4 : vector<2x1xi32> to vector<2x128xi32>
    %297 = arith.cmpi slt, %295, %296 : vector<2x128xi32>
    %c0_145 = arith.constant 0 : index
    %c0_146 = arith.constant 0 : index
    %298 = vector.load %arg5[%c0_145, %c0_146] : memref<2x128xf32, #tpu.memory_space<vmem>>, vector<2x128xf32>
    %299 = arith.select %297, %290, %298 : vector<2x128xi1>, vector<2x128xf32>
    %c0_147 = arith.constant 0 : index
    %c0_148 = arith.constant 0 : index
    %300 = vector.load %arg5[%c0_147, %c0_148] : memref<2x128xf32, #tpu.memory_space<vmem>>, vector<2x128xf32>
    tpu.vector_store %arg5[%c0_147, %c0_148], %299 {strides = array<i32>} : memref<2x128xf32, #tpu.memory_space<vmem>>, vector<2x128xf32>,
    %c0_149 = arith.constant 0 : index
    %c0_150 = arith.constant 0 : index
    %301 = vector.load %arg6[%c0_149, %c0_150] : memref<2x128xf32, #tpu.memory_space<vmem>>, vector<2x128xf32>
    %302 = arith.select %297, %288, %301 : vector<2x128xi1>, vector<2x128xf32>
    %c0_151 = arith.constant 0 : index
    %c0_152 = arith.constant 0 : index
    %303 = vector.load %arg6[%c0_151, %c0_152] : memref<2x128xf32, #tpu.memory_space<vmem>>, vector<2x128xf32>
    tpu.vector_store %arg6[%c0_151, %c0_152], %302 {strides = array<i32>} : memref<2x128xf32, #tpu.memory_space<vmem>>, vector<2x128xf32>,
    %cst_153 = arith.constant 0.000000e+00 : f32
    %304 = vector.broadcast %cst_153 : f32 to vector<2x128xf32>
    %305 = arith.select %297, %290, %304 : vector<2x128xi1>, vector<2x128xf32>
    %c6_154 = arith.constant 6 : index
    %c0_155 = arith.constant 0 : index
    %c0_156 = arith.constant 0 : index
    %306 = vector.load %arg4[%c6_154, %c0_155, %c0_156] : memref<16x2x128xf32, #tpu.memory_space<vmem>>, vector<1x2x128xf32>
    %307 = vector.shape_cast %306 : vector<1x2x128xf32> to vector<2x128xf32>
    %308 = vector.shape_cast %305 : vector<2x128xf32> to vector<1x2x128xf32>
    tpu.vector_store %arg4[%c6_154, %c0_155, %c0_156], %308 {strides = array<i32>} : memref<16x2x128xf32, #tpu.memory_space<vmem>>, vector<1x2x128xf32>,
    %c16_i32_157 = arith.constant 16 : i32
    %309 = arith.muli %arg0, %c16_i32_157 : i32
    %c7_i32 = arith.constant 7 : i32
    %310 = arith.addi %309, %c7_i32 : i32
    %c7 = arith.constant 7 : index
    %c0_158 = arith.constant 0 : index
    %c0_159 = arith.constant 0 : index
    %311 = vector.load %arg1[%c7, %c0_158, %c0_159] : memref<16x2x512xbf16, #tpu.memory_space<vmem>>, vector<1x2x512xbf16>
    %312 = vector.shape_cast %311 : vector<1x2x512xbf16> to vector<2x512xbf16>
    %313 = arith.extf %312 : vector<2x512xbf16> to vector<2x512xf32>
    %c0_160 = arith.constant 0 : index
    %c0_161 = arith.constant 0 : index
    %314 = vector.load %arg5[%c0_160, %c0_161] : memref<2x128xf32, #tpu.memory_space<vmem>>, vector<2x128xf32>
    %cst_162 = arith.constant dense<0.000000e+00> : vector<2x512xf32>
    %315 = tpu.matmul %314, %3, %cst_162 {dimension_numbers = #tpu.dot_dimension_numbers<[1], [0], [0], [1], [0, 0, 1, 1], [], []>} : vector<2x128xf32>, vector<128x512xf32>, vector<2x512xf32> -> vector<2x512xf32>
    %316 = arith.addf %313, %315 : vector<2x512xf32>
    %317 = vector.extract_strided_slice %316 {offsets = [0, 0], sizes = [2, 384], strides = [1, 1]} : vector<2x512xf32> to vector<2x384xf32>
    %318 = arith.negf %317 : vector<2x384xf32>
    %319 = math.exp %318 : vector<2x384xf32>
    %cst_163 = arith.constant 1.000000e+00 : f32
    %320 = vector.broadcast %cst_163 : f32 to vector<2x384xf32>
    %321 = arith.addf %320, %319 : vector<2x384xf32>
    %322 = arith.divf %320, %321 : vector<2x384xf32>
    %323 = vector.extract_strided_slice %322 {offsets = [0, 0], sizes = [2, 128], strides = [1, 1]} : vector<2x384xf32> to vector<2x128xf32>
    %324 = vector.extract_strided_slice %322 {offsets = [0, 128], sizes = [2, 128], strides = [1, 1]} : vector<2x384xf32> to vector<2x128xf32>
    %325 = vector.extract_strided_slice %322 {offsets = [0, 256], sizes = [2, 128], strides = [1, 1]} : vector<2x384xf32> to vector<2x128xf32>
    %326 = vector.extract_strided_slice %316 {offsets = [0, 384], sizes = [2, 128], strides = [1, 1]} : vector<2x512xf32> to vector<2x128xf32>
    %327 = math.tanh %326 : vector<2x128xf32>
    %c0_164 = arith.constant 0 : index
    %c0_165 = arith.constant 0 : index
    %328 = vector.load %arg6[%c0_164, %c0_165] : memref<2x128xf32, #tpu.memory_space<vmem>>, vector<2x128xf32>
    %329 = arith.mulf %324, %328 : vector<2x128xf32>
    %330 = arith.mulf %323, %327 : vector<2x128xf32>
    %331 = arith.addf %329, %330 : vector<2x128xf32>
    %332 = math.tanh %331 : vector<2x128xf32>
    %333 = arith.mulf %325, %332 : vector<2x128xf32>
    %c15_i32_166 = arith.constant 15 : i32
    %334 = arith.subi %c15_i32_166, %310 : i32
    %335 = vector.broadcast %310 : i32 to vector<1x128xi32>
    %336 = vector.broadcast %334 : i32 to vector<1x128xi32>
    %337 = arith.select %7, %335, %336 : vector<1x128xi1>, vector<1x128xi32>
    %338 = vector.broadcast %337 : vector<1x128xi32> to vector<2x128xi32>
    %339 = vector.broadcast %4 : vector<2x1xi32> to vector<2x128xi32>
    %340 = arith.cmpi slt, %338, %339 : vector<2x128xi32>
    %c0_167 = arith.constant 0 : index
    %c0_168 = arith.constant 0 : index
    %341 = vector.load %arg5[%c0_167, %c0_168] : memref<2x128xf32, #tpu.memory_space<vmem>>, vector<2x128xf32>
    %342 = arith.select %340, %333, %341 : vector<2x128xi1>, vector<2x128xf32>
    %c0_169 = arith.constant 0 : index
    %c0_170 = arith.constant 0 : index
    %343 = vector.load %arg5[%c0_169, %c0_170] : memref<2x128xf32, #tpu.memory_space<vmem>>, vector<2x128xf32>
    tpu.vector_store %arg5[%c0_169, %c0_170], %342 {strides = array<i32>} : memref<2x128xf32, #tpu.memory_space<vmem>>, vector<2x128xf32>,
    %c0_171 = arith.constant 0 : index
    %c0_172 = arith.constant 0 : index
    %344 = vector.load %arg6[%c0_171, %c0_172] : memref<2x128xf32, #tpu.memory_space<vmem>>, vector<2x128xf32>
    %345 = arith.select %340, %331, %344 : vector<2x128xi1>, vector<2x128xf32>
    %c0_173 = arith.constant 0 : index
    %c0_174 = arith.constant 0 : index
    %346 = vector.load %arg6[%c0_173, %c0_174] : memref<2x128xf32, #tpu.memory_space<vmem>>, vector<2x128xf32>
    tpu.vector_store %arg6[%c0_173, %c0_174], %345 {strides = array<i32>} : memref<2x128xf32, #tpu.memory_space<vmem>>, vector<2x128xf32>,
    %cst_175 = arith.constant 0.000000e+00 : f32
    %347 = vector.broadcast %cst_175 : f32 to vector<2x128xf32>
    %348 = arith.select %340, %333, %347 : vector<2x128xi1>, vector<2x128xf32>
    %c7_176 = arith.constant 7 : index
    %c0_177 = arith.constant 0 : index
    %c0_178 = arith.constant 0 : index
    %349 = vector.load %arg4[%c7_176, %c0_177, %c0_178] : memref<16x2x128xf32, #tpu.memory_space<vmem>>, vector<1x2x128xf32>
    %350 = vector.shape_cast %349 : vector<1x2x128xf32> to vector<2x128xf32>
    %351 = vector.shape_cast %348 : vector<2x128xf32> to vector<1x2x128xf32>
    tpu.vector_store %arg4[%c7_176, %c0_177, %c0_178], %351 {strides = array<i32>} : memref<16x2x128xf32, #tpu.memory_space<vmem>>, vector<1x2x128xf32>,
    %c16_i32_179 = arith.constant 16 : i32
    %352 = arith.muli %arg0, %c16_i32_179 : i32
    %c8_i32 = arith.constant 8 : i32
    %353 = arith.addi %352, %c8_i32 : i32
    %c8 = arith.constant 8 : index
    %c0_180 = arith.constant 0 : index
    %c0_181 = arith.constant 0 : index
    %354 = vector.load %arg1[%c8, %c0_180, %c0_181] : memref<16x2x512xbf16, #tpu.memory_space<vmem>>, vector<1x2x512xbf16>
    %355 = vector.shape_cast %354 : vector<1x2x512xbf16> to vector<2x512xbf16>
    %356 = arith.extf %355 : vector<2x512xbf16> to vector<2x512xf32>
    %c0_182 = arith.constant 0 : index
    %c0_183 = arith.constant 0 : index
    %357 = vector.load %arg5[%c0_182, %c0_183] : memref<2x128xf32, #tpu.memory_space<vmem>>, vector<2x128xf32>
    %cst_184 = arith.constant dense<0.000000e+00> : vector<2x512xf32>
    %358 = tpu.matmul %357, %3, %cst_184 {dimension_numbers = #tpu.dot_dimension_numbers<[1], [0], [0], [1], [0, 0, 1, 1], [], []>} : vector<2x128xf32>, vector<128x512xf32>, vector<2x512xf32> -> vector<2x512xf32>
    %359 = arith.addf %356, %358 : vector<2x512xf32>
    %360 = vector.extract_strided_slice %359 {offsets = [0, 0], sizes = [2, 384], strides = [1, 1]} : vector<2x512xf32> to vector<2x384xf32>
    %361 = arith.negf %360 : vector<2x384xf32>
    %362 = math.exp %361 : vector<2x384xf32>
    %cst_185 = arith.constant 1.000000e+00 : f32
    %363 = vector.broadcast %cst_185 : f32 to vector<2x384xf32>
    %364 = arith.addf %363, %362 : vector<2x384xf32>
    %365 = arith.divf %363, %364 : vector<2x384xf32>
    %366 = vector.extract_strided_slice %365 {offsets = [0, 0], sizes = [2, 128], strides = [1, 1]} : vector<2x384xf32> to vector<2x128xf32>
    %367 = vector.extract_strided_slice %365 {offsets = [0, 128], sizes = [2, 128], strides = [1, 1]} : vector<2x384xf32> to vector<2x128xf32>
    %368 = vector.extract_strided_slice %365 {offsets = [0, 256], sizes = [2, 128], strides = [1, 1]} : vector<2x384xf32> to vector<2x128xf32>
    %369 = vector.extract_strided_slice %359 {offsets = [0, 384], sizes = [2, 128], strides = [1, 1]} : vector<2x512xf32> to vector<2x128xf32>
    %370 = math.tanh %369 : vector<2x128xf32>
    %c0_186 = arith.constant 0 : index
    %c0_187 = arith.constant 0 : index
    %371 = vector.load %arg6[%c0_186, %c0_187] : memref<2x128xf32, #tpu.memory_space<vmem>>, vector<2x128xf32>
    %372 = arith.mulf %367, %371 : vector<2x128xf32>
    %373 = arith.mulf %366, %370 : vector<2x128xf32>
    %374 = arith.addf %372, %373 : vector<2x128xf32>
    %375 = math.tanh %374 : vector<2x128xf32>
    %376 = arith.mulf %368, %375 : vector<2x128xf32>
    %c15_i32_188 = arith.constant 15 : i32
    %377 = arith.subi %c15_i32_188, %353 : i32
    %378 = vector.broadcast %353 : i32 to vector<1x128xi32>
    %379 = vector.broadcast %377 : i32 to vector<1x128xi32>
    %380 = arith.select %7, %378, %379 : vector<1x128xi1>, vector<1x128xi32>
    %381 = vector.broadcast %380 : vector<1x128xi32> to vector<2x128xi32>
    %382 = vector.broadcast %4 : vector<2x1xi32> to vector<2x128xi32>
    %383 = arith.cmpi slt, %381, %382 : vector<2x128xi32>
    %c0_189 = arith.constant 0 : index
    %c0_190 = arith.constant 0 : index
    %384 = vector.load %arg5[%c0_189, %c0_190] : memref<2x128xf32, #tpu.memory_space<vmem>>, vector<2x128xf32>
    %385 = arith.select %383, %376, %384 : vector<2x128xi1>, vector<2x128xf32>
    %c0_191 = arith.constant 0 : index
    %c0_192 = arith.constant 0 : index
    %386 = vector.load %arg5[%c0_191, %c0_192] : memref<2x128xf32, #tpu.memory_space<vmem>>, vector<2x128xf32>
    tpu.vector_store %arg5[%c0_191, %c0_192], %385 {strides = array<i32>} : memref<2x128xf32, #tpu.memory_space<vmem>>, vector<2x128xf32>,
    %c0_193 = arith.constant 0 : index
    %c0_194 = arith.constant 0 : index
    %387 = vector.load %arg6[%c0_193, %c0_194] : memref<2x128xf32, #tpu.memory_space<vmem>>, vector<2x128xf32>
    %388 = arith.select %383, %374, %387 : vector<2x128xi1>, vector<2x128xf32>
    %c0_195 = arith.constant 0 : index
    %c0_196 = arith.constant 0 : index
    %389 = vector.load %arg6[%c0_195, %c0_196] : memref<2x128xf32, #tpu.memory_space<vmem>>, vector<2x128xf32>
    tpu.vector_store %arg6[%c0_195, %c0_196], %388 {strides = array<i32>} : memref<2x128xf32, #tpu.memory_space<vmem>>, vector<2x128xf32>,
    %cst_197 = arith.constant 0.000000e+00 : f32
    %390 = vector.broadcast %cst_197 : f32 to vector<2x128xf32>
    %391 = arith.select %383, %376, %390 : vector<2x128xi1>, vector<2x128xf32>
    %c8_198 = arith.constant 8 : index
    %c0_199 = arith.constant 0 : index
    %c0_200 = arith.constant 0 : index
    %392 = vector.load %arg4[%c8_198, %c0_199, %c0_200] : memref<16x2x128xf32, #tpu.memory_space<vmem>>, vector<1x2x128xf32>
    %393 = vector.shape_cast %392 : vector<1x2x128xf32> to vector<2x128xf32>
    %394 = vector.shape_cast %391 : vector<2x128xf32> to vector<1x2x128xf32>
    tpu.vector_store %arg4[%c8_198, %c0_199, %c0_200], %394 {strides = array<i32>} : memref<16x2x128xf32, #tpu.memory_space<vmem>>, vector<1x2x128xf32>,
    %c16_i32_201 = arith.constant 16 : i32
    %395 = arith.muli %arg0, %c16_i32_201 : i32
    %c9_i32 = arith.constant 9 : i32
    %396 = arith.addi %395, %c9_i32 : i32
    %c9 = arith.constant 9 : index
    %c0_202 = arith.constant 0 : index
    %c0_203 = arith.constant 0 : index
    %397 = vector.load %arg1[%c9, %c0_202, %c0_203] : memref<16x2x512xbf16, #tpu.memory_space<vmem>>, vector<1x2x512xbf16>
    %398 = vector.shape_cast %397 : vector<1x2x512xbf16> to vector<2x512xbf16>
    %399 = arith.extf %398 : vector<2x512xbf16> to vector<2x512xf32>
    %c0_204 = arith.constant 0 : index
    %c0_205 = arith.constant 0 : index
    %400 = vector.load %arg5[%c0_204, %c0_205] : memref<2x128xf32, #tpu.memory_space<vmem>>, vector<2x128xf32>
    %cst_206 = arith.constant dense<0.000000e+00> : vector<2x512xf32>
    %401 = tpu.matmul %400, %3, %cst_206 {dimension_numbers = #tpu.dot_dimension_numbers<[1], [0], [0], [1], [0, 0, 1, 1], [], []>} : vector<2x128xf32>, vector<128x512xf32>, vector<2x512xf32> -> vector<2x512xf32>
    %402 = arith.addf %399, %401 : vector<2x512xf32>
    %403 = vector.extract_strided_slice %402 {offsets = [0, 0], sizes = [2, 384], strides = [1, 1]} : vector<2x512xf32> to vector<2x384xf32>
    %404 = arith.negf %403 : vector<2x384xf32>
    %405 = math.exp %404 : vector<2x384xf32>
    %cst_207 = arith.constant 1.000000e+00 : f32
    %406 = vector.broadcast %cst_207 : f32 to vector<2x384xf32>
    %407 = arith.addf %406, %405 : vector<2x384xf32>
    %408 = arith.divf %406, %407 : vector<2x384xf32>
    %409 = vector.extract_strided_slice %408 {offsets = [0, 0], sizes = [2, 128], strides = [1, 1]} : vector<2x384xf32> to vector<2x128xf32>
    %410 = vector.extract_strided_slice %408 {offsets = [0, 128], sizes = [2, 128], strides = [1, 1]} : vector<2x384xf32> to vector<2x128xf32>
    %411 = vector.extract_strided_slice %408 {offsets = [0, 256], sizes = [2, 128], strides = [1, 1]} : vector<2x384xf32> to vector<2x128xf32>
    %412 = vector.extract_strided_slice %402 {offsets = [0, 384], sizes = [2, 128], strides = [1, 1]} : vector<2x512xf32> to vector<2x128xf32>
    %413 = math.tanh %412 : vector<2x128xf32>
    %c0_208 = arith.constant 0 : index
    %c0_209 = arith.constant 0 : index
    %414 = vector.load %arg6[%c0_208, %c0_209] : memref<2x128xf32, #tpu.memory_space<vmem>>, vector<2x128xf32>
    %415 = arith.mulf %410, %414 : vector<2x128xf32>
    %416 = arith.mulf %409, %413 : vector<2x128xf32>
    %417 = arith.addf %415, %416 : vector<2x128xf32>
    %418 = math.tanh %417 : vector<2x128xf32>
    %419 = arith.mulf %411, %418 : vector<2x128xf32>
    %c15_i32_210 = arith.constant 15 : i32
    %420 = arith.subi %c15_i32_210, %396 : i32
    %421 = vector.broadcast %396 : i32 to vector<1x128xi32>
    %422 = vector.broadcast %420 : i32 to vector<1x128xi32>
    %423 = arith.select %7, %421, %422 : vector<1x128xi1>, vector<1x128xi32>
    %424 = vector.broadcast %423 : vector<1x128xi32> to vector<2x128xi32>
    %425 = vector.broadcast %4 : vector<2x1xi32> to vector<2x128xi32>
    %426 = arith.cmpi slt, %424, %425 : vector<2x128xi32>
    %c0_211 = arith.constant 0 : index
    %c0_212 = arith.constant 0 : index
    %427 = vector.load %arg5[%c0_211, %c0_212] : memref<2x128xf32, #tpu.memory_space<vmem>>, vector<2x128xf32>
    %428 = arith.select %426, %419, %427 : vector<2x128xi1>, vector<2x128xf32>
    %c0_213 = arith.constant 0 : index
    %c0_214 = arith.constant 0 : index
    %429 = vector.load %arg5[%c0_213, %c0_214] : memref<2x128xf32, #tpu.memory_space<vmem>>, vector<2x128xf32>
    tpu.vector_store %arg5[%c0_213, %c0_214], %428 {strides = array<i32>} : memref<2x128xf32, #tpu.memory_space<vmem>>, vector<2x128xf32>,
    %c0_215 = arith.constant 0 : index
    %c0_216 = arith.constant 0 : index
    %430 = vector.load %arg6[%c0_215, %c0_216] : memref<2x128xf32, #tpu.memory_space<vmem>>, vector<2x128xf32>
    %431 = arith.select %426, %417, %430 : vector<2x128xi1>, vector<2x128xf32>
    %c0_217 = arith.constant 0 : index
    %c0_218 = arith.constant 0 : index
    %432 = vector.load %arg6[%c0_217, %c0_218] : memref<2x128xf32, #tpu.memory_space<vmem>>, vector<2x128xf32>
    tpu.vector_store %arg6[%c0_217, %c0_218], %431 {strides = array<i32>} : memref<2x128xf32, #tpu.memory_space<vmem>>, vector<2x128xf32>,
    %cst_219 = arith.constant 0.000000e+00 : f32
    %433 = vector.broadcast %cst_219 : f32 to vector<2x128xf32>
    %434 = arith.select %426, %419, %433 : vector<2x128xi1>, vector<2x128xf32>
    %c9_220 = arith.constant 9 : index
    %c0_221 = arith.constant 0 : index
    %c0_222 = arith.constant 0 : index
    %435 = vector.load %arg4[%c9_220, %c0_221, %c0_222] : memref<16x2x128xf32, #tpu.memory_space<vmem>>, vector<1x2x128xf32>
    %436 = vector.shape_cast %435 : vector<1x2x128xf32> to vector<2x128xf32>
    %437 = vector.shape_cast %434 : vector<2x128xf32> to vector<1x2x128xf32>
    tpu.vector_store %arg4[%c9_220, %c0_221, %c0_222], %437 {strides = array<i32>} : memref<16x2x128xf32, #tpu.memory_space<vmem>>, vector<1x2x128xf32>,
    %c16_i32_223 = arith.constant 16 : i32
    %438 = arith.muli %arg0, %c16_i32_223 : i32
    %c10_i32 = arith.constant 10 : i32
    %439 = arith.addi %438, %c10_i32 : i32
    %c10 = arith.constant 10 : index
    %c0_224 = arith.constant 0 : index
    %c0_225 = arith.constant 0 : index
    %440 = vector.load %arg1[%c10, %c0_224, %c0_225] : memref<16x2x512xbf16, #tpu.memory_space<vmem>>, vector<1x2x512xbf16>
    %441 = vector.shape_cast %440 : vector<1x2x512xbf16> to vector<2x512xbf16>
    %442 = arith.extf %441 : vector<2x512xbf16> to vector<2x512xf32>
    %c0_226 = arith.constant 0 : index
    %c0_227 = arith.constant 0 : index
    %443 = vector.load %arg5[%c0_226, %c0_227] : memref<2x128xf32, #tpu.memory_space<vmem>>, vector<2x128xf32>
    %cst_228 = arith.constant dense<0.000000e+00> : vector<2x512xf32>
    %444 = tpu.matmul %443, %3, %cst_228 {dimension_numbers = #tpu.dot_dimension_numbers<[1], [0], [0], [1], [0, 0, 1, 1], [], []>} : vector<2x128xf32>, vector<128x512xf32>, vector<2x512xf32> -> vector<2x512xf32>
    %445 = arith.addf %442, %444 : vector<2x512xf32>
    %446 = vector.extract_strided_slice %445 {offsets = [0, 0], sizes = [2, 384], strides = [1, 1]} : vector<2x512xf32> to vector<2x384xf32>
    %447 = arith.negf %446 : vector<2x384xf32>
    %448 = math.exp %447 : vector<2x384xf32>
    %cst_229 = arith.constant 1.000000e+00 : f32
    %449 = vector.broadcast %cst_229 : f32 to vector<2x384xf32>
    %450 = arith.addf %449, %448 : vector<2x384xf32>
    %451 = arith.divf %449, %450 : vector<2x384xf32>
    %452 = vector.extract_strided_slice %451 {offsets = [0, 0], sizes = [2, 128], strides = [1, 1]} : vector<2x384xf32> to vector<2x128xf32>
    %453 = vector.extract_strided_slice %451 {offsets = [0, 128], sizes = [2, 128], strides = [1, 1]} : vector<2x384xf32> to vector<2x128xf32>
    %454 = vector.extract_strided_slice %451 {offsets = [0, 256], sizes = [2, 128], strides = [1, 1]} : vector<2x384xf32> to vector<2x128xf32>
    %455 = vector.extract_strided_slice %445 {offsets = [0, 384], sizes = [2, 128], strides = [1, 1]} : vector<2x512xf32> to vector<2x128xf32>
    %456 = math.tanh %455 : vector<2x128xf32>
    %c0_230 = arith.constant 0 : index
    %c0_231 = arith.constant 0 : index
    %457 = vector.load %arg6[%c0_230, %c0_231] : memref<2x128xf32, #tpu.memory_space<vmem>>, vector<2x128xf32>
    %458 = arith.mulf %453, %457 : vector<2x128xf32>
    %459 = arith.mulf %452, %456 : vector<2x128xf32>
    %460 = arith.addf %458, %459 : vector<2x128xf32>
    %461 = math.tanh %460 : vector<2x128xf32>
    %462 = arith.mulf %454, %461 : vector<2x128xf32>
    %c15_i32_232 = arith.constant 15 : i32
    %463 = arith.subi %c15_i32_232, %439 : i32
    %464 = vector.broadcast %439 : i32 to vector<1x128xi32>
    %465 = vector.broadcast %463 : i32 to vector<1x128xi32>
    %466 = arith.select %7, %464, %465 : vector<1x128xi1>, vector<1x128xi32>
    %467 = vector.broadcast %466 : vector<1x128xi32> to vector<2x128xi32>
    %468 = vector.broadcast %4 : vector<2x1xi32> to vector<2x128xi32>
    %469 = arith.cmpi slt, %467, %468 : vector<2x128xi32>
    %c0_233 = arith.constant 0 : index
    %c0_234 = arith.constant 0 : index
    %470 = vector.load %arg5[%c0_233, %c0_234] : memref<2x128xf32, #tpu.memory_space<vmem>>, vector<2x128xf32>
    %471 = arith.select %469, %462, %470 : vector<2x128xi1>, vector<2x128xf32>
    %c0_235 = arith.constant 0 : index
    %c0_236 = arith.constant 0 : index
    %472 = vector.load %arg5[%c0_235, %c0_236] : memref<2x128xf32, #tpu.memory_space<vmem>>, vector<2x128xf32>
    tpu.vector_store %arg5[%c0_235, %c0_236], %471 {strides = array<i32>} : memref<2x128xf32, #tpu.memory_space<vmem>>, vector<2x128xf32>,
    %c0_237 = arith.constant 0 : index
    %c0_238 = arith.constant 0 : index
    %473 = vector.load %arg6[%c0_237, %c0_238] : memref<2x128xf32, #tpu.memory_space<vmem>>, vector<2x128xf32>
    %474 = arith.select %469, %460, %473 : vector<2x128xi1>, vector<2x128xf32>
    %c0_239 = arith.constant 0 : index
    %c0_240 = arith.constant 0 : index
    %475 = vector.load %arg6[%c0_239, %c0_240] : memref<2x128xf32, #tpu.memory_space<vmem>>, vector<2x128xf32>
    tpu.vector_store %arg6[%c0_239, %c0_240], %474 {strides = array<i32>} : memref<2x128xf32, #tpu.memory_space<vmem>>, vector<2x128xf32>,
    %cst_241 = arith.constant 0.000000e+00 : f32
    %476 = vector.broadcast %cst_241 : f32 to vector<2x128xf32>
    %477 = arith.select %469, %462, %476 : vector<2x128xi1>, vector<2x128xf32>
    %c10_242 = arith.constant 10 : index
    %c0_243 = arith.constant 0 : index
    %c0_244 = arith.constant 0 : index
    %478 = vector.load %arg4[%c10_242, %c0_243, %c0_244] : memref<16x2x128xf32, #tpu.memory_space<vmem>>, vector<1x2x128xf32>
    %479 = vector.shape_cast %478 : vector<1x2x128xf32> to vector<2x128xf32>
    %480 = vector.shape_cast %477 : vector<2x128xf32> to vector<1x2x128xf32>
    tpu.vector_store %arg4[%c10_242, %c0_243, %c0_244], %480 {strides = array<i32>} : memref<16x2x128xf32, #tpu.memory_space<vmem>>, vector<1x2x128xf32>,
    %c16_i32_245 = arith.constant 16 : i32
    %481 = arith.muli %arg0, %c16_i32_245 : i32
    %c11_i32 = arith.constant 11 : i32
    %482 = arith.addi %481, %c11_i32 : i32
    %c11 = arith.constant 11 : index
    %c0_246 = arith.constant 0 : index
    %c0_247 = arith.constant 0 : index
    %483 = vector.load %arg1[%c11, %c0_246, %c0_247] : memref<16x2x512xbf16, #tpu.memory_space<vmem>>, vector<1x2x512xbf16>
    %484 = vector.shape_cast %483 : vector<1x2x512xbf16> to vector<2x512xbf16>
    %485 = arith.extf %484 : vector<2x512xbf16> to vector<2x512xf32>
    %c0_248 = arith.constant 0 : index
    %c0_249 = arith.constant 0 : index
    %486 = vector.load %arg5[%c0_248, %c0_249] : memref<2x128xf32, #tpu.memory_space<vmem>>, vector<2x128xf32>
    %cst_250 = arith.constant dense<0.000000e+00> : vector<2x512xf32>
    %487 = tpu.matmul %486, %3, %cst_250 {dimension_numbers = #tpu.dot_dimension_numbers<[1], [0], [0], [1], [0, 0, 1, 1], [], []>} : vector<2x128xf32>, vector<128x512xf32>, vector<2x512xf32> -> vector<2x512xf32>
    %488 = arith.addf %485, %487 : vector<2x512xf32>
    %489 = vector.extract_strided_slice %488 {offsets = [0, 0], sizes = [2, 384], strides = [1, 1]} : vector<2x512xf32> to vector<2x384xf32>
    %490 = arith.negf %489 : vector<2x384xf32>
    %491 = math.exp %490 : vector<2x384xf32>
    %cst_251 = arith.constant 1.000000e+00 : f32
    %492 = vector.broadcast %cst_251 : f32 to vector<2x384xf32>
    %493 = arith.addf %492, %491 : vector<2x384xf32>
    %494 = arith.divf %492, %493 : vector<2x384xf32>
    %495 = vector.extract_strided_slice %494 {offsets = [0, 0], sizes = [2, 128], strides = [1, 1]} : vector<2x384xf32> to vector<2x128xf32>
    %496 = vector.extract_strided_slice %494 {offsets = [0, 128], sizes = [2, 128], strides = [1, 1]} : vector<2x384xf32> to vector<2x128xf32>
    %497 = vector.extract_strided_slice %494 {offsets = [0, 256], sizes = [2, 128], strides = [1, 1]} : vector<2x384xf32> to vector<2x128xf32>
    %498 = vector.extract_strided_slice %488 {offsets = [0, 384], sizes = [2, 128], strides = [1, 1]} : vector<2x512xf32> to vector<2x128xf32>
    %499 = math.tanh %498 : vector<2x128xf32>
    %c0_252 = arith.constant 0 : index
    %c0_253 = arith.constant 0 : index
    %500 = vector.load %arg6[%c0_252, %c0_253] : memref<2x128xf32, #tpu.memory_space<vmem>>, vector<2x128xf32>
    %501 = arith.mulf %496, %500 : vector<2x128xf32>
    %502 = arith.mulf %495, %499 : vector<2x128xf32>
    %503 = arith.addf %501, %502 : vector<2x128xf32>
    %504 = math.tanh %503 : vector<2x128xf32>
    %505 = arith.mulf %497, %504 : vector<2x128xf32>
    %c15_i32_254 = arith.constant 15 : i32
    %506 = arith.subi %c15_i32_254, %482 : i32
    %507 = vector.broadcast %482 : i32 to vector<1x128xi32>
    %508 = vector.broadcast %506 : i32 to vector<1x128xi32>
    %509 = arith.select %7, %507, %508 : vector<1x128xi1>, vector<1x128xi32>
    %510 = vector.broadcast %509 : vector<1x128xi32> to vector<2x128xi32>
    %511 = vector.broadcast %4 : vector<2x1xi32> to vector<2x128xi32>
    %512 = arith.cmpi slt, %510, %511 : vector<2x128xi32>
    %c0_255 = arith.constant 0 : index
    %c0_256 = arith.constant 0 : index
    %513 = vector.load %arg5[%c0_255, %c0_256] : memref<2x128xf32, #tpu.memory_space<vmem>>, vector<2x128xf32>
    %514 = arith.select %512, %505, %513 : vector<2x128xi1>, vector<2x128xf32>
    %c0_257 = arith.constant 0 : index
    %c0_258 = arith.constant 0 : index
    %515 = vector.load %arg5[%c0_257, %c0_258] : memref<2x128xf32, #tpu.memory_space<vmem>>, vector<2x128xf32>
    tpu.vector_store %arg5[%c0_257, %c0_258], %514 {strides = array<i32>} : memref<2x128xf32, #tpu.memory_space<vmem>>, vector<2x128xf32>,
    %c0_259 = arith.constant 0 : index
    %c0_260 = arith.constant 0 : index
    %516 = vector.load %arg6[%c0_259, %c0_260] : memref<2x128xf32, #tpu.memory_space<vmem>>, vector<2x128xf32>
    %517 = arith.select %512, %503, %516 : vector<2x128xi1>, vector<2x128xf32>
    %c0_261 = arith.constant 0 : index
    %c0_262 = arith.constant 0 : index
    %518 = vector.load %arg6[%c0_261, %c0_262] : memref<2x128xf32, #tpu.memory_space<vmem>>, vector<2x128xf32>
    tpu.vector_store %arg6[%c0_261, %c0_262], %517 {strides = array<i32>} : memref<2x128xf32, #tpu.memory_space<vmem>>, vector<2x128xf32>,
    %cst_263 = arith.constant 0.000000e+00 : f32
    %519 = vector.broadcast %cst_263 : f32 to vector<2x128xf32>
    %520 = arith.select %512, %505, %519 : vector<2x128xi1>, vector<2x128xf32>
    %c11_264 = arith.constant 11 : index
    %c0_265 = arith.constant 0 : index
    %c0_266 = arith.constant 0 : index
    %521 = vector.load %arg4[%c11_264, %c0_265, %c0_266] : memref<16x2x128xf32, #tpu.memory_space<vmem>>, vector<1x2x128xf32>
    %522 = vector.shape_cast %521 : vector<1x2x128xf32> to vector<2x128xf32>
    %523 = vector.shape_cast %520 : vector<2x128xf32> to vector<1x2x128xf32>
    tpu.vector_store %arg4[%c11_264, %c0_265, %c0_266], %523 {strides = array<i32>} : memref<16x2x128xf32, #tpu.memory_space<vmem>>, vector<1x2x128xf32>,
    %c16_i32_267 = arith.constant 16 : i32
    %524 = arith.muli %arg0, %c16_i32_267 : i32
    %c12_i32 = arith.constant 12 : i32
    %525 = arith.addi %524, %c12_i32 : i32
    %c12 = arith.constant 12 : index
    %c0_268 = arith.constant 0 : index
    %c0_269 = arith.constant 0 : index
    %526 = vector.load %arg1[%c12, %c0_268, %c0_269] : memref<16x2x512xbf16, #tpu.memory_space<vmem>>, vector<1x2x512xbf16>
    %527 = vector.shape_cast %526 : vector<1x2x512xbf16> to vector<2x512xbf16>
    %528 = arith.extf %527 : vector<2x512xbf16> to vector<2x512xf32>
    %c0_270 = arith.constant 0 : index
    %c0_271 = arith.constant 0 : index
    %529 = vector.load %arg5[%c0_270, %c0_271] : memref<2x128xf32, #tpu.memory_space<vmem>>, vector<2x128xf32>
    %cst_272 = arith.constant dense<0.000000e+00> : vector<2x512xf32>
    %530 = tpu.matmul %529, %3, %cst_272 {dimension_numbers = #tpu.dot_dimension_numbers<[1], [0], [0], [1], [0, 0, 1, 1], [], []>} : vector<2x128xf32>, vector<128x512xf32>, vector<2x512xf32> -> vector<2x512xf32>
    %531 = arith.addf %528, %530 : vector<2x512xf32>
    %532 = vector.extract_strided_slice %531 {offsets = [0, 0], sizes = [2, 384], strides = [1, 1]} : vector<2x512xf32> to vector<2x384xf32>
    %533 = arith.negf %532 : vector<2x384xf32>
    %534 = math.exp %533 : vector<2x384xf32>
    %cst_273 = arith.constant 1.000000e+00 : f32
    %535 = vector.broadcast %cst_273 : f32 to vector<2x384xf32>
    %536 = arith.addf %535, %534 : vector<2x384xf32>
    %537 = arith.divf %535, %536 : vector<2x384xf32>
    %538 = vector.extract_strided_slice %537 {offsets = [0, 0], sizes = [2, 128], strides = [1, 1]} : vector<2x384xf32> to vector<2x128xf32>
    %539 = vector.extract_strided_slice %537 {offsets = [0, 128], sizes = [2, 128], strides = [1, 1]} : vector<2x384xf32> to vector<2x128xf32>
    %540 = vector.extract_strided_slice %537 {offsets = [0, 256], sizes = [2, 128], strides = [1, 1]} : vector<2x384xf32> to vector<2x128xf32>
    %541 = vector.extract_strided_slice %531 {offsets = [0, 384], sizes = [2, 128], strides = [1, 1]} : vector<2x512xf32> to vector<2x128xf32>
    %542 = math.tanh %541 : vector<2x128xf32>
    %c0_274 = arith.constant 0 : index
    %c0_275 = arith.constant 0 : index
    %543 = vector.load %arg6[%c0_274, %c0_275] : memref<2x128xf32, #tpu.memory_space<vmem>>, vector<2x128xf32>
    %544 = arith.mulf %539, %543 : vector<2x128xf32>
    %545 = arith.mulf %538, %542 : vector<2x128xf32>
    %546 = arith.addf %544, %545 : vector<2x128xf32>
    %547 = math.tanh %546 : vector<2x128xf32>
    %548 = arith.mulf %540, %547 : vector<2x128xf32>
    %c15_i32_276 = arith.constant 15 : i32
    %549 = arith.subi %c15_i32_276, %525 : i32
    %550 = vector.broadcast %525 : i32 to vector<1x128xi32>
    %551 = vector.broadcast %549 : i32 to vector<1x128xi32>
    %552 = arith.select %7, %550, %551 : vector<1x128xi1>, vector<1x128xi32>
    %553 = vector.broadcast %552 : vector<1x128xi32> to vector<2x128xi32>
    %554 = vector.broadcast %4 : vector<2x1xi32> to vector<2x128xi32>
    %555 = arith.cmpi slt, %553, %554 : vector<2x128xi32>
    %c0_277 = arith.constant 0 : index
    %c0_278 = arith.constant 0 : index
    %556 = vector.load %arg5[%c0_277, %c0_278] : memref<2x128xf32, #tpu.memory_space<vmem>>, vector<2x128xf32>
    %557 = arith.select %555, %548, %556 : vector<2x128xi1>, vector<2x128xf32>
    %c0_279 = arith.constant 0 : index
    %c0_280 = arith.constant 0 : index
    %558 = vector.load %arg5[%c0_279, %c0_280] : memref<2x128xf32, #tpu.memory_space<vmem>>, vector<2x128xf32>
    tpu.vector_store %arg5[%c0_279, %c0_280], %557 {strides = array<i32>} : memref<2x128xf32, #tpu.memory_space<vmem>>, vector<2x128xf32>,
    %c0_281 = arith.constant 0 : index
    %c0_282 = arith.constant 0 : index
    %559 = vector.load %arg6[%c0_281, %c0_282] : memref<2x128xf32, #tpu.memory_space<vmem>>, vector<2x128xf32>
    %560 = arith.select %555, %546, %559 : vector<2x128xi1>, vector<2x128xf32>
    %c0_283 = arith.constant 0 : index
    %c0_284 = arith.constant 0 : index
    %561 = vector.load %arg6[%c0_283, %c0_284] : memref<2x128xf32, #tpu.memory_space<vmem>>, vector<2x128xf32>
    tpu.vector_store %arg6[%c0_283, %c0_284], %560 {strides = array<i32>} : memref<2x128xf32, #tpu.memory_space<vmem>>, vector<2x128xf32>,
    %cst_285 = arith.constant 0.000000e+00 : f32
    %562 = vector.broadcast %cst_285 : f32 to vector<2x128xf32>
    %563 = arith.select %555, %548, %562 : vector<2x128xi1>, vector<2x128xf32>
    %c12_286 = arith.constant 12 : index
    %c0_287 = arith.constant 0 : index
    %c0_288 = arith.constant 0 : index
    %564 = vector.load %arg4[%c12_286, %c0_287, %c0_288] : memref<16x2x128xf32, #tpu.memory_space<vmem>>, vector<1x2x128xf32>
    %565 = vector.shape_cast %564 : vector<1x2x128xf32> to vector<2x128xf32>
    %566 = vector.shape_cast %563 : vector<2x128xf32> to vector<1x2x128xf32>
    tpu.vector_store %arg4[%c12_286, %c0_287, %c0_288], %566 {strides = array<i32>} : memref<16x2x128xf32, #tpu.memory_space<vmem>>, vector<1x2x128xf32>,
    %c16_i32_289 = arith.constant 16 : i32
    %567 = arith.muli %arg0, %c16_i32_289 : i32
    %c13_i32 = arith.constant 13 : i32
    %568 = arith.addi %567, %c13_i32 : i32
    %c13 = arith.constant 13 : index
    %c0_290 = arith.constant 0 : index
    %c0_291 = arith.constant 0 : index
    %569 = vector.load %arg1[%c13, %c0_290, %c0_291] : memref<16x2x512xbf16, #tpu.memory_space<vmem>>, vector<1x2x512xbf16>
    %570 = vector.shape_cast %569 : vector<1x2x512xbf16> to vector<2x512xbf16>
    %571 = arith.extf %570 : vector<2x512xbf16> to vector<2x512xf32>
    %c0_292 = arith.constant 0 : index
    %c0_293 = arith.constant 0 : index
    %572 = vector.load %arg5[%c0_292, %c0_293] : memref<2x128xf32, #tpu.memory_space<vmem>>, vector<2x128xf32>
    %cst_294 = arith.constant dense<0.000000e+00> : vector<2x512xf32>
    %573 = tpu.matmul %572, %3, %cst_294 {dimension_numbers = #tpu.dot_dimension_numbers<[1], [0], [0], [1], [0, 0, 1, 1], [], []>} : vector<2x128xf32>, vector<128x512xf32>, vector<2x512xf32> -> vector<2x512xf32>
    %574 = arith.addf %571, %573 : vector<2x512xf32>
    %575 = vector.extract_strided_slice %574 {offsets = [0, 0], sizes = [2, 384], strides = [1, 1]} : vector<2x512xf32> to vector<2x384xf32>
    %576 = arith.negf %575 : vector<2x384xf32>
    %577 = math.exp %576 : vector<2x384xf32>
    %cst_295 = arith.constant 1.000000e+00 : f32
    %578 = vector.broadcast %cst_295 : f32 to vector<2x384xf32>
    %579 = arith.addf %578, %577 : vector<2x384xf32>
    %580 = arith.divf %578, %579 : vector<2x384xf32>
    %581 = vector.extract_strided_slice %580 {offsets = [0, 0], sizes = [2, 128], strides = [1, 1]} : vector<2x384xf32> to vector<2x128xf32>
    %582 = vector.extract_strided_slice %580 {offsets = [0, 128], sizes = [2, 128], strides = [1, 1]} : vector<2x384xf32> to vector<2x128xf32>
    %583 = vector.extract_strided_slice %580 {offsets = [0, 256], sizes = [2, 128], strides = [1, 1]} : vector<2x384xf32> to vector<2x128xf32>
    %584 = vector.extract_strided_slice %574 {offsets = [0, 384], sizes = [2, 128], strides = [1, 1]} : vector<2x512xf32> to vector<2x128xf32>
    %585 = math.tanh %584 : vector<2x128xf32>
    %c0_296 = arith.constant 0 : index
    %c0_297 = arith.constant 0 : index
    %586 = vector.load %arg6[%c0_296, %c0_297] : memref<2x128xf32, #tpu.memory_space<vmem>>, vector<2x128xf32>
    %587 = arith.mulf %582, %586 : vector<2x128xf32>
    %588 = arith.mulf %581, %585 : vector<2x128xf32>
    %589 = arith.addf %587, %588 : vector<2x128xf32>
    %590 = math.tanh %589 : vector<2x128xf32>
    %591 = arith.mulf %583, %590 : vector<2x128xf32>
    %c15_i32_298 = arith.constant 15 : i32
    %592 = arith.subi %c15_i32_298, %568 : i32
    %593 = vector.broadcast %568 : i32 to vector<1x128xi32>
    %594 = vector.broadcast %592 : i32 to vector<1x128xi32>
    %595 = arith.select %7, %593, %594 : vector<1x128xi1>, vector<1x128xi32>
    %596 = vector.broadcast %595 : vector<1x128xi32> to vector<2x128xi32>
    %597 = vector.broadcast %4 : vector<2x1xi32> to vector<2x128xi32>
    %598 = arith.cmpi slt, %596, %597 : vector<2x128xi32>
    %c0_299 = arith.constant 0 : index
    %c0_300 = arith.constant 0 : index
    %599 = vector.load %arg5[%c0_299, %c0_300] : memref<2x128xf32, #tpu.memory_space<vmem>>, vector<2x128xf32>
    %600 = arith.select %598, %591, %599 : vector<2x128xi1>, vector<2x128xf32>
    %c0_301 = arith.constant 0 : index
    %c0_302 = arith.constant 0 : index
    %601 = vector.load %arg5[%c0_301, %c0_302] : memref<2x128xf32, #tpu.memory_space<vmem>>, vector<2x128xf32>
    tpu.vector_store %arg5[%c0_301, %c0_302], %600 {strides = array<i32>} : memref<2x128xf32, #tpu.memory_space<vmem>>, vector<2x128xf32>,
    %c0_303 = arith.constant 0 : index
    %c0_304 = arith.constant 0 : index
    %602 = vector.load %arg6[%c0_303, %c0_304] : memref<2x128xf32, #tpu.memory_space<vmem>>, vector<2x128xf32>
    %603 = arith.select %598, %589, %602 : vector<2x128xi1>, vector<2x128xf32>
    %c0_305 = arith.constant 0 : index
    %c0_306 = arith.constant 0 : index
    %604 = vector.load %arg6[%c0_305, %c0_306] : memref<2x128xf32, #tpu.memory_space<vmem>>, vector<2x128xf32>
    tpu.vector_store %arg6[%c0_305, %c0_306], %603 {strides = array<i32>} : memref<2x128xf32, #tpu.memory_space<vmem>>, vector<2x128xf32>,
    %cst_307 = arith.constant 0.000000e+00 : f32
    %605 = vector.broadcast %cst_307 : f32 to vector<2x128xf32>
    %606 = arith.select %598, %591, %605 : vector<2x128xi1>, vector<2x128xf32>
    %c13_308 = arith.constant 13 : index
    %c0_309 = arith.constant 0 : index
    %c0_310 = arith.constant 0 : index
    %607 = vector.load %arg4[%c13_308, %c0_309, %c0_310] : memref<16x2x128xf32, #tpu.memory_space<vmem>>, vector<1x2x128xf32>
    %608 = vector.shape_cast %607 : vector<1x2x128xf32> to vector<2x128xf32>
    %609 = vector.shape_cast %606 : vector<2x128xf32> to vector<1x2x128xf32>
    tpu.vector_store %arg4[%c13_308, %c0_309, %c0_310], %609 {strides = array<i32>} : memref<16x2x128xf32, #tpu.memory_space<vmem>>, vector<1x2x128xf32>,
    %c16_i32_311 = arith.constant 16 : i32
    %610 = arith.muli %arg0, %c16_i32_311 : i32
    %c14_i32 = arith.constant 14 : i32
    %611 = arith.addi %610, %c14_i32 : i32
    %c14 = arith.constant 14 : index
    %c0_312 = arith.constant 0 : index
    %c0_313 = arith.constant 0 : index
    %612 = vector.load %arg1[%c14, %c0_312, %c0_313] : memref<16x2x512xbf16, #tpu.memory_space<vmem>>, vector<1x2x512xbf16>
    %613 = vector.shape_cast %612 : vector<1x2x512xbf16> to vector<2x512xbf16>
    %614 = arith.extf %613 : vector<2x512xbf16> to vector<2x512xf32>
    %c0_314 = arith.constant 0 : index
    %c0_315 = arith.constant 0 : index
    %615 = vector.load %arg5[%c0_314, %c0_315] : memref<2x128xf32, #tpu.memory_space<vmem>>, vector<2x128xf32>
    %cst_316 = arith.constant dense<0.000000e+00> : vector<2x512xf32>
    %616 = tpu.matmul %615, %3, %cst_316 {dimension_numbers = #tpu.dot_dimension_numbers<[1], [0], [0], [1], [0, 0, 1, 1], [], []>} : vector<2x128xf32>, vector<128x512xf32>, vector<2x512xf32> -> vector<2x512xf32>
    %617 = arith.addf %614, %616 : vector<2x512xf32>
    %618 = vector.extract_strided_slice %617 {offsets = [0, 0], sizes = [2, 384], strides = [1, 1]} : vector<2x512xf32> to vector<2x384xf32>
    %619 = arith.negf %618 : vector<2x384xf32>
    %620 = math.exp %619 : vector<2x384xf32>
    %cst_317 = arith.constant 1.000000e+00 : f32
    %621 = vector.broadcast %cst_317 : f32 to vector<2x384xf32>
    %622 = arith.addf %621, %620 : vector<2x384xf32>
    %623 = arith.divf %621, %622 : vector<2x384xf32>
    %624 = vector.extract_strided_slice %623 {offsets = [0, 0], sizes = [2, 128], strides = [1, 1]} : vector<2x384xf32> to vector<2x128xf32>
    %625 = vector.extract_strided_slice %623 {offsets = [0, 128], sizes = [2, 128], strides = [1, 1]} : vector<2x384xf32> to vector<2x128xf32>
    %626 = vector.extract_strided_slice %623 {offsets = [0, 256], sizes = [2, 128], strides = [1, 1]} : vector<2x384xf32> to vector<2x128xf32>
    %627 = vector.extract_strided_slice %617 {offsets = [0, 384], sizes = [2, 128], strides = [1, 1]} : vector<2x512xf32> to vector<2x128xf32>
    %628 = math.tanh %627 : vector<2x128xf32>
    %c0_318 = arith.constant 0 : index
    %c0_319 = arith.constant 0 : index
    %629 = vector.load %arg6[%c0_318, %c0_319] : memref<2x128xf32, #tpu.memory_space<vmem>>, vector<2x128xf32>
    %630 = arith.mulf %625, %629 : vector<2x128xf32>
    %631 = arith.mulf %624, %628 : vector<2x128xf32>
    %632 = arith.addf %630, %631 : vector<2x128xf32>
    %633 = math.tanh %632 : vector<2x128xf32>
    %634 = arith.mulf %626, %633 : vector<2x128xf32>
    %c15_i32_320 = arith.constant 15 : i32
    %635 = arith.subi %c15_i32_320, %611 : i32
    %636 = vector.broadcast %611 : i32 to vector<1x128xi32>
    %637 = vector.broadcast %635 : i32 to vector<1x128xi32>
    %638 = arith.select %7, %636, %637 : vector<1x128xi1>, vector<1x128xi32>
    %639 = vector.broadcast %638 : vector<1x128xi32> to vector<2x128xi32>
    %640 = vector.broadcast %4 : vector<2x1xi32> to vector<2x128xi32>
    %641 = arith.cmpi slt, %639, %640 : vector<2x128xi32>
    %c0_321 = arith.constant 0 : index
    %c0_322 = arith.constant 0 : index
    %642 = vector.load %arg5[%c0_321, %c0_322] : memref<2x128xf32, #tpu.memory_space<vmem>>, vector<2x128xf32>
    %643 = arith.select %641, %634, %642 : vector<2x128xi1>, vector<2x128xf32>
    %c0_323 = arith.constant 0 : index
    %c0_324 = arith.constant 0 : index
    %644 = vector.load %arg5[%c0_323, %c0_324] : memref<2x128xf32, #tpu.memory_space<vmem>>, vector<2x128xf32>
    tpu.vector_store %arg5[%c0_323, %c0_324], %643 {strides = array<i32>} : memref<2x128xf32, #tpu.memory_space<vmem>>, vector<2x128xf32>,
    %c0_325 = arith.constant 0 : index
    %c0_326 = arith.constant 0 : index
    %645 = vector.load %arg6[%c0_325, %c0_326] : memref<2x128xf32, #tpu.memory_space<vmem>>, vector<2x128xf32>
    %646 = arith.select %641, %632, %645 : vector<2x128xi1>, vector<2x128xf32>
    %c0_327 = arith.constant 0 : index
    %c0_328 = arith.constant 0 : index
    %647 = vector.load %arg6[%c0_327, %c0_328] : memref<2x128xf32, #tpu.memory_space<vmem>>, vector<2x128xf32>
    tpu.vector_store %arg6[%c0_327, %c0_328], %646 {strides = array<i32>} : memref<2x128xf32, #tpu.memory_space<vmem>>, vector<2x128xf32>,
    %cst_329 = arith.constant 0.000000e+00 : f32
    %648 = vector.broadcast %cst_329 : f32 to vector<2x128xf32>
    %649 = arith.select %641, %634, %648 : vector<2x128xi1>, vector<2x128xf32>
    %c14_330 = arith.constant 14 : index
    %c0_331 = arith.constant 0 : index
    %c0_332 = arith.constant 0 : index
    %650 = vector.load %arg4[%c14_330, %c0_331, %c0_332] : memref<16x2x128xf32, #tpu.memory_space<vmem>>, vector<1x2x128xf32>
    %651 = vector.shape_cast %650 : vector<1x2x128xf32> to vector<2x128xf32>
    %652 = vector.shape_cast %649 : vector<2x128xf32> to vector<1x2x128xf32>
    tpu.vector_store %arg4[%c14_330, %c0_331, %c0_332], %652 {strides = array<i32>} : memref<16x2x128xf32, #tpu.memory_space<vmem>>, vector<1x2x128xf32>,
    %c16_i32_333 = arith.constant 16 : i32
    %653 = arith.muli %arg0, %c16_i32_333 : i32
    %c15_i32_334 = arith.constant 15 : i32
    %654 = arith.addi %653, %c15_i32_334 : i32
    %c15 = arith.constant 15 : index
    %c0_335 = arith.constant 0 : index
    %c0_336 = arith.constant 0 : index
    %655 = vector.load %arg1[%c15, %c0_335, %c0_336] : memref<16x2x512xbf16, #tpu.memory_space<vmem>>, vector<1x2x512xbf16>
    %656 = vector.shape_cast %655 : vector<1x2x512xbf16> to vector<2x512xbf16>
    %657 = arith.extf %656 : vector<2x512xbf16> to vector<2x512xf32>
    %c0_337 = arith.constant 0 : index
    %c0_338 = arith.constant 0 : index
    %658 = vector.load %arg5[%c0_337, %c0_338] : memref<2x128xf32, #tpu.memory_space<vmem>>, vector<2x128xf32>
    %cst_339 = arith.constant dense<0.000000e+00> : vector<2x512xf32>
    %659 = tpu.matmul %658, %3, %cst_339 {dimension_numbers = #tpu.dot_dimension_numbers<[1], [0], [0], [1], [0, 0, 1, 1], [], []>} : vector<2x128xf32>, vector<128x512xf32>, vector<2x512xf32> -> vector<2x512xf32>
    %660 = arith.addf %657, %659 : vector<2x512xf32>
    %661 = vector.extract_strided_slice %660 {offsets = [0, 0], sizes = [2, 384], strides = [1, 1]} : vector<2x512xf32> to vector<2x384xf32>
    %662 = arith.negf %661 : vector<2x384xf32>
    %663 = math.exp %662 : vector<2x384xf32>
    %cst_340 = arith.constant 1.000000e+00 : f32
    %664 = vector.broadcast %cst_340 : f32 to vector<2x384xf32>
    %665 = arith.addf %664, %663 : vector<2x384xf32>
    %666 = arith.divf %664, %665 : vector<2x384xf32>
    %667 = vector.extract_strided_slice %666 {offsets = [0, 0], sizes = [2, 128], strides = [1, 1]} : vector<2x384xf32> to vector<2x128xf32>
    %668 = vector.extract_strided_slice %666 {offsets = [0, 128], sizes = [2, 128], strides = [1, 1]} : vector<2x384xf32> to vector<2x128xf32>
    %669 = vector.extract_strided_slice %666 {offsets = [0, 256], sizes = [2, 128], strides = [1, 1]} : vector<2x384xf32> to vector<2x128xf32>
    %670 = vector.extract_strided_slice %660 {offsets = [0, 384], sizes = [2, 128], strides = [1, 1]} : vector<2x512xf32> to vector<2x128xf32>
    %671 = math.tanh %670 : vector<2x128xf32>
    %c0_341 = arith.constant 0 : index
    %c0_342 = arith.constant 0 : index
    %672 = vector.load %arg6[%c0_341, %c0_342] : memref<2x128xf32, #tpu.memory_space<vmem>>, vector<2x128xf32>
    %673 = arith.mulf %668, %672 : vector<2x128xf32>
    %674 = arith.mulf %667, %671 : vector<2x128xf32>
    %675 = arith.addf %673, %674 : vector<2x128xf32>
    %676 = math.tanh %675 : vector<2x128xf32>
    %677 = arith.mulf %669, %676 : vector<2x128xf32>
    %c15_i32_343 = arith.constant 15 : i32
    %678 = arith.subi %c15_i32_343, %654 : i32
    %679 = vector.broadcast %654 : i32 to vector<1x128xi32>
    %680 = vector.broadcast %678 : i32 to vector<1x128xi32>
    %681 = arith.select %7, %679, %680 : vector<1x128xi1>, vector<1x128xi32>
    %682 = vector.broadcast %681 : vector<1x128xi32> to vector<2x128xi32>
    %683 = vector.broadcast %4 : vector<2x1xi32> to vector<2x128xi32>
    %684 = arith.cmpi slt, %682, %683 : vector<2x128xi32>
    %c0_344 = arith.constant 0 : index
    %c0_345 = arith.constant 0 : index
    %685 = vector.load %arg5[%c0_344, %c0_345] : memref<2x128xf32, #tpu.memory_space<vmem>>, vector<2x128xf32>
    %686 = arith.select %684, %677, %685 : vector<2x128xi1>, vector<2x128xf32>
    %c0_346 = arith.constant 0 : index
    %c0_347 = arith.constant 0 : index
    %687 = vector.load %arg5[%c0_346, %c0_347] : memref<2x128xf32, #tpu.memory_space<vmem>>, vector<2x128xf32>
    tpu.vector_store %arg5[%c0_346, %c0_347], %686 {strides = array<i32>} : memref<2x128xf32, #tpu.memory_space<vmem>>, vector<2x128xf32>,
    %c0_348 = arith.constant 0 : index
    %c0_349 = arith.constant 0 : index
    %688 = vector.load %arg6[%c0_348, %c0_349] : memref<2x128xf32, #tpu.memory_space<vmem>>, vector<2x128xf32>
    %689 = arith.select %684, %675, %688 : vector<2x128xi1>, vector<2x128xf32>
    %c0_350 = arith.constant 0 : index
    %c0_351 = arith.constant 0 : index
    %690 = vector.load %arg6[%c0_350, %c0_351] : memref<2x128xf32, #tpu.memory_space<vmem>>, vector<2x128xf32>
    tpu.vector_store %arg6[%c0_350, %c0_351], %689 {strides = array<i32>} : memref<2x128xf32, #tpu.memory_space<vmem>>, vector<2x128xf32>,
    %cst_352 = arith.constant 0.000000e+00 : f32
    %691 = vector.broadcast %cst_352 : f32 to vector<2x128xf32>
    %692 = arith.select %684, %677, %691 : vector<2x128xi1>, vector<2x128xf32>
    %c15_353 = arith.constant 15 : index
    %c0_354 = arith.constant 0 : index
    %c0_355 = arith.constant 0 : index
    %693 = vector.load %arg4[%c15_353, %c0_354, %c0_355] : memref<16x2x128xf32, #tpu.memory_space<vmem>>, vector<1x2x128xf32>
    %694 = vector.shape_cast %693 : vector<1x2x128xf32> to vector<2x128xf32>
    %695 = vector.shape_cast %692 : vector<2x128xf32> to vector<1x2x128xf32>
    tpu.vector_store %arg4[%c15_353, %c0_354, %c0_355], %695 {strides = array<i32>} : memref<16x2x128xf32, #tpu.memory_space<vmem>>, vector<1x2x128xf32>,
    return
  }
  func.func @transform_0(%arg0: i32) -> (i32, i32, i32) {
    %c0_i32 = arith.constant 0 : i32
    %c0_i32_0 = arith.constant 0 : i32
    %c0_i32_1 = arith.constant 0 : i32
    return %arg0, %c0_i32, %c0_i32_0 : i32, i32, i32
  }
  func.func @transform_1(%arg0: i32) -> (i32, i32) {
    %c0_i32 = arith.constant 0 : i32
    %c0_i32_0 = arith.constant 0 : i32
    %c0_i32_1 = arith.constant 0 : i32
    return %c0_i32, %c0_i32_0 : i32, i32
  }
  func.func @transform_2(%arg0: i32) -> (i32, i32) {
    %c0_i32 = arith.constant 0 : i32
    %c0_i32_0 = arith.constant 0 : i32
    %c0_i32_1 = arith.constant 0 : i32
    return %c0_i32, %c0_i32_0 : i32, i32
  }
  func.func @transform_3(%arg0: i32) -> (i32, i32, i32) {
    %c0_i32 = arith.constant 0 : i32
    %c0_i32_0 = arith.constant 0 : i32
    %c0_i32_1 = arith.constant 0 : i32
    return %arg0, %c0_i32, %c0_i32_0 : i32, i32, i32
  }
}

</mosaic_0001>

<llo_original>
// kernel: encoder_forward.2
$region0: #{encoder_forward.2}
  #allocation0 [shape = 'u32[]', space=smem, size = 0x4, offset = 0x4, fixed_abs, tag = 'smem constant byte address 0x4 - core index']
  #allocation1 [shape = 'u32[144,128]{1,0:T(1,128)}', space=vmem, size = 0x12000, scoped, tag = 'internal scratch']
  %s0 = inlined_call_operand.vmem [shape: bf16[2,28,128], index: 0, kind: input, shape index: {}]
  %s1 = inlined_call_operand.hbm [shape: f32[640,128], index: 1, kind: input, shape index: {}]
  %s2 = inlined_call_operand.vmem [shape: f32[1,128], index: 2, kind: input, shape index: {}]
  %s3 = inlined_call_operand.vmem [shape: f32[1,128], index: 3, kind: input, shape index: {}]
  %s4 = inlined_call_operand.hbm [shape: f32[640,128], index: 4, kind: input, shape index: {}]
  %s5 = inlined_call_operand.vmem [shape: f32[1,128], index: 5, kind: input, shape index: {}]
  %s6 = inlined_call_operand.vmem [shape: f32[1,128], index: 6, kind: input, shape index: {}]
  %s7 = inlined_call_operand.hbm [shape: f32[640,128], index: 7, kind: input, shape index: {}]
  %s8 = inlined_call_operand.vmem [shape: f32[1,128], index: 8, kind: input, shape index: {}]
  %s9 = inlined_call_operand.vmem [shape: f32[1,128], index: 9, kind: input, shape index: {}]
  %s10 = inlined_call_operand.vmem [shape: bf16[2,16,128], index: 10, kind: output, shape index: {}]
  %s11 = sld [smem:[#allocation0]]
  $region85: #{encoder_forward.2} parent=0
    _
  %s13 = ssub.s32 1, %s11
  %s14 = scalar_select 0, %s13, %s11
  $region1: #{encoder_forward.2} parent=0
    #allocation2 [shape = 'u8[327680]{0}', space=vmem, size = 0x50000, scoped, tag = 'input window, operand 1, single buffered']
    #allocation3 [shape = 's32[2]{0}', space=sflag, size = 0x8, scoped, tag = 'scoped memory for encoder_forward.2']
    #allocation4 [shape = 'u8[327680]{0}', space=vmem, size = 0x50000, scoped, tag = 'input window, operand 4, single buffered']
    #allocation5 [shape = 's32[1]{0}', space=sflag, size = 0x4, scoped, tag = 'scoped memory for encoder_forward.2']
    #allocation6 [shape = 'u8[327680]{0}', space=vmem, size = 0x50000, scoped, tag = 'input window, operand 7, single buffered']
    %15 = vsyncpa [#allocation3], 0
    %16 = vsyncpa [#allocation5], 0
    loop: start=0, step=1, limit=4
    $region2: #{encoder_forward.2} parent=1 // loop_pre_header
      _
    $region3: #{encoder_forward.2} parent=1 // loop_header
      %s18 = sphi 0, %s22
      %p19 = scmp.ge.s32.totalorder %s18, 4
      %s25 = sphi 0, %s37
      %s26 = sphi 0, %s33
      %s27 = sphi 0, %s25
      %s28 = sphi 0, %s26
      %s29 = sphi 0, %s27
      %s30 = sphi 0, %s28
      %s40 = sphi 0, %s42
      %s43 = sphi 0, %s40
      %s44 = sphi 0, %s43
      %s60 = sphi 0, %s44
      %s64 = sphi 0, %s64
      %s66 = sphi 0, %s64
      %s67 = sphi 0, %s66
      %s81 = sphi 0, %s67
      %s85 = sphi 0, %s85
      %s87 = sphi 0, %s85
      %s88 = sphi 0, %s87
      %s102 = sphi 0, %s88
      %s106 = sphi 0, %s106
      %s108 = sphi 0, %s106
      %s109 = sphi 0, %s108
      %s123 = sphi 0, %s109
      %s127 = sphi 0, %s127
      %s129 = sphi 0, %s127
      %s130 = sphi 0, %s129
      %s144 = sphi 0, %s130
      %s148 = sphi 0, %s148
      %s150 = sphi 0, %s148
      %s151 = sphi 0, %s150
      %s165 = sphi 0, %s151
      %s169 = sphi 0, %s169
      %s171 = sphi 0, %s169
      %s172 = sphi 0, %s171
      %s186 = sphi 0, %s172
      %s190 = sphi 0, %s190
      %s192 = sphi 0, %s190
      %s193 = sphi 0, %s192
      %s207 = sphi 0, %s193
      %s211 = sphi 0, %s211
      %s213 = sphi 0, %s211
      %s214 = sphi 0, %s213
      %s228 = sphi 0, %s214
      %s232 = sphi 0, %s232
      %s234 = sphi 0, %s232
      %s235 = sphi 0, %s234
      %s249 = sphi 0, %s235
      %s257 = sphi 0, %s259
      %s260 = sphi 0, %s257
      %s261 = sphi 0, %s260
      %s277 = sphi 0, %s261
    $region4: #{encoder_forward.2} parent=1 // loop_header_branch
      %21 = sbr.rel (%p19) target = $region8
    $region5: #{encoder_forward.2} parent=1 // loop_body
      %s23 = ssub.s32 %s18, 1
      %s24 = ssub.s32 %s18, 2
      %s31 = sadd.s32 1, %s26
      %p32 = scmp.ge.s32.totalorder %s31, 1
      %s33 = scalar_select %p32, 0, %s31
      %s34 = sadd.s32 1, %s25
      %s35 = scalar_select %p32, %s34, %s25
      %p36 = scmp.ge.s32.totalorder %s35, 2
      %s37 = scalar_select %p36, 0, %s35
      %s38 = ssub.s32 %s25, %s37
      %p39 = scmp.eq.s32.totalorder %s38, 0
      %s41 = sadd.s32 %s40, 1
      %s42 = scalar_select %p39, %s40, %s41
      %p45 = pneg %p39
      %p46 = scmp.eq.s32.totalorder %s18, 1
      %p47 = por %p45, %p46
      %p48 = scmp.ne.s32.totalorder %s40, %s43
      %p49 = scmp.eq.s32.totalorder %s18, 0
      %p50 = por %p48, %p49
      %p51 = scmp.ne.s32.totalorder %s40, %s43
      %p52 = scmp.eq.s32.totalorder %s23, 1
      %p53 = por %p51, %p52
      %p54 = scmp.ne.s32.totalorder %s43, %s44
      %p55 = scmp.eq.s32.totalorder %s23, 0
      %p56 = por %p54, %p55
      %p57 = scmp.ne.s32.totalorder %s43, %s44
      %p58 = scmp.eq.s32.totalorder %s24, 1
      %p59 = por %p57, %p58
      %p61 = scmp.ne.s32.totalorder %s44, %s60
      %p62 = scmp.eq.s32.totalorder %s24, 0
      %p63 = por %p61, %p62
      %s65 = sadd.s32 %s64, 1
      %p68 = scmp.eq.s32.totalorder %s18, 1
      %p69 = scmp.ne.s32.totalorder %s64, %s66
      %p70 = scmp.eq.s32.totalorder %s18, 0
      %p71 = por %p69, %p70
      %p72 = scmp.ne.s32.totalorder %s64, %s66
      %p73 = scmp.eq.s32.totalorder %s23, 1
      %p74 = por %p72, %p73
      %p75 = scmp.ne.s32.totalorder %s66, %s67
      %p76 = scmp.eq.s32.totalorder %s23, 0
      %p77 = por %p75, %p76
      %p78 = scmp.ne.s32.totalorder %s66, %s67
      %p79 = scmp.eq.s32.totalorder %s24, 1
      %p80 = por %p78, %p79
      %p82 = scmp.ne.s32.totalorder %s67, %s81
      %p83 = scmp.eq.s32.totalorder %s24, 0
      %p84 = por %p82, %p83
      %s86 = sadd.s32 %s85, 1
      %p89 = scmp.eq.s32.totalorder %s18, 1
      %p90 = scmp.ne.s32.totalorder %s85, %s87
      %p91 = scmp.eq.s32.totalorder %s18, 0
      %p92 = por %p90, %p91
      %p93 = scmp.ne.s32.totalorder %s85, %s87
      %p94 = scmp.eq.s32.totalorder %s23, 1
      %p95 = por %p93, %p94
      %p96 = scmp.ne.s32.totalorder %s87, %s88
      %p97 = scmp.eq.s32.totalorder %s23, 0
      %p98 = por %p96, %p97
      %p99 = scmp.ne.s32.totalorder %s87, %s88
      %p100 = scmp.eq.s32.totalorder %s24, 1
      %p101 = por %p99, %p100
      %p103 = scmp.ne.s32.totalorder %s88, %s102
      %p104 = scmp.eq.s32.totalorder %s24, 0
      %p105 = por %p103, %p104
      %s107 = sadd.s32 %s106, 1
      %p110 = scmp.eq.s32.totalorder %s18, 1
      %p111 = scmp.ne.s32.totalorder %s106, %s108
      %p112 = scmp.eq.s32.totalorder %s18, 0
      %p113 = por %p111, %p112
      %p114 = scmp.ne.s32.totalorder %s106, %s108
      %p115 = scmp.eq.s32.totalorder %s23, 1
      %p116 = por %p114, %p115
      %p117 = scmp.ne.s32.totalorder %s108, %s109
      %p118 = scmp.eq.s32.totalorder %s23, 0
      %p119 = por %p117, %p118
      %p120 = scmp.ne.s32.totalorder %s108, %s109
      %p121 = scmp.eq.s32.totalorder %s24, 1
      %p122 = por %p120, %p121
      %p124 = scmp.ne.s32.totalorder %s109, %s123
      %p125 = scmp.eq.s32.totalorder %s24, 0
      %p126 = por %p124, %p125
      %s128 = sadd.s32 %s127, 1
      %p131 = scmp.eq.s32.totalorder %s18, 1
      %p132 = scmp.ne.s32.totalorder %s127, %s129
      %p133 = scmp.eq.s32.totalorder %s18, 0
      %p134 = por %p132, %p133
      %p135 = scmp.ne.s32.totalorder %s127, %s129
      %p136 = scmp.eq.s32.totalorder %s23, 1
      %p137 = por %p135, %p136
      %p138 = scmp.ne.s32.totalorder %s129, %s130
      %p139 = scmp.eq.s32.totalorder %s23, 0
      %p140 = por %p138, %p139
      %p141 = scmp.ne.s32.totalorder %s129, %s130
      %p142 = scmp.eq.s32.totalorder %s24, 1
      %p143 = por %p141, %p142
      %p145 = scmp.ne.s32.totalorder %s130, %s144
      %p146 = scmp.eq.s32.totalorder %s24, 0
      %p147 = por %p145, %p146
      %s149 = sadd.s32 %s148, 1
      %p152 = scmp.eq.s32.totalorder %s18, 1
      %p153 = scmp.ne.s32.totalorder %s148, %s150
      %p154 = scmp.eq.s32.totalorder %s18, 0
      %p155 = por %p153, %p154
      %p156 = scmp.ne.s32.totalorder %s148, %s150
      %p157 = scmp.eq.s32.totalorder %s23, 1
      %p158 = por %p156, %p157
      %p159 = scmp.ne.s32.totalorder %s150, %s151
      %p160 = scmp.eq.s32.totalorder %s23, 0
      %p161 = por %p159, %p160
      %p162 = scmp.ne.s32.totalorder %s150, %s151
      %p163 = scmp.eq.s32.totalorder %s24, 1
      %p164 = por %p162, %p163
      %p166 = scmp.ne.s32.totalorder %s151, %s165
      %p167 = scmp.eq.s32.totalorder %s24, 0
      %p168 = por %p166, %p167
      %s170 = sadd.s32 %s169, 1
      %p173 = scmp.eq.s32.totalorder %s18, 1
      %p174 = scmp.ne.s32.totalorder %s169, %s171
      %p175 = scmp.eq.s32.totalorder %s18, 0
      %p176 = por %p174, %p175
      %p177 = scmp.ne.s32.totalorder %s169, %s171
      %p178 = scmp.eq.s32.totalorder %s23, 1
      %p179 = por %p177, %p178
      %p180 = scmp.ne.s32.totalorder %s171, %s172
      %p181 = scmp.eq.s32.totalorder %s23, 0
      %p182 = por %p180, %p181
      %p183 = scmp.ne.s32.totalorder %s171, %s172
      %p184 = scmp.eq.s32.totalorder %s24, 1
      %p185 = por %p183, %p184
      %p187 = scmp.ne.s32.totalorder %s172, %s186
      %p188 = scmp.eq.s32.totalorder %s24, 0
      %p189 = por %p187, %p188
      %s191 = sadd.s32 %s190, 1
      %p194 = scmp.eq.s32.totalorder %s18, 1
      %p195 = scmp.ne.s32.totalorder %s190, %s192
      %p196 = scmp.eq.s32.totalorder %s18, 0
      %p197 = por %p195, %p196
      %p198 = scmp.ne.s32.totalorder %s190, %s192
      %p199 = scmp.eq.s32.totalorder %s23, 1
      %p200 = por %p198, %p199
      %p201 = scmp.ne.s32.totalorder %s192, %s193
      %p202 = scmp.eq.s32.totalorder %s23, 0
      %p203 = por %p201, %p202
      %p204 = scmp.ne.s32.totalorder %s192, %s193
      %p205 = scmp.eq.s32.totalorder %s24, 1
      %p206 = por %p204, %p205
      %p208 = scmp.ne.s32.totalorder %s193, %s207
      %p209 = scmp.eq.s32.totalorder %s24, 0
      %p210 = por %p208, %p209
      %s212 = sadd.s32 %s211, 1
      %p215 = scmp.eq.s32.totalorder %s18, 1
      %p216 = scmp.ne.s32.totalorder %s211, %s213
      %p217 = scmp.eq.s32.totalorder %s18, 0
      %p218 = por %p216, %p217
      %p219 = scmp.ne.s32.totalorder %s211, %s213
      %p220 = scmp.eq.s32.totalorder %s23, 1
      %p221 = por %p219, %p220
      %p222 = scmp.ne.s32.totalorder %s213, %s214
      %p223 = scmp.eq.s32.totalorder %s23, 0
      %p224 = por %p222, %p223
      %p225 = scmp.ne.s32.totalorder %s213, %s214
      %p226 = scmp.eq.s32.totalorder %s24, 1
      %p227 = por %p225, %p226
      %p229 = scmp.ne.s32.totalorder %s214, %s228
      %p230 = scmp.eq.s32.totalorder %s24, 0
      %p231 = por %p229, %p230
      %s233 = sadd.s32 %s232, 1
      %p236 = scmp.eq.s32.totalorder %s18, 1
      %p237 = scmp.ne.s32.totalorder %s232, %s234
      %p238 = scmp.eq.s32.totalorder %s18, 0
      %p239 = por %p237, %p238
      %p240 = scmp.ne.s32.totalorder %s232, %s234
      %p241 = scmp.eq.s32.totalorder %s23, 1
      %p242 = por %p240, %p241
      %p243 = scmp.ne.s32.totalorder %s234, %s235
      %p244 = scmp.eq.s32.totalorder %s23, 0
      %p245 = por %p243, %p244
      %p246 = scmp.ne.s32.totalorder %s234, %s235
      %p247 = scmp.eq.s32.totalorder %s24, 1
      %p248 = por %p246, %p247
      %p250 = scmp.ne.s32.totalorder %s235, %s249
      %p251 = scmp.eq.s32.totalorder %s24, 0
      %p252 = por %p250, %p251
      %s253 = ssub.s32 %s25, %s37
      %s254 = ssub.s32 %s26, %s33
      %s255 = sor.u32 %s253, %s254
      %p256 = scmp.eq.s32.totalorder %s255, 0
      %s258 = sadd.s32 %s257, 1
      %s259 = scalar_select %p256, %s257, %s258
      %p262 = pneg %p256
      %p263 = scmp.eq.s32.totalorder %s18, 1
      %p264 = por %p262, %p263
      %p265 = scmp.ne.s32.totalorder %s257, %s260
      %p266 = scmp.eq.s32.totalorder %s18, 0
      %p267 = por %p265, %p266
      %p268 = scmp.ne.s32.totalorder %s257, %s260
      %p269 = scmp.eq.s32.totalorder %s23, 1
      %p270 = por %p268, %p269
      %p271 = scmp.ne.s32.totalorder %s260, %s261
      %p272 = scmp.eq.s32.totalorder %s23, 0
      %p273 = por %p271, %p272
      %p274 = scmp.ne.s32.totalorder %s260, %s261
      %p275 = scmp.eq.s32.totalorder %s24, 1
      %p276 = por %p274, %p275
      %p278 = scmp.ne.s32.totalorder %s261, %s277
      %p279 = scmp.eq.s32.totalorder %s24, 0
      %p280 = por %p278, %p279
      %p281 = scmp.le.s32.totalorder 1, %s18
      %p282 = scmp.lt.s32.totalorder %s18, 3
      %p283 = pnand %p281, %p282
      %p284 = pneg %p283
      // Predicated region
      $region9: #{encoder_forward.2} parent=5 // pred_check
        _
      $region10: #{encoder_forward.2} parent=5 // pred_check_branch
        %286 = sbr.rel (%p283) target = $region12
      $region11: #{encoder_forward.2} parent=5 // pred_region
        %s287 = ssub.s32 %s18, 1
        // Predicated region
        $region13: #{encoder_forward.2} parent=11 // pred_check
          %p288 = pneg %p77
        $region14: #{encoder_forward.2} parent=11 // pred_check_branch
          %290 = sbr.rel (%p288) target = $region16
        $region15: #{encoder_forward.2} parent=11 // pred_region
          %s292 = ssub.s32 10240, 10240
          %293 = vsyncadd [#allocation3], %s292
          %s294 = sshll.u32 [#allocation2], 4
          %s295 = int_to_ptr.vmem [resolvable:$true] %s294
          %300 = dma.hbm_to_vmem [thread:$0]  %s1, 10240, %s295, [#allocation3], 128, 128, 8
        $region16: #{encoder_forward.2} parent=11 // pred_fallthru
          _
        // Predicated region
        $region17: #{encoder_forward.2} parent=11 // pred_check
          %p301 = pneg %p98
        $region18: #{encoder_forward.2} parent=11 // pred_check_branch
          %303 = sbr.rel (%p301) target = $region20
        $region19: #{encoder_forward.2} parent=11 // pred_region
          _
        $region20: #{encoder_forward.2} parent=11 // pred_fallthru
          _
        // Predicated region
        $region21: #{encoder_forward.2} parent=11 // pred_check
          %p304 = pneg %p119
        $region22: #{encoder_forward.2} parent=11 // pred_check_branch
          %306 = sbr.rel (%p304) target = $region24
        $region23: #{encoder_forward.2} parent=11 // pred_region
          _
        $region24: #{encoder_forward.2} parent=11 // pred_fallthru
          _
        // Predicated region
        $region25: #{encoder_forward.2} parent=11 // pred_check
          %p307 = pneg %p140
        $region26: #{encoder_forward.2} parent=11 // pred_check_branch
          %309 = sbr.rel (%p307) target = $region28
        $region27: #{encoder_forward.2} parent=11 // pred_region
          %s311 = ssub.s32 10240, 10240
          %312 = vsyncadd [#allocation5], %s311
          %s313 = sshll.u32 [#allocation4], 4
          %s314 = int_to_ptr.vmem [resolvable:$true] %s313
          %319 = dma.hbm_to_vmem [thread:$0]  %s4, 10240, %s314, [#allocation5], 128, 128, 8
        $region28: #{encoder_forward.2} parent=11 // pred_fallthru
          _
        // Predicated region
        $region29: #{encoder_forward.2} parent=11 // pred_check
          %p320 = pneg %p161
        $region30: #{encoder_forward.2} parent=11 // pred_check_branch
          %322 = sbr.rel (%p320) target = $region32
        $region31: #{encoder_forward.2} parent=11 // pred_region
          _
        $region32: #{encoder_forward.2} parent=11 // pred_fallthru
          _
        // Predicated region
        $region33: #{encoder_forward.2} parent=11 // pred_check
          %p323 = pneg %p182
        $region34: #{encoder_forward.2} parent=11 // pred_check_branch
          %325 = sbr.rel (%p323) target = $region36
        $region35: #{encoder_forward.2} parent=11 // pred_region
          _
        $region36: #{encoder_forward.2} parent=11 // pred_fallthru
          _
        // Predicated region
        $region37: #{encoder_forward.2} parent=11 // pred_check
          %p326 = pneg %p203
        $region38: #{encoder_forward.2} parent=11 // pred_check_branch
          %328 = sbr.rel (%p326) target = $region40
        $region39: #{encoder_forward.2} parent=11 // pred_region
          %s330 = ssub.s32 10240, 10240
          %331 = vsyncadd [#allocation5], %s330
          %s332 = sshll.u32 [#allocation6], 4
          %s333 = int_to_ptr.vmem [resolvable:$true] %s332
          %338 = dma.hbm_to_vmem [thread:$0]  %s7, 10240, %s333, [#allocation5], 128, 128, 8
        $region40: #{encoder_forward.2} parent=11 // pred_fallthru
          _
        // Predicated region
        $region41: #{encoder_forward.2} parent=11 // pred_check
          %p339 = pneg %p224
        $region42: #{encoder_forward.2} parent=11 // pred_check_branch
          %341 = sbr.rel (%p339) target = $region44
        $region43: #{encoder_forward.2} parent=11 // pred_region
          _
        $region44: #{encoder_forward.2} parent=11 // pred_fallthru
          _
        // Predicated region
        $region45: #{encoder_forward.2} parent=11 // pred_check
          %p342 = pneg %p245
        $region46: #{encoder_forward.2} parent=11 // pred_check_branch
          %344 = sbr.rel (%p342) target = $region48
        $region47: #{encoder_forward.2} parent=11 // pred_region
          _
        $region48: #{encoder_forward.2} parent=11 // pred_fallthru
          _
      $region12: #{encoder_forward.2} parent=5 // pred_fallthru
        _
      %p345 = scmp.lt.s32.totalorder %s18, 2
      // Predicated region
      $region49: #{encoder_forward.2} parent=5 // pred_check
        %p346 = pneg %p345
      $region50: #{encoder_forward.2} parent=5 // pred_check_branch
        %348 = sbr.rel (%p346) target = $region52
      $region51: #{encoder_forward.2} parent=5 // pred_region
        // Predicated region
        $region53: #{encoder_forward.2} parent=51 // pred_check
          %p349 = pneg %p50
        $region54: #{encoder_forward.2} parent=51 // pred_check_branch
          %351 = sbr.rel (%p349) target = $region56
        $region55: #{encoder_forward.2} parent=51 // pred_region
          %p352 = scmp.lt.s32.totalorder %s25, 1
          %s353 = scalar_select %p352, %s25, 1
          %s354 = smul.addr %s353, 4
          %s355 = smul.addr %s354, 4
          %s356 = scalar_lea.vmem %s0, %s355
        $region56: #{encoder_forward.2} parent=51 // pred_fallthru
          _
      $region52: #{encoder_forward.2} parent=5 // pred_fallthru
        _
      %p357 = scmp.le.s32.totalorder 1, %s18
      %p358 = scmp.lt.s32.totalorder %s18, 3
      %p359 = pnand %p357, %p358
      %p360 = pneg %p359
      // Predicated region
      $region57: #{encoder_forward.2} parent=5 // pred_check
        _
      $region58: #{encoder_forward.2} parent=5 // pred_check_branch
        %362 = sbr.rel (%p359) target = $region60
      $region59: #{encoder_forward.2} parent=5 // pred_region
        %s363 = ssub.s32 %s18, 1
        // Predicated region
        $region61: #{encoder_forward.2} parent=59 // pred_check
          %p364 = pneg %p77
        $region62: #{encoder_forward.2} parent=59 // pred_check_branch
          %366 = sbr.rel (%p364) target = $region64
        $region63: #{encoder_forward.2} parent=59 // pred_region
          %367 = dma.done [#allocation3], 10240
        $region64: #{encoder_forward.2} parent=59 // pred_fallthru
          _
        // Predicated region
        $region65: #{encoder_forward.2} parent=59 // pred_check
          %p368 = pneg %p140
        $region66: #{encoder_forward.2} parent=59 // pred_check_branch
          %370 = sbr.rel (%p368) target = $region68
        $region67: #{encoder_forward.2} parent=59 // pred_region
          %371 = dma.done [#allocation5], 10240
        $region68: #{encoder_forward.2} parent=59 // pred_fallthru
          _
        // Predicated region
        $region69: #{encoder_forward.2} parent=59 // pred_check
          %p372 = pneg %p203
        $region70: #{encoder_forward.2} parent=59 // pred_check_branch
          %374 = sbr.rel (%p372) target = $region72
        $region71: #{encoder_forward.2} parent=59 // pred_region
          %375 = dma.done [#allocation5], 10240
        $region72: #{encoder_forward.2} parent=59 // pred_fallthru
          _
        %p376 = scmp.lt.s32.totalorder %s27, 1
        %s377 = scalar_select %p376, %s27, 1
        %s378 = smul.addr %s377, 4
        %s379 = smul.addr %s378, 4
        %s380 = scalar_lea.vmem %s0, %s379
        %p381 = pneg %p56
        %p382 = pneg %p53
        %p383 = pneg %p77
        %p384 = pneg %p74
        %p385 = pneg %p98
        %p386 = pneg %p95
        %p387 = pneg %p119
        %p388 = pneg %p116
        %p389 = pneg %p140
        %p390 = pneg %p137
        %p391 = pneg %p161
        %p392 = pneg %p158
        %p393 = pneg %p182
        %p394 = pneg %p179
        %p395 = pneg %p203
        %p396 = pneg %p200
        %p397 = pneg %p224
        %p398 = pneg %p221
        %p399 = pneg %p245
        %p400 = pneg %p242
        %p401 = pneg %p273
        %p402 = pneg %p270
        %p403 = scmp.lt.s32.totalorder %s27, 1
        %s404 = scalar_select %p403, %s27, 1
        %p405 = scmp.lt.s32.totalorder %s28, 0
        %s406 = scalar_select %p405, %s28, 0
        %s407 = sadd.s32 %s406, %s404
        %s408 = smul.addr %s407, 8
        %s409 = scalar_lea.vmem %s10, %s408
        %p410 = scmp.lt.s32.totalorder %s27, 1
        %s411 = scalar_select %p410, %s27, 1
        %s412 = smul.addr %s411, 4
        %s413 = smul.addr %s412, 4
        %s414 = scalar_lea.vmem %s0, %s413
        %p415 = scmp.lt.s32.totalorder %s27, 1
        %s416 = scalar_select %p415, %s27, 1
        %p417 = scmp.lt.s32.totalorder %s28, 0
        %s418 = scalar_select %p417, %s28, 0
        %s419 = sadd.s32 %s418, %s416
        %s420 = smul.addr %s419, 8
        %s421 = scalar_lea.vmem %s10, %s420
        %s422 = smul.u32 %s28, 16
        %s423 = sshra.s32 %s422, 3
        %s424 = sand.u32 %s422, 7
        %s425 = smul.addr %s423, 4
        %s426 = scalar_lea.vmem %s414, %s425
        %v427 = vld [vmem:[%s426] sm:$0xf]
        %v428 = vld [vmem:[%s426 + $0x4] sm:$0xf]
        %v429 = vld [vmem:[%s426 + $0x8] sm:$0xf]
        %v430 = vld [vmem:[%s426 + $0xc] sm:$0x3]
        %v431 = vunpack.c.l.bf16 %v427
        %v432 = vunpack.c.l.bf16 %v428
        %v433 = vunpack.c.l.bf16 %v429
        %v434 = vunpack.c.l.bf16 %v430
        %v435 = vld [vmem:[%s2] sm:$0x1]
        %v436 = vld [vmem:[%s3] sm:$0x1]
        %vm441 = vcmask 1046528
        %v442 = vrot.slane %v431, 1
        %v443 = vrot.slane %v432, 1
        %v444 = vsel %vm441, %v442, %v443
        %v445 = vrot.slane %v433, 1
        %v446 = vsel %vm441, %v443, %v445
        %v447 = vrot.slane %v434, 1
        %v448 = vsel %vm441, %v445, %v447
        %vm452 = vcmask 1045504
        %v453 = vrot.slane %v431, 2
        %v454 = vrot.slane %v432, 2
        %v455 = vsel %vm452, %v453, %v454
        %v456 = vrot.slane %v433, 2
        %v457 = vsel %vm452, %v454, %v456
        %v458 = vrot.slane %v434, 2
        %v459 = vsel %vm452, %v456, %v458
        %vm463 = vcmask 1044480
        %v464 = vrot.slane %v431, 3
        %v465 = vrot.slane %v432, 3
        %v466 = vsel %vm463, %v464, %v465
        %v467 = vrot.slane %v433, 3
        %v468 = vsel %vm463, %v465, %v467
        %v469 = vrot.slane %v434, 3
        %v470 = vsel %vm463, %v467, %v469
        %vm474 = vcmask 1043456
        %v475 = vrot.slane %v431, 4
        %v476 = vrot.slane %v432, 4
        %v477 = vsel %vm474, %v475, %v476
        %v478 = vrot.slane %v433, 4
        %v479 = vsel %vm474, %v476, %v478
        %v480 = vrot.slane %v434, 4
        %v481 = vsel %vm474, %v478, %v480
        %v485 = vld [vmem:[#allocation2] sm:$0xff]
        %v486 = vld [vmem:[#allocation2 + $0x8] sm:$0xff]
        %v487 = vld [vmem:[#allocation2 + $0x10] sm:$0xff]
        %v488 = vld [vmem:[#allocation2 + $0x18] sm:$0xff]
        %v489 = vld [vmem:[#allocation2 + $0x20] sm:$0xff]
        %v490 = vld [vmem:[#allocation2 + $0x28] sm:$0xff]
        %v491 = vld [vmem:[#allocation2 + $0x30] sm:$0xff]
        %v492 = vld [vmem:[#allocation2 + $0x38] sm:$0xff]
        %v493 = vld [vmem:[#allocation2 + $0x40] sm:$0xff]
        %v494 = vld [vmem:[#allocation2 + $0x48] sm:$0xff]
        %v495 = vld [vmem:[#allocation2 + $0x50] sm:$0xff]
        %v496 = vld [vmem:[#allocation2 + $0x58] sm:$0xff]
        %v497 = vld [vmem:[#allocation2 + $0x60] sm:$0xff]
        %v498 = vld [vmem:[#allocation2 + $0x68] sm:$0xff]
        %v499 = vld [vmem:[#allocation2 + $0x70] sm:$0xff]
        %v500 = vld [vmem:[#allocation2 + $0x78] sm:$0xff]
        %v501 = vld [vmem:[#allocation2 + $0x80] sm:$0xff]
        %v502 = vld [vmem:[#allocation2 + $0x88] sm:$0xff]
        %v503 = vld [vmem:[#allocation2 + $0x90] sm:$0xff]
        %v504 = vld [vmem:[#allocation2 + $0x98] sm:$0xff]
        %v505 = vld [vmem:[#allocation2 + $0xa0] sm:$0xff]
        %v506 = vld [vmem:[#allocation2 + $0xa8] sm:$0xff]
        %v507 = vld [vmem:[#allocation2 + $0xb0] sm:$0xff]
        %v508 = vld [vmem:[#allocation2 + $0xb8] sm:$0xff]
        %v509 = vld [vmem:[#allocation2 + $0xc0] sm:$0xff]
        %v510 = vld [vmem:[#allocation2 + $0xc8] sm:$0xff]
        %v511 = vld [vmem:[#allocation2 + $0xd0] sm:$0xff]
        %v512 = vld [vmem:[#allocation2 + $0xd8] sm:$0xff]
        %v513 = vld [vmem:[#allocation2 + $0xe0] sm:$0xff]
        %v514 = vld [vmem:[#allocation2 + $0xe8] sm:$0xff]
        %v515 = vld [vmem:[#allocation2 + $0xf0] sm:$0xff]
        %v516 = vld [vmem:[#allocation2 + $0xf8] sm:$0xff]
        %v517 = vld [vmem:[#allocation2 + $0x100] sm:$0xff]
        %v518 = vld [vmem:[#allocation2 + $0x108] sm:$0xff]
        %v519 = vld [vmem:[#allocation2 + $0x110] sm:$0xff]
        %v520 = vld [vmem:[#allocation2 + $0x118] sm:$0xff]
        %v521 = vld [vmem:[#allocation2 + $0x120] sm:$0xff]
        %v522 = vld [vmem:[#allocation2 + $0x128] sm:$0xff]
        %v523 = vld [vmem:[#allocation2 + $0x130] sm:$0xff]
        %v524 = vld [vmem:[#allocation2 + $0x138] sm:$0xff]
        %v525 = vld [vmem:[#allocation2 + $0x140] sm:$0xff]
        %v526 = vld [vmem:[#allocation2 + $0x148] sm:$0xff]
        %v527 = vld [vmem:[#allocation2 + $0x150] sm:$0xff]
        %v528 = vld [vmem:[#allocation2 + $0x158] sm:$0xff]
        %v529 = vld [vmem:[#allocation2 + $0x160] sm:$0xff]
        %v530 = vld [vmem:[#allocation2 + $0x168] sm:$0xff]
        %v531 = vld [vmem:[#allocation2 + $0x170] sm:$0xff]
        %v532 = vld [vmem:[#allocation2 + $0x178] sm:$0xff]
        %v533 = vld [vmem:[#allocation2 + $0x180] sm:$0xff]
        %v534 = vld [vmem:[#allocation2 + $0x188] sm:$0xff]
        %v535 = vld [vmem:[#allocation2 + $0x190] sm:$0xff]
        %v536 = vld [vmem:[#allocation2 + $0x198] sm:$0xff]
        %v537 = vld [vmem:[#allocation2 + $0x1a0] sm:$0xff]
        %v538 = vld [vmem:[#allocation2 + $0x1a8] sm:$0xff]
        %v539 = vld [vmem:[#allocation2 + $0x1b0] sm:$0xff]
        %v540 = vld [vmem:[#allocation2 + $0x1b8] sm:$0xff]
        %v541 = vld [vmem:[#allocation2 + $0x1c0] sm:$0xff]
        %v542 = vld [vmem:[#allocation2 + $0x1c8] sm:$0xff]
        %v543 = vld [vmem:[#allocation2 + $0x1d0] sm:$0xff]
        %v544 = vld [vmem:[#allocation2 + $0x1d8] sm:$0xff]
        %v545 = vld [vmem:[#allocation2 + $0x1e0] sm:$0xff]
        %v546 = vld [vmem:[#allocation2 + $0x1e8] sm:$0xff]
        %v547 = vld [vmem:[#allocation2 + $0x1f0] sm:$0xff]
        %v548 = vld [vmem:[#allocation2 + $0x1f8] sm:$0xff]
        %v549 = vld [vmem:[#allocation2 + $0x200] sm:$0xff]
        %v550 = vld [vmem:[#allocation2 + $0x208] sm:$0xff]
        %v551 = vld [vmem:[#allocation2 + $0x210] sm:$0xff]
        %v552 = vld [vmem:[#allocation2 + $0x218] sm:$0xff]
        %v553 = vld [vmem:[#allocation2 + $0x220] sm:$0xff]
        %v554 = vld [vmem:[#allocation2 + $0x228] sm:$0xff]
        %v555 = vld [vmem:[#allocation2 + $0x230] sm:$0xff]
        %v556 = vld [vmem:[#allocation2 + $0x238] sm:$0xff]
        %v557 = vld [vmem:[#allocation2 + $0x240] sm:$0xff]
        %v558 = vld [vmem:[#allocation2 + $0x248] sm:$0xff]
        %v559 = vld [vmem:[#allocation2 + $0x250] sm:$0xff]
        %v560 = vld [vmem:[#allocation2 + $0x258] sm:$0xff]
        %v561 = vld [vmem:[#allocation2 + $0x260] sm:$0xff]
        %v562 = vld [vmem:[#allocation2 + $0x268] sm:$0xff]
        %v563 = vld [vmem:[#allocation2 + $0x270] sm:$0xff]
        %v564 = vld [vmem:[#allocation2 + $0x278] sm:$0xff]
        %565 = vmatprep.subr.mxu0 0.0
        %566 = vmatpush1.msra.mxu0 %v485
        %567 = vmatprep.subr.mxu0 0.0
        %568 = vmatpush1.msra.mxu0 %v486
        %569 = vmatprep.subr.mxu0 0.0
        %570 = vmatpush1.msra.mxu0 %v487
        %571 = vmatprep.subr.mxu0 0.0
        %572 = vmatpush1.msra.mxu0 %v488
        %573 = vmatprep.subr.mxu0 0.0
        %574 = vmatpush1.msra.mxu0 %v489
        %575 = vmatprep.subr.mxu0 0.0
        %576 = vmatpush1.msra.mxu0 %v490
        %577 = vmatprep.subr.mxu0 0.0
        %578 = vmatpush1.msra.mxu0 %v491
        %579 = vmatprep.subr.mxu0 0.0
        %580 = vmatpush1.msra.mxu0 %v492
        %581 = vmatprep.subr.mxu0 0.0
        %582 = vmatpush1.msra.mxu0 %v493
        %583 = vmatprep.subr.mxu0 0.0
        %584 = vmatpush1.msra.mxu0 %v494
        %585 = vmatprep.subr.mxu0 0.0
        %586 = vmatpush1.msra.mxu0 %v495
        %587 = vmatprep.subr.mxu0 0.0
        %588 = vmatpush1.msra.mxu0 %v496
        %589 = vmatprep.subr.mxu0 0.0
        %590 = vmatpush1.msra.mxu0 %v497
        %591 = vmatprep.subr.mxu0 0.0
        %592 = vmatpush1.msra.mxu0 %v498
        %593 = vmatprep.subr.mxu0 0.0
        %594 = vmatpush1.msra.mxu0 %v499
        %595 = vmatprep.subr.mxu0 0.0
        %596 = vmatpush1.msra.mxu0 %v500
        %597 = vmatprep.subr.mxu0 0.0
        %598 = vmatpush1.msra.mxu0 %v501
        %599 = vmatprep.subr.mxu0 0.0
        %600 = vmatpush1.msra.mxu0 %v502
        %601 = vmatprep.subr.mxu0 0.0
        %602 = vmatpush1.msra.mxu0 %v503
        %603 = vmatprep.subr.mxu0 0.0
        %604 = vmatpush1.msra.mxu0 %v504
        %605 = vmatprep.subr.mxu0 0.0
        %606 = vmatpush1.msra.mxu0 %v505
        %607 = vmatprep.subr.mxu0 0.0
        %608 = vmatpush1.msra.mxu0 %v506
        %609 = vmatprep.subr.mxu0 0.0
        %610 = vmatpush1.msra.mxu0 %v507
        %611 = vmatprep.subr.mxu0 0.0
        %612 = vmatpush1.msra.mxu0 %v508
        %613 = vmatprep.subr.mxu0 0.0
        %614 = vmatpush1.msra.mxu0 %v509
        %615 = vmatprep.subr.mxu0 0.0
        %616 = vmatpush1.msra.mxu0 %v510
        %617 = vmatprep.subr.mxu0 0.0
        %618 = vmatpush1.msra.mxu0 %v511
        %619 = vmatprep.subr.mxu0 0.0
        %620 = vmatpush1.msra.mxu0 %v512
        %621 = vmatprep.subr.mxu0 0.0
        %622 = vmatpush1.msra.mxu0 %v513
        %623 = vmatprep.subr.mxu0 0.0
        %624 = vmatpush1.msra.mxu0 %v514
        %625 = vmatprep.subr.mxu0 0.0
        %626 = vmatpush1.msra.mxu0 %v515
        %627 = vmatprep.subr.mxu0 0.0
        %628 = vmatpush1.msra.mxu0 %v516
        %629 = vmatprep.mubr.f32.mxu0 %v444
        %630 = vmatmul.mubr.f32.gmra.mrb[0].mxu0 %v431
        %v631 = vpop.f32.mrb[0].mxu0
        %v632 = vadd.f32 0.0, %v631
        %v633 = vpop.f32.mrb[0].mxu0
        %634 = vmatprep.mubr.f32.mxu0 %v446
        %635 = vmatmul.mubr.f32.gmra.mrb[0].mxu0 %v432
        %v636 = vpop.f32.mrb[0].mxu0
        %v637 = vadd.f32 0.0, %v636
        %v638 = vpop.f32.mrb[0].mxu0
        %639 = vmatprep.mubr.f32.mxu0 %v448
        %640 = vmatmul.mubr.f32.gmra.mrb[0].mxu0 %v433
        %v641 = vpop.f32.mrb[0].mxu0
        %v642 = vadd.f32 0.0, %v641
        %v643 = vpop.f32.mrb[0].mxu0
        %644 = vdwg.mxu0
        %645 = vmatprep.subr.mxu0 0.0
        %646 = vmatpush1.msra.mxu0 %v517
        %647 = vmatprep.subr.mxu0 0.0
        %648 = vmatpush1.msra.mxu0 %v518
        %649 = vmatprep.subr.mxu0 0.0
        %650 = vmatpush1.msra.mxu0 %v519
        %651 = vmatprep.subr.mxu0 0.0
        %652 = vmatpush1.msra.mxu0 %v520
        %653 = vmatprep.subr.mxu0 0.0
        %654 = vmatpush1.msra.mxu0 %v521
        %655 = vmatprep.subr.mxu0 0.0
        %656 = vmatpush1.msra.mxu0 %v522
        %657 = vmatprep.subr.mxu0 0.0
        %658 = vmatpush1.msra.mxu0 %v523
        %659 = vmatprep.subr.mxu0 0.0
        %660 = vmatpush1.msra.mxu0 %v524
        %661 = vmatprep.subr.mxu0 0.0
        %662 = vmatpush1.msra.mxu0 %v525
        %663 = vmatprep.subr.mxu0 0.0
        %664 = vmatpush1.msra.mxu0 %v526
        %665 = vmatprep.subr.mxu0 0.0
        %666 = vmatpush1.msra.mxu0 %v527
        %667 = vmatprep.subr.mxu0 0.0
        %668 = vmatpush1.msra.mxu0 %v528
        %669 = vmatprep.subr.mxu0 0.0
        %670 = vmatpush1.msra.mxu0 %v529
        %671 = vmatprep.subr.mxu0 0.0
        %672 = vmatpush1.msra.mxu0 %v530
        %673 = vmatprep.subr.mxu0 0.0
        %674 = vmatpush1.msra.mxu0 %v531
        %675 = vmatprep.subr.mxu0 0.0
        %676 = vmatpush1.msra.mxu0 %v532
        %677 = vmatprep.subr.mxu0 0.0
        %678 = vmatpush1.msra.mxu0 %v533
        %679 = vmatprep.subr.mxu0 0.0
        %680 = vmatpush1.msra.mxu0 %v534
        %681 = vmatprep.subr.mxu0 0.0
        %682 = vmatpush1.msra.mxu0 %v535
        %683 = vmatprep.subr.mxu0 0.0
        %684 = vmatpush1.msra.mxu0 %v536
        %685 = vmatprep.subr.mxu0 0.0
        %686 = vmatpush1.msra.mxu0 %v537
        %687 = vmatprep.subr.mxu0 0.0
        %688 = vmatpush1.msra.mxu0 %v538
        %689 = vmatprep.subr.mxu0 0.0
        %690 = vmatpush1.msra.mxu0 %v539
        %691 = vmatprep.subr.mxu0 0.0
        %692 = vmatpush1.msra.mxu0 %v540
        %693 = vmatprep.subr.mxu0 0.0
        %694 = vmatpush1.msra.mxu0 %v541
        %695 = vmatprep.subr.mxu0 0.0
        %696 = vmatpush1.msra.mxu0 %v542
        %697 = vmatprep.subr.mxu0 0.0
        %698 = vmatpush1.msra.mxu0 %v543
        %699 = vmatprep.subr.mxu0 0.0
        %700 = vmatpush1.msra.mxu0 %v544
        %701 = vmatprep.subr.mxu0 0.0
        %702 = vmatpush1.msra.mxu0 %v545
        %703 = vmatprep.subr.mxu0 0.0
        %704 = vmatpush1.msra.mxu0 %v546
        %705 = vmatprep.subr.mxu0 0.0
        %706 = vmatpush1.msra.mxu0 %v547
        %707 = vmatprep.subr.mxu0 0.0
        %708 = vmatpush1.msra.mxu0 %v548
        %709 = vmatprep.mubr.f32.mxu0 %v466
        %710 = vmatmul.mubr.f32.gmra.mrb[0].mxu0 %v455
        %v711 = vpop.f32.mrb[0].mxu0
        %v712 = vadd.f32 %v632, %v711
        %v713 = vpop.f32.mrb[0].mxu0
        %714 = vmatprep.mubr.f32.mxu0 %v468
        %715 = vmatmul.mubr.f32.gmra.mrb[0].mxu0 %v457
        %v716 = vpop.f32.mrb[0].mxu0
        %v717 = vadd.f32 %v637, %v716
        %v718 = vpop.f32.mrb[0].mxu0
        %719 = vmatprep.mubr.f32.mxu0 %v470
        %720 = vmatmul.mubr.f32.gmra.mrb[0].mxu0 %v459
        %v721 = vpop.f32.mrb[0].mxu0
        %v722 = vadd.f32 %v642, %v721
        %v723 = vpop.f32.mrb[0].mxu0
        %724 = vdwg.mxu0
        %725 = vmatprep.subr.mxu0 0.0
        %726 = vmatpush1.msra.mxu0 %v549
        %727 = vmatprep.subr.mxu0 0.0
        %728 = vmatpush1.msra.mxu0 %v550
        %729 = vmatprep.subr.mxu0 0.0
        %730 = vmatpush1.msra.mxu0 %v551
        %731 = vmatprep.subr.mxu0 0.0
        %732 = vmatpush1.msra.mxu0 %v552
        %733 = vmatprep.subr.mxu0 0.0
        %734 = vmatpush1.msra.mxu0 %v553
        %735 = vmatprep.subr.mxu0 0.0
        %736 = vmatpush1.msra.mxu0 %v554
        %737 = vmatprep.subr.mxu0 0.0
        %738 = vmatpush1.msra.mxu0 %v555
        %739 = vmatprep.subr.mxu0 0.0
        %740 = vmatpush1.msra.mxu0 %v556
        %741 = vmatprep.subr.mxu0 0.0
        %742 = vmatpush1.msra.mxu0 %v557
        %743 = vmatprep.subr.mxu0 0.0
        %744 = vmatpush1.msra.mxu0 %v558
        %745 = vmatprep.subr.mxu0 0.0
        %746 = vmatpush1.msra.mxu0 %v559
        %747 = vmatprep.subr.mxu0 0.0
        %748 = vmatpush1.msra.mxu0 %v560
        %749 = vmatprep.subr.mxu0 0.0
        %750 = vmatpush1.msra.mxu0 %v561
        %751 = vmatprep.subr.mxu0 0.0
        %752 = vmatpush1.msra.mxu0 %v562
        %753 = vmatprep.subr.mxu0 0.0
        %754 = vmatpush1.msra.mxu0 %v563
        %755 = vmatprep.subr.mxu0 0.0
        %756 = vmatpush1.msra.mxu0 %v564
        %757 = vmatprep.subr.mxu0 0.0
        %758 = vmatpush1.msra.mxu0 0.0
        %759 = vmatprep.subr.mxu0 0.0
        %760 = vmatpush1.msra.mxu0 0.0
        %761 = vmatprep.subr.mxu0 0.0
        %762 = vmatpush1.msra.mxu0 0.0
        %763 = vmatprep.subr.mxu0 0.0
        %764 = vmatpush1.msra.mxu0 0.0
        %765 = vmatprep.subr.mxu0 0.0
        %766 = vmatpush1.msra.mxu0 0.0
        %767 = vmatprep.subr.mxu0 0.0
        %768 = vmatpush1.msra.mxu0 0.0
        %769 = vmatprep.subr.mxu0 0.0
        %770 = vmatpush1.msra.mxu0 0.0
        %771 = vmatprep.subr.mxu0 0.0
        %772 = vmatpush1.msra.mxu0 0.0
        %773 = vmatprep.subr.mxu0 0.0
        %774 = vmatpush1.msra.mxu0 0.0
        %775 = vmatprep.subr.mxu0 0.0
        %776 = vmatpush1.msra.mxu0 0.0
        %777 = vmatprep.subr.mxu0 0.0
        %778 = vmatpush1.msra.mxu0 0.0
        %779 = vmatprep.subr.mxu0 0.0
        %780 = vmatpush1.msra.mxu0 0.0
        %781 = vmatprep.subr.mxu0 0.0
        %782 = vmatpush1.msra.mxu0 0.0
        %783 = vmatprep.subr.mxu0 0.0
        %784 = vmatpush1.msra.mxu0 0.0
        %785 = vmatprep.subr.mxu0 0.0
        %786 = vmatpush1.msra.mxu0 0.0
        %787 = vmatprep.subr.mxu0 0.0
        %788 = vmatpush1.msra.mxu0 0.0
        %789 = vmatprep.mubr.f32.mxu0 0.0
        %790 = vmatmul.mubr.f32.gmra.mrb[0].mxu0 %v477
        %v791 = vpop.f32.mrb[0].mxu0
        %v792 = vadd.f32 %v712, %v791
        %v793 = vpop.f32.mrb[0].mxu0
        %794 = vmatprep.mubr.f32.mxu0 0.0
        %795 = vmatmul.mubr.f32.gmra.mrb[0].mxu0 %v479
        %v796 = vpop.f32.mrb[0].mxu0
        %v797 = vadd.f32 %v717, %v796
        %v798 = vpop.f32.mrb[0].mxu0
        %799 = vmatprep.mubr.f32.mxu0 0.0
        %800 = vmatmul.mubr.f32.gmra.mrb[0].mxu0 %v481
        %v801 = vpop.f32.mrb[0].mxu0
        %v802 = vadd.f32 %v722, %v801
        %v803 = vpop.f32.mrb[0].mxu0
        %804 = vdwg.mxu0
        %v806 = vlaneseq
        %v807 = vshrl.u32 %v806, 7
        %v808 = vsub.s32 0, %v807
        %v809 = vrot.slane %v435, %v808
        %v811 = vmul.f32 %v792, %v809
        %v812 = vmul.f32 %v797, %v809
        %v813 = vmul.f32 %v802, %v809
        %v815 = vlaneseq
        %v816 = vshrl.u32 %v815, 7
        %v817 = vsub.s32 0, %v816
        %v818 = vrot.slane %v436, %v817
        %v820 = vadd.f32 %v811, %v818
        %v821 = vadd.f32 %v812, %v818
        %v822 = vadd.f32 %v813, %v818
        %v823 = vmax.f32 %v820, 0.0
        %v824 = vmax.f32 %v821, 0.0
        %v825 = vmax.f32 %v822, 0.0
        %s826 = ssub.s32 %s422, 4
        %v827 = vlaneseq
        %v828 = vshrl.u32 %v827, 7
        %v829 = vadd.s32 %v828, 8
        %v830 = vadd.s32 %v828, 16
        %v831 = vstv %s826
        %v832 = vadd.s32 %v831, %v828
        %v833 = vadd.s32 %v831, %v829
        %v834 = vadd.s32 %v831, %v830
        %vm835 = vcmp.ge.s32.totalorder %v832, 0
        %vm836 = vcmp.ge.s32.totalorder %v833, 0
        %vm837 = vcmp.ge.s32.totalorder %v834, 0
        %vm838 = vcmp.lt.s32.totalorder %v832, 16
        %vm839 = vcmp.lt.s32.totalorder %v833, 16
        %vm840 = vcmp.lt.s32.totalorder %v834, 16
        %vm841 = vmand %vm835, %vm838
        %vm842 = vmand %vm836, %vm839
        %vm843 = vmand %vm837, %vm840
        %v844 = vsel %vm841, 1, 0
        %v845 = vsel %vm842, 1, 0
        %v846 = vsel %vm843, 1, 0
        %vm847 = vcmp.eq.s32.totalorder %v844, 1
        %vm848 = vcmp.eq.s32.totalorder %v845, 1
        %vm849 = vcmp.eq.s32.totalorder %v846, 1
        %v850 = vsel %vm847, %v823, 0.0
        %v851 = vsel %vm848, %v824, 0.0
        %v852 = vsel %vm849, %v825, 0.0
        %v853 = vld [vmem:[%s5] sm:$0x1]
        %v854 = vld [vmem:[%s6] sm:$0x1]
        %v858 = vrot.slane %v850, 1
        %v859 = vrot.slane %v851, 1
        %v860 = vsel %vm441, %v858, %v859
        %v861 = vrot.slane %v852, 1
        %v862 = vsel %vm441, %v859, %v861
        %v866 = vrot.slane %v850, 2
        %v867 = vrot.slane %v851, 2
        %v868 = vsel %vm452, %v866, %v867
        %v869 = vrot.slane %v852, 2
        %v870 = vsel %vm452, %v867, %v869
        %v874 = vrot.slane %v850, 3
        %v875 = vrot.slane %v851, 3
        %v876 = vsel %vm463, %v874, %v875
        %v877 = vrot.slane %v852, 3
        %v878 = vsel %vm463, %v875, %v877
        %v882 = vrot.slane %v850, 4
        %v883 = vrot.slane %v851, 4
        %v884 = vsel %vm474, %v882, %v883
        %v885 = vrot.slane %v852, 4
        %v886 = vsel %vm474, %v883, %v885
        %v890 = vld [vmem:[#allocation4] sm:$0xff]
        %v891 = vld [vmem:[#allocation4 + $0x8] sm:$0xff]
        %v892 = vld [vmem:[#allocation4 + $0x10] sm:$0xff]
        %v893 = vld [vmem:[#allocation4 + $0x18] sm:$0xff]
        %v894 = vld [vmem:[#allocation4 + $0x20] sm:$0xff]
        %v895 = vld [vmem:[#allocation4 + $0x28] sm:$0xff]
        %v896 = vld [vmem:[#allocation4 + $0x30] sm:$0xff]
        %v897 = vld [vmem:[#allocation4 + $0x38] sm:$0xff]
        %v898 = vld [vmem:[#allocation4 + $0x40] sm:$0xff]
        %v899 = vld [vmem:[#allocation4 + $0x48] sm:$0xff]
        %v900 = vld [vmem:[#allocation4 + $0x50] sm:$0xff]
        %v901 = vld [vmem:[#allocation4 + $0x58] sm:$0xff]
        %v902 = vld [vmem:[#allocation4 + $0x60] sm:$0xff]
        %v903 = vld [vmem:[#allocation4 + $0x68] sm:$0xff]
        %v904 = vld [vmem:[#allocation4 + $0x70] sm:$0xff]
        %v905 = vld [vmem:[#allocation4 + $0x78] sm:$0xff]
        %v906 = vld [vmem:[#allocation4 + $0x80] sm:$0xff]
        %v907 = vld [vmem:[#allocation4 + $0x88] sm:$0xff]
        %v908 = vld [vmem:[#allocation4 + $0x90] sm:$0xff]
        %v909 = vld [vmem:[#allocation4 + $0x98] sm:$0xff]
        %v910 = vld [vmem:[#allocation4 + $0xa0] sm:$0xff]
        %v911 = vld [vmem:[#allocation4 + $0xa8] sm:$0xff]
        %v912 = vld [vmem:[#allocation4 + $0xb0] sm:$0xff]
        %v913 = vld [vmem:[#allocation4 + $0xb8] sm:$0xff]
        %v914 = vld [vmem:[#allocation4 + $0xc0] sm:$0xff]
        %v915 = vld [vmem:[#allocation4 + $0xc8] sm:$0xff]
        %v916 = vld [vmem:[#allocation4 + $0xd0] sm:$0xff]
        %v917 = vld [vmem:[#allocation4 + $0xd8] sm:$0xff]
        %v918 = vld [vmem:[#allocation4 + $0xe0] sm:$0xff]
        %v919 = vld [vmem:[#allocation4 + $0xe8] sm:$0xff]
        %v920 = vld [vmem:[#allocation4 + $0xf0] sm:$0xff]
        %v921 = vld [vmem:[#allocation4 + $0xf8] sm:$0xff]
        %v922 = vld [vmem:[#allocation4 + $0x100] sm:$0xff]
        %v923 = vld [vmem:[#allocation4 + $0x108] sm:$0xff]
        %v924 = vld [vmem:[#allocation4 + $0x110] sm:$0xff]
        %v925 = vld [vmem:[#allocation4 + $0x118] sm:$0xff]
        %v926 = vld [vmem:[#allocation4 + $0x120] sm:$0xff]
        %v927 = vld [vmem:[#allocation4 + $0x128] sm:$0xff]
        %v928 = vld [vmem:[#allocation4 + $0x130] sm:$0xff]
        %v929 = vld [vmem:[#allocation4 + $0x138] sm:$0xff]
        %v930 = vld [vmem:[#allocation4 + $0x140] sm:$0xff]
        %v931 = vld [vmem:[#allocation4 + $0x148] sm:$0xff]
        %v932 = vld [vmem:[#allocation4 + $0x150] sm:$0xff]
        %v933 = vld [vmem:[#allocation4 + $0x158] sm:$0xff]
        %v934 = vld [vmem:[#allocation4 + $0x160] sm:$0xff]
        %v935 = vld [vmem:[#allocation4 + $0x168] sm:$0xff]
        %v936 = vld [vmem:[#allocation4 + $0x170] sm:$0xff]
        %v937 = vld [vmem:[#allocation4 + $0x178] sm:$0xff]
        %v938 = vld [vmem:[#allocation4 + $0x180] sm:$0xff]
        %v939 = vld [vmem:[#allocation4 + $0x188] sm:$0xff]
        %v940 = vld [vmem:[#allocation4 + $0x190] sm:$0xff]
        %v941 = vld [vmem:[#allocation4 + $0x198] sm:$0xff]
        %v942 = vld [vmem:[#allocation4 + $0x1a0] sm:$0xff]
        %v943 = vld [vmem:[#allocation4 + $0x1a8] sm:$0xff]
        %v944 = vld [vmem:[#allocation4 + $0x1b0] sm:$0xff]
        %v945 = vld [vmem:[#allocation4 + $0x1b8] sm:$0xff]
        %v946 = vld [vmem:[#allocation4 + $0x1c0] sm:$0xff]
        %v947 = vld [vmem:[#allocation4 + $0x1c8] sm:$0xff]
        %v948 = vld [vmem:[#allocation4 + $0x1d0] sm:$0xff]
        %v949 = vld [vmem:[#allocation4 + $0x1d8] sm:$0xff]
        %v950 = vld [vmem:[#allocation4 + $0x1e0] sm:$0xff]
        %v951 = vld [vmem:[#allocation4 + $0x1e8] sm:$0xff]
        %v952 = vld [vmem:[#allocation4 + $0x1f0] sm:$0xff]
        %v953 = vld [vmem:[#allocation4 + $0x1f8] sm:$0xff]
        %v954 = vld [vmem:[#allocation4 + $0x200] sm:$0xff]
        %v955 = vld [vmem:[#allocation4 + $0x208] sm:$0xff]
        %v956 = vld [vmem:[#allocation4 + $0x210] sm:$0xff]
        %v957 = vld [vmem:[#allocation4 + $0x218] sm:$0xff]
        %v958 = vld [vmem:[#allocation4 + $0x220] sm:$0xff]
        %v959 = vld [vmem:[#allocation4 + $0x228] sm:$0xff]
        %v960 = vld [vmem:[#allocation4 + $0x230] sm:$0xff]
        %v961 = vld [vmem:[#allocation4 + $0x238] sm:$0xff]
        %v962 = vld [vmem:[#allocation4 + $0x240] sm:$0xff]
        %v963 = vld [vmem:[#allocation4 + $0x248] sm:$0xff]
        %v964 = vld [vmem:[#allocation4 + $0x250] sm:$0xff]
        %v965 = vld [vmem:[#allocation4 + $0x258] sm:$0xff]
        %v966 = vld [vmem:[#allocation4 + $0x260] sm:$0xff]
        %v967 = vld [vmem:[#allocation4 + $0x268] sm:$0xff]
        %v968 = vld [vmem:[#allocation4 + $0x270] sm:$0xff]
        %v969 = vld [vmem:[#allocation4 + $0x278] sm:$0xff]
        %970 = vmatprep.subr.mxu0 0.0
        %971 = vmatpush1.msra.mxu0 %v890
        %972 = vmatprep.subr.mxu0 0.0
        %973 = vmatpush1.msra.mxu0 %v891
        %974 = vmatprep.subr.mxu0 0.0
        %975 = vmatpush1.msra.mxu0 %v892
        %976 = vmatprep.subr.mxu0 0.0
        %977 = vmatpush1.msra.mxu0 %v893
        %978 = vmatprep.subr.mxu0 0.0
        %979 = vmatpush1.msra.mxu0 %v894
        %980 = vmatprep.subr.mxu0 0.0
        %981 = vmatpush1.msra.mxu0 %v895
        %982 = vmatprep.subr.mxu0 0.0
        %983 = vmatpush1.msra.mxu0 %v896
        %984 = vmatprep.subr.mxu0 0.0
        %985 = vmatpush1.msra.mxu0 %v897
        %986 = vmatprep.subr.mxu0 0.0
        %987 = vmatpush1.msra.mxu0 %v898
        %988 = vmatprep.subr.mxu0 0.0
        %989 = vmatpush1.msra.mxu0 %v899
        %990 = vmatprep.subr.mxu0 0.0
        %991 = vmatpush1.msra.mxu0 %v900
        %992 = vmatprep.subr.mxu0 0.0
        %993 = vmatpush1.msra.mxu0 %v901
        %994 = vmatprep.subr.mxu0 0.0
        %995 = vmatpush1.msra.mxu0 %v902
        %996 = vmatprep.subr.mxu0 0.0
        %997 = vmatpush1.msra.mxu0 %v903
        %998 = vmatprep.subr.mxu0 0.0
        %999 = vmatpush1.msra.mxu0 %v904
        %1000 = vmatprep.subr.mxu0 0.0
        %1001 = vmatpush1.msra.mxu0 %v905
        %1002 = vmatprep.subr.mxu0 0.0
        %1003 = vmatpush1.msra.mxu0 %v906
        %1004 = vmatprep.subr.mxu0 0.0
        %1005 = vmatpush1.msra.mxu0 %v907
        %1006 = vmatprep.subr.mxu0 0.0
        %1007 = vmatpush1.msra.mxu0 %v908
        %1008 = vmatprep.subr.mxu0 0.0
        %1009 = vmatpush1.msra.mxu0 %v909
        %1010 = vmatprep.subr.mxu0 0.0
        %1011 = vmatpush1.msra.mxu0 %v910
        %1012 = vmatprep.subr.mxu0 0.0
        %1013 = vmatpush1.msra.mxu0 %v911
        %1014 = vmatprep.subr.mxu0 0.0
        %1015 = vmatpush1.msra.mxu0 %v912
        %1016 = vmatprep.subr.mxu0 0.0
        %1017 = vmatpush1.msra.mxu0 %v913
        %1018 = vmatprep.subr.mxu0 0.0
        %1019 = vmatpush1.msra.mxu0 %v914
        %1020 = vmatprep.subr.mxu0 0.0
        %1021 = vmatpush1.msra.mxu0 %v915
        %1022 = vmatprep.subr.mxu0 0.0
        %1023 = vmatpush1.msra.mxu0 %v916
        %1024 = vmatprep.subr.mxu0 0.0
        %1025 = vmatpush1.msra.mxu0 %v917
        %1026 = vmatprep.subr.mxu0 0.0
        %1027 = vmatpush1.msra.mxu0 %v918
        %1028 = vmatprep.subr.mxu0 0.0
        %1029 = vmatpush1.msra.mxu0 %v919
        %1030 = vmatprep.subr.mxu0 0.0
        %1031 = vmatpush1.msra.mxu0 %v920
        %1032 = vmatprep.subr.mxu0 0.0
        %1033 = vmatpush1.msra.mxu0 %v921
        %1034 = vmatprep.mubr.f32.mxu0 %v860
        %1035 = vmatmul.mubr.f32.gmra.mrb[0].mxu0 %v850
        %v1036 = vpop.f32.mrb[0].mxu0
        %v1037 = vadd.f32 0.0, %v1036
        %v1038 = vpop.f32.mrb[0].mxu0
        %1039 = vmatprep.mubr.f32.mxu0 %v862
        %1040 = vmatmul.mubr.f32.gmra.mrb[0].mxu0 %v851
        %v1041 = vpop.f32.mrb[0].mxu0
        %v1042 = vadd.f32 0.0, %v1041
        %v1043 = vpop.f32.mrb[0].mxu0
        %1044 = vmatprep.mubr.f32.mxu0 %v861
        %1045 = vmatmul.mubr.f32.gmra.mrb[0].mxu0 %v852
        %v1046 = vpop.f32.mrb[0].mxu0
        %v1047 = vadd.f32 0.0, %v1046
        %v1048 = vpop.f32.mrb[0].mxu0
        %1049 = vdwg.mxu0
        %1050 = vmatprep.subr.mxu0 0.0
        %1051 = vmatpush1.msra.mxu0 %v922
        %1052 = vmatprep.subr.mxu0 0.0
        %1053 = vmatpush1.msra.mxu0 %v923
        %1054 = vmatprep.subr.mxu0 0.0
        %1055 = vmatpush1.msra.mxu0 %v924
        %1056 = vmatprep.subr.mxu0 0.0
        %1057 = vmatpush1.msra.mxu0 %v925
        %1058 = vmatprep.subr.mxu0 0.0
        %1059 = vmatpush1.msra.mxu0 %v926
        %1060 = vmatprep.subr.mxu0 0.0
        %1061 = vmatpush1.msra.mxu0 %v927
        %1062 = vmatprep.subr.mxu0 0.0
        %1063 = vmatpush1.msra.mxu0 %v928
        %1064 = vmatprep.subr.mxu0 0.0
        %1065 = vmatpush1.msra.mxu0 %v929
        %1066 = vmatprep.subr.mxu0 0.0
        %1067 = vmatpush1.msra.mxu0 %v930
        %1068 = vmatprep.subr.mxu0 0.0
        %1069 = vmatpush1.msra.mxu0 %v931
        %1070 = vmatprep.subr.mxu0 0.0
        %1071 = vmatpush1.msra.mxu0 %v932
        %1072 = vmatprep.subr.mxu0 0.0
        %1073 = vmatpush1.msra.mxu0 %v933
        %1074 = vmatprep.subr.mxu0 0.0
        %1075 = vmatpush1.msra.mxu0 %v934
        %1076 = vmatprep.subr.mxu0 0.0
        %1077 = vmatpush1.msra.mxu0 %v935
        %1078 = vmatprep.subr.mxu0 0.0
        %1079 = vmatpush1.msra.mxu0 %v936
        %1080 = vmatprep.subr.mxu0 0.0
        %1081 = vmatpush1.msra.mxu0 %v937
        %1082 = vmatprep.subr.mxu0 0.0
        %1083 = vmatpush1.msra.mxu0 %v938
        %1084 = vmatprep.subr.mxu0 0.0
        %1085 = vmatpush1.msra.mxu0 %v939
        %1086 = vmatprep.subr.mxu0 0.0
        %1087 = vmatpush1.msra.mxu0 %v940
        %1088 = vmatprep.subr.mxu0 0.0
        %1089 = vmatpush1.msra.mxu0 %v941
        %1090 = vmatprep.subr.mxu0 0.0
        %1091 = vmatpush1.msra.mxu0 %v942
        %1092 = vmatprep.subr.mxu0 0.0
        %1093 = vmatpush1.msra.mxu0 %v943
        %1094 = vmatprep.subr.mxu0 0.0
        %1095 = vmatpush1.msra.mxu0 %v944
        %1096 = vmatprep.subr.mxu0 0.0
        %1097 = vmatpush1.msra.mxu0 %v945
        %1098 = vmatprep.subr.mxu0 0.0
        %1099 = vmatpush1.msra.mxu0 %v946
        %1100 = vmatprep.subr.mxu0 0.0
        %1101 = vmatpush1.msra.mxu0 %v947
        %1102 = vmatprep.subr.mxu0 0.0
        %1103 = vmatpush1.msra.mxu0 %v948
        %1104 = vmatprep.subr.mxu0 0.0
        %1105 = vmatpush1.msra.mxu0 %v949
        %1106 = vmatprep.subr.mxu0 0.0
        %1107 = vmatpush1.msra.mxu0 %v950
        %1108 = vmatprep.subr.mxu0 0.0
        %1109 = vmatpush1.msra.mxu0 %v951
        %1110 = vmatprep.subr.mxu0 0.0
        %1111 = vmatpush1.msra.mxu0 %v952
        %1112 = vmatprep.subr.mxu0 0.0
        %1113 = vmatpush1.msra.mxu0 %v953
        %1114 = vmatprep.mubr.f32.mxu0 %v876
        %1115 = vmatmul.mubr.f32.gmra.mrb[0].mxu0 %v868
        %v1116 = vpop.f32.mrb[0].mxu0
        %v1117 = vadd.f32 %v1037, %v1116
        %v1118 = vpop.f32.mrb[0].mxu0
        %1119 = vmatprep.mubr.f32.mxu0 %v878
        %1120 = vmatmul.mubr.f32.gmra.mrb[0].mxu0 %v870
        %v1121 = vpop.f32.mrb[0].mxu0
        %v1122 = vadd.f32 %v1042, %v1121
        %v1123 = vpop.f32.mrb[0].mxu0
        %1124 = vmatprep.mubr.f32.mxu0 %v877
        %1125 = vmatmul.mubr.f32.gmra.mrb[0].mxu0 %v869
        %v1126 = vpop.f32.mrb[0].mxu0
        %v1127 = vadd.f32 %v1047, %v1126
        %v1128 = vpop.f32.mrb[0].mxu0
        %1129 = vdwg.mxu0
        %1130 = vmatprep.subr.mxu0 0.0
        %1131 = vmatpush1.msra.mxu0 %v954
        %1132 = vmatprep.subr.mxu0 0.0
        %1133 = vmatpush1.msra.mxu0 %v955
        %1134 = vmatprep.subr.mxu0 0.0
        %1135 = vmatpush1.msra.mxu0 %v956
        %1136 = vmatprep.subr.mxu0 0.0
        %1137 = vmatpush1.msra.mxu0 %v957
        %1138 = vmatprep.subr.mxu0 0.0
        %1139 = vmatpush1.msra.mxu0 %v958
        %1140 = vmatprep.subr.mxu0 0.0
        %1141 = vmatpush1.msra.mxu0 %v959
        %1142 = vmatprep.subr.mxu0 0.0
        %1143 = vmatpush1.msra.mxu0 %v960
        %1144 = vmatprep.subr.mxu0 0.0
        %1145 = vmatpush1.msra.mxu0 %v961
        %1146 = vmatprep.subr.mxu0 0.0
        %1147 = vmatpush1.msra.mxu0 %v962
        %1148 = vmatprep.subr.mxu0 0.0
        %1149 = vmatpush1.msra.mxu0 %v963
        %1150 = vmatprep.subr.mxu0 0.0
        %1151 = vmatpush1.msra.mxu0 %v964
        %1152 = vmatprep.subr.mxu0 0.0
        %1153 = vmatpush1.msra.mxu0 %v965
        %1154 = vmatprep.subr.mxu0 0.0
        %1155 = vmatpush1.msra.mxu0 %v966
        %1156 = vmatprep.subr.mxu0 0.0
        %1157 = vmatpush1.msra.mxu0 %v967
        %1158 = vmatprep.subr.mxu0 0.0
        %1159 = vmatpush1.msra.mxu0 %v968
        %1160 = vmatprep.subr.mxu0 0.0
        %1161 = vmatpush1.msra.mxu0 %v969
        %1162 = vmatprep.subr.mxu0 0.0
        %1163 = vmatpush1.msra.mxu0 0.0
        %1164 = vmatprep.subr.mxu0 0.0
        %1165 = vmatpush1.msra.mxu0 0.0
        %1166 = vmatprep.subr.mxu0 0.0
        %1167 = vmatpush1.msra.mxu0 0.0
        %1168 = vmatprep.subr.mxu0 0.0
        %1169 = vmatpush1.msra.mxu0 0.0
        %1170 = vmatprep.subr.mxu0 0.0
        %1171 = vmatpush1.msra.mxu0 0.0
        %1172 = vmatprep.subr.mxu0 0.0
        %1173 = vmatpush1.msra.mxu0 0.0
        %1174 = vmatprep.subr.mxu0 0.0
        %1175 = vmatpush1.msra.mxu0 0.0
        %1176 = vmatprep.subr.mxu0 0.0
        %1177 = vmatpush1.msra.mxu0 0.0
        %1178 = vmatprep.subr.mxu0 0.0
        %1179 = vmatpush1.msra.mxu0 0.0
        %1180 = vmatprep.subr.mxu0 0.0
        %1181 = vmatpush1.msra.mxu0 0.0
        %1182 = vmatprep.subr.mxu0 0.0
        %1183 = vmatpush1.msra.mxu0 0.0
        %1184 = vmatprep.subr.mxu0 0.0
        %1185 = vmatpush1.msra.mxu0 0.0
        %1186 = vmatprep.subr.mxu0 0.0
        %1187 = vmatpush1.msra.mxu0 0.0
        %1188 = vmatprep.subr.mxu0 0.0
        %1189 = vmatpush1.msra.mxu0 0.0
        %1190 = vmatprep.subr.mxu0 0.0
        %1191 = vmatpush1.msra.mxu0 0.0
        %1192 = vmatprep.subr.mxu0 0.0
        %1193 = vmatpush1.msra.mxu0 0.0
        %1194 = vmatprep.mubr.f32.mxu0 0.0
        %1195 = vmatmul.mubr.f32.gmra.mrb[0].mxu0 %v884
        %v1196 = vpop.f32.mrb[0].mxu0
        %v1197 = vadd.f32 %v1117, %v1196
        %v1198 = vpop.f32.mrb[0].mxu0
        %1199 = vmatprep.mubr.f32.mxu0 0.0
        %1200 = vmatmul.mubr.f32.gmra.mrb[0].mxu0 %v886
        %v1201 = vpop.f32.mrb[0].mxu0
        %v1202 = vadd.f32 %v1122, %v1201
        %v1203 = vpop.f32.mrb[0].mxu0
        %1204 = vmatprep.mubr.f32.mxu0 0.0
        %1205 = vmatmul.mubr.f32.gmra.mrb[0].mxu0 %v885
        %v1206 = vpop.f32.mrb[0].mxu0
        %v1207 = vadd.f32 %v1127, %v1206
        %v1208 = vpop.f32.mrb[0].mxu0
        %1209 = vdwg.mxu0
        %v1211 = vlaneseq
        %v1212 = vshrl.u32 %v1211, 7
        %v1213 = vsub.s32 0, %v1212
        %v1214 = vrot.slane %v853, %v1213
        %v1216 = vmul.f32 %v1197, %v1214
        %v1217 = vmul.f32 %v1202, %v1214
        %v1218 = vmul.f32 %v1207, %v1214
        %v1220 = vlaneseq
        %v1221 = vshrl.u32 %v1220, 7
        %v1222 = vsub.s32 0, %v1221
        %v1223 = vrot.slane %v854, %v1222
        %v1225 = vadd.f32 %v1216, %v1223
        %v1226 = vadd.f32 %v1217, %v1223
        %v1227 = vadd.f32 %v1218, %v1223
        %v1228 = vmax.f32 %v1225, 0.0
        %v1229 = vmax.f32 %v1226, 0.0
        %v1230 = vmax.f32 %v1227, 0.0
        %s1231 = ssub.s32 %s422, 2
        %v1232 = vstv %s1231
        %v1233 = vadd.s32 %v1232, %v828
        %v1234 = vadd.s32 %v1232, %v829
        %v1235 = vadd.s32 %v1232, %v830
        %vm1236 = vcmp.ge.s32.totalorder %v1233, 0
        %vm1237 = vcmp.ge.s32.totalorder %v1234, 0
        %vm1238 = vcmp.ge.s32.totalorder %v1235, 0
        %vm1239 = vcmp.lt.s32.totalorder %v1233, 16
        %vm1240 = vcmp.lt.s32.totalorder %v1234, 16
        %vm1241 = vcmp.lt.s32.totalorder %v1235, 16
        %vm1242 = vmand %vm1236, %vm1239
        %vm1243 = vmand %vm1237, %vm1240
        %vm1244 = vmand %vm1238, %vm1241
        %v1245 = vsel %vm1242, 1, 0
        %v1246 = vsel %vm1243, 1, 0
        %v1247 = vsel %vm1244, 1, 0
        %vm1248 = vcmp.eq.s32.totalorder %v1245, 1
        %vm1249 = vcmp.eq.s32.totalorder %v1246, 1
        %vm1250 = vcmp.eq.s32.totalorder %v1247, 1
        %v1251 = vsel %vm1248, %v1228, 0.0
        %v1252 = vsel %vm1249, %v1229, 0.0
        %v1253 = vsel %vm1250, %v1230, 0.0
        %v1254 = vld [vmem:[%s8] sm:$0x1]
        %v1255 = vld [vmem:[%s9] sm:$0x1]
        %v1259 = vrot.slane %v1251, 1
        %v1260 = vrot.slane %v1252, 1
        %v1261 = vsel %vm441, %v1259, %v1260
        %v1262 = vrot.slane %v1253, 1
        %v1263 = vsel %vm441, %v1260, %v1262
        %v1266 = vrot.slane %v1251, 2
        %v1267 = vrot.slane %v1252, 2
        %v1268 = vsel %vm452, %v1266, %v1267
        %v1269 = vrot.slane %v1253, 2
        %v1270 = vsel %vm452, %v1267, %v1269
        %v1273 = vrot.slane %v1251, 3
        %v1274 = vrot.slane %v1252, 3
        %v1275 = vsel %vm463, %v1273, %v1274
        %v1276 = vrot.slane %v1253, 3
        %v1277 = vsel %vm463, %v1274, %v1276
        %v1280 = vrot.slane %v1251, 4
        %v1281 = vrot.slane %v1252, 4
        %v1282 = vsel %vm474, %v1280, %v1281
        %v1283 = vrot.slane %v1253, 4
        %v1284 = vsel %vm474, %v1281, %v1283
        %v1287 = vld [vmem:[#allocation6] sm:$0xff]
        %v1288 = vld [vmem:[#allocation6 + $0x8] sm:$0xff]
        %v1289 = vld [vmem:[#allocation6 + $0x10] sm:$0xff]
        %v1290 = vld [vmem:[#allocation6 + $0x18] sm:$0xff]
        %v1291 = vld [vmem:[#allocation6 + $0x20] sm:$0xff]
        %v1292 = vld [vmem:[#allocation6 + $0x28] sm:$0xff]
        %v1293 = vld [vmem:[#allocation6 + $0x30] sm:$0xff]
        %v1294 = vld [vmem:[#allocation6 + $0x38] sm:$0xff]
        %v1295 = vld [vmem:[#allocation6 + $0x40] sm:$0xff]
        %v1296 = vld [vmem:[#allocation6 + $0x48] sm:$0xff]
        %v1297 = vld [vmem:[#allocation6 + $0x50] sm:$0xff]
        %v1298 = vld [vmem:[#allocation6 + $0x58] sm:$0xff]
        %v1299 = vld [vmem:[#allocation6 + $0x60] sm:$0xff]
        %v1300 = vld [vmem:[#allocation6 + $0x68] sm:$0xff]
        %v1301 = vld [vmem:[#allocation6 + $0x70] sm:$0xff]
        %v1302 = vld [vmem:[#allocation6 + $0x78] sm:$0xff]
        %v1303 = vld [vmem:[#allocation6 + $0x80] sm:$0xff]
        %v1304 = vld [vmem:[#allocation6 + $0x88] sm:$0xff]
        %v1305 = vld [vmem:[#allocation6 + $0x90] sm:$0xff]
        %v1306 = vld [vmem:[#allocation6 + $0x98] sm:$0xff]
        %v1307 = vld [vmem:[#allocation6 + $0xa0] sm:$0xff]
        %v1308 = vld [vmem:[#allocation6 + $0xa8] sm:$0xff]
        %v1309 = vld [vmem:[#allocation6 + $0xb0] sm:$0xff]
        %v1310 = vld [vmem:[#allocation6 + $0xb8] sm:$0xff]
        %v1311 = vld [vmem:[#allocation6 + $0xc0] sm:$0xff]
        %v1312 = vld [vmem:[#allocation6 + $0xc8] sm:$0xff]
        %v1313 = vld [vmem:[#allocation6 + $0xd0] sm:$0xff]
        %v1314 = vld [vmem:[#allocation6 + $0xd8] sm:$0xff]
        %v1315 = vld [vmem:[#allocation6 + $0xe0] sm:$0xff]
        %v1316 = vld [vmem:[#allocation6 + $0xe8] sm:$0xff]
        %v1317 = vld [vmem:[#allocation6 + $0xf0] sm:$0xff]
        %v1318 = vld [vmem:[#allocation6 + $0xf8] sm:$0xff]
        %v1319 = vld [vmem:[#allocation6 + $0x100] sm:$0xff]
        %v1320 = vld [vmem:[#allocation6 + $0x108] sm:$0xff]
        %v1321 = vld [vmem:[#allocation6 + $0x110] sm:$0xff]
        %v1322 = vld [vmem:[#allocation6 + $0x118] sm:$0xff]
        %v1323 = vld [vmem:[#allocation6 + $0x120] sm:$0xff]
        %v1324 = vld [vmem:[#allocation6 + $0x128] sm:$0xff]
        %v1325 = vld [vmem:[#allocation6 + $0x130] sm:$0xff]
        %v1326 = vld [vmem:[#allocation6 + $0x138] sm:$0xff]
        %v1327 = vld [vmem:[#allocation6 + $0x140] sm:$0xff]
        %v1328 = vld [vmem:[#allocation6 + $0x148] sm:$0xff]
        %v1329 = vld [vmem:[#allocation6 + $0x150] sm:$0xff]
        %v1330 = vld [vmem:[#allocation6 + $0x158] sm:$0xff]
        %v1331 = vld [vmem:[#allocation6 + $0x160] sm:$0xff]
        %v1332 = vld [vmem:[#allocation6 + $0x168] sm:$0xff]
        %v1333 = vld [vmem:[#allocation6 + $0x170] sm:$0xff]
        %v1334 = vld [vmem:[#allocation6 + $0x178] sm:$0xff]
        %v1335 = vld [vmem:[#allocation6 + $0x180] sm:$0xff]
        %v1336 = vld [vmem:[#allocation6 + $0x188] sm:$0xff]
        %v1337 = vld [vmem:[#allocation6 + $0x190] sm:$0xff]
        %v1338 = vld [vmem:[#allocation6 + $0x198] sm:$0xff]
        %v1339 = vld [vmem:[#allocation6 + $0x1a0] sm:$0xff]
        %v1340 = vld [vmem:[#allocation6 + $0x1a8] sm:$0xff]
        %v1341 = vld [vmem:[#allocation6 + $0x1b0] sm:$0xff]
        %v1342 = vld [vmem:[#allocation6 + $0x1b8] sm:$0xff]
        %v1343 = vld [vmem:[#allocation6 + $0x1c0] sm:$0xff]
        %v1344 = vld [vmem:[#allocation6 + $0x1c8] sm:$0xff]
        %v1345 = vld [vmem:[#allocation6 + $0x1d0] sm:$0xff]
        %v1346 = vld [vmem:[#allocation6 + $0x1d8] sm:$0xff]
        %v1347 = vld [vmem:[#allocation6 + $0x1e0] sm:$0xff]
        %v1348 = vld [vmem:[#allocation6 + $0x1e8] sm:$0xff]
        %v1349 = vld [vmem:[#allocation6 + $0x1f0] sm:$0xff]
        %v1350 = vld [vmem:[#allocation6 + $0x1f8] sm:$0xff]
        %v1351 = vld [vmem:[#allocation6 + $0x200] sm:$0xff]
        %v1352 = vld [vmem:[#allocation6 + $0x208] sm:$0xff]
        %v1353 = vld [vmem:[#allocation6 + $0x210] sm:$0xff]
        %v1354 = vld [vmem:[#allocation6 + $0x218] sm:$0xff]
        %v1355 = vld [vmem:[#allocation6 + $0x220] sm:$0xff]
        %v1356 = vld [vmem:[#allocation6 + $0x228] sm:$0xff]
        %v1357 = vld [vmem:[#allocation6 + $0x230] sm:$0xff]
        %v1358 = vld [vmem:[#allocation6 + $0x238] sm:$0xff]
        %v1359 = vld [vmem:[#allocation6 + $0x240] sm:$0xff]
        %v1360 = vld [vmem:[#allocation6 + $0x248] sm:$0xff]
        %v1361 = vld [vmem:[#allocation6 + $0x250] sm:$0xff]
        %v1362 = vld [vmem:[#allocation6 + $0x258] sm:$0xff]
        %v1363 = vld [vmem:[#allocation6 + $0x260] sm:$0xff]
        %v1364 = vld [vmem:[#allocation6 + $0x268] sm:$0xff]
        %v1365 = vld [vmem:[#allocation6 + $0x270] sm:$0xff]
        %v1366 = vld [vmem:[#allocation6 + $0x278] sm:$0xff]
        %1367 = vmatprep.subr.mxu0 0.0
        %1368 = vmatpush1.msra.mxu0 %v1287
        %1369 = vmatprep.subr.mxu0 0.0
        %1370 = vmatpush1.msra.mxu0 %v1288
        %1371 = vmatprep.subr.mxu0 0.0
        %1372 = vmatpush1.msra.mxu0 %v1289
        %1373 = vmatprep.subr.mxu0 0.0
        %1374 = vmatpush1.msra.mxu0 %v1290
        %1375 = vmatprep.subr.mxu0 0.0
        %1376 = vmatpush1.msra.mxu0 %v1291
        %1377 = vmatprep.subr.mxu0 0.0
        %1378 = vmatpush1.msra.mxu0 %v1292
        %1379 = vmatprep.subr.mxu0 0.0
        %1380 = vmatpush1.msra.mxu0 %v1293
        %1381 = vmatprep.subr.mxu0 0.0
        %1382 = vmatpush1.msra.mxu0 %v1294
        %1383 = vmatprep.subr.mxu0 0.0
        %1384 = vmatpush1.msra.mxu0 %v1295
        %1385 = vmatprep.subr.mxu0 0.0
        %1386 = vmatpush1.msra.mxu0 %v1296
        %1387 = vmatprep.subr.mxu0 0.0
        %1388 = vmatpush1.msra.mxu0 %v1297
        %1389 = vmatprep.subr.mxu0 0.0
        %1390 = vmatpush1.msra.mxu0 %v1298
        %1391 = vmatprep.subr.mxu0 0.0
        %1392 = vmatpush1.msra.mxu0 %v1299
        %1393 = vmatprep.subr.mxu0 0.0
        %1394 = vmatpush1.msra.mxu0 %v1300
        %1395 = vmatprep.subr.mxu0 0.0
        %1396 = vmatpush1.msra.mxu0 %v1301
        %1397 = vmatprep.subr.mxu0 0.0
        %1398 = vmatpush1.msra.mxu0 %v1302
        %1399 = vmatprep.subr.mxu0 0.0
        %1400 = vmatpush1.msra.mxu0 %v1303
        %1401 = vmatprep.subr.mxu0 0.0
        %1402 = vmatpush1.msra.mxu0 %v1304
        %1403 = vmatprep.subr.mxu0 0.0
        %1404 = vmatpush1.msra.mxu0 %v1305
        %1405 = vmatprep.subr.mxu0 0.0
        %1406 = vmatpush1.msra.mxu0 %v1306
        %1407 = vmatprep.subr.mxu0 0.0
        %1408 = vmatpush1.msra.mxu0 %v1307
        %1409 = vmatprep.subr.mxu0 0.0
        %1410 = vmatpush1.msra.mxu0 %v1308
        %1411 = vmatprep.subr.mxu0 0.0
        %1412 = vmatpush1.msra.mxu0 %v1309
        %1413 = vmatprep.subr.mxu0 0.0
        %1414 = vmatpush1.msra.mxu0 %v1310
        %1415 = vmatprep.subr.mxu0 0.0
        %1416 = vmatpush1.msra.mxu0 %v1311
        %1417 = vmatprep.subr.mxu0 0.0
        %1418 = vmatpush1.msra.mxu0 %v1312
        %1419 = vmatprep.subr.mxu0 0.0
        %1420 = vmatpush1.msra.mxu0 %v1313
        %1421 = vmatprep.subr.mxu0 0.0
        %1422 = vmatpush1.msra.mxu0 %v1314
        %1423 = vmatprep.subr.mxu0 0.0
        %1424 = vmatpush1.msra.mxu0 %v1315
        %1425 = vmatprep.subr.mxu0 0.0
        %1426 = vmatpush1.msra.mxu0 %v1316
        %1427 = vmatprep.subr.mxu0 0.0
        %1428 = vmatpush1.msra.mxu0 %v1317
        %1429 = vmatprep.subr.mxu0 0.0
        %1430 = vmatpush1.msra.mxu0 %v1318
        %1431 = vmatprep.mubr.f32.mxu0 %v1261
        %1432 = vmatmul.mubr.f32.gmra.mrb[0].mxu0 %v1251
        %v1433 = vpop.f32.mrb[0].mxu0
        %v1434 = vadd.f32 0.0, %v1433
        %v1435 = vpop.f32.mrb[0].mxu0
        %1436 = vmatprep.mubr.f32.mxu0 %v1263
        %1437 = vmatmul.mubr.f32.gmra.mrb[0].mxu0 %v1252
        %v1438 = vpop.f32.mrb[0].mxu0
        %v1439 = vadd.f32 0.0, %v1438
        %v1440 = vpop.f32.mrb[0].mxu0
        %1441 = vdwg.mxu0
        %1442 = vmatprep.subr.mxu0 0.0
        %1443 = vmatpush1.msra.mxu0 %v1319
        %1444 = vmatprep.subr.mxu0 0.0
        %1445 = vmatpush1.msra.mxu0 %v1320
        %1446 = vmatprep.subr.mxu0 0.0
        %1447 = vmatpush1.msra.mxu0 %v1321
        %1448 = vmatprep.subr.mxu0 0.0
        %1449 = vmatpush1.msra.mxu0 %v1322
        %1450 = vmatprep.subr.mxu0 0.0
        %1451 = vmatpush1.msra.mxu0 %v1323
        %1452 = vmatprep.subr.mxu0 0.0
        %1453 = vmatpush1.msra.mxu0 %v1324
        %1454 = vmatprep.subr.mxu0 0.0
        %1455 = vmatpush1.msra.mxu0 %v1325
        %1456 = vmatprep.subr.mxu0 0.0
        %1457 = vmatpush1.msra.mxu0 %v1326
        %1458 = vmatprep.subr.mxu0 0.0
        %1459 = vmatpush1.msra.mxu0 %v1327
        %1460 = vmatprep.subr.mxu0 0.0
        %1461 = vmatpush1.msra.mxu0 %v1328
        %1462 = vmatprep.subr.mxu0 0.0
        %1463 = vmatpush1.msra.mxu0 %v1329
        %1464 = vmatprep.subr.mxu0 0.0
        %1465 = vmatpush1.msra.mxu0 %v1330
        %1466 = vmatprep.subr.mxu0 0.0
        %1467 = vmatpush1.msra.mxu0 %v1331
        %1468 = vmatprep.subr.mxu0 0.0
        %1469 = vmatpush1.msra.mxu0 %v1332
        %1470 = vmatprep.subr.mxu0 0.0
        %1471 = vmatpush1.msra.mxu0 %v1333
        %1472 = vmatprep.subr.mxu0 0.0
        %1473 = vmatpush1.msra.mxu0 %v1334
        %1474 = vmatprep.subr.mxu0 0.0
        %1475 = vmatpush1.msra.mxu0 %v1335
        %1476 = vmatprep.subr.mxu0 0.0
        %1477 = vmatpush1.msra.mxu0 %v1336
        %1478 = vmatprep.subr.mxu0 0.0
        %1479 = vmatpush1.msra.mxu0 %v1337
        %1480 = vmatprep.subr.mxu0 0.0
        %1481 = vmatpush1.msra.mxu0 %v1338
        %1482 = vmatprep.subr.mxu0 0.0
        %1483 = vmatpush1.msra.mxu0 %v1339
        %1484 = vmatprep.subr.mxu0 0.0
        %1485 = vmatpush1.msra.mxu0 %v1340
        %1486 = vmatprep.subr.mxu0 0.0
        %1487 = vmatpush1.msra.mxu0 %v1341
        %1488 = vmatprep.subr.mxu0 0.0
        %1489 = vmatpush1.msra.mxu0 %v1342
        %1490 = vmatprep.subr.mxu0 0.0
        %1491 = vmatpush1.msra.mxu0 %v1343
        %1492 = vmatprep.subr.mxu0 0.0
        %1493 = vmatpush1.msra.mxu0 %v1344
        %1494 = vmatprep.subr.mxu0 0.0
        %1495 = vmatpush1.msra.mxu0 %v1345
        %1496 = vmatprep.subr.mxu0 0.0
        %1497 = vmatpush1.msra.mxu0 %v1346
        %1498 = vmatprep.subr.mxu0 0.0
        %1499 = vmatpush1.msra.mxu0 %v1347
        %1500 = vmatprep.subr.mxu0 0.0
        %1501 = vmatpush1.msra.mxu0 %v1348
        %1502 = vmatprep.subr.mxu0 0.0
        %1503 = vmatpush1.msra.mxu0 %v1349
        %1504 = vmatprep.subr.mxu0 0.0
        %1505 = vmatpush1.msra.mxu0 %v1350
        %1506 = vmatprep.mubr.f32.mxu0 %v1275
        %1507 = vmatmul.mubr.f32.gmra.mrb[0].mxu0 %v1268
        %v1508 = vpop.f32.mrb[0].mxu0
        %v1509 = vadd.f32 %v1434, %v1508
        %v1510 = vpop.f32.mrb[0].mxu0
        %1511 = vmatprep.mubr.f32.mxu0 %v1277
        %1512 = vmatmul.mubr.f32.gmra.mrb[0].mxu0 %v1270
        %v1513 = vpop.f32.mrb[0].mxu0
        %v1514 = vadd.f32 %v1439, %v1513
        %v1515 = vpop.f32.mrb[0].mxu0
        %1516 = vdwg.mxu0
        %1517 = vmatprep.subr.mxu0 0.0
        %1518 = vmatpush1.msra.mxu0 %v1351
        %1519 = vmatprep.subr.mxu0 0.0
        %1520 = vmatpush1.msra.mxu0 %v1352
        %1521 = vmatprep.subr.mxu0 0.0
        %1522 = vmatpush1.msra.mxu0 %v1353
        %1523 = vmatprep.subr.mxu0 0.0
        %1524 = vmatpush1.msra.mxu0 %v1354
        %1525 = vmatprep.subr.mxu0 0.0
        %1526 = vmatpush1.msra.mxu0 %v1355
        %1527 = vmatprep.subr.mxu0 0.0
        %1528 = vmatpush1.msra.mxu0 %v1356
        %1529 = vmatprep.subr.mxu0 0.0
        %1530 = vmatpush1.msra.mxu0 %v1357
        %1531 = vmatprep.subr.mxu0 0.0
        %1532 = vmatpush1.msra.mxu0 %v1358
        %1533 = vmatprep.subr.mxu0 0.0
        %1534 = vmatpush1.msra.mxu0 %v1359
        %1535 = vmatprep.subr.mxu0 0.0
        %1536 = vmatpush1.msra.mxu0 %v1360
        %1537 = vmatprep.subr.mxu0 0.0
        %1538 = vmatpush1.msra.mxu0 %v1361
        %1539 = vmatprep.subr.mxu0 0.0
        %1540 = vmatpush1.msra.mxu0 %v1362
        %1541 = vmatprep.subr.mxu0 0.0
        %1542 = vmatpush1.msra.mxu0 %v1363
        %1543 = vmatprep.subr.mxu0 0.0
        %1544 = vmatpush1.msra.mxu0 %v1364
        %1545 = vmatprep.subr.mxu0 0.0
        %1546 = vmatpush1.msra.mxu0 %v1365
        %1547 = vmatprep.subr.mxu0 0.0
        %1548 = vmatpush1.msra.mxu0 %v1366
        %1549 = vmatprep.subr.mxu0 0.0
        %1550 = vmatpush1.msra.mxu0 0.0
        %1551 = vmatprep.subr.mxu0 0.0
        %1552 = vmatpush1.msra.mxu0 0.0
        %1553 = vmatprep.subr.mxu0 0.0
        %1554 = vmatpush1.msra.mxu0 0.0
        %1555 = vmatprep.subr.mxu0 0.0
        %1556 = vmatpush1.msra.mxu0 0.0
        %1557 = vmatprep.subr.mxu0 0.0
        %1558 = vmatpush1.msra.mxu0 0.0
        %1559 = vmatprep.subr.mxu0 0.0
        %1560 = vmatpush1.msra.mxu0 0.0
        %1561 = vmatprep.subr.mxu0 0.0
        %1562 = vmatpush1.msra.mxu0 0.0
        %1563 = vmatprep.subr.mxu0 0.0
        %1564 = vmatpush1.msra.mxu0 0.0
        %1565 = vmatprep.subr.mxu0 0.0
        %1566 = vmatpush1.msra.mxu0 0.0
        %1567 = vmatprep.subr.mxu0 0.0
        %1568 = vmatpush1.msra.mxu0 0.0
        %1569 = vmatprep.subr.mxu0 0.0
        %1570 = vmatpush1.msra.mxu0 0.0
        %1571 = vmatprep.subr.mxu0 0.0
        %1572 = vmatpush1.msra.mxu0 0.0
        %1573 = vmatprep.subr.mxu0 0.0
        %1574 = vmatpush1.msra.mxu0 0.0
        %1575 = vmatprep.subr.mxu0 0.0
        %1576 = vmatpush1.msra.mxu0 0.0
        %1577 = vmatprep.subr.mxu0 0.0
        %1578 = vmatpush1.msra.mxu0 0.0
        %1579 = vmatprep.subr.mxu0 0.0
        %1580 = vmatpush1.msra.mxu0 0.0
        %1581 = vmatprep.mubr.f32.mxu0 0.0
        %1582 = vmatmul.mubr.f32.gmra.mrb[0].mxu0 %v1282
        %v1583 = vpop.f32.mrb[0].mxu0
        %v1584 = vadd.f32 %v1509, %v1583
        %v1585 = vpop.f32.mrb[0].mxu0
        %1586 = vmatprep.mubr.f32.mxu0 0.0
        %1587 = vmatmul.mubr.f32.gmra.mrb[0].mxu0 %v1284
        %v1588 = vpop.f32.mrb[0].mxu0
        %v1589 = vadd.f32 %v1514, %v1588
        %v1590 = vpop.f32.mrb[0].mxu0
        %1591 = vdwg.mxu0
        %v1593 = vlaneseq
        %v1594 = vshrl.u32 %v1593, 7
        %v1595 = vsub.s32 0, %v1594
        %v1596 = vrot.slane %v1254, %v1595
        %v1598 = vmul.f32 %v1584, %v1596
        %v1599 = vmul.f32 %v1589, %v1596
        %v1601 = vlaneseq
        %v1602 = vshrl.u32 %v1601, 7
        %v1603 = vsub.s32 0, %v1602
        %v1604 = vrot.slane %v1255, %v1603
        %v1606 = vadd.f32 %v1598, %v1604
        %v1607 = vadd.f32 %v1599, %v1604
        %v1608 = vmax.f32 %v1606, 0.0
        %v1609 = vmax.f32 %v1607, 0.0
        %v1610 = vpack.c.bf16 %v1609, %v1608
        %1611 = vst [vmem:[%s421] sm:$0xff] %v1610
        %p1612 = scmp.lt.s32.totalorder %s27, 1
        %s1613 = scalar_select %p1612, %s27, 1
        %p1614 = scmp.lt.s32.totalorder %s28, 0
        %s1615 = scalar_select %p1614, %s28, 0
        %s1616 = sadd.s32 %s1615, %s1613
        %s1617 = smul.addr %s1616, 8
        %s1618 = scalar_lea.vmem %s10, %s1617
        // Predicated region
        $region73: #{encoder_forward.2} parent=59 // pred_check
          %p1619 = pneg %p270
        $region74: #{encoder_forward.2} parent=59 // pred_check_branch
          %1621 = sbr.rel (%p1619) target = $region76
        $region75: #{encoder_forward.2} parent=59 // pred_region
          _
        $region76: #{encoder_forward.2} parent=59 // pred_fallthru
          _
      $region60: #{encoder_forward.2} parent=5 // pred_fallthru
        _
      %p1622 = scmp.le.s32.totalorder 2, %s18
      // Predicated region
      $region77: #{encoder_forward.2} parent=5 // pred_check
        %p1623 = pneg %p1622
      $region78: #{encoder_forward.2} parent=5 // pred_check_branch
        %1625 = sbr.rel (%p1623) target = $region80
      $region79: #{encoder_forward.2} parent=5 // pred_region
        %s1626 = ssub.s32 %s18, 2
        // Predicated region
        $region81: #{encoder_forward.2} parent=79 // pred_check
          %p1627 = pneg %p276
        $region82: #{encoder_forward.2} parent=79 // pred_check_branch
          %1629 = sbr.rel (%p1627) target = $region84
        $region83: #{encoder_forward.2} parent=79 // pred_region
          %p1630 = scmp.lt.s32.totalorder %s29, 1
          %s1631 = scalar_select %p1630, %s29, 1
          %p1632 = scmp.lt.s32.totalorder %s30, 0
          %s1633 = scalar_select %p1632, %s30, 0
          %s1634 = sadd.s32 %s1633, %s1631
          %s1635 = smul.addr %s1634, 8
          %s1636 = scalar_lea.vmem %s10, %s1635
        $region84: #{encoder_forward.2} parent=79 // pred_fallthru
          _
      $region80: #{encoder_forward.2} parent=5 // pred_fallthru
        _
    $region6: #{encoder_forward.2} parent=1 // loop_footer
      %s22 = sadd.s32 1, %s18
    $region7: #{encoder_forward.2} parent=1 // loop_footer_branch
      %17 = sbr.rel target = $region3
    $region8: #{encoder_forward.2} parent=1 // loop_exit
      _
    %1637 = vsyncpa [#allocation3], 1
    %s1638 = scalar_lea.sflag [#allocation3], 1
    %1639 = vsyncpa %s1638, 1
    %1640 = vsyncpa [#allocation5], 1

// kernel: encoder_forward.3
$region0: #{encoder_forward.3}
  #allocation0 [shape = 'u32[]', space=smem, size = 0x4, offset = 0x4, fixed_abs, tag = 'smem constant byte address 0x4 - core index']
  #allocation1 [shape = 'u32[144,128]{1,0:T(1,128)}', space=vmem, size = 0x12000, scoped, tag = 'internal scratch']
  #allocation2 [shape = 'f32[2,128]{1,0:T(2,128)}', space=vmem, size = 0x400, scoped, tag = 'scratch operand']
  #allocation3 [shape = 'f32[2,128]{1,0:T(2,128)}', space=vmem, size = 0x400, scoped, tag = 'scratch operand']
  %s0 = inlined_call_operand.vmem [shape: bf16[16,2,512], index: 0, kind: input, shape index: {}]
  %s1 = inlined_call_operand.vmem [shape: f32[128,512], index: 1, kind: input, shape index: {}]
  %s2 = inlined_call_operand.vmem [shape: s32[2,1], index: 2, kind: input, shape index: {}]
  %s3 = inlined_call_operand.vmem [shape: f32[16,2,128], index: 3, kind: output, shape index: {}]
  %s4 = sld [smem:[#allocation0]]
  $region26: #{encoder_forward.3} parent=0
    _
  %s6 = ssub.s32 1, %s4
  %s7 = scalar_select 0, %s6, %s4
  // Predicated region
  $region2: #{encoder_forward.3} parent=0 // pred_check
    _
  $region3: #{encoder_forward.3} parent=0 // pred_check_branch
    %9 = sbr.rel (0) target = $region5
  $region4: #{encoder_forward.3} parent=0 // pred_region
    _
  $region5: #{encoder_forward.3} parent=0 // pred_fallthru
    _
  // Predicated region
  $region6: #{encoder_forward.3} parent=0 // pred_check
    _
  $region7: #{encoder_forward.3} parent=0 // pred_check_branch
    %11 = sbr.rel (0) target = $region9
  $region8: #{encoder_forward.3} parent=0 // pred_region
    _
  $region9: #{encoder_forward.3} parent=0 // pred_fallthru
    _
  // Predicated region
  $region10: #{encoder_forward.3} parent=0 // pred_check
    _
  $region11: #{encoder_forward.3} parent=0 // pred_check_branch
    %13 = sbr.rel (0) target = $region13
  $region12: #{encoder_forward.3} parent=0 // pred_region
    _
  $region13: #{encoder_forward.3} parent=0 // pred_fallthru
    _
  %p14 = scmp.eq.s32.totalorder 0, 0
  // Predicated region
  $region14: #{encoder_forward.3} parent=0 // pred_check
    %p15 = pneg %p14
  $region15: #{encoder_forward.3} parent=0 // pred_check_branch
    %17 = sbr.rel (%p15) target = $region17
  $region16: #{encoder_forward.3} parent=0 // pred_region
    %18 = vst [vmem:[#allocation2] sm:$0x3] 0.0
    %19 = vst [vmem:[#allocation3] sm:$0x3] 0.0
  $region17: #{encoder_forward.3} parent=0 // pred_fallthru
    _
  %v20 = vld [vmem:[%s1] sm:$0xff]
  %v21 = vld [vmem:[%s1 + $0x8] sm:$0xff]
  %v22 = vld [vmem:[%s1 + $0x10] sm:$0xff]
  %v23 = vld [vmem:[%s1 + $0x18] sm:$0xff]
  %v24 = vld [vmem:[%s1 + $0x20] sm:$0xff]
  %v25 = vld [vmem:[%s1 + $0x28] sm:$0xff]
  %v26 = vld [vmem:[%s1 + $0x30] sm:$0xff]
  %v27 = vld [vmem:[%s1 + $0x38] sm:$0xff]
  %v28 = vld [vmem:[%s1 + $0x40] sm:$0xff]
  %v29 = vld [vmem:[%s1 + $0x48] sm:$0xff]
  %v30 = vld [vmem:[%s1 + $0x50] sm:$0xff]
  %v31 = vld [vmem:[%s1 + $0x58] sm:$0xff]
  %v32 = vld [vmem:[%s1 + $0x60] sm:$0xff]
  %v33 = vld [vmem:[%s1 + $0x68] sm:$0xff]
  %v34 = vld [vmem:[%s1 + $0x70] sm:$0xff]
  %v35 = vld [vmem:[%s1 + $0x78] sm:$0xff]
  %v36 = vld [vmem:[%s1 + $0x80] sm:$0xff]
  %v37 = vld [vmem:[%s1 + $0x88] sm:$0xff]
  %v38 = vld [vmem:[%s1 + $0x90] sm:$0xff]
  %v39 = vld [vmem:[%s1 + $0x98] sm:$0xff]
  %v40 = vld [vmem:[%s1 + $0xa0] sm:$0xff]
  %v41 = vld [vmem:[%s1 + $0xa8] sm:$0xff]
  %v42 = vld [vmem:[%s1 + $0xb0] sm:$0xff]
  %v43 = vld [vmem:[%s1 + $0xb8] sm:$0xff]
  %v44 = vld [vmem:[%s1 + $0xc0] sm:$0xff]
  %v45 = vld [vmem:[%s1 + $0xc8] sm:$0xff]
  %v46 = vld [vmem:[%s1 + $0xd0] sm:$0xff]
  %v47 = vld [vmem:[%s1 + $0xd8] sm:$0xff]
  %v48 = vld [vmem:[%s1 + $0xe0] sm:$0xff]
  %v49 = vld [vmem:[%s1 + $0xe8] sm:$0xff]
  %v50 = vld [vmem:[%s1 + $0xf0] sm:$0xff]
  %v51 = vld [vmem:[%s1 + $0xf8] sm:$0xff]
  %v52 = vld [vmem:[%s1 + $0x100] sm:$0xff]
  %v53 = vld [vmem:[%s1 + $0x108] sm:$0xff]
  %v54 = vld [vmem:[%s1 + $0x110] sm:$0xff]
  %v55 = vld [vmem:[%s1 + $0x118] sm:$0xff]
  %v56 = vld [vmem:[%s1 + $0x120] sm:$0xff]
  %v57 = vld [vmem:[%s1 + $0x128] sm:$0xff]
  %v58 = vld [vmem:[%s1 + $0x130] sm:$0xff]
  %v59 = vld [vmem:[%s1 + $0x138] sm:$0xff]
  %v60 = vld [vmem:[%s1 + $0x140] sm:$0xff]
  %v61 = vld [vmem:[%s1 + $0x148] sm:$0xff]
  %v62 = vld [vmem:[%s1 + $0x150] sm:$0xff]
  %v63 = vld [vmem:[%s1 + $0x158] sm:$0xff]
  %v64 = vld [vmem:[%s1 + $0x160] sm:$0xff]
  %v65 = vld [vmem:[%s1 + $0x168] sm:$0xff]
  %v66 = vld [vmem:[%s1 + $0x170] sm:$0xff]
  %v67 = vld [vmem:[%s1 + $0x178] sm:$0xff]
  %v68 = vld [vmem:[%s1 + $0x180] sm:$0xff]
  %v69 = vld [vmem:[%s1 + $0x188] sm:$0xff]
  %v70 = vld [vmem:[%s1 + $0x190] sm:$0xff]
  %v71 = vld [vmem:[%s1 + $0x198] sm:$0xff]
  %v72 = vld [vmem:[%s1 + $0x1a0] sm:$0xff]
  %v73 = vld [vmem:[%s1 + $0x1a8] sm:$0xff]
  %v74 = vld [vmem:[%s1 + $0x1b0] sm:$0xff]
  %v75 = vld [vmem:[%s1 + $0x1b8] sm:$0xff]
  %v76 = vld [vmem:[%s1 + $0x1c0] sm:$0xff]
  %v77 = vld [vmem:[%s1 + $0x1c8] sm:$0xff]
  %v78 = vld [vmem:[%s1 + $0x1d0] sm:$0xff]
  %v79 = vld [vmem:[%s1 + $0x1d8] sm:$0xff]
  %v80 = vld [vmem:[%s1 + $0x1e0] sm:$0xff]
  %v81 = vld [vmem:[%s1 + $0x1e8] sm:$0xff]
  %v82 = vld [vmem:[%s1 + $0x1f0] sm:$0xff]
  %v83 = vld [vmem:[%s1 + $0x1f8] sm:$0xff]
  %v84 = vld [vmem:[%s2] sm:$0x3]
  %v85 = vlaneseq
  %v86 = vand.u32 %v85, 127
  %vm87 = vcmp.lt.s32.totalorder %v86, 64
  %s88 = smul.u32 0, 16
  %v89 = vld [vmem:[%s0] sm:$0xf]
  %v90 = vunpack.c.l.bf16 %v89
  %v91 = vld [vmem:[#allocation2] sm:$0x3]
  %92 = vmatprep.subr.mxu0 %v21
  %93 = vmatpush1.msra.mxu0 %v20
  %94 = vmatprep.subr.mxu0 %v25
  %95 = vmatpush1.msra.mxu0 %v24
  %96 = vmatprep.subr.mxu0 %v29
  %97 = vmatpush1.msra.mxu0 %v28
  %98 = vmatprep.subr.mxu0 %v33
  %99 = vmatpush1.msra.mxu0 %v32
  %100 = vmatprep.subr.mxu0 %v37
  %101 = vmatpush1.msra.mxu0 %v36
  %102 = vmatprep.subr.mxu0 %v41
  %103 = vmatpush1.msra.mxu0 %v40
  %104 = vmatprep.subr.mxu0 %v45
  %105 = vmatpush1.msra.mxu0 %v44
  %106 = vmatprep.subr.mxu0 %v49
  %107 = vmatpush1.msra.mxu0 %v48
  %108 = vmatprep.subr.mxu0 %v53
  %109 = vmatpush1.msra.mxu0 %v52
  %110 = vmatprep.subr.mxu0 %v57
  %111 = vmatpush1.msra.mxu0 %v56
  %112 = vmatprep.subr.mxu0 %v61
  %113 = vmatpush1.msra.mxu0 %v60
  %114 = vmatprep.subr.mxu0 %v65
  %115 = vmatpush1.msra.mxu0 %v64
  %116 = vmatprep.subr.mxu0 %v69
  %117 = vmatpush1.msra.mxu0 %v68
  %118 = vmatprep.subr.mxu0 %v73
  %119 = vmatpush1.msra.mxu0 %v72
  %120 = vmatprep.subr.mxu0 %v77
  %121 = vmatpush1.msra.mxu0 %v76
  %122 = vmatprep.subr.mxu0 %v81
  %123 = vmatpush1.msra.mxu0 %v80
  %124 = vmatprep.subr.mxu0 0.0
  %125 = vmatpush1.msra.mxu0 0.0
  %126 = vmatprep.subr.mxu0 0.0
  %127 = vmatpush1.msra.mxu0 0.0
  %128 = vmatprep.subr.mxu0 0.0
  %129 = vmatpush1.msra.mxu0 0.0
  %130 = vmatprep.subr.mxu0 0.0
  %131 = vmatpush1.msra.mxu0 0.0
  %132 = vmatprep.subr.mxu0 0.0
  %133 = vmatpush1.msra.mxu0 0.0
  %134 = vmatprep.subr.mxu0 0.0
  %135 = vmatpush1.msra.mxu0 0.0
  %136 = vmatprep.subr.mxu0 0.0
  %137 = vmatpush1.msra.mxu0 0.0
  %138 = vmatprep.subr.mxu0 0.0
  %139 = vmatpush1.msra.mxu0 0.0
  %140 = vmatprep.subr.mxu0 0.0
  %141 = vmatpush1.msra.mxu0 0.0
  %142 = vmatprep.subr.mxu0 0.0
  %143 = vmatpush1.msra.mxu0 0.0
  %144 = vmatprep.subr.mxu0 0.0
  %145 = vmatpush1.msra.mxu0 0.0
  %146 = vmatprep.subr.mxu0 0.0
  %147 = vmatpush1.msra.mxu0 0.0
  %148 = vmatprep.subr.mxu0 0.0
  %149 = vmatpush1.msra.mxu0 0.0
  %150 = vmatprep.subr.mxu0 0.0
  %151 = vmatpush1.msra.mxu0 0.0
  %152 = vmatprep.subr.mxu0 0.0
  %153 = vmatpush1.msra.mxu0 0.0
  %154 = vmatprep.subr.mxu0 0.0
  %155 = vmatpush1.msra.mxu0 0.0
  %156 = vmatprep.mubr.f32.mxu0 0.0
  %157 = vmatmul.mubr.f32.gmra.mrb[0].mxu0 %v91
  %v158 = vpop.f32.mrb[0].mxu0
  %v159 = vadd.f32 0.0, %v158
  %v160 = vpop.f32.mrb[0].mxu0
  %v161 = vadd.f32 0.0, %v160
  %162 = vdwg.mxu0
  %163 = vmatprep.subr.mxu0 %v23
  %164 = vmatpush1.msra.mxu0 %v22
  %165 = vmatprep.subr.mxu0 %v27
  %166 = vmatpush1.msra.mxu0 %v26
  %167 = vmatprep.subr.mxu0 %v31
  %168 = vmatpush1.msra.mxu0 %v30
  %169 = vmatprep.subr.mxu0 %v35
  %170 = vmatpush1.msra.mxu0 %v34
  %171 = vmatprep.subr.mxu0 %v39
  %172 = vmatpush1.msra.mxu0 %v38
  %173 = vmatprep.subr.mxu0 %v43
  %174 = vmatpush1.msra.mxu0 %v42
  %175 = vmatprep.subr.mxu0 %v47
  %176 = vmatpush1.msra.mxu0 %v46
  %177 = vmatprep.subr.mxu0 %v51
  %178 = vmatpush1.msra.mxu0 %v50
  %179 = vmatprep.subr.mxu0 %v55
  %180 = vmatpush1.msra.mxu0 %v54
  %181 = vmatprep.subr.mxu0 %v59
  %182 = vmatpush1.msra.mxu0 %v58
  %183 = vmatprep.subr.mxu0 %v63
  %184 = vmatpush1.msra.mxu0 %v62
  %185 = vmatprep.subr.mxu0 %v67
  %186 = vmatpush1.msra.mxu0 %v66
  %187 = vmatprep.subr.mxu0 %v71
  %188 = vmatpush1.msra.mxu0 %v70
  %189 = vmatprep.subr.mxu0 %v75
  %190 = vmatpush1.msra.mxu0 %v74
  %191 = vmatprep.subr.mxu0 %v79
  %192 = vmatpush1.msra.mxu0 %v78
  %193 = vmatprep.subr.mxu0 %v83
  %194 = vmatpush1.msra.mxu0 %v82
  %195 = vmatprep.subr.mxu0 0.0
  %196 = vmatpush1.msra.mxu0 0.0
  %197 = vmatprep.subr.mxu0 0.0
  %198 = vmatpush1.msra.mxu0 0.0
  %199 = vmatprep.subr.mxu0 0.0
  %200 = vmatpush1.msra.mxu0 0.0
  %201 = vmatprep.subr.mxu0 0.0
  %202 = vmatpush1.msra.mxu0 0.0
  %203 = vmatprep.subr.mxu0 0.0
  %204 = vmatpush1.msra.mxu0 0.0
  %205 = vmatprep.subr.mxu0 0.0
  %206 = vmatpush1.msra.mxu0 0.0
  %207 = vmatprep.subr.mxu0 0.0
  %208 = vmatpush1.msra.mxu0 0.0
  %209 = vmatprep.subr.mxu0 0.0
  %210 = vmatpush1.msra.mxu0 0.0
  %211 = vmatprep.subr.mxu0 0.0
  %212 = vmatpush1.msra.mxu0 0.0
  %213 = vmatprep.subr.mxu0 0.0
  %214 = vmatpush1.msra.mxu0 0.0
  %215 = vmatprep.subr.mxu0 0.0
  %216 = vmatpush1.msra.mxu0 0.0
  %217 = vmatprep.subr.mxu0 0.0
  %218 = vmatpush1.msra.mxu0 0.0
  %219 = vmatprep.subr.mxu0 0.0
  %220 = vmatpush1.msra.mxu0 0.0
  %221 = vmatprep.subr.mxu0 0.0
  %222 = vmatpush1.msra.mxu0 0.0
  %223 = vmatprep.subr.mxu0 0.0
  %224 = vmatpush1.msra.mxu0 0.0
  %225 = vmatprep.subr.mxu0 0.0
  %226 = vmatpush1.msra.mxu0 0.0
  %227 = vmatprep.mubr.f32.mxu0 0.0
  %228 = vmatmul.mubr.f32.gmra.mrb[0].mxu0 %v91
  %v229 = vpop.f32.mrb[0].mxu0
  %v230 = vadd.f32 0.0, %v229
  %v231 = vpop.f32.mrb[0].mxu0
  %v232 = vadd.f32 0.0, %v231
  %233 = vdwg.mxu0
  %v238 = vcombine.low %v159, %v161
  %v239 = vcombine.low %v230, %v232
  %v241 = vunpack.c.l.s4 1983009808
  %v242 = vunpack.c.0.s8 %v241
  %v243 = vlaneseq
  %v244 = vshrl.u32 %v243, 7
  %v245 = vsub.s32 %v242, %v244
  %v246 = vrot.slane %v238, %v245
  %v248 = vunpack.c.l.s4 1983009808
  %v249 = vunpack.c.0.s8 %v248
  %v250 = vlaneseq
  %v251 = vshrl.u32 %v250, 7
  %v252 = vsub.s32 %v249, %v251
  %v253 = vrot.slane %v239, %v252
  %v254 = vcombine.low %v246, %v253
  %v256 = vadd.f32 %v90, %v254
  %v257 = vxor.u32 %v256, 2147483648
  %v258 = vmul.f32 %v257, 1.442695
  %v259 = vpow.pop %v258
  %v260 = vadd.f32 %v259, 1.0
  %v261 = vrcp.pop %v260
  %v262 = vmul.f32 1.0, %v261
  %v264 = vrot.slane %v256, 6
  %v266 = vtanh.pop %v264
  %v267 = vld [vmem:[#allocation3] sm:$0x3]
  %v269 = vrot.slane %v262, 2
  %v271 = vmul.f32 %v269, %v267
  %v272 = vmul.f32 %v262, %v266
  %v273 = vadd.f32 %v271, %v272
  %v274 = vtanh.pop %v273
  %v275 = vrot.slane %v262, 4
  %v277 = vmul.f32 %v275, %v274
  %s278 = ssub.s32 15, %s88
  %v279 = vstv %s88
  %v280 = vstv %s278
  %v281 = vsel %vm87, %v279, %v280
  %282 = vset.pattern.permute.xlu0 0
  %283 = vperm.xlu0 %282, %v84
  %v284 = vpop.permute.xlu0 %283
  %vm285 = vcmp.lt.s32.totalorder %v281, %v284
  %v286 = vsel %vm285, %v277, %v91
  %287 = vst [vmem:[#allocation2] sm:$0x3] %v286
  %v288 = vld [vmem:[#allocation3] sm:$0x3]
  %v289 = vsel %vm285, %v273, %v288
  %290 = vst [vmem:[#allocation3] sm:$0x3] %v289
  %v291 = vsel %vm285, %v277, 0.0
  %292 = vst [vmem:[%s3] sm:$0x3] %v291
  %s293 = sadd.s32 %s88, 1
  %s294 = scalar_lea.vmem %s0, 4
  %v295 = vld [vmem:[%s294] sm:$0xf]
  %v296 = vunpack.c.l.bf16 %v295
  %v297 = vld [vmem:[#allocation2] sm:$0x3]
  %298 = vmatprep.subr.mxu0 %v21
  %299 = vmatpush1.msra.mxu0 %v20
  %300 = vmatprep.subr.mxu0 %v25
  %301 = vmatpush1.msra.mxu0 %v24
  %302 = vmatprep.subr.mxu0 %v29
  %303 = vmatpush1.msra.mxu0 %v28
  %304 = vmatprep.subr.mxu0 %v33
  %305 = vmatpush1.msra.mxu0 %v32
  %306 = vmatprep.subr.mxu0 %v37
  %307 = vmatpush1.msra.mxu0 %v36
  %308 = vmatprep.subr.mxu0 %v41
  %309 = vmatpush1.msra.mxu0 %v40
  %310 = vmatprep.subr.mxu0 %v45
  %311 = vmatpush1.msra.mxu0 %v44
  %312 = vmatprep.subr.mxu0 %v49
  %313 = vmatpush1.msra.mxu0 %v48
  %314 = vmatprep.subr.mxu0 %v53
  %315 = vmatpush1.msra.mxu0 %v52
  %316 = vmatprep.subr.mxu0 %v57
  %317 = vmatpush1.msra.mxu0 %v56
  %318 = vmatprep.subr.mxu0 %v61
  %319 = vmatpush1.msra.mxu0 %v60
  %320 = vmatprep.subr.mxu0 %v65
  %321 = vmatpush1.msra.mxu0 %v64
  %322 = vmatprep.subr.mxu0 %v69
  %323 = vmatpush1.msra.mxu0 %v68
  %324 = vmatprep.subr.mxu0 %v73
  %325 = vmatpush1.msra.mxu0 %v72
  %326 = vmatprep.subr.mxu0 %v77
  %327 = vmatpush1.msra.mxu0 %v76
  %328 = vmatprep.subr.mxu0 %v81
  %329 = vmatpush1.msra.mxu0 %v80
  %330 = vmatprep.subr.mxu0 0.0
  %331 = vmatpush1.msra.mxu0 0.0
  %332 = vmatprep.subr.mxu0 0.0
  %333 = vmatpush1.msra.mxu0 0.0
  %334 = vmatprep.subr.mxu0 0.0
  %335 = vmatpush1.msra.mxu0 0.0
  %336 = vmatprep.subr.mxu0 0.0
  %337 = vmatpush1.msra.mxu0 0.0
  %338 = vmatprep.subr.mxu0 0.0
  %339 = vmatpush1.msra.mxu0 0.0
  %340 = vmatprep.subr.mxu0 0.0
  %341 = vmatpush1.msra.mxu0 0.0
  %342 = vmatprep.subr.mxu0 0.0
  %343 = vmatpush1.msra.mxu0 0.0
  %344 = vmatprep.subr.mxu0 0.0
  %345 = vmatpush1.msra.mxu0 0.0
  %346 = vmatprep.subr.mxu0 0.0
  %347 = vmatpush1.msra.mxu0 0.0
  %348 = vmatprep.subr.mxu0 0.0
  %349 = vmatpush1.msra.mxu0 0.0
  %350 = vmatprep.subr.mxu0 0.0
  %351 = vmatpush1.msra.mxu0 0.0
  %352 = vmatprep.subr.mxu0 0.0
  %353 = vmatpush1.msra.mxu0 0.0
  %354 = vmatprep.subr.mxu0 0.0
  %355 = vmatpush1.msra.mxu0 0.0
  %356 = vmatprep.subr.mxu0 0.0
  %357 = vmatpush1.msra.mxu0 0.0
  %358 = vmatprep.subr.mxu0 0.0
  %359 = vmatpush1.msra.mxu0 0.0
  %360 = vmatprep.subr.mxu0 0.0
  %361 = vmatpush1.msra.mxu0 0.0
  %362 = vmatprep.mubr.f32.mxu0 0.0
  %363 = vmatmul.mubr.f32.gmra.mrb[0].mxu0 %v297
  %v364 = vpop.f32.mrb[0].mxu0
  %v365 = vadd.f32 0.0, %v364
  %v366 = vpop.f32.mrb[0].mxu0
  %v367 = vadd.f32 0.0, %v366
  %368 = vdwg.mxu0
  %369 = vmatprep.subr.mxu0 %v23
  %370 = vmatpush1.msra.mxu0 %v22
  %371 = vmatprep.subr.mxu0 %v27
  %372 = vmatpush1.msra.mxu0 %v26
  %373 = vmatprep.subr.mxu0 %v31
  %374 = vmatpush1.msra.mxu0 %v30
  %375 = vmatprep.subr.mxu0 %v35
  %376 = vmatpush1.msra.mxu0 %v34
  %377 = vmatprep.subr.mxu0 %v39
  %378 = vmatpush1.msra.mxu0 %v38
  %379 = vmatprep.subr.mxu0 %v43
  %380 = vmatpush1.msra.mxu0 %v42
  %381 = vmatprep.subr.mxu0 %v47
  %382 = vmatpush1.msra.mxu0 %v46
  %383 = vmatprep.subr.mxu0 %v51
  %384 = vmatpush1.msra.mxu0 %v50
  %385 = vmatprep.subr.mxu0 %v55
  %386 = vmatpush1.msra.mxu0 %v54
  %387 = vmatprep.subr.mxu0 %v59
  %388 = vmatpush1.msra.mxu0 %v58
  %389 = vmatprep.subr.mxu0 %v63
  %390 = vmatpush1.msra.mxu0 %v62
  %391 = vmatprep.subr.mxu0 %v67
  %392 = vmatpush1.msra.mxu0 %v66
  %393 = vmatprep.subr.mxu0 %v71
  %394 = vmatpush1.msra.mxu0 %v70
  %395 = vmatprep.subr.mxu0 %v75
  %396 = vmatpush1.msra.mxu0 %v74
  %397 = vmatprep.subr.mxu0 %v79
  %398 = vmatpush1.msra.mxu0 %v78
  %399 = vmatprep.subr.mxu0 %v83
  %400 = vmatpush1.msra.mxu0 %v82
  %401 = vmatprep.subr.mxu0 0.0
  %402 = vmatpush1.msra.mxu0 0.0
  %403 = vmatprep.subr.mxu0 0.0
  %404 = vmatpush1.msra.mxu0 0.0
  %405 = vmatprep.subr.mxu0 0.0
  %406 = vmatpush1.msra.mxu0 0.0
  %407 = vmatprep.subr.mxu0 0.0
  %408 = vmatpush1.msra.mxu0 0.0
  %409 = vmatprep.subr.mxu0 0.0
  %410 = vmatpush1.msra.mxu0 0.0
  %411 = vmatprep.subr.mxu0 0.0
  %412 = vmatpush1.msra.mxu0 0.0
  %413 = vmatprep.subr.mxu0 0.0
  %414 = vmatpush1.msra.mxu0 0.0
  %415 = vmatprep.subr.mxu0 0.0
  %416 = vmatpush1.msra.mxu0 0.0
  %417 = vmatprep.subr.mxu0 0.0
  %418 = vmatpush1.msra.mxu0 0.0
  %419 = vmatprep.subr.mxu0 0.0
  %420 = vmatpush1.msra.mxu0 0.0
  %421 = vmatprep.subr.mxu0 0.0
  %422 = vmatpush1.msra.mxu0 0.0
  %423 = vmatprep.subr.mxu0 0.0
  %424 = vmatpush1.msra.mxu0 0.0
  %425 = vmatprep.subr.mxu0 0.0
  %426 = vmatpush1.msra.mxu0 0.0
  %427 = vmatprep.subr.mxu0 0.0
  %428 = vmatpush1.msra.mxu0 0.0
  %429 = vmatprep.subr.mxu0 0.0
  %430 = vmatpush1.msra.mxu0 0.0
  %431 = vmatprep.subr.mxu0 0.0
  %432 = vmatpush1.msra.mxu0 0.0
  %433 = vmatprep.mubr.f32.mxu0 0.0
  %434 = vmatmul.mubr.f32.gmra.mrb[0].mxu0 %v297
  %v435 = vpop.f32.mrb[0].mxu0
  %v436 = vadd.f32 0.0, %v435
  %v437 = vpop.f32.mrb[0].mxu0
  %v438 = vadd.f32 0.0, %v437
  %439 = vdwg.mxu0
  %v444 = vcombine.low %v365, %v367
  %v445 = vcombine.low %v436, %v438
  %v447 = vunpack.c.l.s4 1983009808
  %v448 = vunpack.c.0.s8 %v447
  %v449 = vlaneseq
  %v450 = vshrl.u32 %v449, 7
  %v451 = vsub.s32 %v448, %v450
  %v452 = vrot.slane %v444, %v451
  %v454 = vunpack.c.l.s4 1983009808
  %v455 = vunpack.c.0.s8 %v454
  %v456 = vlaneseq
  %v457 = vshrl.u32 %v456, 7
  %v458 = vsub.s32 %v455, %v457
  %v459 = vrot.slane %v445, %v458
  %v460 = vcombine.low %v452, %v459
  %v462 = vadd.f32 %v296, %v460
  %v463 = vxor.u32 %v462, 2147483648
  %v464 = vmul.f32 %v463, 1.442695
  %v465 = vpow.pop %v464
  %v466 = vadd.f32 %v465, 1.0
  %v467 = vrcp.pop %v466
  %v468 = vmul.f32 1.0, %v467
  %v470 = vrot.slane %v462, 6
  %v472 = vtanh.pop %v470
  %v473 = vld [vmem:[#allocation3] sm:$0x3]
  %v475 = vrot.slane %v468, 2
  %v477 = vmul.f32 %v475, %v473
  %v478 = vmul.f32 %v468, %v472
  %v479 = vadd.f32 %v477, %v478
  %v480 = vtanh.pop %v479
  %v481 = vrot.slane %v468, 4
  %v483 = vmul.f32 %v481, %v480
  %s484 = ssub.s32 14, %s88
  %v485 = vstv %s293
  %v486 = vstv %s484
  %v487 = vsel %vm87, %v485, %v486
  %vm488 = vcmp.lt.s32.totalorder %v487, %v284
  %v489 = vsel %vm488, %v483, %v297
  %490 = vst [vmem:[#allocation2] sm:$0x3] %v489
  %v491 = vld [vmem:[#allocation3] sm:$0x3]
  %v492 = vsel %vm488, %v479, %v491
  %493 = vst [vmem:[#allocation3] sm:$0x3] %v492
  %v494 = vsel %vm488, %v483, 0.0
  %s495 = scalar_lea.vmem %s3, 2
  %496 = vst [vmem:[%s495] sm:$0x3] %v494
  %s497 = sadd.s32 %s88, 2
  %s498 = scalar_lea.vmem %s0, 8
  %v499 = vld [vmem:[%s498] sm:$0xf]
  %v500 = vunpack.c.l.bf16 %v499
  %v501 = vld [vmem:[#allocation2] sm:$0x3]
  %502 = vmatprep.subr.mxu0 %v21
  %503 = vmatpush1.msra.mxu0 %v20
  %504 = vmatprep.subr.mxu0 %v25
  %505 = vmatpush1.msra.mxu0 %v24
  %506 = vmatprep.subr.mxu0 %v29
  %507 = vmatpush1.msra.mxu0 %v28
  %508 = vmatprep.subr.mxu0 %v33
  %509 = vmatpush1.msra.mxu0 %v32
  %510 = vmatprep.subr.mxu0 %v37
  %511 = vmatpush1.msra.mxu0 %v36
  %512 = vmatprep.subr.mxu0 %v41
  %513 = vmatpush1.msra.mxu0 %v40
  %514 = vmatprep.subr.mxu0 %v45
  %515 = vmatpush1.msra.mxu0 %v44
  %516 = vmatprep.subr.mxu0 %v49
  %517 = vmatpush1.msra.mxu0 %v48
  %518 = vmatprep.subr.mxu0 %v53
  %519 = vmatpush1.msra.mxu0 %v52
  %520 = vmatprep.subr.mxu0 %v57
  %521 = vmatpush1.msra.mxu0 %v56
  %522 = vmatprep.subr.mxu0 %v61
  %523 = vmatpush1.msra.mxu0 %v60
  %524 = vmatprep.subr.mxu0 %v65
  %525 = vmatpush1.msra.mxu0 %v64
  %526 = vmatprep.subr.mxu0 %v69
  %527 = vmatpush1.msra.mxu0 %v68
  %528 = vmatprep.subr.mxu0 %v73
  %529 = vmatpush1.msra.mxu0 %v72
  %530 = vmatprep.subr.mxu0 %v77
  %531 = vmatpush1.msra.mxu0 %v76
  %532 = vmatprep.subr.mxu0 %v81
  %533 = vmatpush1.msra.mxu0 %v80
  %534 = vmatprep.subr.mxu0 0.0
  %535 = vmatpush1.msra.mxu0 0.0
  %536 = vmatprep.subr.mxu0 0.0
  %537 = vmatpush1.msra.mxu0 0.0
  %538 = vmatprep.subr.mxu0 0.0
  %539 = vmatpush1.msra.mxu0 0.0
  %540 = vmatprep.subr.mxu0 0.0
  %541 = vmatpush1.msra.mxu0 0.0
  %542 = vmatprep.subr.mxu0 0.0
  %543 = vmatpush1.msra.mxu0 0.0
  %544 = vmatprep.subr.mxu0 0.0
  %545 = vmatpush1.msra.mxu0 0.0
  %546 = vmatprep.subr.mxu0 0.0
  %547 = vmatpush1.msra.mxu0 0.0
  %548 = vmatprep.subr.mxu0 0.0
  %549 = vmatpush1.msra.mxu0 0.0
  %550 = vmatprep.subr.mxu0 0.0
  %551 = vmatpush1.msra.mxu0 0.0
  %552 = vmatprep.subr.mxu0 0.0
  %553 = vmatpush1.msra.mxu0 0.0
  %554 = vmatprep.subr.mxu0 0.0
  %555 = vmatpush1.msra.mxu0 0.0
  %556 = vmatprep.subr.mxu0 0.0
  %557 = vmatpush1.msra.mxu0 0.0
  %558 = vmatprep.subr.mxu0 0.0
  %559 = vmatpush1.msra.mxu0 0.0
  %560 = vmatprep.subr.mxu0 0.0
  %561 = vmatpush1.msra.mxu0 0.0
  %562 = vmatprep.subr.mxu0 0.0
  %563 = vmatpush1.msra.mxu0 0.0
  %564 = vmatprep.subr.mxu0 0.0
  %565 = vmatpush1.msra.mxu0 0.0
  %566 = vmatprep.mubr.f32.mxu0 0.0
  %567 = vmatmul.mubr.f32.gmra.mrb[0].mxu0 %v501
  %v568 = vpop.f32.mrb[0].mxu0
  %v569 = vadd.f32 0.0, %v568
  %v570 = vpop.f32.mrb[0].mxu0
  %v571 = vadd.f32 0.0, %v570
  %572 = vdwg.mxu0
  %573 = vmatprep.subr.mxu0 %v23
  %574 = vmatpush1.msra.mxu0 %v22
  %575 = vmatprep.subr.mxu0 %v27
  %576 = vmatpush1.msra.mxu0 %v26
  %577 = vmatprep.subr.mxu0 %v31
  %578 = vmatpush1.msra.mxu0 %v30
  %579 = vmatprep.subr.mxu0 %v35
  %580 = vmatpush1.msra.mxu0 %v34
  %581 = vmatprep.subr.mxu0 %v39
  %582 = vmatpush1.msra.mxu0 %v38
  %583 = vmatprep.subr.mxu0 %v43
  %584 = vmatpush1.msra.mxu0 %v42
  %585 = vmatprep.subr.mxu0 %v47
  %586 = vmatpush1.msra.mxu0 %v46
  %587 = vmatprep.subr.mxu0 %v51
  %588 = vmatpush1.msra.mxu0 %v50
  %589 = vmatprep.subr.mxu0 %v55
  %590 = vmatpush1.msra.mxu0 %v54
  %591 = vmatprep.subr.mxu0 %v59
  %592 = vmatpush1.msra.mxu0 %v58
  %593 = vmatprep.subr.mxu0 %v63
  %594 = vmatpush1.msra.mxu0 %v62
  %595 = vmatprep.subr.mxu0 %v67
  %596 = vmatpush1.msra.mxu0 %v66
  %597 = vmatprep.subr.mxu0 %v71
  %598 = vmatpush1.msra.mxu0 %v70
  %599 = vmatprep.subr.mxu0 %v75
  %600 = vmatpush1.msra.mxu0 %v74
  %601 = vmatprep.subr.mxu0 %v79
  %602 = vmatpush1.msra.mxu0 %v78
  %603 = vmatprep.subr.mxu0 %v83
  %604 = vmatpush1.msra.mxu0 %v82
  %605 = vmatprep.subr.mxu0 0.0
  %606 = vmatpush1.msra.mxu0 0.0
  %607 = vmatprep.subr.mxu0 0.0
  %608 = vmatpush1.msra.mxu0 0.0
  %609 = vmatprep.subr.mxu0 0.0
  %610 = vmatpush1.msra.mxu0 0.0
  %611 = vmatprep.subr.mxu0 0.0
  %612 = vmatpush1.msra.mxu0 0.0
  %613 = vmatprep.subr.mxu0 0.0
  %614 = vmatpush1.msra.mxu0 0.0
  %615 = vmatprep.subr.mxu0 0.0
  %616 = vmatpush1.msra.mxu0 0.0
  %617 = vmatprep.subr.mxu0 0.0
  %618 = vmatpush1.msra.mxu0 0.0
  %619 = vmatprep.subr.mxu0 0.0
  %620 = vmatpush1.msra.mxu0 0.0
  %621 = vmatprep.subr.mxu0 0.0
  %622 = vmatpush1.msra.mxu0 0.0
  %623 = vmatprep.subr.mxu0 0.0
  %624 = vmatpush1.msra.mxu0 0.0
  %625 = vmatprep.subr.mxu0 0.0
  %626 = vmatpush1.msra.mxu0 0.0
  %627 = vmatprep.subr.mxu0 0.0
  %628 = vmatpush1.msra.mxu0 0.0
  %629 = vmatprep.subr.mxu0 0.0
  %630 = vmatpush1.msra.mxu0 0.0
  %631 = vmatprep.subr.mxu0 0.0
  %632 = vmatpush1.msra.mxu0 0.0
  %633 = vmatprep.subr.mxu0 0.0
  %634 = vmatpush1.msra.mxu0 0.0
  %635 = vmatprep.subr.mxu0 0.0
  %636 = vmatpush1.msra.mxu0 0.0
  %637 = vmatprep.mubr.f32.mxu0 0.0
  %638 = vmatmul.mubr.f32.gmra.mrb[0].mxu0 %v501
  %v639 = vpop.f32.mrb[0].mxu0
  %v640 = vadd.f32 0.0, %v639
  %v641 = vpop.f32.mrb[0].mxu0
  %v642 = vadd.f32 0.0, %v641
  %643 = vdwg.mxu0
  %v648 = vcombine.low %v569, %v571
  %v649 = vcombine.low %v640, %v642
  %v651 = vunpack.c.l.s4 1983009808
  %v652 = vunpack.c.0.s8 %v651
  %v653 = vlaneseq
  %v654 = vshrl.u32 %v653, 7
  %v655 = vsub.s32 %v652, %v654
  %v656 = vrot.slane %v648, %v655
  %v658 = vunpack.c.l.s4 1983009808
  %v659 = vunpack.c.0.s8 %v658
  %v660 = vlaneseq
  %v661 = vshrl.u32 %v660, 7
  %v662 = vsub.s32 %v659, %v661
  %v663 = vrot.slane %v649, %v662
  %v664 = vcombine.low %v656, %v663
  %v666 = vadd.f32 %v500, %v664
  %v667 = vxor.u32 %v666, 2147483648
  %v668 = vmul.f32 %v667, 1.442695
  %v669 = vpow.pop %v668
  %v670 = vadd.f32 %v669, 1.0
  %v671 = vrcp.pop %v670
  %v672 = vmul.f32 1.0, %v671
  %v674 = vrot.slane %v666, 6
  %v676 = vtanh.pop %v674
  %v677 = vld [vmem:[#allocation3] sm:$0x3]
  %v679 = vrot.slane %v672, 2
  %v681 = vmul.f32 %v679, %v677
  %v682 = vmul.f32 %v672, %v676
  %v683 = vadd.f32 %v681, %v682
  %v684 = vtanh.pop %v683
  %v685 = vrot.slane %v672, 4
  %v687 = vmul.f32 %v685, %v684
  %s688 = ssub.s32 13, %s88
  %v689 = vstv %s497
  %v690 = vstv %s688
  %v691 = vsel %vm87, %v689, %v690
  %vm692 = vcmp.lt.s32.totalorder %v691, %v284
  %v693 = vsel %vm692, %v687, %v501
  %694 = vst [vmem:[#allocation2] sm:$0x3] %v693
  %v695 = vld [vmem:[#allocation3] sm:$0x3]
  %v696 = vsel %vm692, %v683, %v695
  %697 = vst [vmem:[#allocation3] sm:$0x3] %v696
  %v698 = vsel %vm692, %v687, 0.0
  %s699 = scalar_lea.vmem %s3, 4
  %700 = vst [vmem:[%s699] sm:$0x3] %v698
  %s701 = sadd.s32 %s88, 3
  %s702 = scalar_lea.vmem %s0, 12
  %v703 = vld [vmem:[%s702] sm:$0xf]
  %v704 = vunpack.c.l.bf16 %v703
  %v705 = vld [vmem:[#allocation2] sm:$0x3]
  %706 = vmatprep.subr.mxu0 %v21
  %707 = vmatpush1.msra.mxu0 %v20
  %708 = vmatprep.subr.mxu0 %v25
  %709 = vmatpush1.msra.mxu0 %v24
  %710 = vmatprep.subr.mxu0 %v29
  %711 = vmatpush1.msra.mxu0 %v28
  %712 = vmatprep.subr.mxu0 %v33
  %713 = vmatpush1.msra.mxu0 %v32
  %714 = vmatprep.subr.mxu0 %v37
  %715 = vmatpush1.msra.mxu0 %v36
  %716 = vmatprep.subr.mxu0 %v41
  %717 = vmatpush1.msra.mxu0 %v40
  %718 = vmatprep.subr.mxu0 %v45
  %719 = vmatpush1.msra.mxu0 %v44
  %720 = vmatprep.subr.mxu0 %v49
  %721 = vmatpush1.msra.mxu0 %v48
  %722 = vmatprep.subr.mxu0 %v53
  %723 = vmatpush1.msra.mxu0 %v52
  %724 = vmatprep.subr.mxu0 %v57
  %725 = vmatpush1.msra.mxu0 %v56
  %726 = vmatprep.subr.mxu0 %v61
  %727 = vmatpush1.msra.mxu0 %v60
  %728 = vmatprep.subr.mxu0 %v65
  %729 = vmatpush1.msra.mxu0 %v64
  %730 = vmatprep.subr.mxu0 %v69
  %731 = vmatpush1.msra.mxu0 %v68
  %732 = vmatprep.subr.mxu0 %v73
  %733 = vmatpush1.msra.mxu0 %v72
  %734 = vmatprep.subr.mxu0 %v77
  %735 = vmatpush1.msra.mxu0 %v76
  %736 = vmatprep.subr.mxu0 %v81
  %737 = vmatpush1.msra.mxu0 %v80
  %738 = vmatprep.subr.mxu0 0.0
  %739 = vmatpush1.msra.mxu0 0.0
  %740 = vmatprep.subr.mxu0 0.0
  %741 = vmatpush1.msra.mxu0 0.0
  %742 = vmatprep.subr.mxu0 0.0
  %743 = vmatpush1.msra.mxu0 0.0
  %744 = vmatprep.subr.mxu0 0.0
  %745 = vmatpush1.msra.mxu0 0.0
  %746 = vmatprep.subr.mxu0 0.0
  %747 = vmatpush1.msra.mxu0 0.0
  %748 = vmatprep.subr.mxu0 0.0
  %749 = vmatpush1.msra.mxu0 0.0
  %750 = vmatprep.subr.mxu0 0.0
  %751 = vmatpush1.msra.mxu0 0.0
  %752 = vmatprep.subr.mxu0 0.0
  %753 = vmatpush1.msra.mxu0 0.0
  %754 = vmatprep.subr.mxu0 0.0
  %755 = vmatpush1.msra.mxu0 0.0
  %756 = vmatprep.subr.mxu0 0.0
  %757 = vmatpush1.msra.mxu0 0.0
  %758 = vmatprep.subr.mxu0 0.0
  %759 = vmatpush1.msra.mxu0 0.0
  %760 = vmatprep.subr.mxu0 0.0
  %761 = vmatpush1.msra.mxu0 0.0
  %762 = vmatprep.subr.mxu0 0.0
  %763 = vmatpush1.msra.mxu0 0.0
  %764 = vmatprep.subr.mxu0 0.0
  %765 = vmatpush1.msra.mxu0 0.0
  %766 = vmatprep.subr.mxu0 0.0
  %767 = vmatpush1.msra.mxu0 0.0
  %768 = vmatprep.subr.mxu0 0.0
  %769 = vmatpush1.msra.mxu0 0.0
  %770 = vmatprep.mubr.f32.mxu0 0.0
  %771 = vmatmul.mubr.f32.gmra.mrb[0].mxu0 %v705
  %v772 = vpop.f32.mrb[0].mxu0
  %v773 = vadd.f32 0.0, %v772
  %v774 = vpop.f32.mrb[0].mxu0
  %v775 = vadd.f32 0.0, %v774
  %776 = vdwg.mxu0
  %777 = vmatprep.subr.mxu0 %v23
  %778 = vmatpush1.msra.mxu0 %v22
  %779 = vmatprep.subr.mxu0 %v27
  %780 = vmatpush1.msra.mxu0 %v26
  %781 = vmatprep.subr.mxu0 %v31
  %782 = vmatpush1.msra.mxu0 %v30
  %783 = vmatprep.subr.mxu0 %v35
  %784 = vmatpush1.msra.mxu0 %v34
  %785 = vmatprep.subr.mxu0 %v39
  %786 = vmatpush1.msra.mxu0 %v38
  %787 = vmatprep.subr.mxu0 %v43
  %788 = vmatpush1.msra.mxu0 %v42
  %789 = vmatprep.subr.mxu0 %v47
  %790 = vmatpush1.msra.mxu0 %v46
  %791 = vmatprep.subr.mxu0 %v51
  %792 = vmatpush1.msra.mxu0 %v50
  %793 = vmatprep.subr.mxu0 %v55
  %794 = vmatpush1.msra.mxu0 %v54
  %795 = vmatprep.subr.mxu0 %v59
  %796 = vmatpush1.msra.mxu0 %v58
  %797 = vmatprep.subr.mxu0 %v63
  %798 = vmatpush1.msra.mxu0 %v62
  %799 = vmatprep.subr.mxu0 %v67
  %800 = vmatpush1.msra.mxu0 %v66
  %801 = vmatprep.subr.mxu0 %v71
  %802 = vmatpush1.msra.mxu0 %v70
  %803 = vmatprep.subr.mxu0 %v75
  %804 = vmatpush1.msra.mxu0 %v74
  %805 = vmatprep.subr.mxu0 %v79
  %806 = vmatpush1.msra.mxu0 %v78
  %807 = vmatprep.subr.mxu0 %v83
  %808 = vmatpush1.msra.mxu0 %v82
  %809 = vmatprep.subr.mxu0 0.0
  %810 = vmatpush1.msra.mxu0 0.0
  %811 = vmatprep.subr.mxu0 0.0
  %812 = vmatpush1.msra.mxu0 0.0
  %813 = vmatprep.subr.mxu0 0.0
  %814 = vmatpush1.msra.mxu0 0.0
  %815 = vmatprep.subr.mxu0 0.0
  %816 = vmatpush1.msra.mxu0 0.0
  %817 = vmatprep.subr.mxu0 0.0
  %818 = vmatpush1.msra.mxu0 0.0
  %819 = vmatprep.subr.mxu0 0.0
  %820 = vmatpush1.msra.mxu0 0.0
  %821 = vmatprep.subr.mxu0 0.0
  %822 = vmatpush1.msra.mxu0 0.0
  %823 = vmatprep.subr.mxu0 0.0
  %824 = vmatpush1.msra.mxu0 0.0
  %825 = vmatprep.subr.mxu0 0.0
  %826 = vmatpush1.msra.mxu0 0.0
  %827 = vmatprep.subr.mxu0 0.0
  %828 = vmatpush1.msra.mxu0 0.0
  %829 = vmatprep.subr.mxu0 0.0
  %830 = vmatpush1.msra.mxu0 0.0
  %831 = vmatprep.subr.mxu0 0.0
  %832 = vmatpush1.msra.mxu0 0.0
  %833 = vmatprep.subr.mxu0 0.0
  %834 = vmatpush1.msra.mxu0 0.0
  %835 = vmatprep.subr.mxu0 0.0
  %836 = vmatpush1.msra.mxu0 0.0
  %837 = vmatprep.subr.mxu0 0.0
  %838 = vmatpush1.msra.mxu0 0.0
  %839 = vmatprep.subr.mxu0 0.0
  %840 = vmatpush1.msra.mxu0 0.0
  %841 = vmatprep.mubr.f32.mxu0 0.0
  %842 = vmatmul.mubr.f32.gmra.mrb[0].mxu0 %v705
  %v843 = vpop.f32.mrb[0].mxu0
  %v844 = vadd.f32 0.0, %v843
  %v845 = vpop.f32.mrb[0].mxu0
  %v846 = vadd.f32 0.0, %v845
  %847 = vdwg.mxu0
  %v852 = vcombine.low %v773, %v775
  %v853 = vcombine.low %v844, %v846
  %v855 = vunpack.c.l.s4 1983009808
  %v856 = vunpack.c.0.s8 %v855
  %v857 = vlaneseq
  %v858 = vshrl.u32 %v857, 7
  %v859 = vsub.s32 %v856, %v858
  %v860 = vrot.slane %v852, %v859
  %v862 = vunpack.c.l.s4 1983009808
  %v863 = vunpack.c.0.s8 %v862
  %v864 = vlaneseq
  %v865 = vshrl.u32 %v864, 7
  %v866 = vsub.s32 %v863, %v865
  %v867 = vrot.slane %v853, %v866
  %v868 = vcombine.low %v860, %v867
  %v870 = vadd.f32 %v704, %v868
  %v871 = vxor.u32 %v870, 2147483648
  %v872 = vmul.f32 %v871, 1.442695
  %v873 = vpow.pop %v872
  %v874 = vadd.f32 %v873, 1.0
  %v875 = vrcp.pop %v874
  %v876 = vmul.f32 1.0, %v875
  %v878 = vrot.slane %v870, 6
  %v880 = vtanh.pop %v878
  %v881 = vld [vmem:[#allocation3] sm:$0x3]
  %v883 = vrot.slane %v876, 2
  %v885 = vmul.f32 %v883, %v881
  %v886 = vmul.f32 %v876, %v880
  %v887 = vadd.f32 %v885, %v886
  %v888 = vtanh.pop %v887
  %v889 = vrot.slane %v876, 4
  %v891 = vmul.f32 %v889, %v888
  %s892 = ssub.s32 12, %s88
  %v893 = vstv %s701
  %v894 = vstv %s892
  %v895 = vsel %vm87, %v893, %v894
  %vm896 = vcmp.lt.s32.totalorder %v895, %v284
  %v897 = vsel %vm896, %v891, %v705
  %898 = vst [vmem:[#allocation2] sm:$0x3] %v897
  %v899 = vld [vmem:[#allocation3] sm:$0x3]
  %v900 = vsel %vm896, %v887, %v899
  %901 = vst [vmem:[#allocation3] sm:$0x3] %v900
  %v902 = vsel %vm896, %v891, 0.0
  %s903 = scalar_lea.vmem %s3, 6
  %904 = vst [vmem:[%s903] sm:$0x3] %v902
  %s905 = sadd.s32 %s88, 4
  %s906 = scalar_lea.vmem %s0, 16
  %v907 = vld [vmem:[%s906] sm:$0xf]
  %v908 = vunpack.c.l.bf16 %v907
  %v909 = vld [vmem:[#allocation2] sm:$0x3]
  %910 = vmatprep.subr.mxu0 %v21
  %911 = vmatpush1.msra.mxu0 %v20
  %912 = vmatprep.subr.mxu0 %v25
  %913 = vmatpush1.msra.mxu0 %v24
  %914 = vmatprep.subr.mxu0 %v29
  %915 = vmatpush1.msra.mxu0 %v28
  %916 = vmatprep.subr.mxu0 %v33
  %917 = vmatpush1.msra.mxu0 %v32
  %918 = vmatprep.subr.mxu0 %v37
  %919 = vmatpush1.msra.mxu0 %v36
  %920 = vmatprep.subr.mxu0 %v41
  %921 = vmatpush1.msra.mxu0 %v40
  %922 = vmatprep.subr.mxu0 %v45
  %923 = vmatpush1.msra.mxu0 %v44
  %924 = vmatprep.subr.mxu0 %v49
  %925 = vmatpush1.msra.mxu0 %v48
  %926 = vmatprep.subr.mxu0 %v53
  %927 = vmatpush1.msra.mxu0 %v52
  %928 = vmatprep.subr.mxu0 %v57
  %929 = vmatpush1.msra.mxu0 %v56
  %930 = vmatprep.subr.mxu0 %v61
  %931 = vmatpush1.msra.mxu0 %v60
  %932 = vmatprep.subr.mxu0 %v65
  %933 = vmatpush1.msra.mxu0 %v64
  %934 = vmatprep.subr.mxu0 %v69
  %935 = vmatpush1.msra.mxu0 %v68
  %936 = vmatprep.subr.mxu0 %v73
  %937 = vmatpush1.msra.mxu0 %v72
  %938 = vmatprep.subr.mxu0 %v77
  %939 = vmatpush1.msra.mxu0 %v76
  %940 = vmatprep.subr.mxu0 %v81
  %941 = vmatpush1.msra.mxu0 %v80
  %942 = vmatprep.subr.mxu0 0.0
  %943 = vmatpush1.msra.mxu0 0.0
  %944 = vmatprep.subr.mxu0 0.0
  %945 = vmatpush1.msra.mxu0 0.0
  %946 = vmatprep.subr.mxu0 0.0
  %947 = vmatpush1.msra.mxu0 0.0
  %948 = vmatprep.subr.mxu0 0.0
  %949 = vmatpush1.msra.mxu0 0.0
  %950 = vmatprep.subr.mxu0 0.0
  %951 = vmatpush1.msra.mxu0 0.0
  %952 = vmatprep.subr.mxu0 0.0
  %953 = vmatpush1.msra.mxu0 0.0
  %954 = vmatprep.subr.mxu0 0.0
  %955 = vmatpush1.msra.mxu0 0.0
  %956 = vmatprep.subr.mxu0 0.0
  %957 = vmatpush1.msra.mxu0 0.0
  %958 = vmatprep.subr.mxu0 0.0
  %959 = vmatpush1.msra.mxu0 0.0
  %960 = vmatprep.subr.mxu0 0.0
  %961 = vmatpush1.msra.mxu0 0.0
  %962 = vmatprep.subr.mxu0 0.0
  %963 = vmatpush1.msra.mxu0 0.0
  %964 = vmatprep.subr.mxu0 0.0
  %965 = vmatpush1.msra.mxu0 0.0
  %966 = vmatprep.subr.mxu0 0.0
  %967 = vmatpush1.msra.mxu0 0.0
  %968 = vmatprep.subr.mxu0 0.0
  %969 = vmatpush1.msra.mxu0 0.0
  %970 = vmatprep.subr.mxu0 0.0
  %971 = vmatpush1.msra.mxu0 0.0
  %972 = vmatprep.subr.mxu0 0.0
  %973 = vmatpush1.msra.mxu0 0.0
  %974 = vmatprep.mubr.f32.mxu0 0.0
  %975 = vmatmul.mubr.f32.gmra.mrb[0].mxu0 %v909
  %v976 = vpop.f32.mrb[0].mxu0
  %v977 = vadd.f32 0.0, %v976
  %v978 = vpop.f32.mrb[0].mxu0
  %v979 = vadd.f32 0.0, %v978
  %980 = vdwg.mxu0
  %981 = vmatprep.subr.mxu0 %v23
  %982 = vmatpush1.msra.mxu0 %v22
  %983 = vmatprep.subr.mxu0 %v27
  %984 = vmatpush1.msra.mxu0 %v26
  %985 = vmatprep.subr.mxu0 %v31
  %986 = vmatpush1.msra.mxu0 %v30
  %987 = vmatprep.subr.mxu0 %v35
  %988 = vmatpush1.msra.mxu0 %v34
  %989 = vmatprep.subr.mxu0 %v39
  %990 = vmatpush1.msra.mxu0 %v38
  %991 = vmatprep.subr.mxu0 %v43
  %992 = vmatpush1.msra.mxu0 %v42
  %993 = vmatprep.subr.mxu0 %v47
  %994 = vmatpush1.msra.mxu0 %v46
  %995 = vmatprep.subr.mxu0 %v51
  %996 = vmatpush1.msra.mxu0 %v50
  %997 = vmatprep.subr.mxu0 %v55
  %998 = vmatpush1.msra.mxu0 %v54
  %999 = vmatprep.subr.mxu0 %v59
  %1000 = vmatpush1.msra.mxu0 %v58
  %1001 = vmatprep.subr.mxu0 %v63
  %1002 = vmatpush1.msra.mxu0 %v62
  %1003 = vmatprep.subr.mxu0 %v67
  %1004 = vmatpush1.msra.mxu0 %v66
  %1005 = vmatprep.subr.mxu0 %v71
  %1006 = vmatpush1.msra.mxu0 %v70
  %1007 = vmatprep.subr.mxu0 %v75
  %1008 = vmatpush1.msra.mxu0 %v74
  %1009 = vmatprep.subr.mxu0 %v79
  %1010 = vmatpush1.msra.mxu0 %v78
  %1011 = vmatprep.subr.mxu0 %v83
  %1012 = vmatpush1.msra.mxu0 %v82
  %1013 = vmatprep.subr.mxu0 0.0
  %1014 = vmatpush1.msra.mxu0 0.0
  %1015 = vmatprep.subr.mxu0 0.0
  %1016 = vmatpush1.msra.mxu0 0.0
  %1017 = vmatprep.subr.mxu0 0.0
  %1018 = vmatpush1.msra.mxu0 0.0
  %1019 = vmatprep.subr.mxu0 0.0
  %1020 = vmatpush1.msra.mxu0 0.0
  %1021 = vmatprep.subr.mxu0 0.0
  %1022 = vmatpush1.msra.mxu0 0.0
  %1023 = vmatprep.subr.mxu0 0.0
  %1024 = vmatpush1.msra.mxu0 0.0
  %1025 = vmatprep.subr.mxu0 0.0
  %1026 = vmatpush1.msra.mxu0 0.0
  %1027 = vmatprep.subr.mxu0 0.0
  %1028 = vmatpush1.msra.mxu0 0.0
  %1029 = vmatprep.subr.mxu0 0.0
  %1030 = vmatpush1.msra.mxu0 0.0
  %1031 = vmatprep.subr.mxu0 0.0
  %1032 = vmatpush1.msra.mxu0 0.0
  %1033 = vmatprep.subr.mxu0 0.0
  %1034 = vmatpush1.msra.mxu0 0.0
  %1035 = vmatprep.subr.mxu0 0.0
  %1036 = vmatpush1.msra.mxu0 0.0
  %1037 = vmatprep.subr.mxu0 0.0
  %1038 = vmatpush1.msra.mxu0 0.0
  %1039 = vmatprep.subr.mxu0 0.0
  %1040 = vmatpush1.msra.mxu0 0.0
  %1041 = vmatprep.subr.mxu0 0.0
  %1042 = vmatpush1.msra.mxu0 0.0
  %1043 = vmatprep.subr.mxu0 0.0
  %1044 = vmatpush1.msra.mxu0 0.0
  %1045 = vmatprep.mubr.f32.mxu0 0.0
  %1046 = vmatmul.mubr.f32.gmra.mrb[0].mxu0 %v909
  %v1047 = vpop.f32.mrb[0].mxu0
  %v1048 = vadd.f32 0.0, %v1047
  %v1049 = vpop.f32.mrb[0].mxu0
  %v1050 = vadd.f32 0.0, %v1049
  %1051 = vdwg.mxu0
  %v1056 = vcombine.low %v977, %v979
  %v1057 = vcombine.low %v1048, %v1050
  %v1059 = vunpack.c.l.s4 1983009808
  %v1060 = vunpack.c.0.s8 %v1059
  %v1061 = vlaneseq
  %v1062 = vshrl.u32 %v1061, 7
  %v1063 = vsub.s32 %v1060, %v1062
  %v1064 = vrot.slane %v1056, %v1063
  %v1066 = vunpack.c.l.s4 1983009808
  %v1067 = vunpack.c.0.s8 %v1066
  %v1068 = vlaneseq
  %v1069 = vshrl.u32 %v1068, 7
  %v1070 = vsub.s32 %v1067, %v1069
  %v1071 = vrot.slane %v1057, %v1070
  %v1072 = vcombine.low %v1064, %v1071
  %v1074 = vadd.f32 %v908, %v1072
  %v1075 = vxor.u32 %v1074, 2147483648
  %v1076 = vmul.f32 %v1075, 1.442695
  %v1077 = vpow.pop %v1076
  %v1078 = vadd.f32 %v1077, 1.0
  %v1079 = vrcp.pop %v1078
  %v1080 = vmul.f32 1.0, %v1079
  %v1082 = vrot.slane %v1074, 6
  %v1084 = vtanh.pop %v1082
  %v1085 = vld [vmem:[#allocation3] sm:$0x3]
  %v1087 = vrot.slane %v1080, 2
  %v1089 = vmul.f32 %v1087, %v1085
  %v1090 = vmul.f32 %v1080, %v1084
  %v1091 = vadd.f32 %v1089, %v1090
  %v1092 = vtanh.pop %v1091
  %v1093 = vrot.slane %v1080, 4
  %v1095 = vmul.f32 %v1093, %v1092
  %s1096 = ssub.s32 11, %s88
  %v1097 = vstv %s905
  %v1098 = vstv %s1096
  %v1099 = vsel %vm87, %v1097, %v1098
  %vm1100 = vcmp.lt.s32.totalorder %v1099, %v284
  %v1101 = vsel %vm1100, %v1095, %v909
  %1102 = vst [vmem:[#allocation2] sm:$0x3] %v1101
  %v1103 = vld [vmem:[#allocation3] sm:$0x3]
  %v1104 = vsel %vm1100, %v1091, %v1103
  %1105 = vst [vmem:[#allocation3] sm:$0x3] %v1104
  %v1106 = vsel %vm1100, %v1095, 0.0
  %s1107 = scalar_lea.vmem %s3, 8
  %1108 = vst [vmem:[%s1107] sm:$0x3] %v1106
  %s1109 = sadd.s32 %s88, 5
  %s1110 = scalar_lea.vmem %s0, 20
  %v1111 = vld [vmem:[%s1110] sm:$0xf]
  %v1112 = vunpack.c.l.bf16 %v1111
  %v1113 = vld [vmem:[#allocation2] sm:$0x3]
  %1114 = vmatprep.subr.mxu0 %v21
  %1115 = vmatpush1.msra.mxu0 %v20
  %1116 = vmatprep.subr.mxu0 %v25
  %1117 = vmatpush1.msra.mxu0 %v24
  %1118 = vmatprep.subr.mxu0 %v29
  %1119 = vmatpush1.msra.mxu0 %v28
  %1120 = vmatprep.subr.mxu0 %v33
  %1121 = vmatpush1.msra.mxu0 %v32
  %1122 = vmatprep.subr.mxu0 %v37
  %1123 = vmatpush1.msra.mxu0 %v36
  %1124 = vmatprep.subr.mxu0 %v41
  %1125 = vmatpush1.msra.mxu0 %v40
  %1126 = vmatprep.subr.mxu0 %v45
  %1127 = vmatpush1.msra.mxu0 %v44
  %1128 = vmatprep.subr.mxu0 %v49
  %1129 = vmatpush1.msra.mxu0 %v48
  %1130 = vmatprep.subr.mxu0 %v53
  %1131 = vmatpush1.msra.mxu0 %v52
  %1132 = vmatprep.subr.mxu0 %v57
  %1133 = vmatpush1.msra.mxu0 %v56
  %1134 = vmatprep.subr.mxu0 %v61
  %1135 = vmatpush1.msra.mxu0 %v60
  %1136 = vmatprep.subr.mxu0 %v65
  %1137 = vmatpush1.msra.mxu0 %v64
  %1138 = vmatprep.subr.mxu0 %v69
  %1139 = vmatpush1.msra.mxu0 %v68
  %1140 = vmatprep.subr.mxu0 %v73
  %1141 = vmatpush1.msra.mxu0 %v72
  %1142 = vmatprep.subr.mxu0 %v77
  %1143 = vmatpush1.msra.mxu0 %v76
  %1144 = vmatprep.subr.mxu0 %v81
  %1145 = vmatpush1.msra.mxu0 %v80
  %1146 = vmatprep.subr.mxu0 0.0
  %1147 = vmatpush1.msra.mxu0 0.0
  %1148 = vmatprep.subr.mxu0 0.0
  %1149 = vmatpush1.msra.mxu0 0.0
  %1150 = vmatprep.subr.mxu0 0.0
  %1151 = vmatpush1.msra.mxu0 0.0
  %1152 = vmatprep.subr.mxu0 0.0
  %1153 = vmatpush1.msra.mxu0 0.0
  %1154 = vmatprep.subr.mxu0 0.0
  %1155 = vmatpush1.msra.mxu0 0.0
  %1156 = vmatprep.subr.mxu0 0.0
  %1157 = vmatpush1.msra.mxu0 0.0
  %1158 = vmatprep.subr.mxu0 0.0
  %1159 = vmatpush1.msra.mxu0 0.0
  %1160 = vmatprep.subr.mxu0 0.0
  %1161 = vmatpush1.msra.mxu0 0.0
  %1162 = vmatprep.subr.mxu0 0.0
  %1163 = vmatpush1.msra.mxu0 0.0
  %1164 = vmatprep.subr.mxu0 0.0
  %1165 = vmatpush1.msra.mxu0 0.0
  %1166 = vmatprep.subr.mxu0 0.0
  %1167 = vmatpush1.msra.mxu0 0.0
  %1168 = vmatprep.subr.mxu0 0.0
  %1169 = vmatpush1.msra.mxu0 0.0
  %1170 = vmatprep.subr.mxu0 0.0
  %1171 = vmatpush1.msra.mxu0 0.0
  %1172 = vmatprep.subr.mxu0 0.0
  %1173 = vmatpush1.msra.mxu0 0.0
  %1174 = vmatprep.subr.mxu0 0.0
  %1175 = vmatpush1.msra.mxu0 0.0
  %1176 = vmatprep.subr.mxu0 0.0
  %1177 = vmatpush1.msra.mxu0 0.0
  %1178 = vmatprep.mubr.f32.mxu0 0.0
  %1179 = vmatmul.mubr.f32.gmra.mrb[0].mxu0 %v1113
  %v1180 = vpop.f32.mrb[0].mxu0
  %v1181 = vadd.f32 0.0, %v1180
  %v1182 = vpop.f32.mrb[0].mxu0
  %v1183 = vadd.f32 0.0, %v1182
  %1184 = vdwg.mxu0
  %1185 = vmatprep.subr.mxu0 %v23
  %1186 = vmatpush1.msra.mxu0 %v22
  %1187 = vmatprep.subr.mxu0 %v27
  %1188 = vmatpush1.msra.mxu0 %v26
  %1189 = vmatprep.subr.mxu0 %v31
  %1190 = vmatpush1.msra.mxu0 %v30
  %1191 = vmatprep.subr.mxu0 %v35
  %1192 = vmatpush1.msra.mxu0 %v34
  %1193 = vmatprep.subr.mxu0 %v39
  %1194 = vmatpush1.msra.mxu0 %v38
  %1195 = vmatprep.subr.mxu0 %v43
  %1196 = vmatpush1.msra.mxu0 %v42
  %1197 = vmatprep.subr.mxu0 %v47
  %1198 = vmatpush1.msra.mxu0 %v46
  %1199 = vmatprep.subr.mxu0 %v51
  %1200 = vmatpush1.msra.mxu0 %v50
  %1201 = vmatprep.subr.mxu0 %v55
  %1202 = vmatpush1.msra.mxu0 %v54
  %1203 = vmatprep.subr.mxu0 %v59
  %1204 = vmatpush1.msra.mxu0 %v58
  %1205 = vmatprep.subr.mxu0 %v63
  %1206 = vmatpush1.msra.mxu0 %v62
  %1207 = vmatprep.subr.mxu0 %v67
  %1208 = vmatpush1.msra.mxu0 %v66
  %1209 = vmatprep.subr.mxu0 %v71
  %1210 = vmatpush1.msra.mxu0 %v70
  %1211 = vmatprep.subr.mxu0 %v75
  %1212 = vmatpush1.msra.mxu0 %v74
  %1213 = vmatprep.subr.mxu0 %v79
  %1214 = vmatpush1.msra.mxu0 %v78
  %1215 = vmatprep.subr.mxu0 %v83
  %1216 = vmatpush1.msra.mxu0 %v82
  %1217 = vmatprep.subr.mxu0 0.0
  %1218 = vmatpush1.msra.mxu0 0.0
  %1219 = vmatprep.subr.mxu0 0.0
  %1220 = vmatpush1.msra.mxu0 0.0
  %1221 = vmatprep.subr.mxu0 0.0
  %1222 = vmatpush1.msra.mxu0 0.0
  %1223 = vmatprep.subr.mxu0 0.0
  %1224 = vmatpush1.msra.mxu0 0.0
  %1225 = vmatprep.subr.mxu0 0.0
  %1226 = vmatpush1.msra.mxu0 0.0
  %1227 = vmatprep.subr.mxu0 0.0
  %1228 = vmatpush1.msra.mxu0 0.0
  %1229 = vmatprep.subr.mxu0 0.0
  %1230 = vmatpush1.msra.mxu0 0.0
  %1231 = vmatprep.subr.mxu0 0.0
  %1232 = vmatpush1.msra.mxu0 0.0
  %1233 = vmatprep.subr.mxu0 0.0
  %1234 = vmatpush1.msra.mxu0 0.0
  %1235 = vmatprep.subr.mxu0 0.0
  %1236 = vmatpush1.msra.mxu0 0.0
  %1237 = vmatprep.subr.mxu0 0.0
  %1238 = vmatpush1.msra.mxu0 0.0
  %1239 = vmatprep.subr.mxu0 0.0
  %1240 = vmatpush1.msra.mxu0 0.0
  %1241 = vmatprep.subr.mxu0 0.0
  %1242 = vmatpush1.msra.mxu0 0.0
  %1243 = vmatprep.subr.mxu0 0.0
  %1244 = vmatpush1.msra.mxu0 0.0
  %1245 = vmatprep.subr.mxu0 0.0
  %1246 = vmatpush1.msra.mxu0 0.0
  %1247 = vmatprep.subr.mxu0 0.0
  %1248 = vmatpush1.msra.mxu0 0.0
  %1249 = vmatprep.mubr.f32.mxu0 0.0
  %1250 = vmatmul.mubr.f32.gmra.mrb[0].mxu0 %v1113
  %v1251 = vpop.f32.mrb[0].mxu0
  %v1252 = vadd.f32 0.0, %v1251
  %v1253 = vpop.f32.mrb[0].mxu0
  %v1254 = vadd.f32 0.0, %v1253
  %1255 = vdwg.mxu0
  %v1260 = vcombine.low %v1181, %v1183
  %v1261 = vcombine.low %v1252, %v1254
  %v1263 = vunpack.c.l.s4 1983009808
  %v1264 = vunpack.c.0.s8 %v1263
  %v1265 = vlaneseq
  %v1266 = vshrl.u32 %v1265, 7
  %v1267 = vsub.s32 %v1264, %v1266
  %v1268 = vrot.slane %v1260, %v1267
  %v1270 = vunpack.c.l.s4 1983009808
  %v1271 = vunpack.c.0.s8 %v1270
  %v1272 = vlaneseq
  %v1273 = vshrl.u32 %v1272, 7
  %v1274 = vsub.s32 %v1271, %v1273
  %v1275 = vrot.slane %v1261, %v1274
  %v1276 = vcombine.low %v1268, %v1275
  %v1278 = vadd.f32 %v1112, %v1276
  %v1279 = vxor.u32 %v1278, 2147483648
  %v1280 = vmul.f32 %v1279, 1.442695
  %v1281 = vpow.pop %v1280
  %v1282 = vadd.f32 %v1281, 1.0
  %v1283 = vrcp.pop %v1282
  %v1284 = vmul.f32 1.0, %v1283
  %v1286 = vrot.slane %v1278, 6
  %v1288 = vtanh.pop %v1286
  %v1289 = vld [vmem:[#allocation3] sm:$0x3]
  %v1291 = vrot.slane %v1284, 2
  %v1293 = vmul.f32 %v1291, %v1289
  %v1294 = vmul.f32 %v1284, %v1288
  %v1295 = vadd.f32 %v1293, %v1294
  %v1296 = vtanh.pop %v1295
  %v1297 = vrot.slane %v1284, 4
  %v1299 = vmul.f32 %v1297, %v1296
  %s1300 = ssub.s32 10, %s88
  %v1301 = vstv %s1109
  %v1302 = vstv %s1300
  %v1303 = vsel %vm87, %v1301, %v1302
  %vm1304 = vcmp.lt.s32.totalorder %v1303, %v284
  %v1305 = vsel %vm1304, %v1299, %v1113
  %1306 = vst [vmem:[#allocation2] sm:$0x3] %v1305
  %v1307 = vld [vmem:[#allocation3] sm:$0x3]
  %v1308 = vsel %vm1304, %v1295, %v1307
  %1309 = vst [vmem:[#allocation3] sm:$0x3] %v1308
  %v1310 = vsel %vm1304, %v1299, 0.0
  %s1311 = scalar_lea.vmem %s3, 10
  %1312 = vst [vmem:[%s1311] sm:$0x3] %v1310
  %s1313 = sadd.s32 %s88, 6
  %s1314 = scalar_lea.vmem %s0, 24
  %v1315 = vld [vmem:[%s1314] sm:$0xf]
  %v1316 = vunpack.c.l.bf16 %v1315
  %v1317 = vld [vmem:[#allocation2] sm:$0x3]
  %1318 = vmatprep.subr.mxu0 %v21
  %1319 = vmatpush1.msra.mxu0 %v20
  %1320 = vmatprep.subr.mxu0 %v25
  %1321 = vmatpush1.msra.mxu0 %v24
  %1322 = vmatprep.subr.mxu0 %v29
  %1323 = vmatpush1.msra.mxu0 %v28
  %1324 = vmatprep.subr.mxu0 %v33
  %1325 = vmatpush1.msra.mxu0 %v32
  %1326 = vmatprep.subr.mxu0 %v37
  %1327 = vmatpush1.msra.mxu0 %v36
  %1328 = vmatprep.subr.mxu0 %v41
  %1329 = vmatpush1.msra.mxu0 %v40
  %1330 = vmatprep.subr.mxu0 %v45
  %1331 = vmatpush1.msra.mxu0 %v44
  %1332 = vmatprep.subr.mxu0 %v49
  %1333 = vmatpush1.msra.mxu0 %v48
  %1334 = vmatprep.subr.mxu0 %v53
  %1335 = vmatpush1.msra.mxu0 %v52
  %1336 = vmatprep.subr.mxu0 %v57
  %1337 = vmatpush1.msra.mxu0 %v56
  %1338 = vmatprep.subr.mxu0 %v61
  %1339 = vmatpush1.msra.mxu0 %v60
  %1340 = vmatprep.subr.mxu0 %v65
  %1341 = vmatpush1.msra.mxu0 %v64
  %1342 = vmatprep.subr.mxu0 %v69
  %1343 = vmatpush1.msra.mxu0 %v68
  %1344 = vmatprep.subr.mxu0 %v73
  %1345 = vmatpush1.msra.mxu0 %v72
  %1346 = vmatprep.subr.mxu0 %v77
  %1347 = vmatpush1.msra.mxu0 %v76
  %1348 = vmatprep.subr.mxu0 %v81
  %1349 = vmatpush1.msra.mxu0 %v80
  %1350 = vmatprep.subr.mxu0 0.0
  %1351 = vmatpush1.msra.mxu0 0.0
  %1352 = vmatprep.subr.mxu0 0.0
  %1353 = vmatpush1.msra.mxu0 0.0
  %1354 = vmatprep.subr.mxu0 0.0
  %1355 = vmatpush1.msra.mxu0 0.0
  %1356 = vmatprep.subr.mxu0 0.0
  %1357 = vmatpush1.msra.mxu0 0.0
  %1358 = vmatprep.subr.mxu0 0.0
  %1359 = vmatpush1.msra.mxu0 0.0
  %1360 = vmatprep.subr.mxu0 0.0
  %1361 = vmatpush1.msra.mxu0 0.0
  %1362 = vmatprep.subr.mxu0 0.0
  %1363 = vmatpush1.msra.mxu0 0.0
  %1364 = vmatprep.subr.mxu0 0.0
  %1365 = vmatpush1.msra.mxu0 0.0
  %1366 = vmatprep.subr.mxu0 0.0
  %1367 = vmatpush1.msra.mxu0 0.0
  %1368 = vmatprep.subr.mxu0 0.0
  %1369 = vmatpush1.msra.mxu0 0.0
  %1370 = vmatprep.subr.mxu0 0.0
  %1371 = vmatpush1.msra.mxu0 0.0
  %1372 = vmatprep.subr.mxu0 0.0
  %1373 = vmatpush1.msra.mxu0 0.0
  %1374 = vmatprep.subr.mxu0 0.0
  %1375 = vmatpush1.msra.mxu0 0.0
  %1376 = vmatprep.subr.mxu0 0.0
  %1377 = vmatpush1.msra.mxu0 0.0
  %1378 = vmatprep.subr.mxu0 0.0
  %1379 = vmatpush1.msra.mxu0 0.0
  %1380 = vmatprep.subr.mxu0 0.0
  %1381 = vmatpush1.msra.mxu0 0.0
  %1382 = vmatprep.mubr.f32.mxu0 0.0
  %1383 = vmatmul.mubr.f32.gmra.mrb[0].mxu0 %v1317
  %v1384 = vpop.f32.mrb[0].mxu0
  %v1385 = vadd.f32 0.0, %v1384
  %v1386 = vpop.f32.mrb[0].mxu0
  %v1387 = vadd.f32 0.0, %v1386
  %1388 = vdwg.mxu0
  %1389 = vmatprep.subr.mxu0 %v23
  %1390 = vmatpush1.msra.mxu0 %v22
  %1391 = vmatprep.subr.mxu0 %v27
  %1392 = vmatpush1.msra.mxu0 %v26
  %1393 = vmatprep.subr.mxu0 %v31
  %1394 = vmatpush1.msra.mxu0 %v30
  %1395 = vmatprep.subr.mxu0 %v35
  %1396 = vmatpush1.msra.mxu0 %v34
  %1397 = vmatprep.subr.mxu0 %v39
  %1398 = vmatpush1.msra.mxu0 %v38
  %1399 = vmatprep.subr.mxu0 %v43
  %1400 = vmatpush1.msra.mxu0 %v42
  %1401 = vmatprep.subr.mxu0 %v47
  %1402 = vmatpush1.msra.mxu0 %v46
  %1403 = vmatprep.subr.mxu0 %v51
  %1404 = vmatpush1.msra.mxu0 %v50
  %1405 = vmatprep.subr.mxu0 %v55
  %1406 = vmatpush1.msra.mxu0 %v54
  %1407 = vmatprep.subr.mxu0 %v59
  %1408 = vmatpush1.msra.mxu0 %v58
  %1409 = vmatprep.subr.mxu0 %v63
  %1410 = vmatpush1.msra.mxu0 %v62
  %1411 = vmatprep.subr.mxu0 %v67
  %1412 = vmatpush1.msra.mxu0 %v66
  %1413 = vmatprep.subr.mxu0 %v71
  %1414 = vmatpush1.msra.mxu0 %v70
  %1415 = vmatprep.subr.mxu0 %v75
  %1416 = vmatpush1.msra.mxu0 %v74
  %1417 = vmatprep.subr.mxu0 %v79
  %1418 = vmatpush1.msra.mxu0 %v78
  %1419 = vmatprep.subr.mxu0 %v83
  %1420 = vmatpush1.msra.mxu0 %v82
  %1421 = vmatprep.subr.mxu0 0.0
  %1422 = vmatpush1.msra.mxu0 0.0
  %1423 = vmatprep.subr.mxu0 0.0
  %1424 = vmatpush1.msra.mxu0 0.0
  %1425 = vmatprep.subr.mxu0 0.0
  %1426 = vmatpush1.msra.mxu0 0.0
  %1427 = vmatprep.subr.mxu0 0.0
  %1428 = vmatpush1.msra.mxu0 0.0
  %1429 = vmatprep.subr.mxu0 0.0
  %1430 = vmatpush1.msra.mxu0 0.0
  %1431 = vmatprep.subr.mxu0 0.0
  %1432 = vmatpush1.msra.mxu0 0.0
  %1433 = vmatprep.subr.mxu0 0.0
  %1434 = vmatpush1.msra.mxu0 0.0
  %1435 = vmatprep.subr.mxu0 0.0
  %1436 = vmatpush1.msra.mxu0 0.0
  %1437 = vmatprep.subr.mxu0 0.0
  %1438 = vmatpush1.msra.mxu0 0.0
  %1439 = vmatprep.subr.mxu0 0.0
  %1440 = vmatpush1.msra.mxu0 0.0
  %1441 = vmatprep.subr.mxu0 0.0
  %1442 = vmatpush1.msra.mxu0 0.0
  %1443 = vmatprep.subr.mxu0 0.0
  %1444 = vmatpush1.msra.mxu0 0.0
  %1445 = vmatprep.subr.mxu0 0.0
  %1446 = vmatpush1.msra.mxu0 0.0
  %1447 = vmatprep.subr.mxu0 0.0
  %1448 = vmatpush1.msra.mxu0 0.0
  %1449 = vmatprep.subr.mxu0 0.0
  %1450 = vmatpush1.msra.mxu0 0.0
  %1451 = vmatprep.subr.mxu0 0.0
  %1452 = vmatpush1.msra.mxu0 0.0
  %1453 = vmatprep.mubr.f32.mxu0 0.0
  %1454 = vmatmul.mubr.f32.gmra.mrb[0].mxu0 %v1317
  %v1455 = vpop.f32.mrb[0].mxu0
  %v1456 = vadd.f32 0.0, %v1455
  %v1457 = vpop.f32.mrb[0].mxu0
  %v1458 = vadd.f32 0.0, %v1457
  %1459 = vdwg.mxu0
  %v1464 = vcombine.low %v1385, %v1387
  %v1465 = vcombine.low %v1456, %v1458
  %v1467 = vunpack.c.l.s4 1983009808
  %v1468 = vunpack.c.0.s8 %v1467
  %v1469 = vlaneseq
  %v1470 = vshrl.u32 %v1469, 7
  %v1471 = vsub.s32 %v1468, %v1470
  %v1472 = vrot.slane %v1464, %v1471
  %v1474 = vunpack.c.l.s4 1983009808
  %v1475 = vunpack.c.0.s8 %v1474
  %v1476 = vlaneseq
  %v1477 = vshrl.u32 %v1476, 7
  %v1478 = vsub.s32 %v1475, %v1477
  %v1479 = vrot.slane %v1465, %v1478
  %v1480 = vcombine.low %v1472, %v1479
  %v1482 = vadd.f32 %v1316, %v1480
  %v1483 = vxor.u32 %v1482, 2147483648
  %v1484 = vmul.f32 %v1483, 1.442695
  %v1485 = vpow.pop %v1484
  %v1486 = vadd.f32 %v1485, 1.0
  %v1487 = vrcp.pop %v1486
  %v1488 = vmul.f32 1.0, %v1487
  %v1490 = vrot.slane %v1482, 6
  %v1492 = vtanh.pop %v1490
  %v1493 = vld [vmem:[#allocation3] sm:$0x3]
  %v1495 = vrot.slane %v1488, 2
  %v1497 = vmul.f32 %v1495, %v1493
  %v1498 = vmul.f32 %v1488, %v1492
  %v1499 = vadd.f32 %v1497, %v1498
  %v1500 = vtanh.pop %v1499
  %v1501 = vrot.slane %v1488, 4
  %v1503 = vmul.f32 %v1501, %v1500
  %s1504 = ssub.s32 9, %s88
  %v1505 = vstv %s1313
  %v1506 = vstv %s1504
  %v1507 = vsel %vm87, %v1505, %v1506
  %vm1508 = vcmp.lt.s32.totalorder %v1507, %v284
  %v1509 = vsel %vm1508, %v1503, %v1317
  %1510 = vst [vmem:[#allocation2] sm:$0x3] %v1509
  %v1511 = vld [vmem:[#allocation3] sm:$0x3]
  %v1512 = vsel %vm1508, %v1499, %v1511
  %1513 = vst [vmem:[#allocation3] sm:$0x3] %v1512
  %v1514 = vsel %vm1508, %v1503, 0.0
  %s1515 = scalar_lea.vmem %s3, 12
  %1516 = vst [vmem:[%s1515] sm:$0x3] %v1514
  %s1517 = sadd.s32 %s88, 7
  %s1518 = scalar_lea.vmem %s0, 28
  %v1519 = vld [vmem:[%s1518] sm:$0xf]
  %v1520 = vunpack.c.l.bf16 %v1519
  %v1521 = vld [vmem:[#allocation2] sm:$0x3]
  %1522 = vmatprep.subr.mxu0 %v21
  %1523 = vmatpush1.msra.mxu0 %v20
  %1524 = vmatprep.subr.mxu0 %v25
  %1525 = vmatpush1.msra.mxu0 %v24
  %1526 = vmatprep.subr.mxu0 %v29
  %1527 = vmatpush1.msra.mxu0 %v28
  %1528 = vmatprep.subr.mxu0 %v33
  %1529 = vmatpush1.msra.mxu0 %v32
  %1530 = vmatprep.subr.mxu0 %v37
  %1531 = vmatpush1.msra.mxu0 %v36
  %1532 = vmatprep.subr.mxu0 %v41
  %1533 = vmatpush1.msra.mxu0 %v40
  %1534 = vmatprep.subr.mxu0 %v45
  %1535 = vmatpush1.msra.mxu0 %v44
  %1536 = vmatprep.subr.mxu0 %v49
  %1537 = vmatpush1.msra.mxu0 %v48
  %1538 = vmatprep.subr.mxu0 %v53
  %1539 = vmatpush1.msra.mxu0 %v52
  %1540 = vmatprep.subr.mxu0 %v57
  %1541 = vmatpush1.msra.mxu0 %v56
  %1542 = vmatprep.subr.mxu0 %v61
  %1543 = vmatpush1.msra.mxu0 %v60
  %1544 = vmatprep.subr.mxu0 %v65
  %1545 = vmatpush1.msra.mxu0 %v64
  %1546 = vmatprep.subr.mxu0 %v69
  %1547 = vmatpush1.msra.mxu0 %v68
  %1548 = vmatprep.subr.mxu0 %v73
  %1549 = vmatpush1.msra.mxu0 %v72
  %1550 = vmatprep.subr.mxu0 %v77
  %1551 = vmatpush1.msra.mxu0 %v76
  %1552 = vmatprep.subr.mxu0 %v81
  %1553 = vmatpush1.msra.mxu0 %v80
  %1554 = vmatprep.subr.mxu0 0.0
  %1555 = vmatpush1.msra.mxu0 0.0
  %1556 = vmatprep.subr.mxu0 0.0
  %1557 = vmatpush1.msra.mxu0 0.0
  %1558 = vmatprep.subr.mxu0 0.0
  %1559 = vmatpush1.msra.mxu0 0.0
  %1560 = vmatprep.subr.mxu0 0.0
  %1561 = vmatpush1.msra.mxu0 0.0
  %1562 = vmatprep.subr.mxu0 0.0
  %1563 = vmatpush1.msra.mxu0 0.0
  %1564 = vmatprep.subr.mxu0 0.0
  %1565 = vmatpush1.msra.mxu0 0.0
  %1566 = vmatprep.subr.mxu0 0.0
  %1567 = vmatpush1.msra.mxu0 0.0
  %1568 = vmatprep.subr.mxu0 0.0
  %1569 = vmatpush1.msra.mxu0 0.0
  %1570 = vmatprep.subr.mxu0 0.0
  %1571 = vmatpush1.msra.mxu0 0.0
  %1572 = vmatprep.subr.mxu0 0.0
  %1573 = vmatpush1.msra.mxu0 0.0
  %1574 = vmatprep.subr.mxu0 0.0
  %1575 = vmatpush1.msra.mxu0 0.0
  %1576 = vmatprep.subr.mxu0 0.0
  %1577 = vmatpush1.msra.mxu0 0.0
  %1578 = vmatprep.subr.mxu0 0.0
  %1579 = vmatpush1.msra.mxu0 0.0
  %1580 = vmatprep.subr.mxu0 0.0
  %1581 = vmatpush1.msra.mxu0 0.0
  %1582 = vmatprep.subr.mxu0 0.0
  %1583 = vmatpush1.msra.mxu0 0.0
  %1584 = vmatprep.subr.mxu0 0.0
  %1585 = vmatpush1.msra.mxu0 0.0
  %1586 = vmatprep.mubr.f32.mxu0 0.0
  %1587 = vmatmul.mubr.f32.gmra.mrb[0].mxu0 %v1521
  %v1588 = vpop.f32.mrb[0].mxu0
  %v1589 = vadd.f32 0.0, %v1588
  %v1590 = vpop.f32.mrb[0].mxu0
  %v1591 = vadd.f32 0.0, %v1590
  %1592 = vdwg.mxu0
  %1593 = vmatprep.subr.mxu0 %v23
  %1594 = vmatpush1.msra.mxu0 %v22
  %1595 = vmatprep.subr.mxu0 %v27
  %1596 = vmatpush1.msra.mxu0 %v26
  %1597 = vmatprep.subr.mxu0 %v31
  %1598 = vmatpush1.msra.mxu0 %v30
  %1599 = vmatprep.subr.mxu0 %v35
  %1600 = vmatpush1.msra.mxu0 %v34
  %1601 = vmatprep.subr.mxu0 %v39
  %1602 = vmatpush1.msra.mxu0 %v38
  %1603 = vmatprep.subr.mxu0 %v43
  %1604 = vmatpush1.msra.mxu0 %v42
  %1605 = vmatprep.subr.mxu0 %v47
  %1606 = vmatpush1.msra.mxu0 %v46
  %1607 = vmatprep.subr.mxu0 %v51
  %1608 = vmatpush1.msra.mxu0 %v50
  %1609 = vmatprep.subr.mxu0 %v55
  %1610 = vmatpush1.msra.mxu0 %v54
  %1611 = vmatprep.subr.mxu0 %v59
  %1612 = vmatpush1.msra.mxu0 %v58
  %1613 = vmatprep.subr.mxu0 %v63
  %1614 = vmatpush1.msra.mxu0 %v62
  %1615 = vmatprep.subr.mxu0 %v67
  %1616 = vmatpush1.msra.mxu0 %v66
  %1617 = vmatprep.subr.mxu0 %v71
  %1618 = vmatpush1.msra.mxu0 %v70
  %1619 = vmatprep.subr.mxu0 %v75
  %1620 = vmatpush1.msra.mxu0 %v74
  %1621 = vmatprep.subr.mxu0 %v79
  %1622 = vmatpush1.msra.mxu0 %v78
  %1623 = vmatprep.subr.mxu0 %v83
  %1624 = vmatpush1.msra.mxu0 %v82
  %1625 = vmatprep.subr.mxu0 0.0
  %1626 = vmatpush1.msra.mxu0 0.0
  %1627 = vmatprep.subr.mxu0 0.0
  %1628 = vmatpush1.msra.mxu0 0.0
  %1629 = vmatprep.subr.mxu0 0.0
  %1630 = vmatpush1.msra.mxu0 0.0
  %1631 = vmatprep.subr.mxu0 0.0
  %1632 = vmatpush1.msra.mxu0 0.0
  %1633 = vmatprep.subr.mxu0 0.0
  %1634 = vmatpush1.msra.mxu0 0.0
  %1635 = vmatprep.subr.mxu0 0.0
  %1636 = vmatpush1.msra.mxu0 0.0
  %1637 = vmatprep.subr.mxu0 0.0
  %1638 = vmatpush1.msra.mxu0 0.0
  %1639 = vmatprep.subr.mxu0 0.0
  %1640 = vmatpush1.msra.mxu0 0.0
  %1641 = vmatprep.subr.mxu0 0.0
  %1642 = vmatpush1.msra.mxu0 0.0
  %1643 = vmatprep.subr.mxu0 0.0
  %1644 = vmatpush1.msra.mxu0 0.0
  %1645 = vmatprep.subr.mxu0 0.0
  %1646 = vmatpush1.msra.mxu0 0.0
  %1647 = vmatprep.subr.mxu0 0.0
  %1648 = vmatpush1.msra.mxu0 0.0
  %1649 = vmatprep.subr.mxu0 0.0
  %1650 = vmatpush1.msra.mxu0 0.0
  %1651 = vmatprep.subr.mxu0 0.0
  %1652 = vmatpush1.msra.mxu0 0.0
  %1653 = vmatprep.subr.mxu0 0.0
  %1654 = vmatpush1.msra.mxu0 0.0
  %1655 = vmatprep.subr.mxu0 0.0
  %1656 = vmatpush1.msra.mxu0 0.0
  %1657 = vmatprep.mubr.f32.mxu0 0.0
  %1658 = vmatmul.mubr.f32.gmra.mrb[0].mxu0 %v1521
  %v1659 = vpop.f32.mrb[0].mxu0
  %v1660 = vadd.f32 0.0, %v1659
  %v1661 = vpop.f32.mrb[0].mxu0
  %v1662 = vadd.f32 0.0, %v1661
  %1663 = vdwg.mxu0
  %v1668 = vcombine.low %v1589, %v1591
  %v1669 = vcombine.low %v1660, %v1662
  %v1671 = vunpack.c.l.s4 1983009808
  %v1672 = vunpack.c.0.s8 %v1671
  %v1673 = vlaneseq
  %v1674 = vshrl.u32 %v1673, 7
  %v1675 = vsub.s32 %v1672, %v1674
  %v1676 = vrot.slane %v1668, %v1675
  %v1678 = vunpack.c.l.s4 1983009808
  %v1679 = vunpack.c.0.s8 %v1678
  %v1680 = vlaneseq
  %v1681 = vshrl.u32 %v1680, 7
  %v1682 = vsub.s32 %v1679, %v1681
  %v1683 = vrot.slane %v1669, %v1682
  %v1684 = vcombine.low %v1676, %v1683
  %v1686 = vadd.f32 %v1520, %v1684
  %v1687 = vxor.u32 %v1686, 2147483648
  %v1688 = vmul.f32 %v1687, 1.442695
  %v1689 = vpow.pop %v1688
  %v1690 = vadd.f32 %v1689, 1.0
  %v1691 = vrcp.pop %v1690
  %v1692 = vmul.f32 1.0, %v1691
  %v1694 = vrot.slane %v1686, 6
  %v1696 = vtanh.pop %v1694
  %v1697 = vld [vmem:[#allocation3] sm:$0x3]
  %v1699 = vrot.slane %v1692, 2
  %v1701 = vmul.f32 %v1699, %v1697
  %v1702 = vmul.f32 %v1692, %v1696
  %v1703 = vadd.f32 %v1701, %v1702
  %v1704 = vtanh.pop %v1703
  %v1705 = vrot.slane %v1692, 4
  %v1707 = vmul.f32 %v1705, %v1704
  %s1708 = ssub.s32 8, %s88
  %v1709 = vstv %s1517
  %v1710 = vstv %s1708
  %v1711 = vsel %vm87, %v1709, %v1710
  %vm1712 = vcmp.lt.s32.totalorder %v1711, %v284
  %v1713 = vsel %vm1712, %v1707, %v1521
  %1714 = vst [vmem:[#allocation2] sm:$0x3] %v1713
  %v1715 = vld [vmem:[#allocation3] sm:$0x3]
  %v1716 = vsel %vm1712, %v1703, %v1715
  %1717 = vst [vmem:[#allocation3] sm:$0x3] %v1716
  %v1718 = vsel %vm1712, %v1707, 0.0
  %s1719 = scalar_lea.vmem %s3, 14
  %1720 = vst [vmem:[%s1719] sm:$0x3] %v1718
  %s1721 = sadd.s32 %s88, 8
  %s1722 = scalar_lea.vmem %s0, 32
  %v1723 = vld [vmem:[%s1722] sm:$0xf]
  %v1724 = vunpack.c.l.bf16 %v1723
  %v1725 = vld [vmem:[#allocation2] sm:$0x3]
  %1726 = vmatprep.subr.mxu0 %v21
  %1727 = vmatpush1.msra.mxu0 %v20
  %1728 = vmatprep.subr.mxu0 %v25
  %1729 = vmatpush1.msra.mxu0 %v24
  %1730 = vmatprep.subr.mxu0 %v29
  %1731 = vmatpush1.msra.mxu0 %v28
  %1732 = vmatprep.subr.mxu0 %v33
  %1733 = vmatpush1.msra.mxu0 %v32
  %1734 = vmatprep.subr.mxu0 %v37
  %1735 = vmatpush1.msra.mxu0 %v36
  %1736 = vmatprep.subr.mxu0 %v41
  %1737 = vmatpush1.msra.mxu0 %v40
  %1738 = vmatprep.subr.mxu0 %v45
  %1739 = vmatpush1.msra.mxu0 %v44
  %1740 = vmatprep.subr.mxu0 %v49
  %1741 = vmatpush1.msra.mxu0 %v48
  %1742 = vmatprep.subr.mxu0 %v53
  %1743 = vmatpush1.msra.mxu0 %v52
  %1744 = vmatprep.subr.mxu0 %v57
  %1745 = vmatpush1.msra.mxu0 %v56
  %1746 = vmatprep.subr.mxu0 %v61
  %1747 = vmatpush1.msra.mxu0 %v60
  %1748 = vmatprep.subr.mxu0 %v65
  %1749 = vmatpush1.msra.mxu0 %v64
  %1750 = vmatprep.subr.mxu0 %v69
  %1751 = vmatpush1.msra.mxu0 %v68
  %1752 = vmatprep.subr.mxu0 %v73
  %1753 = vmatpush1.msra.mxu0 %v72
  %1754 = vmatprep.subr.mxu0 %v77
  %1755 = vmatpush1.msra.mxu0 %v76
  %1756 = vmatprep.subr.mxu0 %v81
  %1757 = vmatpush1.msra.mxu0 %v80
  %1758 = vmatprep.subr.mxu0 0.0
  %1759 = vmatpush1.msra.mxu0 0.0
  %1760 = vmatprep.subr.mxu0 0.0
  %1761 = vmatpush1.msra.mxu0 0.0
  %1762 = vmatprep.subr.mxu0 0.0
  %1763 = vmatpush1.msra.mxu0 0.0
  %1764 = vmatprep.subr.mxu0 0.0
  %1765 = vmatpush1.msra.mxu0 0.0
  %1766 = vmatprep.subr.mxu0 0.0
  %1767 = vmatpush1.msra.mxu0 0.0
  %1768 = vmatprep.subr.mxu0 0.0
  %1769 = vmatpush1.msra.mxu0 0.0
  %1770 = vmatprep.subr.mxu0 0.0
  %1771 = vmatpush1.msra.mxu0 0.0
  %1772 = vmatprep.subr.mxu0 0.0
  %1773 = vmatpush1.msra.mxu0 0.0
  %1774 = vmatprep.subr.mxu0 0.0
  %1775 = vmatpush1.msra.mxu0 0.0
  %1776 = vmatprep.subr.mxu0 0.0
  %1777 = vmatpush1.msra.mxu0 0.0
  %1778 = vmatprep.subr.mxu0 0.0
  %1779 = vmatpush1.msra.mxu0 0.0
  %1780 = vmatprep.subr.mxu0 0.0
  %1781 = vmatpush1.msra.mxu0 0.0
  %1782 = vmatprep.subr.mxu0 0.0
  %1783 = vmatpush1.msra.mxu0 0.0
  %1784 = vmatprep.subr.mxu0 0.0
  %1785 = vmatpush1.msra.mxu0 0.0
  %1786 = vmatprep.subr.mxu0 0.0
  %1787 = vmatpush1.msra.mxu0 0.0
  %1788 = vmatprep.subr.mxu0 0.0
  %1789 = vmatpush1.msra.mxu0 0.0
  %1790 = vmatprep.mubr.f32.mxu0 0.0
  %1791 = vmatmul.mubr.f32.gmra.mrb[0].mxu0 %v1725
  %v1792 = vpop.f32.mrb[0].mxu0
  %v1793 = vadd.f32 0.0, %v1792
  %v1794 = vpop.f32.mrb[0].mxu0
  %v1795 = vadd.f32 0.0, %v1794
  %1796 = vdwg.mxu0
  %1797 = vmatprep.subr.mxu0 %v23
  %1798 = vmatpush1.msra.mxu0 %v22
  %1799 = vmatprep.subr.mxu0 %v27
  %1800 = vmatpush1.msra.mxu0 %v26
  %1801 = vmatprep.subr.mxu0 %v31
  %1802 = vmatpush1.msra.mxu0 %v30
  %1803 = vmatprep.subr.mxu0 %v35
  %1804 = vmatpush1.msra.mxu0 %v34
  %1805 = vmatprep.subr.mxu0 %v39
  %1806 = vmatpush1.msra.mxu0 %v38
  %1807 = vmatprep.subr.mxu0 %v43
  %1808 = vmatpush1.msra.mxu0 %v42
  %1809 = vmatprep.subr.mxu0 %v47
  %1810 = vmatpush1.msra.mxu0 %v46
  %1811 = vmatprep.subr.mxu0 %v51
  %1812 = vmatpush1.msra.mxu0 %v50
  %1813 = vmatprep.subr.mxu0 %v55
  %1814 = vmatpush1.msra.mxu0 %v54
  %1815 = vmatprep.subr.mxu0 %v59
  %1816 = vmatpush1.msra.mxu0 %v58
  %1817 = vmatprep.subr.mxu0 %v63
  %1818 = vmatpush1.msra.mxu0 %v62
  %1819 = vmatprep.subr.mxu0 %v67
  %1820 = vmatpush1.msra.mxu0 %v66
  %1821 = vmatprep.subr.mxu0 %v71
  %1822 = vmatpush1.msra.mxu0 %v70
  %1823 = vmatprep.subr.mxu0 %v75
  %1824 = vmatpush1.msra.mxu0 %v74
  %1825 = vmatprep.subr.mxu0 %v79
  %1826 = vmatpush1.msra.mxu0 %v78
  %1827 = vmatprep.subr.mxu0 %v83
  %1828 = vmatpush1.msra.mxu0 %v82
  %1829 = vmatprep.subr.mxu0 0.0
  %1830 = vmatpush1.msra.mxu0 0.0
  %1831 = vmatprep.subr.mxu0 0.0
  %1832 = vmatpush1.msra.mxu0 0.0
  %1833 = vmatprep.subr.mxu0 0.0
  %1834 = vmatpush1.msra.mxu0 0.0
  %1835 = vmatprep.subr.mxu0 0.0
  %1836 = vmatpush1.msra.mxu0 0.0
  %1837 = vmatprep.subr.mxu0 0.0
  %1838 = vmatpush1.msra.mxu0 0.0
  %1839 = vmatprep.subr.mxu0 0.0
  %1840 = vmatpush1.msra.mxu0 0.0
  %1841 = vmatprep.subr.mxu0 0.0
  %1842 = vmatpush1.msra.mxu0 0.0
  %1843 = vmatprep.subr.mxu0 0.0
  %1844 = vmatpush1.msra.mxu0 0.0
  %1845 = vmatprep.subr.mxu0 0.0
  %1846 = vmatpush1.msra.mxu0 0.0
  %1847 = vmatprep.subr.mxu0 0.0
  %1848 = vmatpush1.msra.mxu0 0.0
  %1849 = vmatprep.subr.mxu0 0.0
  %1850 = vmatpush1.msra.mxu0 0.0
  %1851 = vmatprep.subr.mxu0 0.0
  %1852 = vmatpush1.msra.mxu0 0.0
  %1853 = vmatprep.subr.mxu0 0.0
  %1854 = vmatpush1.msra.mxu0 0.0
  %1855 = vmatprep.subr.mxu0 0.0
  %1856 = vmatpush1.msra.mxu0 0.0
  %1857 = vmatprep.subr.mxu0 0.0
  %1858 = vmatpush1.msra.mxu0 0.0
  %1859 = vmatprep.subr.mxu0 0.0
  %1860 = vmatpush1.msra.mxu0 0.0
  %1861 = vmatprep.mubr.f32.mxu0 0.0
  %1862 = vmatmul.mubr.f32.gmra.mrb[0].mxu0 %v1725
  %v1863 = vpop.f32.mrb[0].mxu0
  %v1864 = vadd.f32 0.0, %v1863
  %v1865 = vpop.f32.mrb[0].mxu0
  %v1866 = vadd.f32 0.0, %v1865
  %1867 = vdwg.mxu0
  %v1872 = vcombine.low %v1793, %v1795
  %v1873 = vcombine.low %v1864, %v1866
  %v1875 = vunpack.c.l.s4 1983009808
  %v1876 = vunpack.c.0.s8 %v1875
  %v1877 = vlaneseq
  %v1878 = vshrl.u32 %v1877, 7
  %v1879 = vsub.s32 %v1876, %v1878
  %v1880 = vrot.slane %v1872, %v1879
  %v1882 = vunpack.c.l.s4 1983009808
  %v1883 = vunpack.c.0.s8 %v1882
  %v1884 = vlaneseq
  %v1885 = vshrl.u32 %v1884, 7
  %v1886 = vsub.s32 %v1883, %v1885
  %v1887 = vrot.slane %v1873, %v1886
  %v1888 = vcombine.low %v1880, %v1887
  %v1890 = vadd.f32 %v1724, %v1888
  %v1891 = vxor.u32 %v1890, 2147483648
  %v1892 = vmul.f32 %v1891, 1.442695
  %v1893 = vpow.pop %v1892
  %v1894 = vadd.f32 %v1893, 1.0
  %v1895 = vrcp.pop %v1894
  %v1896 = vmul.f32 1.0, %v1895
  %v1898 = vrot.slane %v1890, 6
  %v1900 = vtanh.pop %v1898
  %v1901 = vld [vmem:[#allocation3] sm:$0x3]
  %v1903 = vrot.slane %v1896, 2
  %v1905 = vmul.f32 %v1903, %v1901
  %v1906 = vmul.f32 %v1896, %v1900
  %v1907 = vadd.f32 %v1905, %v1906
  %v1908 = vtanh.pop %v1907
  %v1909 = vrot.slane %v1896, 4
  %v1911 = vmul.f32 %v1909, %v1908
  %s1912 = ssub.s32 7, %s88
  %v1913 = vstv %s1721
  %v1914 = vstv %s1912
  %v1915 = vsel %vm87, %v1913, %v1914
  %vm1916 = vcmp.lt.s32.totalorder %v1915, %v284
  %v1917 = vsel %vm1916, %v1911, %v1725
  %1918 = vst [vmem:[#allocation2] sm:$0x3] %v1917
  %v1919 = vld [vmem:[#allocation3] sm:$0x3]
  %v1920 = vsel %vm1916, %v1907, %v1919
  %1921 = vst [vmem:[#allocation3] sm:$0x3] %v1920
  %v1922 = vsel %vm1916, %v1911, 0.0
  %s1923 = scalar_lea.vmem %s3, 16
  %1924 = vst [vmem:[%s1923] sm:$0x3] %v1922
  %s1925 = sadd.s32 %s88, 9
  %s1926 = scalar_lea.vmem %s0, 36
  %v1927 = vld [vmem:[%s1926] sm:$0xf]
  %v1928 = vunpack.c.l.bf16 %v1927
  %v1929 = vld [vmem:[#allocation2] sm:$0x3]
  %1930 = vmatprep.subr.mxu0 %v21
  %1931 = vmatpush1.msra.mxu0 %v20
  %1932 = vmatprep.subr.mxu0 %v25
  %1933 = vmatpush1.msra.mxu0 %v24
  %1934 = vmatprep.subr.mxu0 %v29
  %1935 = vmatpush1.msra.mxu0 %v28
  %1936 = vmatprep.subr.mxu0 %v33
  %1937 = vmatpush1.msra.mxu0 %v32
  %1938 = vmatprep.subr.mxu0 %v37
  %1939 = vmatpush1.msra.mxu0 %v36
  %1940 = vmatprep.subr.mxu0 %v41
  %1941 = vmatpush1.msra.mxu0 %v40
  %1942 = vmatprep.subr.mxu0 %v45
  %1943 = vmatpush1.msra.mxu0 %v44
  %1944 = vmatprep.subr.mxu0 %v49
  %1945 = vmatpush1.msra.mxu0 %v48
  %1946 = vmatprep.subr.mxu0 %v53
  %1947 = vmatpush1.msra.mxu0 %v52
  %1948 = vmatprep.subr.mxu0 %v57
  %1949 = vmatpush1.msra.mxu0 %v56
  %1950 = vmatprep.subr.mxu0 %v61
  %1951 = vmatpush1.msra.mxu0 %v60
  %1952 = vmatprep.subr.mxu0 %v65
  %1953 = vmatpush1.msra.mxu0 %v64
  %1954 = vmatprep.subr.mxu0 %v69
  %1955 = vmatpush1.msra.mxu0 %v68
  %1956 = vmatprep.subr.mxu0 %v73
  %1957 = vmatpush1.msra.mxu0 %v72
  %1958 = vmatprep.subr.mxu0 %v77
  %1959 = vmatpush1.msra.mxu0 %v76
  %1960 = vmatprep.subr.mxu0 %v81
  %1961 = vmatpush1.msra.mxu0 %v80
  %1962 = vmatprep.subr.mxu0 0.0
  %1963 = vmatpush1.msra.mxu0 0.0
  %1964 = vmatprep.subr.mxu0 0.0
  %1965 = vmatpush1.msra.mxu0 0.0
  %1966 = vmatprep.subr.mxu0 0.0
  %1967 = vmatpush1.msra.mxu0 0.0
  %1968 = vmatprep.subr.mxu0 0.0
  %1969 = vmatpush1.msra.mxu0 0.0
  %1970 = vmatprep.subr.mxu0 0.0
  %1971 = vmatpush1.msra.mxu0 0.0
  %1972 = vmatprep.subr.mxu0 0.0
  %1973 = vmatpush1.msra.mxu0 0.0
  %1974 = vmatprep.subr.mxu0 0.0
  %1975 = vmatpush1.msra.mxu0 0.0
  %1976 = vmatprep.subr.mxu0 0.0
  %1977 = vmatpush1.msra.mxu0 0.0
  %1978 = vmatprep.subr.mxu0 0.0
  %1979 = vmatpush1.msra.mxu0 0.0
  %1980 = vmatprep.subr.mxu0 0.0
  %1981 = vmatpush1.msra.mxu0 0.0
  %1982 = vmatprep.subr.mxu0 0.0
  %1983 = vmatpush1.msra.mxu0 0.0
  %1984 = vmatprep.subr.mxu0 0.0
  %1985 = vmatpush1.msra.mxu0 0.0
  %1986 = vmatprep.subr.mxu0 0.0
  %1987 = vmatpush1.msra.mxu0 0.0
  %1988 = vmatprep.subr.mxu0 0.0
  %1989 = vmatpush1.msra.mxu0 0.0
  %1990 = vmatprep.subr.mxu0 0.0
  %1991 = vmatpush1.msra.mxu0 0.0
  %1992 = vmatprep.subr.mxu0 0.0
  %1993 = vmatpush1.msra.mxu0 0.0
  %1994 = vmatprep.mubr.f32.mxu0 0.0
  %1995 = vmatmul.mubr.f32.gmra.mrb[0].mxu0 %v1929
  %v1996 = vpop.f32.mrb[0].mxu0
  %v1997 = vadd.f32 0.0, %v1996
  %v1998 = vpop.f32.mrb[0].mxu0
  %v1999 = vadd.f32 0.0, %v1998
  %2000 = vdwg.mxu0
  %2001 = vmatprep.subr.mxu0 %v23
  %2002 = vmatpush1.msra.mxu0 %v22
  %2003 = vmatprep.subr.mxu0 %v27
  %2004 = vmatpush1.msra.mxu0 %v26
  %2005 = vmatprep.subr.mxu0 %v31
  %2006 = vmatpush1.msra.mxu0 %v30
  %2007 = vmatprep.subr.mxu0 %v35
  %2008 = vmatpush1.msra.mxu0 %v34
  %2009 = vmatprep.subr.mxu0 %v39
  %2010 = vmatpush1.msra.mxu0 %v38
  %2011 = vmatprep.subr.mxu0 %v43
  %2012 = vmatpush1.msra.mxu0 %v42
  %2013 = vmatprep.subr.mxu0 %v47
  %2014 = vmatpush1.msra.mxu0 %v46
  %2015 = vmatprep.subr.mxu0 %v51
  %2016 = vmatpush1.msra.mxu0 %v50
  %2017 = vmatprep.subr.mxu0 %v55
  %2018 = vmatpush1.msra.mxu0 %v54
  %2019 = vmatprep.subr.mxu0 %v59
  %2020 = vmatpush1.msra.mxu0 %v58
  %2021 = vmatprep.subr.mxu0 %v63
  %2022 = vmatpush1.msra.mxu0 %v62
  %2023 = vmatprep.subr.mxu0 %v67
  %2024 = vmatpush1.msra.mxu0 %v66
  %2025 = vmatprep.subr.mxu0 %v71
  %2026 = vmatpush1.msra.mxu0 %v70
  %2027 = vmatprep.subr.mxu0 %v75
  %2028 = vmatpush1.msra.mxu0 %v74
  %2029 = vmatprep.subr.mxu0 %v79
  %2030 = vmatpush1.msra.mxu0 %v78
  %2031 = vmatprep.subr.mxu0 %v83
  %2032 = vmatpush1.msra.mxu0 %v82
  %2033 = vmatprep.subr.mxu0 0.0
  %2034 = vmatpush1.msra.mxu0 0.0
  %2035 = vmatprep.subr.mxu0 0.0
  %2036 = vmatpush1.msra.mxu0 0.0
  %2037 = vmatprep.subr.mxu0 0.0
  %2038 = vmatpush1.msra.mxu0 0.0
  %2039 = vmatprep.subr.mxu0 0.0
  %2040 = vmatpush1.msra.mxu0 0.0
  %2041 = vmatprep.subr.mxu0 0.0
  %2042 = vmatpush1.msra.mxu0 0.0
  %2043 = vmatprep.subr.mxu0 0.0
  %2044 = vmatpush1.msra.mxu0 0.0
  %2045 = vmatprep.subr.mxu0 0.0
  %2046 = vmatpush1.msra.mxu0 0.0
  %2047 = vmatprep.subr.mxu0 0.0
  %2048 = vmatpush1.msra.mxu0 0.0
  %2049 = vmatprep.subr.mxu0 0.0
  %2050 = vmatpush1.msra.mxu0 0.0
  %2051 = vmatprep.subr.mxu0 0.0
  %2052 = vmatpush1.msra.mxu0 0.0
  %2053 = vmatprep.subr.mxu0 0.0
  %2054 = vmatpush1.msra.mxu0 0.0
  %2055 = vmatprep.subr.mxu0 0.0
  %2056 = vmatpush1.msra.mxu0 0.0
  %2057 = vmatprep.subr.mxu0 0.0
  %2058 = vmatpush1.msra.mxu0 0.0
  %2059 = vmatprep.subr.mxu0 0.0
  %2060 = vmatpush1.msra.mxu0 0.0
  %2061 = vmatprep.subr.mxu0 0.0
  %2062 = vmatpush1.msra.mxu0 0.0
  %2063 = vmatprep.subr.mxu0 0.0
  %2064 = vmatpush1.msra.mxu0 0.0
  %2065 = vmatprep.mubr.f32.mxu0 0.0
  %2066 = vmatmul.mubr.f32.gmra.mrb[0].mxu0 %v1929
  %v2067 = vpop.f32.mrb[0].mxu0
  %v2068 = vadd.f32 0.0, %v2067
  %v2069 = vpop.f32.mrb[0].mxu0
  %v2070 = vadd.f32 0.0, %v2069
  %2071 = vdwg.mxu0
  %v2076 = vcombine.low %v1997, %v1999
  %v2077 = vcombine.low %v2068, %v2070
  %v2079 = vunpack.c.l.s4 1983009808
  %v2080 = vunpack.c.0.s8 %v2079
  %v2081 = vlaneseq
  %v2082 = vshrl.u32 %v2081, 7
  %v2083 = vsub.s32 %v2080, %v2082
  %v2084 = vrot.slane %v2076, %v2083
  %v2086 = vunpack.c.l.s4 1983009808
  %v2087 = vunpack.c.0.s8 %v2086
  %v2088 = vlaneseq
  %v2089 = vshrl.u32 %v2088, 7
  %v2090 = vsub.s32 %v2087, %v2089
  %v2091 = vrot.slane %v2077, %v2090
  %v2092 = vcombine.low %v2084, %v2091
  %v2094 = vadd.f32 %v1928, %v2092
  %v2095 = vxor.u32 %v2094, 2147483648
  %v2096 = vmul.f32 %v2095, 1.442695
  %v2097 = vpow.pop %v2096
  %v2098 = vadd.f32 %v2097, 1.0
  %v2099 = vrcp.pop %v2098
  %v2100 = vmul.f32 1.0, %v2099
  %v2102 = vrot.slane %v2094, 6
  %v2104 = vtanh.pop %v2102
  %v2105 = vld [vmem:[#allocation3] sm:$0x3]
  %v2107 = vrot.slane %v2100, 2
  %v2109 = vmul.f32 %v2107, %v2105
  %v2110 = vmul.f32 %v2100, %v2104
  %v2111 = vadd.f32 %v2109, %v2110
  %v2112 = vtanh.pop %v2111
  %v2113 = vrot.slane %v2100, 4
  %v2115 = vmul.f32 %v2113, %v2112
  %s2116 = ssub.s32 6, %s88
  %v2117 = vstv %s1925
  %v2118 = vstv %s2116
  %v2119 = vsel %vm87, %v2117, %v2118
  %vm2120 = vcmp.lt.s32.totalorder %v2119, %v284
  %v2121 = vsel %vm2120, %v2115, %v1929
  %2122 = vst [vmem:[#allocation2] sm:$0x3] %v2121
  %v2123 = vld [vmem:[#allocation3] sm:$0x3]
  %v2124 = vsel %vm2120, %v2111, %v2123
  %2125 = vst [vmem:[#allocation3] sm:$0x3] %v2124
  %v2126 = vsel %vm2120, %v2115, 0.0
  %s2127 = scalar_lea.vmem %s3, 18
  %2128 = vst [vmem:[%s2127] sm:$0x3] %v2126
  %s2129 = sadd.s32 %s88, 10
  %s2130 = scalar_lea.vmem %s0, 40
  %v2131 = vld [vmem:[%s2130] sm:$0xf]
  %v2132 = vunpack.c.l.bf16 %v2131
  %v2133 = vld [vmem:[#allocation2] sm:$0x3]
  %2134 = vmatprep.subr.mxu0 %v21
  %2135 = vmatpush1.msra.mxu0 %v20
  %2136 = vmatprep.subr.mxu0 %v25
  %2137 = vmatpush1.msra.mxu0 %v24
  %2138 = vmatprep.subr.mxu0 %v29
  %2139 = vmatpush1.msra.mxu0 %v28
  %2140 = vmatprep.subr.mxu0 %v33
  %2141 = vmatpush1.msra.mxu0 %v32
  %2142 = vmatprep.subr.mxu0 %v37
  %2143 = vmatpush1.msra.mxu0 %v36
  %2144 = vmatprep.subr.mxu0 %v41
  %2145 = vmatpush1.msra.mxu0 %v40
  %2146 = vmatprep.subr.mxu0 %v45
  %2147 = vmatpush1.msra.mxu0 %v44
  %2148 = vmatprep.subr.mxu0 %v49
  %2149 = vmatpush1.msra.mxu0 %v48
  %2150 = vmatprep.subr.mxu0 %v53
  %2151 = vmatpush1.msra.mxu0 %v52
  %2152 = vmatprep.subr.mxu0 %v57
  %2153 = vmatpush1.msra.mxu0 %v56
  %2154 = vmatprep.subr.mxu0 %v61
  %2155 = vmatpush1.msra.mxu0 %v60
  %2156 = vmatprep.subr.mxu0 %v65
  %2157 = vmatpush1.msra.mxu0 %v64
  %2158 = vmatprep.subr.mxu0 %v69
  %2159 = vmatpush1.msra.mxu0 %v68
  %2160 = vmatprep.subr.mxu0 %v73
  %2161 = vmatpush1.msra.mxu0 %v72
  %2162 = vmatprep.subr.mxu0 %v77
  %2163 = vmatpush1.msra.mxu0 %v76
  %2164 = vmatprep.subr.mxu0 %v81
  %2165 = vmatpush1.msra.mxu0 %v80
  %2166 = vmatprep.subr.mxu0 0.0
  %2167 = vmatpush1.msra.mxu0 0.0
  %2168 = vmatprep.subr.mxu0 0.0
  %2169 = vmatpush1.msra.mxu0 0.0
  %2170 = vmatprep.subr.mxu0 0.0
  %2171 = vmatpush1.msra.mxu0 0.0
  %2172 = vmatprep.subr.mxu0 0.0
  %2173 = vmatpush1.msra.mxu0 0.0
  %2174 = vmatprep.subr.mxu0 0.0
  %2175 = vmatpush1.msra.mxu0 0.0
  %2176 = vmatprep.subr.mxu0 0.0
  %2177 = vmatpush1.msra.mxu0 0.0
  %2178 = vmatprep.subr.mxu0 0.0
  %2179 = vmatpush1.msra.mxu0 0.0
  %2180 = vmatprep.subr.mxu0 0.0
  %2181 = vmatpush1.msra.mxu0 0.0
  %2182 = vmatprep.subr.mxu0 0.0
  %2183 = vmatpush1.msra.mxu0 0.0
  %2184 = vmatprep.subr.mxu0 0.0
  %2185 = vmatpush1.msra.mxu0 0.0
  %2186 = vmatprep.subr.mxu0 0.0
  %2187 = vmatpush1.msra.mxu0 0.0
  %2188 = vmatprep.subr.mxu0 0.0
  %2189 = vmatpush1.msra.mxu0 0.0
  %2190 = vmatprep.subr.mxu0 0.0
  %2191 = vmatpush1.msra.mxu0 0.0
  %2192 = vmatprep.subr.mxu0 0.0
  %2193 = vmatpush1.msra.mxu0 0.0
  %2194 = vmatprep.subr.mxu0 0.0
  %2195 = vmatpush1.msra.mxu0 0.0
  %2196 = vmatprep.subr.mxu0 0.0
  %2197 = vmatpush1.msra.mxu0 0.0
  %2198 = vmatprep.mubr.f32.mxu0 0.0
  %2199 = vmatmul.mubr.f32.gmra.mrb[0].mxu0 %v2133
  %v2200 = vpop.f32.mrb[0].mxu0
  %v2201 = vadd.f32 0.0, %v2200
  %v2202 = vpop.f32.mrb[0].mxu0
  %v2203 = vadd.f32 0.0, %v2202
  %2204 = vdwg.mxu0
  %2205 = vmatprep.subr.mxu0 %v23
  %2206 = vmatpush1.msra.mxu0 %v22
  %2207 = vmatprep.subr.mxu0 %v27
  %2208 = vmatpush1.msra.mxu0 %v26
  %2209 = vmatprep.subr.mxu0 %v31
  %2210 = vmatpush1.msra.mxu0 %v30
  %2211 = vmatprep.subr.mxu0 %v35
  %2212 = vmatpush1.msra.mxu0 %v34
  %2213 = vmatprep.subr.mxu0 %v39
  %2214 = vmatpush1.msra.mxu0 %v38
  %2215 = vmatprep.subr.mxu0 %v43
  %2216 = vmatpush1.msra.mxu0 %v42
  %2217 = vmatprep.subr.mxu0 %v47
  %2218 = vmatpush1.msra.mxu0 %v46
  %2219 = vmatprep.subr.mxu0 %v51
  %2220 = vmatpush1.msra.mxu0 %v50
  %2221 = vmatprep.subr.mxu0 %v55
  %2222 = vmatpush1.msra.mxu0 %v54
  %2223 = vmatprep.subr.mxu0 %v59
  %2224 = vmatpush1.msra.mxu0 %v58
  %2225 = vmatprep.subr.mxu0 %v63
  %2226 = vmatpush1.msra.mxu0 %v62
  %2227 = vmatprep.subr.mxu0 %v67
  %2228 = vmatpush1.msra.mxu0 %v66
  %2229 = vmatprep.subr.mxu0 %v71
  %2230 = vmatpush1.msra.mxu0 %v70
  %2231 = vmatprep.subr.mxu0 %v75
  %2232 = vmatpush1.msra.mxu0 %v74
  %2233 = vmatprep.subr.mxu0 %v79
  %2234 = vmatpush1.msra.mxu0 %v78
  %2235 = vmatprep.subr.mxu0 %v83
  %2236 = vmatpush1.msra.mxu0 %v82
  %2237 = vmatprep.subr.mxu0 0.0
  %2238 = vmatpush1.msra.mxu0 0.0
  %2239 = vmatprep.subr.mxu0 0.0
  %2240 = vmatpush1.msra.mxu0 0.0
  %2241 = vmatprep.subr.mxu0 0.0
  %2242 = vmatpush1.msra.mxu0 0.0
  %2243 = vmatprep.subr.mxu0 0.0
  %2244 = vmatpush1.msra.mxu0 0.0
  %2245 = vmatprep.subr.mxu0 0.0
  %2246 = vmatpush1.msra.mxu0 0.0
  %2247 = vmatprep.subr.mxu0 0.0
  %2248 = vmatpush1.msra.mxu0 0.0
  %2249 = vmatprep.subr.mxu0 0.0
  %2250 = vmatpush1.msra.mxu0 0.0
  %2251 = vmatprep.subr.mxu0 0.0
  %2252 = vmatpush1.msra.mxu0 0.0
  %2253 = vmatprep.subr.mxu0 0.0
  %2254 = vmatpush1.msra.mxu0 0.0
  %2255 = vmatprep.subr.mxu0 0.0
  %2256 = vmatpush1.msra.mxu0 0.0
  %2257 = vmatprep.subr.mxu0 0.0
  %2258 = vmatpush1.msra.mxu0 0.0
  %2259 = vmatprep.subr.mxu0 0.0
  %2260 = vmatpush1.msra.mxu0 0.0
  %2261 = vmatprep.subr.mxu0 0.0
  %2262 = vmatpush1.msra.mxu0 0.0
  %2263 = vmatprep.subr.mxu0 0.0
  %2264 = vmatpush1.msra.mxu0 0.0
  %2265 = vmatprep.subr.mxu0 0.0
  %2266 = vmatpush1.msra.mxu0 0.0
  %2267 = vmatprep.subr.mxu0 0.0
  %2268 = vmatpush1.msra.mxu0 0.0
  %2269 = vmatprep.mubr.f32.mxu0 0.0
  %2270 = vmatmul.mubr.f32.gmra.mrb[0].mxu0 %v2133
  %v2271 = vpop.f32.mrb[0].mxu0
  %v2272 = vadd.f32 0.0, %v2271
  %v2273 = vpop.f32.mrb[0].mxu0
  %v2274 = vadd.f32 0.0, %v2273
  %2275 = vdwg.mxu0
  %v2280 = vcombine.low %v2201, %v2203
  %v2281 = vcombine.low %v2272, %v2274
  %v2283 = vunpack.c.l.s4 1983009808
  %v2284 = vunpack.c.0.s8 %v2283
  %v2285 = vlaneseq
  %v2286 = vshrl.u32 %v2285, 7
  %v2287 = vsub.s32 %v2284, %v2286
  %v2288 = vrot.slane %v2280, %v2287
  %v2290 = vunpack.c.l.s4 1983009808
  %v2291 = vunpack.c.0.s8 %v2290
  %v2292 = vlaneseq
  %v2293 = vshrl.u32 %v2292, 7
  %v2294 = vsub.s32 %v2291, %v2293
  %v2295 = vrot.slane %v2281, %v2294
  %v2296 = vcombine.low %v2288, %v2295
  %v2298 = vadd.f32 %v2132, %v2296
  %v2299 = vxor.u32 %v2298, 2147483648
  %v2300 = vmul.f32 %v2299, 1.442695
  %v2301 = vpow.pop %v2300
  %v2302 = vadd.f32 %v2301, 1.0
  %v2303 = vrcp.pop %v2302
  %v2304 = vmul.f32 1.0, %v2303
  %v2306 = vrot.slane %v2298, 6
  %v2308 = vtanh.pop %v2306
  %v2309 = vld [vmem:[#allocation3] sm:$0x3]
  %v2311 = vrot.slane %v2304, 2
  %v2313 = vmul.f32 %v2311, %v2309
  %v2314 = vmul.f32 %v2304, %v2308
  %v2315 = vadd.f32 %v2313, %v2314
  %v2316 = vtanh.pop %v2315
  %v2317 = vrot.slane %v2304, 4
  %v2319 = vmul.f32 %v2317, %v2316
  %s2320 = ssub.s32 5, %s88
  %v2321 = vstv %s2129
  %v2322 = vstv %s2320
  %v2323 = vsel %vm87, %v2321, %v2322
  %vm2324 = vcmp.lt.s32.totalorder %v2323, %v284
  %v2325 = vsel %vm2324, %v2319, %v2133
  %2326 = vst [vmem:[#allocation2] sm:$0x3] %v2325
  %v2327 = vld [vmem:[#allocation3] sm:$0x3]
  %v2328 = vsel %vm2324, %v2315, %v2327
  %2329 = vst [vmem:[#allocation3] sm:$0x3] %v2328
  %v2330 = vsel %vm2324, %v2319, 0.0
  %s2331 = scalar_lea.vmem %s3, 20
  %2332 = vst [vmem:[%s2331] sm:$0x3] %v2330
  %s2333 = sadd.s32 %s88, 11
  %s2334 = scalar_lea.vmem %s0, 44
  %v2335 = vld [vmem:[%s2334] sm:$0xf]
  %v2336 = vunpack.c.l.bf16 %v2335
  %v2337 = vld [vmem:[#allocation2] sm:$0x3]
  %2338 = vmatprep.subr.mxu0 %v21
  %2339 = vmatpush1.msra.mxu0 %v20
  %2340 = vmatprep.subr.mxu0 %v25
  %2341 = vmatpush1.msra.mxu0 %v24
  %2342 = vmatprep.subr.mxu0 %v29
  %2343 = vmatpush1.msra.mxu0 %v28
  %2344 = vmatprep.subr.mxu0 %v33
  %2345 = vmatpush1.msra.mxu0 %v32
  %2346 = vmatprep.subr.mxu0 %v37
  %2347 = vmatpush1.msra.mxu0 %v36
  %2348 = vmatprep.subr.mxu0 %v41
  %2349 = vmatpush1.msra.mxu0 %v40
  %2350 = vmatprep.subr.mxu0 %v45
  %2351 = vmatpush1.msra.mxu0 %v44
  %2352 = vmatprep.subr.mxu0 %v49
  %2353 = vmatpush1.msra.mxu0 %v48
  %2354 = vmatprep.subr.mxu0 %v53
  %2355 = vmatpush1.msra.mxu0 %v52
  %2356 = vmatprep.subr.mxu0 %v57
  %2357 = vmatpush1.msra.mxu0 %v56
  %2358 = vmatprep.subr.mxu0 %v61
  %2359 = vmatpush1.msra.mxu0 %v60
  %2360 = vmatprep.subr.mxu0 %v65
  %2361 = vmatpush1.msra.mxu0 %v64
  %2362 = vmatprep.subr.mxu0 %v69
  %2363 = vmatpush1.msra.mxu0 %v68
  %2364 = vmatprep.subr.mxu0 %v73
  %2365 = vmatpush1.msra.mxu0 %v72
  %2366 = vmatprep.subr.mxu0 %v77
  %2367 = vmatpush1.msra.mxu0 %v76
  %2368 = vmatprep.subr.mxu0 %v81
  %2369 = vmatpush1.msra.mxu0 %v80
  %2370 = vmatprep.subr.mxu0 0.0
  %2371 = vmatpush1.msra.mxu0 0.0
  %2372 = vmatprep.subr.mxu0 0.0
  %2373 = vmatpush1.msra.mxu0 0.0
  %2374 = vmatprep.subr.mxu0 0.0
  %2375 = vmatpush1.msra.mxu0 0.0
  %2376 = vmatprep.subr.mxu0 0.0
  %2377 = vmatpush1.msra.mxu0 0.0
  %2378 = vmatprep.subr.mxu0 0.0
  %2379 = vmatpush1.msra.mxu0 0.0
  %2380 = vmatprep.subr.mxu0 0.0
  %2381 = vmatpush1.msra.mxu0 0.0
  %2382 = vmatprep.subr.mxu0 0.0
  %2383 = vmatpush1.msra.mxu0 0.0
  %2384 = vmatprep.subr.mxu0 0.0
  %2385 = vmatpush1.msra.mxu0 0.0
  %2386 = vmatprep.subr.mxu0 0.0
  %2387 = vmatpush1.msra.mxu0 0.0
  %2388 = vmatprep.subr.mxu0 0.0
  %2389 = vmatpush1.msra.mxu0 0.0
  %2390 = vmatprep.subr.mxu0 0.0
  %2391 = vmatpush1.msra.mxu0 0.0
  %2392 = vmatprep.subr.mxu0 0.0
  %2393 = vmatpush1.msra.mxu0 0.0
  %2394 = vmatprep.subr.mxu0 0.0
  %2395 = vmatpush1.msra.mxu0 0.0
  %2396 = vmatprep.subr.mxu0 0.0
  %2397 = vmatpush1.msra.mxu0 0.0
  %2398 = vmatprep.subr.mxu0 0.0
  %2399 = vmatpush1.msra.mxu0 0.0
  %2400 = vmatprep.subr.mxu0 0.0
  %2401 = vmatpush1.msra.mxu0 0.0
  %2402 = vmatprep.mubr.f32.mxu0 0.0
  %2403 = vmatmul.mubr.f32.gmra.mrb[0].mxu0 %v2337
  %v2404 = vpop.f32.mrb[0].mxu0
  %v2405 = vadd.f32 0.0, %v2404
  %v2406 = vpop.f32.mrb[0].mxu0
  %v2407 = vadd.f32 0.0, %v2406
  %2408 = vdwg.mxu0
  %2409 = vmatprep.subr.mxu0 %v23
  %2410 = vmatpush1.msra.mxu0 %v22
  %2411 = vmatprep.subr.mxu0 %v27
  %2412 = vmatpush1.msra.mxu0 %v26
  %2413 = vmatprep.subr.mxu0 %v31
  %2414 = vmatpush1.msra.mxu0 %v30
  %2415 = vmatprep.subr.mxu0 %v35
  %2416 = vmatpush1.msra.mxu0 %v34
  %2417 = vmatprep.subr.mxu0 %v39
  %2418 = vmatpush1.msra.mxu0 %v38
  %2419 = vmatprep.subr.mxu0 %v43
  %2420 = vmatpush1.msra.mxu0 %v42
  %2421 = vmatprep.subr.mxu0 %v47
  %2422 = vmatpush1.msra.mxu0 %v46
  %2423 = vmatprep.subr.mxu0 %v51
  %2424 = vmatpush1.msra.mxu0 %v50
  %2425 = vmatprep.subr.mxu0 %v55
  %2426 = vmatpush1.msra.mxu0 %v54
  %2427 = vmatprep.subr.mxu0 %v59
  %2428 = vmatpush1.msra.mxu0 %v58
  %2429 = vmatprep.subr.mxu0 %v63
  %2430 = vmatpush1.msra.mxu0 %v62
  %2431 = vmatprep.subr.mxu0 %v67
  %2432 = vmatpush1.msra.mxu0 %v66
  %2433 = vmatprep.subr.mxu0 %v71
  %2434 = vmatpush1.msra.mxu0 %v70
  %2435 = vmatprep.subr.mxu0 %v75
  %2436 = vmatpush1.msra.mxu0 %v74
  %2437 = vmatprep.subr.mxu0 %v79
  %2438 = vmatpush1.msra.mxu0 %v78
  %2439 = vmatprep.subr.mxu0 %v83
  %2440 = vmatpush1.msra.mxu0 %v82
  %2441 = vmatprep.subr.mxu0 0.0
  %2442 = vmatpush1.msra.mxu0 0.0
  %2443 = vmatprep.subr.mxu0 0.0
  %2444 = vmatpush1.msra.mxu0 0.0
  %2445 = vmatprep.subr.mxu0 0.0
  %2446 = vmatpush1.msra.mxu0 0.0
  %2447 = vmatprep.subr.mxu0 0.0
  %2448 = vmatpush1.msra.mxu0 0.0
  %2449 = vmatprep.subr.mxu0 0.0
  %2450 = vmatpush1.msra.mxu0 0.0
  %2451 = vmatprep.subr.mxu0 0.0
  %2452 = vmatpush1.msra.mxu0 0.0
  %2453 = vmatprep.subr.mxu0 0.0
  %2454 = vmatpush1.msra.mxu0 0.0
  %2455 = vmatprep.subr.mxu0 0.0
  %2456 = vmatpush1.msra.mxu0 0.0
  %2457 = vmatprep.subr.mxu0 0.0
  %2458 = vmatpush1.msra.mxu0 0.0
  %2459 = vmatprep.subr.mxu0 0.0
  %2460 = vmatpush1.msra.mxu0 0.0
  %2461 = vmatprep.subr.mxu0 0.0
  %2462 = vmatpush1.msra.mxu0 0.0
  %2463 = vmatprep.subr.mxu0 0.0
  %2464 = vmatpush1.msra.mxu0 0.0
  %2465 = vmatprep.subr.mxu0 0.0
  %2466 = vmatpush1.msra.mxu0 0.0
  %2467 = vmatprep.subr.mxu0 0.0
  %2468 = vmatpush1.msra.mxu0 0.0
  %2469 = vmatprep.subr.mxu0 0.0
  %2470 = vmatpush1.msra.mxu0 0.0
  %2471 = vmatprep.subr.mxu0 0.0
  %2472 = vmatpush1.msra.mxu0 0.0
  %2473 = vmatprep.mubr.f32.mxu0 0.0
  %2474 = vmatmul.mubr.f32.gmra.mrb[0].mxu0 %v2337
  %v2475 = vpop.f32.mrb[0].mxu0
  %v2476 = vadd.f32 0.0, %v2475
  %v2477 = vpop.f32.mrb[0].mxu0
  %v2478 = vadd.f32 0.0, %v2477
  %2479 = vdwg.mxu0
  %v2484 = vcombine.low %v2405, %v2407
  %v2485 = vcombine.low %v2476, %v2478
  %v2487 = vunpack.c.l.s4 1983009808
  %v2488 = vunpack.c.0.s8 %v2487
  %v2489 = vlaneseq
  %v2490 = vshrl.u32 %v2489, 7
  %v2491 = vsub.s32 %v2488, %v2490
  %v2492 = vrot.slane %v2484, %v2491
  %v2494 = vunpack.c.l.s4 1983009808
  %v2495 = vunpack.c.0.s8 %v2494
  %v2496 = vlaneseq
  %v2497 = vshrl.u32 %v2496, 7
  %v2498 = vsub.s32 %v2495, %v2497
  %v2499 = vrot.slane %v2485, %v2498
  %v2500 = vcombine.low %v2492, %v2499
  %v2502 = vadd.f32 %v2336, %v2500
  %v2503 = vxor.u32 %v2502, 2147483648
  %v2504 = vmul.f32 %v2503, 1.442695
  %v2505 = vpow.pop %v2504
  %v2506 = vadd.f32 %v2505, 1.0
  %v2507 = vrcp.pop %v2506
  %v2508 = vmul.f32 1.0, %v2507
  %v2510 = vrot.slane %v2502, 6
  %v2512 = vtanh.pop %v2510
  %v2513 = vld [vmem:[#allocation3] sm:$0x3]
  %v2515 = vrot.slane %v2508, 2
  %v2517 = vmul.f32 %v2515, %v2513
  %v2518 = vmul.f32 %v2508, %v2512
  %v2519 = vadd.f32 %v2517, %v2518
  %v2520 = vtanh.pop %v2519
  %v2521 = vrot.slane %v2508, 4
  %v2523 = vmul.f32 %v2521, %v2520
  %s2524 = ssub.s32 4, %s88
  %v2525 = vstv %s2333
  %v2526 = vstv %s2524
  %v2527 = vsel %vm87, %v2525, %v2526
  %vm2528 = vcmp.lt.s32.totalorder %v2527, %v284
  %v2529 = vsel %vm2528, %v2523, %v2337
  %2530 = vst [vmem:[#allocation2] sm:$0x3] %v2529
  %v2531 = vld [vmem:[#allocation3] sm:$0x3]
  %v2532 = vsel %vm2528, %v2519, %v2531
  %2533 = vst [vmem:[#allocation3] sm:$0x3] %v2532
  %v2534 = vsel %vm2528, %v2523, 0.0
  %s2535 = scalar_lea.vmem %s3, 22
  %2536 = vst [vmem:[%s2535] sm:$0x3] %v2534
  %s2537 = sadd.s32 %s88, 12
  %s2538 = scalar_lea.vmem %s0, 48
  %v2539 = vld [vmem:[%s2538] sm:$0xf]
  %v2540 = vunpack.c.l.bf16 %v2539
  %v2541 = vld [vmem:[#allocation2] sm:$0x3]
  %2542 = vmatprep.subr.mxu0 %v21
  %2543 = vmatpush1.msra.mxu0 %v20
  %2544 = vmatprep.subr.mxu0 %v25
  %2545 = vmatpush1.msra.mxu0 %v24
  %2546 = vmatprep.subr.mxu0 %v29
  %2547 = vmatpush1.msra.mxu0 %v28
  %2548 = vmatprep.subr.mxu0 %v33
  %2549 = vmatpush1.msra.mxu0 %v32
  %2550 = vmatprep.subr.mxu0 %v37
  %2551 = vmatpush1.msra.mxu0 %v36
  %2552 = vmatprep.subr.mxu0 %v41
  %2553 = vmatpush1.msra.mxu0 %v40
  %2554 = vmatprep.subr.mxu0 %v45
  %2555 = vmatpush1.msra.mxu0 %v44
  %2556 = vmatprep.subr.mxu0 %v49
  %2557 = vmatpush1.msra.mxu0 %v48
  %2558 = vmatprep.subr.mxu0 %v53
  %2559 = vmatpush1.msra.mxu0 %v52
  %2560 = vmatprep.subr.mxu0 %v57
  %2561 = vmatpush1.msra.mxu0 %v56
  %2562 = vmatprep.subr.mxu0 %v61
  %2563 = vmatpush1.msra.mxu0 %v60
  %2564 = vmatprep.subr.mxu0 %v65
  %2565 = vmatpush1.msra.mxu0 %v64
  %2566 = vmatprep.subr.mxu0 %v69
  %2567 = vmatpush1.msra.mxu0 %v68
  %2568 = vmatprep.subr.mxu0 %v73
  %2569 = vmatpush1.msra.mxu0 %v72
  %2570 = vmatprep.subr.mxu0 %v77
  %2571 = vmatpush1.msra.mxu0 %v76
  %2572 = vmatprep.subr.mxu0 %v81
  %2573 = vmatpush1.msra.mxu0 %v80
  %2574 = vmatprep.subr.mxu0 0.0
  %2575 = vmatpush1.msra.mxu0 0.0
  %2576 = vmatprep.subr.mxu0 0.0
  %2577 = vmatpush1.msra.mxu0 0.0
  %2578 = vmatprep.subr.mxu0 0.0
  %2579 = vmatpush1.msra.mxu0 0.0
  %2580 = vmatprep.subr.mxu0 0.0
  %2581 = vmatpush1.msra.mxu0 0.0
  %2582 = vmatprep.subr.mxu0 0.0
  %2583 = vmatpush1.msra.mxu0 0.0
  %2584 = vmatprep.subr.mxu0 0.0
  %2585 = vmatpush1.msra.mxu0 0.0
  %2586 = vmatprep.subr.mxu0 0.0
  %2587 = vmatpush1.msra.mxu0 0.0
  %2588 = vmatprep.subr.mxu0 0.0
  %2589 = vmatpush1.msra.mxu0 0.0
  %2590 = vmatprep.subr.mxu0 0.0
  %2591 = vmatpush1.msra.mxu0 0.0
  %2592 = vmatprep.subr.mxu0 0.0
  %2593 = vmatpush1.msra.mxu0 0.0
  %2594 = vmatprep.subr.mxu0 0.0
  %2595 = vmatpush1.msra.mxu0 0.0
  %2596 = vmatprep.subr.mxu0 0.0
  %2597 = vmatpush1.msra.mxu0 0.0
  %2598 = vmatprep.subr.mxu0 0.0
  %2599 = vmatpush1.msra.mxu0 0.0
  %2600 = vmatprep.subr.mxu0 0.0
  %2601 = vmatpush1.msra.mxu0 0.0
  %2602 = vmatprep.subr.mxu0 0.0
  %2603 = vmatpush1.msra.mxu0 0.0
  %2604 = vmatprep.subr.mxu0 0.0
  %2605 = vmatpush1.msra.mxu0 0.0
  %2606 = vmatprep.mubr.f32.mxu0 0.0
  %2607 = vmatmul.mubr.f32.gmra.mrb[0].mxu0 %v2541
  %v2608 = vpop.f32.mrb[0].mxu0
  %v2609 = vadd.f32 0.0, %v2608
  %v2610 = vpop.f32.mrb[0].mxu0
  %v2611 = vadd.f32 0.0, %v2610
  %2612 = vdwg.mxu0
  %2613 = vmatprep.subr.mxu0 %v23
  %2614 = vmatpush1.msra.mxu0 %v22
  %2615 = vmatprep.subr.mxu0 %v27
  %2616 = vmatpush1.msra.mxu0 %v26
  %2617 = vmatprep.subr.mxu0 %v31
  %2618 = vmatpush1.msra.mxu0 %v30
  %2619 = vmatprep.subr.mxu0 %v35
  %2620 = vmatpush1.msra.mxu0 %v34
  %2621 = vmatprep.subr.mxu0 %v39
  %2622 = vmatpush1.msra.mxu0 %v38
  %2623 = vmatprep.subr.mxu0 %v43
  %2624 = vmatpush1.msra.mxu0 %v42
  %2625 = vmatprep.subr.mxu0 %v47
  %2626 = vmatpush1.msra.mxu0 %v46
  %2627 = vmatprep.subr.mxu0 %v51
  %2628 = vmatpush1.msra.mxu0 %v50
  %2629 = vmatprep.subr.mxu0 %v55
  %2630 = vmatpush1.msra.mxu0 %v54
  %2631 = vmatprep.subr.mxu0 %v59
  %2632 = vmatpush1.msra.mxu0 %v58
  %2633 = vmatprep.subr.mxu0 %v63
  %2634 = vmatpush1.msra.mxu0 %v62
  %2635 = vmatprep.subr.mxu0 %v67
  %2636 = vmatpush1.msra.mxu0 %v66
  %2637 = vmatprep.subr.mxu0 %v71
  %2638 = vmatpush1.msra.mxu0 %v70
  %2639 = vmatprep.subr.mxu0 %v75
  %2640 = vmatpush1.msra.mxu0 %v74
  %2641 = vmatprep.subr.mxu0 %v79
  %2642 = vmatpush1.msra.mxu0 %v78
  %2643 = vmatprep.subr.mxu0 %v83
  %2644 = vmatpush1.msra.mxu0 %v82
  %2645 = vmatprep.subr.mxu0 0.0
  %2646 = vmatpush1.msra.mxu0 0.0
  %2647 = vmatprep.subr.mxu0 0.0
  %2648 = vmatpush1.msra.mxu0 0.0
  %2649 = vmatprep.subr.mxu0 0.0
  %2650 = vmatpush1.msra.mxu0 0.0
  %2651 = vmatprep.subr.mxu0 0.0
  %2652 = vmatpush1.msra.mxu0 0.0
  %2653 = vmatprep.subr.mxu0 0.0
  %2654 = vmatpush1.msra.mxu0 0.0
  %2655 = vmatprep.subr.mxu0 0.0
  %2656 = vmatpush1.msra.mxu0 0.0
  %2657 = vmatprep.subr.mxu0 0.0
  %2658 = vmatpush1.msra.mxu0 0.0
  %2659 = vmatprep.subr.mxu0 0.0
  %2660 = vmatpush1.msra.mxu0 0.0
  %2661 = vmatprep.subr.mxu0 0.0
  %2662 = vmatpush1.msra.mxu0 0.0
  %2663 = vmatprep.subr.mxu0 0.0
  %2664 = vmatpush1.msra.mxu0 0.0
  %2665 = vmatprep.subr.mxu0 0.0
  %2666 = vmatpush1.msra.mxu0 0.0
  %2667 = vmatprep.subr.mxu0 0.0
  %2668 = vmatpush1.msra.mxu0 0.0
  %2669 = vmatprep.subr.mxu0 0.0
  %2670 = vmatpush1.msra.mxu0 0.0
  %2671 = vmatprep.subr.mxu0 0.0
  %2672 = vmatpush1.msra.mxu0 0.0
  %2673 = vmatprep.subr.mxu0 0.0
  %2674 = vmatpush1.msra.mxu0 0.0
  %2675 = vmatprep.subr.mxu0 0.0
  %2676 = vmatpush1.msra.mxu0 0.0
  %2677 = vmatprep.mubr.f32.mxu0 0.0
  %2678 = vmatmul.mubr.f32.gmra.mrb[0].mxu0 %v2541
  %v2679 = vpop.f32.mrb[0].mxu0
  %v2680 = vadd.f32 0.0, %v2679
  %v2681 = vpop.f32.mrb[0].mxu0
  %v2682 = vadd.f32 0.0, %v2681
  %2683 = vdwg.mxu0
  %v2688 = vcombine.low %v2609, %v2611
  %v2689 = vcombine.low %v2680, %v2682
  %v2691 = vunpack.c.l.s4 1983009808
  %v2692 = vunpack.c.0.s8 %v2691
  %v2693 = vlaneseq
  %v2694 = vshrl.u32 %v2693, 7
  %v2695 = vsub.s32 %v2692, %v2694
  %v2696 = vrot.slane %v2688, %v2695
  %v2698 = vunpack.c.l.s4 1983009808
  %v2699 = vunpack.c.0.s8 %v2698
  %v2700 = vlaneseq
  %v2701 = vshrl.u32 %v2700, 7
  %v2702 = vsub.s32 %v2699, %v2701
  %v2703 = vrot.slane %v2689, %v2702
  %v2704 = vcombine.low %v2696, %v2703
  %v2706 = vadd.f32 %v2540, %v2704
  %v2707 = vxor.u32 %v2706, 2147483648
  %v2708 = vmul.f32 %v2707, 1.442695
  %v2709 = vpow.pop %v2708
  %v2710 = vadd.f32 %v2709, 1.0
  %v2711 = vrcp.pop %v2710
  %v2712 = vmul.f32 1.0, %v2711
  %v2714 = vrot.slane %v2706, 6
  %v2716 = vtanh.pop %v2714
  %v2717 = vld [vmem:[#allocation3] sm:$0x3]
  %v2719 = vrot.slane %v2712, 2
  %v2721 = vmul.f32 %v2719, %v2717
  %v2722 = vmul.f32 %v2712, %v2716
  %v2723 = vadd.f32 %v2721, %v2722
  %v2724 = vtanh.pop %v2723
  %v2725 = vrot.slane %v2712, 4
  %v2727 = vmul.f32 %v2725, %v2724
  %s2728 = ssub.s32 3, %s88
  %v2729 = vstv %s2537
  %v2730 = vstv %s2728
  %v2731 = vsel %vm87, %v2729, %v2730
  %vm2732 = vcmp.lt.s32.totalorder %v2731, %v284
  %v2733 = vsel %vm2732, %v2727, %v2541
  %2734 = vst [vmem:[#allocation2] sm:$0x3] %v2733
  %v2735 = vld [vmem:[#allocation3] sm:$0x3]
  %v2736 = vsel %vm2732, %v2723, %v2735
  %2737 = vst [vmem:[#allocation3] sm:$0x3] %v2736
  %v2738 = vsel %vm2732, %v2727, 0.0
  %s2739 = scalar_lea.vmem %s3, 24
  %2740 = vst [vmem:[%s2739] sm:$0x3] %v2738
  %s2741 = sadd.s32 %s88, 13
  %s2742 = scalar_lea.vmem %s0, 52
  %v2743 = vld [vmem:[%s2742] sm:$0xf]
  %v2744 = vunpack.c.l.bf16 %v2743
  %v2745 = vld [vmem:[#allocation2] sm:$0x3]
  %2746 = vmatprep.subr.mxu0 %v21
  %2747 = vmatpush1.msra.mxu0 %v20
  %2748 = vmatprep.subr.mxu0 %v25
  %2749 = vmatpush1.msra.mxu0 %v24
  %2750 = vmatprep.subr.mxu0 %v29
  %2751 = vmatpush1.msra.mxu0 %v28
  %2752 = vmatprep.subr.mxu0 %v33
  %2753 = vmatpush1.msra.mxu0 %v32
  %2754 = vmatprep.subr.mxu0 %v37
  %2755 = vmatpush1.msra.mxu0 %v36
  %2756 = vmatprep.subr.mxu0 %v41
  %2757 = vmatpush1.msra.mxu0 %v40
  %2758 = vmatprep.subr.mxu0 %v45
  %2759 = vmatpush1.msra.mxu0 %v44
  %2760 = vmatprep.subr.mxu0 %v49
  %2761 = vmatpush1.msra.mxu0 %v48
  %2762 = vmatprep.subr.mxu0 %v53
  %2763 = vmatpush1.msra.mxu0 %v52
  %2764 = vmatprep.subr.mxu0 %v57
  %2765 = vmatpush1.msra.mxu0 %v56
  %2766 = vmatprep.subr.mxu0 %v61
  %2767 = vmatpush1.msra.mxu0 %v60
  %2768 = vmatprep.subr.mxu0 %v65
  %2769 = vmatpush1.msra.mxu0 %v64
  %2770 = vmatprep.subr.mxu0 %v69
  %2771 = vmatpush1.msra.mxu0 %v68
  %2772 = vmatprep.subr.mxu0 %v73
  %2773 = vmatpush1.msra.mxu0 %v72
  %2774 = vmatprep.subr.mxu0 %v77
  %2775 = vmatpush1.msra.mxu0 %v76
  %2776 = vmatprep.subr.mxu0 %v81
  %2777 = vmatpush1.msra.mxu0 %v80
  %2778 = vmatprep.subr.mxu0 0.0
  %2779 = vmatpush1.msra.mxu0 0.0
  %2780 = vmatprep.subr.mxu0 0.0
  %2781 = vmatpush1.msra.mxu0 0.0
  %2782 = vmatprep.subr.mxu0 0.0
  %2783 = vmatpush1.msra.mxu0 0.0
  %2784 = vmatprep.subr.mxu0 0.0
  %2785 = vmatpush1.msra.mxu0 0.0
  %2786 = vmatprep.subr.mxu0 0.0
  %2787 = vmatpush1.msra.mxu0 0.0
  %2788 = vmatprep.subr.mxu0 0.0
  %2789 = vmatpush1.msra.mxu0 0.0
  %2790 = vmatprep.subr.mxu0 0.0
  %2791 = vmatpush1.msra.mxu0 0.0
  %2792 = vmatprep.subr.mxu0 0.0
  %2793 = vmatpush1.msra.mxu0 0.0
  %2794 = vmatprep.subr.mxu0 0.0
  %2795 = vmatpush1.msra.mxu0 0.0
  %2796 = vmatprep.subr.mxu0 0.0
  %2797 = vmatpush1.msra.mxu0 0.0
  %2798 = vmatprep.subr.mxu0 0.0
  %2799 = vmatpush1.msra.mxu0 0.0
  %2800 = vmatprep.subr.mxu0 0.0
  %2801 = vmatpush1.msra.mxu0 0.0
  %2802 = vmatprep.subr.mxu0 0.0
  %2803 = vmatpush1.msra.mxu0 0.0
  %2804 = vmatprep.subr.mxu0 0.0
  %2805 = vmatpush1.msra.mxu0 0.0
  %2806 = vmatprep.subr.mxu0 0.0
  %2807 = vmatpush1.msra.mxu0 0.0
  %2808 = vmatprep.subr.mxu0 0.0
  %2809 = vmatpush1.msra.mxu0 0.0
  %2810 = vmatprep.mubr.f32.mxu0 0.0
  %2811 = vmatmul.mubr.f32.gmra.mrb[0].mxu0 %v2745
  %v2812 = vpop.f32.mrb[0].mxu0
  %v2813 = vadd.f32 0.0, %v2812
  %v2814 = vpop.f32.mrb[0].mxu0
  %v2815 = vadd.f32 0.0, %v2814
  %2816 = vdwg.mxu0
  %2817 = vmatprep.subr.mxu0 %v23
  %2818 = vmatpush1.msra.mxu0 %v22
  %2819 = vmatprep.subr.mxu0 %v27
  %2820 = vmatpush1.msra.mxu0 %v26
  %2821 = vmatprep.subr.mxu0 %v31
  %2822 = vmatpush1.msra.mxu0 %v30
  %2823 = vmatprep.subr.mxu0 %v35
  %2824 = vmatpush1.msra.mxu0 %v34
  %2825 = vmatprep.subr.mxu0 %v39
  %2826 = vmatpush1.msra.mxu0 %v38
  %2827 = vmatprep.subr.mxu0 %v43
  %2828 = vmatpush1.msra.mxu0 %v42
  %2829 = vmatprep.subr.mxu0 %v47
  %2830 = vmatpush1.msra.mxu0 %v46
  %2831 = vmatprep.subr.mxu0 %v51
  %2832 = vmatpush1.msra.mxu0 %v50
  %2833 = vmatprep.subr.mxu0 %v55
  %2834 = vmatpush1.msra.mxu0 %v54
  %2835 = vmatprep.subr.mxu0 %v59
  %2836 = vmatpush1.msra.mxu0 %v58
  %2837 = vmatprep.subr.mxu0 %v63
  %2838 = vmatpush1.msra.mxu0 %v62
  %2839 = vmatprep.subr.mxu0 %v67
  %2840 = vmatpush1.msra.mxu0 %v66
  %2841 = vmatprep.subr.mxu0 %v71
  %2842 = vmatpush1.msra.mxu0 %v70
  %2843 = vmatprep.subr.mxu0 %v75
  %2844 = vmatpush1.msra.mxu0 %v74
  %2845 = vmatprep.subr.mxu0 %v79
  %2846 = vmatpush1.msra.mxu0 %v78
  %2847 = vmatprep.subr.mxu0 %v83
  %2848 = vmatpush1.msra.mxu0 %v82
  %2849 = vmatprep.subr.mxu0 0.0
  %2850 = vmatpush1.msra.mxu0 0.0
  %2851 = vmatprep.subr.mxu0 0.0
  %2852 = vmatpush1.msra.mxu0 0.0
  %2853 = vmatprep.subr.mxu0 0.0
  %2854 = vmatpush1.msra.mxu0 0.0
  %2855 = vmatprep.subr.mxu0 0.0
  %2856 = vmatpush1.msra.mxu0 0.0
  %2857 = vmatprep.subr.mxu0 0.0
  %2858 = vmatpush1.msra.mxu0 0.0
  %2859 = vmatprep.subr.mxu0 0.0
  %2860 = vmatpush1.msra.mxu0 0.0
  %2861 = vmatprep.subr.mxu0 0.0
  %2862 = vmatpush1.msra.mxu0 0.0
  %2863 = vmatprep.subr.mxu0 0.0
  %2864 = vmatpush1.msra.mxu0 0.0
  %2865 = vmatprep.subr.mxu0 0.0
  %2866 = vmatpush1.msra.mxu0 0.0
  %2867 = vmatprep.subr.mxu0 0.0
  %2868 = vmatpush1.msra.mxu0 0.0
  %2869 = vmatprep.subr.mxu0 0.0
  %2870 = vmatpush1.msra.mxu0 0.0
  %2871 = vmatprep.subr.mxu0 0.0
  %2872 = vmatpush1.msra.mxu0 0.0
  %2873 = vmatprep.subr.mxu0 0.0
  %2874 = vmatpush1.msra.mxu0 0.0
  %2875 = vmatprep.subr.mxu0 0.0
  %2876 = vmatpush1.msra.mxu0 0.0
  %2877 = vmatprep.subr.mxu0 0.0
  %2878 = vmatpush1.msra.mxu0 0.0
  %2879 = vmatprep.subr.mxu0 0.0
  %2880 = vmatpush1.msra.mxu0 0.0
  %2881 = vmatprep.mubr.f32.mxu0 0.0
  %2882 = vmatmul.mubr.f32.gmra.mrb[0].mxu0 %v2745
  %v2883 = vpop.f32.mrb[0].mxu0
  %v2884 = vadd.f32 0.0, %v2883
  %v2885 = vpop.f32.mrb[0].mxu0
  %v2886 = vadd.f32 0.0, %v2885
  %2887 = vdwg.mxu0
  %v2892 = vcombine.low %v2813, %v2815
  %v2893 = vcombine.low %v2884, %v2886
  %v2895 = vunpack.c.l.s4 1983009808
  %v2896 = vunpack.c.0.s8 %v2895
  %v2897 = vlaneseq
  %v2898 = vshrl.u32 %v2897, 7
  %v2899 = vsub.s32 %v2896, %v2898
  %v2900 = vrot.slane %v2892, %v2899
  %v2902 = vunpack.c.l.s4 1983009808
  %v2903 = vunpack.c.0.s8 %v2902
  %v2904 = vlaneseq
  %v2905 = vshrl.u32 %v2904, 7
  %v2906 = vsub.s32 %v2903, %v2905
  %v2907 = vrot.slane %v2893, %v2906
  %v2908 = vcombine.low %v2900, %v2907
  %v2910 = vadd.f32 %v2744, %v2908
  %v2911 = vxor.u32 %v2910, 2147483648
  %v2912 = vmul.f32 %v2911, 1.442695
  %v2913 = vpow.pop %v2912
  %v2914 = vadd.f32 %v2913, 1.0
  %v2915 = vrcp.pop %v2914
  %v2916 = vmul.f32 1.0, %v2915
  %v2918 = vrot.slane %v2910, 6
  %v2920 = vtanh.pop %v2918
  %v2921 = vld [vmem:[#allocation3] sm:$0x3]
  %v2923 = vrot.slane %v2916, 2
  %v2925 = vmul.f32 %v2923, %v2921
  %v2926 = vmul.f32 %v2916, %v2920
  %v2927 = vadd.f32 %v2925, %v2926
  %v2928 = vtanh.pop %v2927
  %v2929 = vrot.slane %v2916, 4
  %v2931 = vmul.f32 %v2929, %v2928
  %s2932 = ssub.s32 2, %s88
  %v2933 = vstv %s2741
  %v2934 = vstv %s2932
  %v2935 = vsel %vm87, %v2933, %v2934
  %vm2936 = vcmp.lt.s32.totalorder %v2935, %v284
  %v2937 = vsel %vm2936, %v2931, %v2745
  %2938 = vst [vmem:[#allocation2] sm:$0x3] %v2937
  %v2939 = vld [vmem:[#allocation3] sm:$0x3]
  %v2940 = vsel %vm2936, %v2927, %v2939
  %2941 = vst [vmem:[#allocation3] sm:$0x3] %v2940
  %v2942 = vsel %vm2936, %v2931, 0.0
  %s2943 = scalar_lea.vmem %s3, 26
  %2944 = vst [vmem:[%s2943] sm:$0x3] %v2942
  %s2945 = sadd.s32 %s88, 14
  %s2946 = scalar_lea.vmem %s0, 56
  %v2947 = vld [vmem:[%s2946] sm:$0xf]
  %v2948 = vunpack.c.l.bf16 %v2947
  %v2949 = vld [vmem:[#allocation2] sm:$0x3]
  %2950 = vmatprep.subr.mxu0 %v21
  %2951 = vmatpush1.msra.mxu0 %v20
  %2952 = vmatprep.subr.mxu0 %v25
  %2953 = vmatpush1.msra.mxu0 %v24
  %2954 = vmatprep.subr.mxu0 %v29
  %2955 = vmatpush1.msra.mxu0 %v28
  %2956 = vmatprep.subr.mxu0 %v33
  %2957 = vmatpush1.msra.mxu0 %v32
  %2958 = vmatprep.subr.mxu0 %v37
  %2959 = vmatpush1.msra.mxu0 %v36
  %2960 = vmatprep.subr.mxu0 %v41
  %2961 = vmatpush1.msra.mxu0 %v40
  %2962 = vmatprep.subr.mxu0 %v45
  %2963 = vmatpush1.msra.mxu0 %v44
  %2964 = vmatprep.subr.mxu0 %v49
  %2965 = vmatpush1.msra.mxu0 %v48
  %2966 = vmatprep.subr.mxu0 %v53
  %2967 = vmatpush1.msra.mxu0 %v52
  %2968 = vmatprep.subr.mxu0 %v57
  %2969 = vmatpush1.msra.mxu0 %v56
  %2970 = vmatprep.subr.mxu0 %v61
  %2971 = vmatpush1.msra.mxu0 %v60
  %2972 = vmatprep.subr.mxu0 %v65
  %2973 = vmatpush1.msra.mxu0 %v64
  %2974 = vmatprep.subr.mxu0 %v69
  %2975 = vmatpush1.msra.mxu0 %v68
  %2976 = vmatprep.subr.mxu0 %v73
  %2977 = vmatpush1.msra.mxu0 %v72
  %2978 = vmatprep.subr.mxu0 %v77
  %2979 = vmatpush1.msra.mxu0 %v76
  %2980 = vmatprep.subr.mxu0 %v81
  %2981 = vmatpush1.msra.mxu0 %v80
  %2982 = vmatprep.subr.mxu0 0.0
  %2983 = vmatpush1.msra.mxu0 0.0
  %2984 = vmatprep.subr.mxu0 0.0
  %2985 = vmatpush1.msra.mxu0 0.0
  %2986 = vmatprep.subr.mxu0 0.0
  %2987 = vmatpush1.msra.mxu0 0.0
  %2988 = vmatprep.subr.mxu0 0.0
  %2989 = vmatpush1.msra.mxu0 0.0
  %2990 = vmatprep.subr.mxu0 0.0
  %2991 = vmatpush1.msra.mxu0 0.0
  %2992 = vmatprep.subr.mxu0 0.0
  %2993 = vmatpush1.msra.mxu0 0.0
  %2994 = vmatprep.subr.mxu0 0.0
  %2995 = vmatpush1.msra.mxu0 0.0
  %2996 = vmatprep.subr.mxu0 0.0
  %2997 = vmatpush1.msra.mxu0 0.0
  %2998 = vmatprep.subr.mxu0 0.0
  %2999 = vmatpush1.msra.mxu0 0.0
  %3000 = vmatprep.subr.mxu0 0.0
  %3001 = vmatpush1.msra.mxu0 0.0
  %3002 = vmatprep.subr.mxu0 0.0
  %3003 = vmatpush1.msra.mxu0 0.0
  %3004 = vmatprep.subr.mxu0 0.0
  %3005 = vmatpush1.msra.mxu0 0.0
  %3006 = vmatprep.subr.mxu0 0.0
  %3007 = vmatpush1.msra.mxu0 0.0
  %3008 = vmatprep.subr.mxu0 0.0
  %3009 = vmatpush1.msra.mxu0 0.0
  %3010 = vmatprep.subr.mxu0 0.0
  %3011 = vmatpush1.msra.mxu0 0.0
  %3012 = vmatprep.subr.mxu0 0.0
  %3013 = vmatpush1.msra.mxu0 0.0
  %3014 = vmatprep.mubr.f32.mxu0 0.0
  %3015 = vmatmul.mubr.f32.gmra.mrb[0].mxu0 %v2949
  %v3016 = vpop.f32.mrb[0].mxu0
  %v3017 = vadd.f32 0.0, %v3016
  %v3018 = vpop.f32.mrb[0].mxu0
  %v3019 = vadd.f32 0.0, %v3018
  %3020 = vdwg.mxu0
  %3021 = vmatprep.subr.mxu0 %v23
  %3022 = vmatpush1.msra.mxu0 %v22
  %3023 = vmatprep.subr.mxu0 %v27
  %3024 = vmatpush1.msra.mxu0 %v26
  %3025 = vmatprep.subr.mxu0 %v31
  %3026 = vmatpush1.msra.mxu0 %v30
  %3027 = vmatprep.subr.mxu0 %v35
  %3028 = vmatpush1.msra.mxu0 %v34
  %3029 = vmatprep.subr.mxu0 %v39
  %3030 = vmatpush1.msra.mxu0 %v38
  %3031 = vmatprep.subr.mxu0 %v43
  %3032 = vmatpush1.msra.mxu0 %v42
  %3033 = vmatprep.subr.mxu0 %v47
  %3034 = vmatpush1.msra.mxu0 %v46
  %3035 = vmatprep.subr.mxu0 %v51
  %3036 = vmatpush1.msra.mxu0 %v50
  %3037 = vmatprep.subr.mxu0 %v55
  %3038 = vmatpush1.msra.mxu0 %v54
  %3039 = vmatprep.subr.mxu0 %v59
  %3040 = vmatpush1.msra.mxu0 %v58
  %3041 = vmatprep.subr.mxu0 %v63
  %3042 = vmatpush1.msra.mxu0 %v62
  %3043 = vmatprep.subr.mxu0 %v67
  %3044 = vmatpush1.msra.mxu0 %v66
  %3045 = vmatprep.subr.mxu0 %v71
  %3046 = vmatpush1.msra.mxu0 %v70
  %3047 = vmatprep.subr.mxu0 %v75
  %3048 = vmatpush1.msra.mxu0 %v74
  %3049 = vmatprep.subr.mxu0 %v79
  %3050 = vmatpush1.msra.mxu0 %v78
  %3051 = vmatprep.subr.mxu0 %v83
  %3052 = vmatpush1.msra.mxu0 %v82
  %3053 = vmatprep.subr.mxu0 0.0
  %3054 = vmatpush1.msra.mxu0 0.0
  %3055 = vmatprep.subr.mxu0 0.0
  %3056 = vmatpush1.msra.mxu0 0.0
  %3057 = vmatprep.subr.mxu0 0.0
  %3058 = vmatpush1.msra.mxu0 0.0
  %3059 = vmatprep.subr.mxu0 0.0
  %3060 = vmatpush1.msra.mxu0 0.0
  %3061 = vmatprep.subr.mxu0 0.0
  %3062 = vmatpush1.msra.mxu0 0.0
  %3063 = vmatprep.subr.mxu0 0.0
  %3064 = vmatpush1.msra.mxu0 0.0
  %3065 = vmatprep.subr.mxu0 0.0
  %3066 = vmatpush1.msra.mxu0 0.0
  %3067 = vmatprep.subr.mxu0 0.0
  %3068 = vmatpush1.msra.mxu0 0.0
  %3069 = vmatprep.subr.mxu0 0.0
  %3070 = vmatpush1.msra.mxu0 0.0
  %3071 = vmatprep.subr.mxu0 0.0
  %3072 = vmatpush1.msra.mxu0 0.0
  %3073 = vmatprep.subr.mxu0 0.0
  %3074 = vmatpush1.msra.mxu0 0.0
  %3075 = vmatprep.subr.mxu0 0.0
  %3076 = vmatpush1.msra.mxu0 0.0
  %3077 = vmatprep.subr.mxu0 0.0
  %3078 = vmatpush1.msra.mxu0 0.0
  %3079 = vmatprep.subr.mxu0 0.0
  %3080 = vmatpush1.msra.mxu0 0.0
  %3081 = vmatprep.subr.mxu0 0.0
  %3082 = vmatpush1.msra.mxu0 0.0
  %3083 = vmatprep.subr.mxu0 0.0
  %3084 = vmatpush1.msra.mxu0 0.0
  %3085 = vmatprep.mubr.f32.mxu0 0.0
  %3086 = vmatmul.mubr.f32.gmra.mrb[0].mxu0 %v2949
  %v3087 = vpop.f32.mrb[0].mxu0
  %v3088 = vadd.f32 0.0, %v3087
  %v3089 = vpop.f32.mrb[0].mxu0
  %v3090 = vadd.f32 0.0, %v3089
  %3091 = vdwg.mxu0
  %v3096 = vcombine.low %v3017, %v3019
  %v3097 = vcombine.low %v3088, %v3090
  %v3099 = vunpack.c.l.s4 1983009808
  %v3100 = vunpack.c.0.s8 %v3099
  %v3101 = vlaneseq
  %v3102 = vshrl.u32 %v3101, 7
  %v3103 = vsub.s32 %v3100, %v3102
  %v3104 = vrot.slane %v3096, %v3103
  %v3106 = vunpack.c.l.s4 1983009808
  %v3107 = vunpack.c.0.s8 %v3106
  %v3108 = vlaneseq
  %v3109 = vshrl.u32 %v3108, 7
  %v3110 = vsub.s32 %v3107, %v3109
  %v3111 = vrot.slane %v3097, %v3110
  %v3112 = vcombine.low %v3104, %v3111
  %v3114 = vadd.f32 %v2948, %v3112
  %v3115 = vxor.u32 %v3114, 2147483648
  %v3116 = vmul.f32 %v3115, 1.442695
  %v3117 = vpow.pop %v3116
  %v3118 = vadd.f32 %v3117, 1.0
  %v3119 = vrcp.pop %v3118
  %v3120 = vmul.f32 1.0, %v3119
  %v3122 = vrot.slane %v3114, 6
  %v3124 = vtanh.pop %v3122
  %v3125 = vld [vmem:[#allocation3] sm:$0x3]
  %v3127 = vrot.slane %v3120, 2
  %v3129 = vmul.f32 %v3127, %v3125
  %v3130 = vmul.f32 %v3120, %v3124
  %v3131 = vadd.f32 %v3129, %v3130
  %v3132 = vtanh.pop %v3131
  %v3133 = vrot.slane %v3120, 4
  %v3135 = vmul.f32 %v3133, %v3132
  %s3136 = ssub.s32 1, %s88
  %v3137 = vstv %s2945
  %v3138 = vstv %s3136
  %v3139 = vsel %vm87, %v3137, %v3138
  %vm3140 = vcmp.lt.s32.totalorder %v3139, %v284
  %v3141 = vsel %vm3140, %v3135, %v2949
  %3142 = vst [vmem:[#allocation2] sm:$0x3] %v3141
  %v3143 = vld [vmem:[#allocation3] sm:$0x3]
  %v3144 = vsel %vm3140, %v3131, %v3143
  %3145 = vst [vmem:[#allocation3] sm:$0x3] %v3144
  %v3146 = vsel %vm3140, %v3135, 0.0
  %s3147 = scalar_lea.vmem %s3, 28
  %3148 = vst [vmem:[%s3147] sm:$0x3] %v3146
  %s3149 = sadd.s32 %s88, 15
  %s3150 = scalar_lea.vmem %s0, 60
  %v3151 = vld [vmem:[%s3150] sm:$0xf]
  %v3152 = vunpack.c.l.bf16 %v3151
  %v3153 = vld [vmem:[#allocation2] sm:$0x3]
  %3154 = vmatprep.subr.mxu0 %v21
  %3155 = vmatpush1.msra.mxu0 %v20
  %3156 = vmatprep.subr.mxu0 %v25
  %3157 = vmatpush1.msra.mxu0 %v24
  %3158 = vmatprep.subr.mxu0 %v29
  %3159 = vmatpush1.msra.mxu0 %v28
  %3160 = vmatprep.subr.mxu0 %v33
  %3161 = vmatpush1.msra.mxu0 %v32
  %3162 = vmatprep.subr.mxu0 %v37
  %3163 = vmatpush1.msra.mxu0 %v36
  %3164 = vmatprep.subr.mxu0 %v41
  %3165 = vmatpush1.msra.mxu0 %v40
  %3166 = vmatprep.subr.mxu0 %v45
  %3167 = vmatpush1.msra.mxu0 %v44
  %3168 = vmatprep.subr.mxu0 %v49
  %3169 = vmatpush1.msra.mxu0 %v48
  %3170 = vmatprep.subr.mxu0 %v53
  %3171 = vmatpush1.msra.mxu0 %v52
  %3172 = vmatprep.subr.mxu0 %v57
  %3173 = vmatpush1.msra.mxu0 %v56
  %3174 = vmatprep.subr.mxu0 %v61
  %3175 = vmatpush1.msra.mxu0 %v60
  %3176 = vmatprep.subr.mxu0 %v65
  %3177 = vmatpush1.msra.mxu0 %v64
  %3178 = vmatprep.subr.mxu0 %v69
  %3179 = vmatpush1.msra.mxu0 %v68
  %3180 = vmatprep.subr.mxu0 %v73
  %3181 = vmatpush1.msra.mxu0 %v72
  %3182 = vmatprep.subr.mxu0 %v77
  %3183 = vmatpush1.msra.mxu0 %v76
  %3184 = vmatprep.subr.mxu0 %v81
  %3185 = vmatpush1.msra.mxu0 %v80
  %3186 = vmatprep.subr.mxu0 0.0
  %3187 = vmatpush1.msra.mxu0 0.0
  %3188 = vmatprep.subr.mxu0 0.0
  %3189 = vmatpush1.msra.mxu0 0.0
  %3190 = vmatprep.subr.mxu0 0.0
  %3191 = vmatpush1.msra.mxu0 0.0
  %3192 = vmatprep.subr.mxu0 0.0
  %3193 = vmatpush1.msra.mxu0 0.0
  %3194 = vmatprep.subr.mxu0 0.0
  %3195 = vmatpush1.msra.mxu0 0.0
  %3196 = vmatprep.subr.mxu0 0.0
  %3197 = vmatpush1.msra.mxu0 0.0
  %3198 = vmatprep.subr.mxu0 0.0
  %3199 = vmatpush1.msra.mxu0 0.0
  %3200 = vmatprep.subr.mxu0 0.0
  %3201 = vmatpush1.msra.mxu0 0.0
  %3202 = vmatprep.subr.mxu0 0.0
  %3203 = vmatpush1.msra.mxu0 0.0
  %3204 = vmatprep.subr.mxu0 0.0
  %3205 = vmatpush1.msra.mxu0 0.0
  %3206 = vmatprep.subr.mxu0 0.0
  %3207 = vmatpush1.msra.mxu0 0.0
  %3208 = vmatprep.subr.mxu0 0.0
  %3209 = vmatpush1.msra.mxu0 0.0
  %3210 = vmatprep.subr.mxu0 0.0
  %3211 = vmatpush1.msra.mxu0 0.0
  %3212 = vmatprep.subr.mxu0 0.0
  %3213 = vmatpush1.msra.mxu0 0.0
  %3214 = vmatprep.subr.mxu0 0.0
  %3215 = vmatpush1.msra.mxu0 0.0
  %3216 = vmatprep.subr.mxu0 0.0
  %3217 = vmatpush1.msra.mxu0 0.0
  %3218 = vmatprep.mubr.f32.mxu0 0.0
  %3219 = vmatmul.mubr.f32.gmra.mrb[0].mxu0 %v3153
  %v3220 = vpop.f32.mrb[0].mxu0
  %v3221 = vadd.f32 0.0, %v3220
  %v3222 = vpop.f32.mrb[0].mxu0
  %v3223 = vadd.f32 0.0, %v3222
  %3224 = vdwg.mxu0
  %3225 = vmatprep.subr.mxu0 %v23
  %3226 = vmatpush1.msra.mxu0 %v22
  %3227 = vmatprep.subr.mxu0 %v27
  %3228 = vmatpush1.msra.mxu0 %v26
  %3229 = vmatprep.subr.mxu0 %v31
  %3230 = vmatpush1.msra.mxu0 %v30
  %3231 = vmatprep.subr.mxu0 %v35
  %3232 = vmatpush1.msra.mxu0 %v34
  %3233 = vmatprep.subr.mxu0 %v39
  %3234 = vmatpush1.msra.mxu0 %v38
  %3235 = vmatprep.subr.mxu0 %v43
  %3236 = vmatpush1.msra.mxu0 %v42
  %3237 = vmatprep.subr.mxu0 %v47
  %3238 = vmatpush1.msra.mxu0 %v46
  %3239 = vmatprep.subr.mxu0 %v51
  %3240 = vmatpush1.msra.mxu0 %v50
  %3241 = vmatprep.subr.mxu0 %v55
  %3242 = vmatpush1.msra.mxu0 %v54
  %3243 = vmatprep.subr.mxu0 %v59
  %3244 = vmatpush1.msra.mxu0 %v58
  %3245 = vmatprep.subr.mxu0 %v63
  %3246 = vmatpush1.msra.mxu0 %v62
  %3247 = vmatprep.subr.mxu0 %v67
  %3248 = vmatpush1.msra.mxu0 %v66
  %3249 = vmatprep.subr.mxu0 %v71
  %3250 = vmatpush1.msra.mxu0 %v70
  %3251 = vmatprep.subr.mxu0 %v75
  %3252 = vmatpush1.msra.mxu0 %v74
  %3253 = vmatprep.subr.mxu0 %v79
  %3254 = vmatpush1.msra.mxu0 %v78
  %3255 = vmatprep.subr.mxu0 %v83
  %3256 = vmatpush1.msra.mxu0 %v82
  %3257 = vmatprep.subr.mxu0 0.0
  %3258 = vmatpush1.msra.mxu0 0.0
  %3259 = vmatprep.subr.mxu0 0.0
  %3260 = vmatpush1.msra.mxu0 0.0
  %3261 = vmatprep.subr.mxu0 0.0
  %3262 = vmatpush1.msra.mxu0 0.0
  %3263 = vmatprep.subr.mxu0 0.0
  %3264 = vmatpush1.msra.mxu0 0.0
  %3265 = vmatprep.subr.mxu0 0.0
  %3266 = vmatpush1.msra.mxu0 0.0
  %3267 = vmatprep.subr.mxu0 0.0
  %3268 = vmatpush1.msra.mxu0 0.0
  %3269 = vmatprep.subr.mxu0 0.0
  %3270 = vmatpush1.msra.mxu0 0.0
  %3271 = vmatprep.subr.mxu0 0.0
  %3272 = vmatpush1.msra.mxu0 0.0
  %3273 = vmatprep.subr.mxu0 0.0
  %3274 = vmatpush1.msra.mxu0 0.0
  %3275 = vmatprep.subr.mxu0 0.0
  %3276 = vmatpush1.msra.mxu0 0.0
  %3277 = vmatprep.subr.mxu0 0.0
  %3278 = vmatpush1.msra.mxu0 0.0
  %3279 = vmatprep.subr.mxu0 0.0
  %3280 = vmatpush1.msra.mxu0 0.0
  %3281 = vmatprep.subr.mxu0 0.0
  %3282 = vmatpush1.msra.mxu0 0.0
  %3283 = vmatprep.subr.mxu0 0.0
  %3284 = vmatpush1.msra.mxu0 0.0
  %3285 = vmatprep.subr.mxu0 0.0
  %3286 = vmatpush1.msra.mxu0 0.0
  %3287 = vmatprep.subr.mxu0 0.0
  %3288 = vmatpush1.msra.mxu0 0.0
  %3289 = vmatprep.mubr.f32.mxu0 0.0
  %3290 = vmatmul.mubr.f32.gmra.mrb[0].mxu0 %v3153
  %v3291 = vpop.f32.mrb[0].mxu0
  %v3292 = vadd.f32 0.0, %v3291
  %v3293 = vpop.f32.mrb[0].mxu0
  %v3294 = vadd.f32 0.0, %v3293
  %3295 = vdwg.mxu0
  %v3300 = vcombine.low %v3221, %v3223
  %v3301 = vcombine.low %v3292, %v3294
  %v3303 = vunpack.c.l.s4 1983009808
  %v3304 = vunpack.c.0.s8 %v3303
  %v3305 = vlaneseq
  %v3306 = vshrl.u32 %v3305, 7
  %v3307 = vsub.s32 %v3304, %v3306
  %v3308 = vrot.slane %v3300, %v3307
  %v3310 = vunpack.c.l.s4 1983009808
  %v3311 = vunpack.c.0.s8 %v3310
  %v3312 = vlaneseq
  %v3313 = vshrl.u32 %v3312, 7
  %v3314 = vsub.s32 %v3311, %v3313
  %v3315 = vrot.slane %v3301, %v3314
  %v3316 = vcombine.low %v3308, %v3315
  %v3318 = vadd.f32 %v3152, %v3316
  %v3319 = vxor.u32 %v3318, 2147483648
  %v3320 = vmul.f32 %v3319, 1.442695
  %v3321 = vpow.pop %v3320
  %v3322 = vadd.f32 %v3321, 1.0
  %v3323 = vrcp.pop %v3322
  %v3324 = vmul.f32 1.0, %v3323
  %v3326 = vrot.slane %v3318, 6
  %v3328 = vtanh.pop %v3326
  %v3329 = vld [vmem:[#allocation3] sm:$0x3]
  %v3331 = vrot.slane %v3324, 2
  %v3333 = vmul.f32 %v3331, %v3329
  %v3334 = vmul.f32 %v3324, %v3328
  %v3335 = vadd.f32 %v3333, %v3334
  %v3336 = vtanh.pop %v3335
  %v3337 = vrot.slane %v3324, 4
  %v3339 = vmul.f32 %v3337, %v3336
  %s3340 = ssub.s32 0, %s88
  %v3341 = vstv %s3149
  %v3342 = vstv %s3340
  %v3343 = vsel %vm87, %v3341, %v3342
  %vm3344 = vcmp.lt.s32.totalorder %v3343, %v284
  %v3345 = vsel %vm3344, %v3339, %v3153
  %3346 = vst [vmem:[#allocation2] sm:$0x3] %v3345
  %v3347 = vld [vmem:[#allocation3] sm:$0x3]
  %v3348 = vsel %vm3344, %v3335, %v3347
  %3349 = vst [vmem:[#allocation3] sm:$0x3] %v3348
  %v3350 = vsel %vm3344, %v3339, 0.0
  %s3351 = scalar_lea.vmem %s3, 30
  %3352 = vst [vmem:[%s3351] sm:$0x3] %v3350
  // Predicated region
  $region18: #{encoder_forward.3} parent=0 // pred_check
    _
  $region19: #{encoder_forward.3} parent=0 // pred_check_branch
    %3354 = sbr.rel (0) target = $region21
  $region20: #{encoder_forward.3} parent=0 // pred_region
    _
  $region21: #{encoder_forward.3} parent=0 // pred_fallthru
    _
  // Predicated region
  $region22: #{encoder_forward.3} parent=0 // pred_check
    _
  $region23: #{encoder_forward.3} parent=0 // pred_check_branch
    %3356 = sbr.rel (0) target = $region25
  $region24: #{encoder_forward.3} parent=0 // pred_region
    _
  $region25: #{encoder_forward.3} parent=0 // pred_fallthru
    _

</llo_original>
